<compile_context>
chip_gen: v5e
topology: v5e:2x2
jax: 0.10.0
libtpu: 0.0.40
codegen_flags: <defaults>
</compile_context>

<pallas_src>
import jax
import jax.numpy as jnp
from jax.experimental import pallas as pl
from jax.experimental.pallas import tpu as pltpu

N = 2
H = W = 28
C1, C2 = 32, 64
HP = WP = 12                 # pooled spatial size (24 / 2)
PW = 16                      # padded pooled width (keeps reshapes 8-aligned)
POOL_ROWS = HP * PW          # 192 rows emitted per sample by the conv kernel
FLAT = HP * WP * C2          # 9216 real features consumed by fc1
HID = 128
CLS = 10
# phase-domain tile sizes
XPH, XPW = 14, 18            # x parity-phase tile (width zero-padded 14 -> 18)
H1H, H1W = 13, 17            # conv1 parity-phase tile


def conv_pool_kernel(xp_ref, w1_ref, b1_ref, w2_ref, b2_ref, out_ref):
    """Per-sample: conv1 -> ReLU -> conv2 -> bias -> 2x2 max pool (phase form)."""
    # The 4 input parity phases of this sample: phase f = 2*r + s holds
    # x[2m + r, 2mm + s]; each is (14, 18, 1), zero-padded in the minor-2 dim.
    xph = [xp_ref[f] for f in range(4)]

    # conv1 (Cin=1 -> 32) + bias + ReLU, computed directly in the 2x2 phase
    # domain so the later pool decimation needs no strided slicing.  Each of
    # the 4 phases is 9 lane-broadcast FMAs on (13, 17, 32) tiles; only
    # [:13, :13] is meaningful, the rest is finite padding that is never used
    # by valid outputs.
    b1 = b1_ref[0, :]
    h1p = [[None, None], [None, None]]
    for p in range(2):
        for q in range(2):
            acc = jnp.zeros((H1H, H1W, C1), jnp.float32)
            for kh in range(3):
                for kw in range(3):
                    u, v = p + kh, q + kw
                    xs = xph[2 * (u % 2) + (v % 2)]
                    a0, b0 = u // 2, v // 2
                    acc = acc + (xs[a0:a0 + H1H, b0:b0 + H1W, :]
                                 * w1_ref[kh, kw, :])
            h1p[p][q] = jnp.maximum(acc + b1, 0.0)       # activation = ReLU

    # conv2 (32 -> 64) evaluated at each 2x2 pool offset (di, dj): 9 MXU
    # matmuls of shape (192, 32) @ (32, 64) per offset, rows = i*16 + j
    # (j >= 12 is alignment padding, sliced off for free in the wrapper).
    accs = []
    for di in range(2):
        for dj in range(2):
            acc = jnp.zeros((POOL_ROWS, C2), jnp.float32)
            for kh in range(3):
                for kw in range(3):
                    u, v = di + kh, dj + kw
                    src = h1p[u % 2][v % 2]
                    i0, j0 = u // 2, v // 2
                    patch = src[i0:i0 + HP, j0:j0 + PW, :].reshape(POOL_ROWS, C1)
                    acc = acc + jnp.dot(patch, w2_ref[kh, kw, :, :],
                                        preferred_element_type=jnp.float32)
            accs.append(acc)

    # 2x2 max pool == elementwise max over the four offsets; conv2 bias is a
    # per-channel constant so it commutes with the max.
    pooled = jnp.maximum(jnp.maximum(accs[0], accs[1]),
                         jnp.maximum(accs[2], accs[3])) + b2_ref[...]
    out_ref[0] = pooled                                   # (192, 64)


def mlp_kernel(x_ref, wf1_ref, bf1_ref, wf2_ref, bf2_ref, out_ref):
    """fc1 -> ReLU -> fc2 -> log_softmax over classes, whole (small) batch."""
    h = jnp.dot(x_ref[...], wf1_ref[...], preferred_element_type=jnp.float32)
    h = jnp.maximum(h + bf1_ref[...], 0.0)                # activation = ReLU
    z = jnp.dot(h, wf2_ref[...], preferred_element_type=jnp.float32) + bf2_ref[...]
    m = jnp.max(z, axis=-1, keepdims=True)
    lse = jnp.log(jnp.sum(jnp.exp(z - m), axis=-1, keepdims=True)) + m
    out_ref[...] = z - lse


def net_forward(x, params):
    (w1, b1, w2, b2, wf1, bf1, wf2, bf2) = params
    n = x.shape[0]

    # glue: split the input into its four 2x2 spatial parity phases (free XLA
    # rearrangement of ~6 KB) and zero-pad the minor spatial dim so every
    # in-kernel reshape stays sublane-aligned.
    xph = x[:, 0].reshape(n, XPH, 2, XPH, 2).transpose(0, 2, 4, 1, 3)
    xph = xph.reshape(n * 4, XPH, XPH)
    xph = jnp.pad(xph, ((0, 0), (0, 0), (0, XPW - XPH)))[..., None]
    xph = xph.astype(jnp.float32)                          # (4n, 14, 18, 1)

    pooled = pl.pallas_call(
        conv_pool_kernel,
        out_shape=jax.ShapeDtypeStruct((n, POOL_ROWS, C2), jnp.float32),
        grid=(n,),
        in_specs=[
            pl.BlockSpec((4, XPH, XPW, 1), lambda b: (b, 0, 0, 0)),
            pl.BlockSpec((3, 3, C1), lambda b: (0, 0, 0)),
            pl.BlockSpec((1, C1), lambda b: (0, 0)),
            pl.BlockSpec((3, 3, C1, C2), lambda b: (0, 0, 0, 0)),
            pl.BlockSpec((1, C2), lambda b: (0, 0)),
        ],
        out_specs=pl.BlockSpec((1, POOL_ROWS, C2), lambda b: (b, 0, 0)),
        compiler_params=pltpu.CompilerParams(
            dimension_semantics=("parallel",)),
    )(xph, w1, b1, w2, b2)

    # glue: dropout1 is identity at inference; drop the 4 alignment-padding
    # columns and flatten (h, w, c) features — a free XLA slice/reshape.
    flat = pooled.reshape(n, HP, PW, C2)[:, :, :WP, :].reshape(n, FLAT)

    out = pl.pallas_call(
        mlp_kernel,
        out_shape=jax.ShapeDtypeStruct((n, CLS), jnp.float32),
        grid=(1,),
        in_specs=[
            pl.BlockSpec((n, FLAT), lambda i: (0, 0)),
            pl.BlockSpec((FLAT, HID), lambda i: (0, 0)),
            pl.BlockSpec((1, HID), lambda i: (0, 0)),
            pl.BlockSpec((HID, CLS), lambda i: (0, 0)),
            pl.BlockSpec((1, CLS), lambda i: (0, 0)),
        ],
        out_specs=pl.BlockSpec((n, CLS), lambda i: (0, 0)),
        compiler_params=pltpu.CompilerParams(
            dimension_semantics=("arbitrary",),
            vmem_limit_bytes=32 * 1024 * 1024),
    )(flat, wf1, bf1, wf2, bf2)
    return out


def reference_forward(x, params):
    """Pure-JAX reference mirroring the PyTorch forward (eval mode, ReLU)."""
    (w1, b1, w2, b2, wf1, bf1, wf2, bf2) = params
    n = x.shape[0]
    k1 = jnp.transpose(w1, (2, 0, 1))[:, None, :, :]            # (32,1,3,3) OIHW
    y = jax.lax.conv_general_dilated(x, k1, (1, 1), 'VALID',
                                     dimension_numbers=('NCHW', 'OIHW', 'NCHW'))
    y = jnp.maximum(y + b1.reshape(1, C1, 1, 1), 0.0)            # (N,32,26,26)
    k2 = jnp.transpose(w2, (3, 2, 0, 1))                         # (64,32,3,3)
    y = jax.lax.conv_general_dilated(y, k2, (1, 1), 'VALID',
                                     dimension_numbers=('NCHW', 'OIHW', 'NCHW'))
    y = y + b2.reshape(1, C2, 1, 1)                              # (N,64,24,24)
    y = y.reshape(n, C2, HP, 2, WP, 2).max(axis=(3, 5))          # 2x2 max pool
    y = jnp.transpose(y, (0, 2, 3, 1)).reshape(n, FLAT)          # (h,w,c) flatten
    h = jnp.maximum(y @ wf1 + bf1, 0.0)
    z = h @ wf2 + bf2
    return jax.nn.log_softmax(z, axis=1)


if __name__ == "__main__":
    key = jax.random.PRNGKey(0)
    ks = jax.random.split(key, 9)
    x = jax.random.normal(ks[0], (N, 1, H, W), jnp.float32)

    # Deterministic synthetic parameters (shapes follow the module's __init__).
    w1 = 0.10 * jax.random.normal(ks[1], (3, 3, C1), jnp.float32)      # conv1 (kh,kw,cout), cin=1
    b1 = 0.10 * jax.random.normal(ks[2], (1, C1), jnp.float32)
    w2 = 0.05 * jax.random.normal(ks[3], (3, 3, C1, C2), jnp.float32)  # conv2 (kh,kw,cin,cout)
    b2 = 0.05 * jax.random.normal(ks[4], (1, C2), jnp.float32)
    wf1 = 0.02 * jax.random.normal(ks[5], (FLAT, HID), jnp.float32)    # fc1 (in,out)
    bf1 = 0.02 * jax.random.normal(ks[6], (1, HID), jnp.float32)
    wf2 = 0.05 * jax.random.normal(ks[7], (HID, CLS), jnp.float32)     # fc2 (in,out)
    bf2 = 0.05 * jax.random.normal(ks[8], (1, CLS), jnp.float32)
    params = (w1, b1, w2, b2, wf1, bf1, wf2, bf2)

    out = jax.block_until_ready(net_forward(x, params))
    ref = reference_forward(x, params)

    assert out.shape == (N, CLS)
    assert bool(jnp.allclose(jnp.exp(out).sum(axis=1), 1.0, atol=1e-3)), "log_softmax rows must normalize"
    assert bool(jnp.allclose(out, ref, atol=2e-3, rtol=2e-3)), "mismatch vs pure-JAX reference"
    print("KERNEL_OK")
</pallas_src>

<mosaic_0001>
module attributes {stable_mosaic.version = 11 : i64} {
  func.func @conv_pool_kernel(%arg0: i32, %arg1: memref<4x14x18x1xf32, #tpu.memory_space<vmem>>, %arg2: memref<3x3x32xf32, #tpu.memory_space<vmem>>, %arg3: memref<1x32xf32, #tpu.memory_space<vmem>>, %arg4: memref<3x3x32x64xf32, #tpu.memory_space<vmem>>, %arg5: memref<1x64xf32, #tpu.memory_space<vmem>>, %arg6: memref<1x192x64xf32, #tpu.memory_space<vmem>>) attributes {dimension_semantics = [#tpu.dimension_semantics<parallel>], iteration_bounds = array<i64: 2>, scalar_prefetch = 0 : i64, scratch_operands = 0 : i64, tpu.core_type = #tpu.core_type<tc>, window_params = [{transform_indices = @transform_0, window_bounds = array<i64: 4, 14, 18, 1>}, {pipeline_mode = #tpu.pipeline_mode<synchronous>, transform_indices = @transform_1, window_bounds = array<i64: 3, 3, 32>}, {pipeline_mode = #tpu.pipeline_mode<synchronous>, transform_indices = @transform_2, window_bounds = array<i64: 1, 32>}, {pipeline_mode = #tpu.pipeline_mode<synchronous>, transform_indices = @transform_3, window_bounds = array<i64: 3, 3, 32, 64>}, {pipeline_mode = #tpu.pipeline_mode<synchronous>, transform_indices = @transform_4, window_bounds = array<i64: 1, 64>}, {transform_indices = @transform_5, window_bounds = array<i64: 1, 192, 64>}]} {
    %c0 = arith.constant 0 : index
    %c0_0 = arith.constant 0 : index
    %c0_1 = arith.constant 0 : index
    %c0_2 = arith.constant 0 : index
    %0 = vector.load %arg1[%c0, %c0_0, %c0_1, %c0_2] : memref<4x14x18x1xf32, #tpu.memory_space<vmem>>, vector<1x14x18x1xf32>
    %1 = vector.shape_cast %0 : vector<1x14x18x1xf32> to vector<14x18x1xf32>
    %c1 = arith.constant 1 : index
    %c0_3 = arith.constant 0 : index
    %c0_4 = arith.constant 0 : index
    %c0_5 = arith.constant 0 : index
    %2 = vector.load %arg1[%c1, %c0_3, %c0_4, %c0_5] : memref<4x14x18x1xf32, #tpu.memory_space<vmem>>, vector<1x14x18x1xf32>
    %3 = vector.shape_cast %2 : vector<1x14x18x1xf32> to vector<14x18x1xf32>
    %c2 = arith.constant 2 : index
    %c0_6 = arith.constant 0 : index
    %c0_7 = arith.constant 0 : index
    %c0_8 = arith.constant 0 : index
    %4 = vector.load %arg1[%c2, %c0_6, %c0_7, %c0_8] : memref<4x14x18x1xf32, #tpu.memory_space<vmem>>, vector<1x14x18x1xf32>
    %5 = vector.shape_cast %4 : vector<1x14x18x1xf32> to vector<14x18x1xf32>
    %c3 = arith.constant 3 : index
    %c0_9 = arith.constant 0 : index
    %c0_10 = arith.constant 0 : index
    %c0_11 = arith.constant 0 : index
    %6 = vector.load %arg1[%c3, %c0_9, %c0_10, %c0_11] : memref<4x14x18x1xf32, #tpu.memory_space<vmem>>, vector<1x14x18x1xf32>
    %7 = vector.shape_cast %6 : vector<1x14x18x1xf32> to vector<14x18x1xf32>
    %c0_12 = arith.constant 0 : index
    %c0_13 = arith.constant 0 : index
    %8 = vector.load %arg3[%c0_12, %c0_13] : memref<1x32xf32, #tpu.memory_space<vmem>>, vector<1x32xf32>
    %9 = vector.shape_cast %8 : vector<1x32xf32> to vector<32xf32>
    %cst = arith.constant 0.000000e+00 : f32
    %10 = vector.broadcast %cst : f32 to vector<13x17x32xf32>
    %11 = vector.extract_strided_slice %1 {offsets = [0, 0, 0], sizes = [13, 17, 1], strides = [1, 1, 1]} : vector<14x18x1xf32> to vector<13x17x1xf32>
    %c0_14 = arith.constant 0 : index
    %c0_15 = arith.constant 0 : index
    %c0_16 = arith.constant 0 : index
    %12 = vector.load %arg2[%c0_14, %c0_15, %c0_16] : memref<3x3x32xf32, #tpu.memory_space<vmem>>, vector<1x1x32xf32>
    %13 = vector.shape_cast %12 : vector<1x1x32xf32> to vector<32xf32>
    %14 = vector.shape_cast %13 : vector<32xf32> to vector<1x1x32xf32>
    %15 = vector.broadcast %11 : vector<13x17x1xf32> to vector<13x17x32xf32>
    %16 = vector.broadcast %14 : vector<1x1x32xf32> to vector<13x17x32xf32>
    %17 = arith.mulf %15, %16 : vector<13x17x32xf32>
    %18 = arith.addf %10, %17 : vector<13x17x32xf32>
    %19 = vector.extract_strided_slice %3 {offsets = [0, 0, 0], sizes = [13, 17, 1], strides = [1, 1, 1]} : vector<14x18x1xf32> to vector<13x17x1xf32>
    %c0_17 = arith.constant 0 : index
    %c1_18 = arith.constant 1 : index
    %c0_19 = arith.constant 0 : index
    %20 = vector.load %arg2[%c0_17, %c1_18, %c0_19] : memref<3x3x32xf32, #tpu.memory_space<vmem>>, vector<1x1x32xf32>
    %21 = vector.shape_cast %20 : vector<1x1x32xf32> to vector<32xf32>
    %22 = vector.shape_cast %21 : vector<32xf32> to vector<1x1x32xf32>
    %23 = vector.broadcast %19 : vector<13x17x1xf32> to vector<13x17x32xf32>
    %24 = vector.broadcast %22 : vector<1x1x32xf32> to vector<13x17x32xf32>
    %25 = arith.mulf %23, %24 : vector<13x17x32xf32>
    %26 = arith.addf %18, %25 : vector<13x17x32xf32>
    %27 = vector.extract_strided_slice %1 {offsets = [0, 1, 0], sizes = [13, 17, 1], strides = [1, 1, 1]} : vector<14x18x1xf32> to vector<13x17x1xf32>
    %c0_20 = arith.constant 0 : index
    %c2_21 = arith.constant 2 : index
    %c0_22 = arith.constant 0 : index
    %28 = vector.load %arg2[%c0_20, %c2_21, %c0_22] : memref<3x3x32xf32, #tpu.memory_space<vmem>>, vector<1x1x32xf32>
    %29 = vector.shape_cast %28 : vector<1x1x32xf32> to vector<32xf32>
    %30 = vector.shape_cast %29 : vector<32xf32> to vector<1x1x32xf32>
    %31 = vector.broadcast %27 : vector<13x17x1xf32> to vector<13x17x32xf32>
    %32 = vector.broadcast %30 : vector<1x1x32xf32> to vector<13x17x32xf32>
    %33 = arith.mulf %31, %32 : vector<13x17x32xf32>
    %34 = arith.addf %26, %33 : vector<13x17x32xf32>
    %35 = vector.extract_strided_slice %5 {offsets = [0, 0, 0], sizes = [13, 17, 1], strides = [1, 1, 1]} : vector<14x18x1xf32> to vector<13x17x1xf32>
    %c1_23 = arith.constant 1 : index
    %c0_24 = arith.constant 0 : index
    %c0_25 = arith.constant 0 : index
    %36 = vector.load %arg2[%c1_23, %c0_24, %c0_25] : memref<3x3x32xf32, #tpu.memory_space<vmem>>, vector<1x1x32xf32>
    %37 = vector.shape_cast %36 : vector<1x1x32xf32> to vector<32xf32>
    %38 = vector.shape_cast %37 : vector<32xf32> to vector<1x1x32xf32>
    %39 = vector.broadcast %35 : vector<13x17x1xf32> to vector<13x17x32xf32>
    %40 = vector.broadcast %38 : vector<1x1x32xf32> to vector<13x17x32xf32>
    %41 = arith.mulf %39, %40 : vector<13x17x32xf32>
    %42 = arith.addf %34, %41 : vector<13x17x32xf32>
    %43 = vector.extract_strided_slice %7 {offsets = [0, 0, 0], sizes = [13, 17, 1], strides = [1, 1, 1]} : vector<14x18x1xf32> to vector<13x17x1xf32>
    %c1_26 = arith.constant 1 : index
    %c1_27 = arith.constant 1 : index
    %c0_28 = arith.constant 0 : index
    %44 = vector.load %arg2[%c1_26, %c1_27, %c0_28] : memref<3x3x32xf32, #tpu.memory_space<vmem>>, vector<1x1x32xf32>
    %45 = vector.shape_cast %44 : vector<1x1x32xf32> to vector<32xf32>
    %46 = vector.shape_cast %45 : vector<32xf32> to vector<1x1x32xf32>
    %47 = vector.broadcast %43 : vector<13x17x1xf32> to vector<13x17x32xf32>
    %48 = vector.broadcast %46 : vector<1x1x32xf32> to vector<13x17x32xf32>
    %49 = arith.mulf %47, %48 : vector<13x17x32xf32>
    %50 = arith.addf %42, %49 : vector<13x17x32xf32>
    %51 = vector.extract_strided_slice %5 {offsets = [0, 1, 0], sizes = [13, 17, 1], strides = [1, 1, 1]} : vector<14x18x1xf32> to vector<13x17x1xf32>
    %c1_29 = arith.constant 1 : index
    %c2_30 = arith.constant 2 : index
    %c0_31 = arith.constant 0 : index
    %52 = vector.load %arg2[%c1_29, %c2_30, %c0_31] : memref<3x3x32xf32, #tpu.memory_space<vmem>>, vector<1x1x32xf32>
    %53 = vector.shape_cast %52 : vector<1x1x32xf32> to vector<32xf32>
    %54 = vector.shape_cast %53 : vector<32xf32> to vector<1x1x32xf32>
    %55 = vector.broadcast %51 : vector<13x17x1xf32> to vector<13x17x32xf32>
    %56 = vector.broadcast %54 : vector<1x1x32xf32> to vector<13x17x32xf32>
    %57 = arith.mulf %55, %56 : vector<13x17x32xf32>
    %58 = arith.addf %50, %57 : vector<13x17x32xf32>
    %59 = vector.extract_strided_slice %1 {offsets = [1, 0, 0], sizes = [13, 17, 1], strides = [1, 1, 1]} : vector<14x18x1xf32> to vector<13x17x1xf32>
    %c2_32 = arith.constant 2 : index
    %c0_33 = arith.constant 0 : index
    %c0_34 = arith.constant 0 : index
    %60 = vector.load %arg2[%c2_32, %c0_33, %c0_34] : memref<3x3x32xf32, #tpu.memory_space<vmem>>, vector<1x1x32xf32>
    %61 = vector.shape_cast %60 : vector<1x1x32xf32> to vector<32xf32>
    %62 = vector.shape_cast %61 : vector<32xf32> to vector<1x1x32xf32>
    %63 = vector.broadcast %59 : vector<13x17x1xf32> to vector<13x17x32xf32>
    %64 = vector.broadcast %62 : vector<1x1x32xf32> to vector<13x17x32xf32>
    %65 = arith.mulf %63, %64 : vector<13x17x32xf32>
    %66 = arith.addf %58, %65 : vector<13x17x32xf32>
    %67 = vector.extract_strided_slice %3 {offsets = [1, 0, 0], sizes = [13, 17, 1], strides = [1, 1, 1]} : vector<14x18x1xf32> to vector<13x17x1xf32>
    %c2_35 = arith.constant 2 : index
    %c1_36 = arith.constant 1 : index
    %c0_37 = arith.constant 0 : index
    %68 = vector.load %arg2[%c2_35, %c1_36, %c0_37] : memref<3x3x32xf32, #tpu.memory_space<vmem>>, vector<1x1x32xf32>
    %69 = vector.shape_cast %68 : vector<1x1x32xf32> to vector<32xf32>
    %70 = vector.shape_cast %69 : vector<32xf32> to vector<1x1x32xf32>
    %71 = vector.broadcast %67 : vector<13x17x1xf32> to vector<13x17x32xf32>
    %72 = vector.broadcast %70 : vector<1x1x32xf32> to vector<13x17x32xf32>
    %73 = arith.mulf %71, %72 : vector<13x17x32xf32>
    %74 = arith.addf %66, %73 : vector<13x17x32xf32>
    %75 = vector.extract_strided_slice %1 {offsets = [1, 1, 0], sizes = [13, 17, 1], strides = [1, 1, 1]} : vector<14x18x1xf32> to vector<13x17x1xf32>
    %c2_38 = arith.constant 2 : index
    %c2_39 = arith.constant 2 : index
    %c0_40 = arith.constant 0 : index
    %76 = vector.load %arg2[%c2_38, %c2_39, %c0_40] : memref<3x3x32xf32, #tpu.memory_space<vmem>>, vector<1x1x32xf32>
    %77 = vector.shape_cast %76 : vector<1x1x32xf32> to vector<32xf32>
    %78 = vector.shape_cast %77 : vector<32xf32> to vector<1x1x32xf32>
    %79 = vector.broadcast %75 : vector<13x17x1xf32> to vector<13x17x32xf32>
    %80 = vector.broadcast %78 : vector<1x1x32xf32> to vector<13x17x32xf32>
    %81 = arith.mulf %79, %80 : vector<13x17x32xf32>
    %82 = arith.addf %74, %81 : vector<13x17x32xf32>
    %83 = vector.shape_cast %9 : vector<32xf32> to vector<1x1x32xf32>
    %84 = vector.broadcast %83 : vector<1x1x32xf32> to vector<13x17x32xf32>
    %85 = arith.addf %82, %84 : vector<13x17x32xf32>
    %cst_41 = arith.constant 0.000000e+00 : f32
    %86 = vector.broadcast %cst_41 : f32 to vector<13x17x32xf32>
    %87 = arith.maximumf %85, %86 : vector<13x17x32xf32>
    %cst_42 = arith.constant 0.000000e+00 : f32
    %88 = vector.broadcast %cst_42 : f32 to vector<13x17x32xf32>
    %89 = vector.extract_strided_slice %3 {offsets = [0, 0, 0], sizes = [13, 17, 1], strides = [1, 1, 1]} : vector<14x18x1xf32> to vector<13x17x1xf32>
    %c0_43 = arith.constant 0 : index
    %c0_44 = arith.constant 0 : index
    %c0_45 = arith.constant 0 : index
    %90 = vector.load %arg2[%c0_43, %c0_44, %c0_45] : memref<3x3x32xf32, #tpu.memory_space<vmem>>, vector<1x1x32xf32>
    %91 = vector.shape_cast %90 : vector<1x1x32xf32> to vector<32xf32>
    %92 = vector.shape_cast %91 : vector<32xf32> to vector<1x1x32xf32>
    %93 = vector.broadcast %89 : vector<13x17x1xf32> to vector<13x17x32xf32>
    %94 = vector.broadcast %92 : vector<1x1x32xf32> to vector<13x17x32xf32>
    %95 = arith.mulf %93, %94 : vector<13x17x32xf32>
    %96 = arith.addf %88, %95 : vector<13x17x32xf32>
    %97 = vector.extract_strided_slice %1 {offsets = [0, 1, 0], sizes = [13, 17, 1], strides = [1, 1, 1]} : vector<14x18x1xf32> to vector<13x17x1xf32>
    %c0_46 = arith.constant 0 : index
    %c1_47 = arith.constant 1 : index
    %c0_48 = arith.constant 0 : index
    %98 = vector.load %arg2[%c0_46, %c1_47, %c0_48] : memref<3x3x32xf32, #tpu.memory_space<vmem>>, vector<1x1x32xf32>
    %99 = vector.shape_cast %98 : vector<1x1x32xf32> to vector<32xf32>
    %100 = vector.shape_cast %99 : vector<32xf32> to vector<1x1x32xf32>
    %101 = vector.broadcast %97 : vector<13x17x1xf32> to vector<13x17x32xf32>
    %102 = vector.broadcast %100 : vector<1x1x32xf32> to vector<13x17x32xf32>
    %103 = arith.mulf %101, %102 : vector<13x17x32xf32>
    %104 = arith.addf %96, %103 : vector<13x17x32xf32>
    %105 = vector.extract_strided_slice %3 {offsets = [0, 1, 0], sizes = [13, 17, 1], strides = [1, 1, 1]} : vector<14x18x1xf32> to vector<13x17x1xf32>
    %c0_49 = arith.constant 0 : index
    %c2_50 = arith.constant 2 : index
    %c0_51 = arith.constant 0 : index
    %106 = vector.load %arg2[%c0_49, %c2_50, %c0_51] : memref<3x3x32xf32, #tpu.memory_space<vmem>>, vector<1x1x32xf32>
    %107 = vector.shape_cast %106 : vector<1x1x32xf32> to vector<32xf32>
    %108 = vector.shape_cast %107 : vector<32xf32> to vector<1x1x32xf32>
    %109 = vector.broadcast %105 : vector<13x17x1xf32> to vector<13x17x32xf32>
    %110 = vector.broadcast %108 : vector<1x1x32xf32> to vector<13x17x32xf32>
    %111 = arith.mulf %109, %110 : vector<13x17x32xf32>
    %112 = arith.addf %104, %111 : vector<13x17x32xf32>
    %113 = vector.extract_strided_slice %7 {offsets = [0, 0, 0], sizes = [13, 17, 1], strides = [1, 1, 1]} : vector<14x18x1xf32> to vector<13x17x1xf32>
    %c1_52 = arith.constant 1 : index
    %c0_53 = arith.constant 0 : index
    %c0_54 = arith.constant 0 : index
    %114 = vector.load %arg2[%c1_52, %c0_53, %c0_54] : memref<3x3x32xf32, #tpu.memory_space<vmem>>, vector<1x1x32xf32>
    %115 = vector.shape_cast %114 : vector<1x1x32xf32> to vector<32xf32>
    %116 = vector.shape_cast %115 : vector<32xf32> to vector<1x1x32xf32>
    %117 = vector.broadcast %113 : vector<13x17x1xf32> to vector<13x17x32xf32>
    %118 = vector.broadcast %116 : vector<1x1x32xf32> to vector<13x17x32xf32>
    %119 = arith.mulf %117, %118 : vector<13x17x32xf32>
    %120 = arith.addf %112, %119 : vector<13x17x32xf32>
    %121 = vector.extract_strided_slice %5 {offsets = [0, 1, 0], sizes = [13, 17, 1], strides = [1, 1, 1]} : vector<14x18x1xf32> to vector<13x17x1xf32>
    %c1_55 = arith.constant 1 : index
    %c1_56 = arith.constant 1 : index
    %c0_57 = arith.constant 0 : index
    %122 = vector.load %arg2[%c1_55, %c1_56, %c0_57] : memref<3x3x32xf32, #tpu.memory_space<vmem>>, vector<1x1x32xf32>
    %123 = vector.shape_cast %122 : vector<1x1x32xf32> to vector<32xf32>
    %124 = vector.shape_cast %123 : vector<32xf32> to vector<1x1x32xf32>
    %125 = vector.broadcast %121 : vector<13x17x1xf32> to vector<13x17x32xf32>
    %126 = vector.broadcast %124 : vector<1x1x32xf32> to vector<13x17x32xf32>
    %127 = arith.mulf %125, %126 : vector<13x17x32xf32>
    %128 = arith.addf %120, %127 : vector<13x17x32xf32>
    %129 = vector.extract_strided_slice %7 {offsets = [0, 1, 0], sizes = [13, 17, 1], strides = [1, 1, 1]} : vector<14x18x1xf32> to vector<13x17x1xf32>
    %c1_58 = arith.constant 1 : index
    %c2_59 = arith.constant 2 : index
    %c0_60 = arith.constant 0 : index
    %130 = vector.load %arg2[%c1_58, %c2_59, %c0_60] : memref<3x3x32xf32, #tpu.memory_space<vmem>>, vector<1x1x32xf32>
    %131 = vector.shape_cast %130 : vector<1x1x32xf32> to vector<32xf32>
    %132 = vector.shape_cast %131 : vector<32xf32> to vector<1x1x32xf32>
    %133 = vector.broadcast %129 : vector<13x17x1xf32> to vector<13x17x32xf32>
    %134 = vector.broadcast %132 : vector<1x1x32xf32> to vector<13x17x32xf32>
    %135 = arith.mulf %133, %134 : vector<13x17x32xf32>
    %136 = arith.addf %128, %135 : vector<13x17x32xf32>
    %137 = vector.extract_strided_slice %3 {offsets = [1, 0, 0], sizes = [13, 17, 1], strides = [1, 1, 1]} : vector<14x18x1xf32> to vector<13x17x1xf32>
    %c2_61 = arith.constant 2 : index
    %c0_62 = arith.constant 0 : index
    %c0_63 = arith.constant 0 : index
    %138 = vector.load %arg2[%c2_61, %c0_62, %c0_63] : memref<3x3x32xf32, #tpu.memory_space<vmem>>, vector<1x1x32xf32>
    %139 = vector.shape_cast %138 : vector<1x1x32xf32> to vector<32xf32>
    %140 = vector.shape_cast %139 : vector<32xf32> to vector<1x1x32xf32>
    %141 = vector.broadcast %137 : vector<13x17x1xf32> to vector<13x17x32xf32>
    %142 = vector.broadcast %140 : vector<1x1x32xf32> to vector<13x17x32xf32>
    %143 = arith.mulf %141, %142 : vector<13x17x32xf32>
    %144 = arith.addf %136, %143 : vector<13x17x32xf32>
    %145 = vector.extract_strided_slice %1 {offsets = [1, 1, 0], sizes = [13, 17, 1], strides = [1, 1, 1]} : vector<14x18x1xf32> to vector<13x17x1xf32>
    %c2_64 = arith.constant 2 : index
    %c1_65 = arith.constant 1 : index
    %c0_66 = arith.constant 0 : index
    %146 = vector.load %arg2[%c2_64, %c1_65, %c0_66] : memref<3x3x32xf32, #tpu.memory_space<vmem>>, vector<1x1x32xf32>
    %147 = vector.shape_cast %146 : vector<1x1x32xf32> to vector<32xf32>
    %148 = vector.shape_cast %147 : vector<32xf32> to vector<1x1x32xf32>
    %149 = vector.broadcast %145 : vector<13x17x1xf32> to vector<13x17x32xf32>
    %150 = vector.broadcast %148 : vector<1x1x32xf32> to vector<13x17x32xf32>
    %151 = arith.mulf %149, %150 : vector<13x17x32xf32>
    %152 = arith.addf %144, %151 : vector<13x17x32xf32>
    %153 = vector.extract_strided_slice %3 {offsets = [1, 1, 0], sizes = [13, 17, 1], strides = [1, 1, 1]} : vector<14x18x1xf32> to vector<13x17x1xf32>
    %c2_67 = arith.constant 2 : index
    %c2_68 = arith.constant 2 : index
    %c0_69 = arith.constant 0 : index
    %154 = vector.load %arg2[%c2_67, %c2_68, %c0_69] : memref<3x3x32xf32, #tpu.memory_space<vmem>>, vector<1x1x32xf32>
    %155 = vector.shape_cast %154 : vector<1x1x32xf32> to vector<32xf32>
    %156 = vector.shape_cast %155 : vector<32xf32> to vector<1x1x32xf32>
    %157 = vector.broadcast %153 : vector<13x17x1xf32> to vector<13x17x32xf32>
    %158 = vector.broadcast %156 : vector<1x1x32xf32> to vector<13x17x32xf32>
    %159 = arith.mulf %157, %158 : vector<13x17x32xf32>
    %160 = arith.addf %152, %159 : vector<13x17x32xf32>
    %161 = vector.shape_cast %9 : vector<32xf32> to vector<1x1x32xf32>
    %162 = vector.broadcast %161 : vector<1x1x32xf32> to vector<13x17x32xf32>
    %163 = arith.addf %160, %162 : vector<13x17x32xf32>
    %cst_70 = arith.constant 0.000000e+00 : f32
    %164 = vector.broadcast %cst_70 : f32 to vector<13x17x32xf32>
    %165 = arith.maximumf %163, %164 : vector<13x17x32xf32>
    %cst_71 = arith.constant 0.000000e+00 : f32
    %166 = vector.broadcast %cst_71 : f32 to vector<13x17x32xf32>
    %167 = vector.extract_strided_slice %5 {offsets = [0, 0, 0], sizes = [13, 17, 1], strides = [1, 1, 1]} : vector<14x18x1xf32> to vector<13x17x1xf32>
    %c0_72 = arith.constant 0 : index
    %c0_73 = arith.constant 0 : index
    %c0_74 = arith.constant 0 : index
    %168 = vector.load %arg2[%c0_72, %c0_73, %c0_74] : memref<3x3x32xf32, #tpu.memory_space<vmem>>, vector<1x1x32xf32>
    %169 = vector.shape_cast %168 : vector<1x1x32xf32> to vector<32xf32>
    %170 = vector.shape_cast %169 : vector<32xf32> to vector<1x1x32xf32>
    %171 = vector.broadcast %167 : vector<13x17x1xf32> to vector<13x17x32xf32>
    %172 = vector.broadcast %170 : vector<1x1x32xf32> to vector<13x17x32xf32>
    %173 = arith.mulf %171, %172 : vector<13x17x32xf32>
    %174 = arith.addf %166, %173 : vector<13x17x32xf32>
    %175 = vector.extract_strided_slice %7 {offsets = [0, 0, 0], sizes = [13, 17, 1], strides = [1, 1, 1]} : vector<14x18x1xf32> to vector<13x17x1xf32>
    %c0_75 = arith.constant 0 : index
    %c1_76 = arith.constant 1 : index
    %c0_77 = arith.constant 0 : index
    %176 = vector.load %arg2[%c0_75, %c1_76, %c0_77] : memref<3x3x32xf32, #tpu.memory_space<vmem>>, vector<1x1x32xf32>
    %177 = vector.shape_cast %176 : vector<1x1x32xf32> to vector<32xf32>
    %178 = vector.shape_cast %177 : vector<32xf32> to vector<1x1x32xf32>
    %179 = vector.broadcast %175 : vector<13x17x1xf32> to vector<13x17x32xf32>
    %180 = vector.broadcast %178 : vector<1x1x32xf32> to vector<13x17x32xf32>
    %181 = arith.mulf %179, %180 : vector<13x17x32xf32>
    %182 = arith.addf %174, %181 : vector<13x17x32xf32>
    %183 = vector.extract_strided_slice %5 {offsets = [0, 1, 0], sizes = [13, 17, 1], strides = [1, 1, 1]} : vector<14x18x1xf32> to vector<13x17x1xf32>
    %c0_78 = arith.constant 0 : index
    %c2_79 = arith.constant 2 : index
    %c0_80 = arith.constant 0 : index
    %184 = vector.load %arg2[%c0_78, %c2_79, %c0_80] : memref<3x3x32xf32, #tpu.memory_space<vmem>>, vector<1x1x32xf32>
    %185 = vector.shape_cast %184 : vector<1x1x32xf32> to vector<32xf32>
    %186 = vector.shape_cast %185 : vector<32xf32> to vector<1x1x32xf32>
    %187 = vector.broadcast %183 : vector<13x17x1xf32> to vector<13x17x32xf32>
    %188 = vector.broadcast %186 : vector<1x1x32xf32> to vector<13x17x32xf32>
    %189 = arith.mulf %187, %188 : vector<13x17x32xf32>
    %190 = arith.addf %182, %189 : vector<13x17x32xf32>
    %191 = vector.extract_strided_slice %1 {offsets = [1, 0, 0], sizes = [13, 17, 1], strides = [1, 1, 1]} : vector<14x18x1xf32> to vector<13x17x1xf32>
    %c1_81 = arith.constant 1 : index
    %c0_82 = arith.constant 0 : index
    %c0_83 = arith.constant 0 : index
    %192 = vector.load %arg2[%c1_81, %c0_82, %c0_83] : memref<3x3x32xf32, #tpu.memory_space<vmem>>, vector<1x1x32xf32>
    %193 = vector.shape_cast %192 : vector<1x1x32xf32> to vector<32xf32>
    %194 = vector.shape_cast %193 : vector<32xf32> to vector<1x1x32xf32>
    %195 = vector.broadcast %191 : vector<13x17x1xf32> to vector<13x17x32xf32>
    %196 = vector.broadcast %194 : vector<1x1x32xf32> to vector<13x17x32xf32>
    %197 = arith.mulf %195, %196 : vector<13x17x32xf32>
    %198 = arith.addf %190, %197 : vector<13x17x32xf32>
    %199 = vector.extract_strided_slice %3 {offsets = [1, 0, 0], sizes = [13, 17, 1], strides = [1, 1, 1]} : vector<14x18x1xf32> to vector<13x17x1xf32>
    %c1_84 = arith.constant 1 : index
    %c1_85 = arith.constant 1 : index
    %c0_86 = arith.constant 0 : index
    %200 = vector.load %arg2[%c1_84, %c1_85, %c0_86] : memref<3x3x32xf32, #tpu.memory_space<vmem>>, vector<1x1x32xf32>
    %201 = vector.shape_cast %200 : vector<1x1x32xf32> to vector<32xf32>
    %202 = vector.shape_cast %201 : vector<32xf32> to vector<1x1x32xf32>
    %203 = vector.broadcast %199 : vector<13x17x1xf32> to vector<13x17x32xf32>
    %204 = vector.broadcast %202 : vector<1x1x32xf32> to vector<13x17x32xf32>
    %205 = arith.mulf %203, %204 : vector<13x17x32xf32>
    %206 = arith.addf %198, %205 : vector<13x17x32xf32>
    %207 = vector.extract_strided_slice %1 {offsets = [1, 1, 0], sizes = [13, 17, 1], strides = [1, 1, 1]} : vector<14x18x1xf32> to vector<13x17x1xf32>
    %c1_87 = arith.constant 1 : index
    %c2_88 = arith.constant 2 : index
    %c0_89 = arith.constant 0 : index
    %208 = vector.load %arg2[%c1_87, %c2_88, %c0_89] : memref<3x3x32xf32, #tpu.memory_space<vmem>>, vector<1x1x32xf32>
    %209 = vector.shape_cast %208 : vector<1x1x32xf32> to vector<32xf32>
    %210 = vector.shape_cast %209 : vector<32xf32> to vector<1x1x32xf32>
    %211 = vector.broadcast %207 : vector<13x17x1xf32> to vector<13x17x32xf32>
    %212 = vector.broadcast %210 : vector<1x1x32xf32> to vector<13x17x32xf32>
    %213 = arith.mulf %211, %212 : vector<13x17x32xf32>
    %214 = arith.addf %206, %213 : vector<13x17x32xf32>
    %215 = vector.extract_strided_slice %5 {offsets = [1, 0, 0], sizes = [13, 17, 1], strides = [1, 1, 1]} : vector<14x18x1xf32> to vector<13x17x1xf32>
    %c2_90 = arith.constant 2 : index
    %c0_91 = arith.constant 0 : index
    %c0_92 = arith.constant 0 : index
    %216 = vector.load %arg2[%c2_90, %c0_91, %c0_92] : memref<3x3x32xf32, #tpu.memory_space<vmem>>, vector<1x1x32xf32>
    %217 = vector.shape_cast %216 : vector<1x1x32xf32> to vector<32xf32>
    %218 = vector.shape_cast %217 : vector<32xf32> to vector<1x1x32xf32>
    %219 = vector.broadcast %215 : vector<13x17x1xf32> to vector<13x17x32xf32>
    %220 = vector.broadcast %218 : vector<1x1x32xf32> to vector<13x17x32xf32>
    %221 = arith.mulf %219, %220 : vector<13x17x32xf32>
    %222 = arith.addf %214, %221 : vector<13x17x32xf32>
    %223 = vector.extract_strided_slice %7 {offsets = [1, 0, 0], sizes = [13, 17, 1], strides = [1, 1, 1]} : vector<14x18x1xf32> to vector<13x17x1xf32>
    %c2_93 = arith.constant 2 : index
    %c1_94 = arith.constant 1 : index
    %c0_95 = arith.constant 0 : index
    %224 = vector.load %arg2[%c2_93, %c1_94, %c0_95] : memref<3x3x32xf32, #tpu.memory_space<vmem>>, vector<1x1x32xf32>
    %225 = vector.shape_cast %224 : vector<1x1x32xf32> to vector<32xf32>
    %226 = vector.shape_cast %225 : vector<32xf32> to vector<1x1x32xf32>
    %227 = vector.broadcast %223 : vector<13x17x1xf32> to vector<13x17x32xf32>
    %228 = vector.broadcast %226 : vector<1x1x32xf32> to vector<13x17x32xf32>
    %229 = arith.mulf %227, %228 : vector<13x17x32xf32>
    %230 = arith.addf %222, %229 : vector<13x17x32xf32>
    %231 = vector.extract_strided_slice %5 {offsets = [1, 1, 0], sizes = [13, 17, 1], strides = [1, 1, 1]} : vector<14x18x1xf32> to vector<13x17x1xf32>
    %c2_96 = arith.constant 2 : index
    %c2_97 = arith.constant 2 : index
    %c0_98 = arith.constant 0 : index
    %232 = vector.load %arg2[%c2_96, %c2_97, %c0_98] : memref<3x3x32xf32, #tpu.memory_space<vmem>>, vector<1x1x32xf32>
    %233 = vector.shape_cast %232 : vector<1x1x32xf32> to vector<32xf32>
    %234 = vector.shape_cast %233 : vector<32xf32> to vector<1x1x32xf32>
    %235 = vector.broadcast %231 : vector<13x17x1xf32> to vector<13x17x32xf32>
    %236 = vector.broadcast %234 : vector<1x1x32xf32> to vector<13x17x32xf32>
    %237 = arith.mulf %235, %236 : vector<13x17x32xf32>
    %238 = arith.addf %230, %237 : vector<13x17x32xf32>
    %239 = vector.shape_cast %9 : vector<32xf32> to vector<1x1x32xf32>
    %240 = vector.broadcast %239 : vector<1x1x32xf32> to vector<13x17x32xf32>
    %241 = arith.addf %238, %240 : vector<13x17x32xf32>
    %cst_99 = arith.constant 0.000000e+00 : f32
    %242 = vector.broadcast %cst_99 : f32 to vector<13x17x32xf32>
    %243 = arith.maximumf %241, %242 : vector<13x17x32xf32>
    %cst_100 = arith.constant 0.000000e+00 : f32
    %244 = vector.broadcast %cst_100 : f32 to vector<13x17x32xf32>
    %245 = vector.extract_strided_slice %7 {offsets = [0, 0, 0], sizes = [13, 17, 1], strides = [1, 1, 1]} : vector<14x18x1xf32> to vector<13x17x1xf32>
    %c0_101 = arith.constant 0 : index
    %c0_102 = arith.constant 0 : index
    %c0_103 = arith.constant 0 : index
    %246 = vector.load %arg2[%c0_101, %c0_102, %c0_103] : memref<3x3x32xf32, #tpu.memory_space<vmem>>, vector<1x1x32xf32>
    %247 = vector.shape_cast %246 : vector<1x1x32xf32> to vector<32xf32>
    %248 = vector.shape_cast %247 : vector<32xf32> to vector<1x1x32xf32>
    %249 = vector.broadcast %245 : vector<13x17x1xf32> to vector<13x17x32xf32>
    %250 = vector.broadcast %248 : vector<1x1x32xf32> to vector<13x17x32xf32>
    %251 = arith.mulf %249, %250 : vector<13x17x32xf32>
    %252 = arith.addf %244, %251 : vector<13x17x32xf32>
    %253 = vector.extract_strided_slice %5 {offsets = [0, 1, 0], sizes = [13, 17, 1], strides = [1, 1, 1]} : vector<14x18x1xf32> to vector<13x17x1xf32>
    %c0_104 = arith.constant 0 : index
    %c1_105 = arith.constant 1 : index
    %c0_106 = arith.constant 0 : index
    %254 = vector.load %arg2[%c0_104, %c1_105, %c0_106] : memref<3x3x32xf32, #tpu.memory_space<vmem>>, vector<1x1x32xf32>
    %255 = vector.shape_cast %254 : vector<1x1x32xf32> to vector<32xf32>
    %256 = vector.shape_cast %255 : vector<32xf32> to vector<1x1x32xf32>
    %257 = vector.broadcast %253 : vector<13x17x1xf32> to vector<13x17x32xf32>
    %258 = vector.broadcast %256 : vector<1x1x32xf32> to vector<13x17x32xf32>
    %259 = arith.mulf %257, %258 : vector<13x17x32xf32>
    %260 = arith.addf %252, %259 : vector<13x17x32xf32>
    %261 = vector.extract_strided_slice %7 {offsets = [0, 1, 0], sizes = [13, 17, 1], strides = [1, 1, 1]} : vector<14x18x1xf32> to vector<13x17x1xf32>
    %c0_107 = arith.constant 0 : index
    %c2_108 = arith.constant 2 : index
    %c0_109 = arith.constant 0 : index
    %262 = vector.load %arg2[%c0_107, %c2_108, %c0_109] : memref<3x3x32xf32, #tpu.memory_space<vmem>>, vector<1x1x32xf32>
    %263 = vector.shape_cast %262 : vector<1x1x32xf32> to vector<32xf32>
    %264 = vector.shape_cast %263 : vector<32xf32> to vector<1x1x32xf32>
    %265 = vector.broadcast %261 : vector<13x17x1xf32> to vector<13x17x32xf32>
    %266 = vector.broadcast %264 : vector<1x1x32xf32> to vector<13x17x32xf32>
    %267 = arith.mulf %265, %266 : vector<13x17x32xf32>
    %268 = arith.addf %260, %267 : vector<13x17x32xf32>
    %269 = vector.extract_strided_slice %3 {offsets = [1, 0, 0], sizes = [13, 17, 1], strides = [1, 1, 1]} : vector<14x18x1xf32> to vector<13x17x1xf32>
    %c1_110 = arith.constant 1 : index
    %c0_111 = arith.constant 0 : index
    %c0_112 = arith.constant 0 : index
    %270 = vector.load %arg2[%c1_110, %c0_111, %c0_112] : memref<3x3x32xf32, #tpu.memory_space<vmem>>, vector<1x1x32xf32>
    %271 = vector.shape_cast %270 : vector<1x1x32xf32> to vector<32xf32>
    %272 = vector.shape_cast %271 : vector<32xf32> to vector<1x1x32xf32>
    %273 = vector.broadcast %269 : vector<13x17x1xf32> to vector<13x17x32xf32>
    %274 = vector.broadcast %272 : vector<1x1x32xf32> to vector<13x17x32xf32>
    %275 = arith.mulf %273, %274 : vector<13x17x32xf32>
    %276 = arith.addf %268, %275 : vector<13x17x32xf32>
    %277 = vector.extract_strided_slice %1 {offsets = [1, 1, 0], sizes = [13, 17, 1], strides = [1, 1, 1]} : vector<14x18x1xf32> to vector<13x17x1xf32>
    %c1_113 = arith.constant 1 : index
    %c1_114 = arith.constant 1 : index
    %c0_115 = arith.constant 0 : index
    %278 = vector.load %arg2[%c1_113, %c1_114, %c0_115] : memref<3x3x32xf32, #tpu.memory_space<vmem>>, vector<1x1x32xf32>
    %279 = vector.shape_cast %278 : vector<1x1x32xf32> to vector<32xf32>
    %280 = vector.shape_cast %279 : vector<32xf32> to vector<1x1x32xf32>
    %281 = vector.broadcast %277 : vector<13x17x1xf32> to vector<13x17x32xf32>
    %282 = vector.broadcast %280 : vector<1x1x32xf32> to vector<13x17x32xf32>
    %283 = arith.mulf %281, %282 : vector<13x17x32xf32>
    %284 = arith.addf %276, %283 : vector<13x17x32xf32>
    %285 = vector.extract_strided_slice %3 {offsets = [1, 1, 0], sizes = [13, 17, 1], strides = [1, 1, 1]} : vector<14x18x1xf32> to vector<13x17x1xf32>
    %c1_116 = arith.constant 1 : index
    %c2_117 = arith.constant 2 : index
    %c0_118 = arith.constant 0 : index
    %286 = vector.load %arg2[%c1_116, %c2_117, %c0_118] : memref<3x3x32xf32, #tpu.memory_space<vmem>>, vector<1x1x32xf32>
    %287 = vector.shape_cast %286 : vector<1x1x32xf32> to vector<32xf32>
    %288 = vector.shape_cast %287 : vector<32xf32> to vector<1x1x32xf32>
    %289 = vector.broadcast %285 : vector<13x17x1xf32> to vector<13x17x32xf32>
    %290 = vector.broadcast %288 : vector<1x1x32xf32> to vector<13x17x32xf32>
    %291 = arith.mulf %289, %290 : vector<13x17x32xf32>
    %292 = arith.addf %284, %291 : vector<13x17x32xf32>
    %293 = vector.extract_strided_slice %7 {offsets = [1, 0, 0], sizes = [13, 17, 1], strides = [1, 1, 1]} : vector<14x18x1xf32> to vector<13x17x1xf32>
    %c2_119 = arith.constant 2 : index
    %c0_120 = arith.constant 0 : index
    %c0_121 = arith.constant 0 : index
    %294 = vector.load %arg2[%c2_119, %c0_120, %c0_121] : memref<3x3x32xf32, #tpu.memory_space<vmem>>, vector<1x1x32xf32>
    %295 = vector.shape_cast %294 : vector<1x1x32xf32> to vector<32xf32>
    %296 = vector.shape_cast %295 : vector<32xf32> to vector<1x1x32xf32>
    %297 = vector.broadcast %293 : vector<13x17x1xf32> to vector<13x17x32xf32>
    %298 = vector.broadcast %296 : vector<1x1x32xf32> to vector<13x17x32xf32>
    %299 = arith.mulf %297, %298 : vector<13x17x32xf32>
    %300 = arith.addf %292, %299 : vector<13x17x32xf32>
    %301 = vector.extract_strided_slice %5 {offsets = [1, 1, 0], sizes = [13, 17, 1], strides = [1, 1, 1]} : vector<14x18x1xf32> to vector<13x17x1xf32>
    %c2_122 = arith.constant 2 : index
    %c1_123 = arith.constant 1 : index
    %c0_124 = arith.constant 0 : index
    %302 = vector.load %arg2[%c2_122, %c1_123, %c0_124] : memref<3x3x32xf32, #tpu.memory_space<vmem>>, vector<1x1x32xf32>
    %303 = vector.shape_cast %302 : vector<1x1x32xf32> to vector<32xf32>
    %304 = vector.shape_cast %303 : vector<32xf32> to vector<1x1x32xf32>
    %305 = vector.broadcast %301 : vector<13x17x1xf32> to vector<13x17x32xf32>
    %306 = vector.broadcast %304 : vector<1x1x32xf32> to vector<13x17x32xf32>
    %307 = arith.mulf %305, %306 : vector<13x17x32xf32>
    %308 = arith.addf %300, %307 : vector<13x17x32xf32>
    %309 = vector.extract_strided_slice %7 {offsets = [1, 1, 0], sizes = [13, 17, 1], strides = [1, 1, 1]} : vector<14x18x1xf32> to vector<13x17x1xf32>
    %c2_125 = arith.constant 2 : index
    %c2_126 = arith.constant 2 : index
    %c0_127 = arith.constant 0 : index
    %310 = vector.load %arg2[%c2_125, %c2_126, %c0_127] : memref<3x3x32xf32, #tpu.memory_space<vmem>>, vector<1x1x32xf32>
    %311 = vector.shape_cast %310 : vector<1x1x32xf32> to vector<32xf32>
    %312 = vector.shape_cast %311 : vector<32xf32> to vector<1x1x32xf32>
    %313 = vector.broadcast %309 : vector<13x17x1xf32> to vector<13x17x32xf32>
    %314 = vector.broadcast %312 : vector<1x1x32xf32> to vector<13x17x32xf32>
    %315 = arith.mulf %313, %314 : vector<13x17x32xf32>
    %316 = arith.addf %308, %315 : vector<13x17x32xf32>
    %317 = vector.shape_cast %9 : vector<32xf32> to vector<1x1x32xf32>
    %318 = vector.broadcast %317 : vector<1x1x32xf32> to vector<13x17x32xf32>
    %319 = arith.addf %316, %318 : vector<13x17x32xf32>
    %cst_128 = arith.constant 0.000000e+00 : f32
    %320 = vector.broadcast %cst_128 : f32 to vector<13x17x32xf32>
    %321 = arith.maximumf %319, %320 : vector<13x17x32xf32>
    %cst_129 = arith.constant 0.000000e+00 : f32
    %322 = vector.broadcast %cst_129 : f32 to vector<192x64xf32>
    %323 = vector.extract_strided_slice %87 {offsets = [0, 0, 0], sizes = [12, 16, 32], strides = [1, 1, 1]} : vector<13x17x32xf32> to vector<12x16x32xf32>
    %324 = vector.shape_cast %323 : vector<12x16x32xf32> to vector<192x32xf32>
    %c0_130 = arith.constant 0 : index
    %c0_131 = arith.constant 0 : index
    %c0_132 = arith.constant 0 : index
    %c0_133 = arith.constant 0 : index
    %325 = vector.load %arg4[%c0_130, %c0_131, %c0_132, %c0_133] : memref<3x3x32x64xf32, #tpu.memory_space<vmem>>, vector<1x1x32x64xf32>
    %326 = vector.shape_cast %325 : vector<1x1x32x64xf32> to vector<32x64xf32>
    %cst_134 = arith.constant dense<0.000000e+00> : vector<192x64xf32>
    %327 = tpu.matmul %324, %326, %cst_134 {dimension_numbers = #tpu.dot_dimension_numbers<[1], [0], [0], [1], [0, 0, 1, 1], [], []>} : vector<192x32xf32>, vector<32x64xf32>, vector<192x64xf32> -> vector<192x64xf32>
    %328 = arith.addf %322, %327 : vector<192x64xf32>
    %329 = vector.extract_strided_slice %165 {offsets = [0, 0, 0], sizes = [12, 16, 32], strides = [1, 1, 1]} : vector<13x17x32xf32> to vector<12x16x32xf32>
    %330 = vector.shape_cast %329 : vector<12x16x32xf32> to vector<192x32xf32>
    %c0_135 = arith.constant 0 : index
    %c1_136 = arith.constant 1 : index
    %c0_137 = arith.constant 0 : index
    %c0_138 = arith.constant 0 : index
    %331 = vector.load %arg4[%c0_135, %c1_136, %c0_137, %c0_138] : memref<3x3x32x64xf32, #tpu.memory_space<vmem>>, vector<1x1x32x64xf32>
    %332 = vector.shape_cast %331 : vector<1x1x32x64xf32> to vector<32x64xf32>
    %cst_139 = arith.constant dense<0.000000e+00> : vector<192x64xf32>
    %333 = tpu.matmul %330, %332, %cst_139 {dimension_numbers = #tpu.dot_dimension_numbers<[1], [0], [0], [1], [0, 0, 1, 1], [], []>} : vector<192x32xf32>, vector<32x64xf32>, vector<192x64xf32> -> vector<192x64xf32>
    %334 = arith.addf %328, %333 : vector<192x64xf32>
    %335 = vector.extract_strided_slice %87 {offsets = [0, 1, 0], sizes = [12, 16, 32], strides = [1, 1, 1]} : vector<13x17x32xf32> to vector<12x16x32xf32>
    %336 = vector.shape_cast %335 : vector<12x16x32xf32> to vector<192x32xf32>
    %c0_140 = arith.constant 0 : index
    %c2_141 = arith.constant 2 : index
    %c0_142 = arith.constant 0 : index
    %c0_143 = arith.constant 0 : index
    %337 = vector.load %arg4[%c0_140, %c2_141, %c0_142, %c0_143] : memref<3x3x32x64xf32, #tpu.memory_space<vmem>>, vector<1x1x32x64xf32>
    %338 = vector.shape_cast %337 : vector<1x1x32x64xf32> to vector<32x64xf32>
    %cst_144 = arith.constant dense<0.000000e+00> : vector<192x64xf32>
    %339 = tpu.matmul %336, %338, %cst_144 {dimension_numbers = #tpu.dot_dimension_numbers<[1], [0], [0], [1], [0, 0, 1, 1], [], []>} : vector<192x32xf32>, vector<32x64xf32>, vector<192x64xf32> -> vector<192x64xf32>
    %340 = arith.addf %334, %339 : vector<192x64xf32>
    %341 = vector.extract_strided_slice %243 {offsets = [0, 0, 0], sizes = [12, 16, 32], strides = [1, 1, 1]} : vector<13x17x32xf32> to vector<12x16x32xf32>
    %342 = vector.shape_cast %341 : vector<12x16x32xf32> to vector<192x32xf32>
    %c1_145 = arith.constant 1 : index
    %c0_146 = arith.constant 0 : index
    %c0_147 = arith.constant 0 : index
    %c0_148 = arith.constant 0 : index
    %343 = vector.load %arg4[%c1_145, %c0_146, %c0_147, %c0_148] : memref<3x3x32x64xf32, #tpu.memory_space<vmem>>, vector<1x1x32x64xf32>
    %344 = vector.shape_cast %343 : vector<1x1x32x64xf32> to vector<32x64xf32>
    %cst_149 = arith.constant dense<0.000000e+00> : vector<192x64xf32>
    %345 = tpu.matmul %342, %344, %cst_149 {dimension_numbers = #tpu.dot_dimension_numbers<[1], [0], [0], [1], [0, 0, 1, 1], [], []>} : vector<192x32xf32>, vector<32x64xf32>, vector<192x64xf32> -> vector<192x64xf32>
    %346 = arith.addf %340, %345 : vector<192x64xf32>
    %347 = vector.extract_strided_slice %321 {offsets = [0, 0, 0], sizes = [12, 16, 32], strides = [1, 1, 1]} : vector<13x17x32xf32> to vector<12x16x32xf32>
    %348 = vector.shape_cast %347 : vector<12x16x32xf32> to vector<192x32xf32>
    %c1_150 = arith.constant 1 : index
    %c1_151 = arith.constant 1 : index
    %c0_152 = arith.constant 0 : index
    %c0_153 = arith.constant 0 : index
    %349 = vector.load %arg4[%c1_150, %c1_151, %c0_152, %c0_153] : memref<3x3x32x64xf32, #tpu.memory_space<vmem>>, vector<1x1x32x64xf32>
    %350 = vector.shape_cast %349 : vector<1x1x32x64xf32> to vector<32x64xf32>
    %cst_154 = arith.constant dense<0.000000e+00> : vector<192x64xf32>
    %351 = tpu.matmul %348, %350, %cst_154 {dimension_numbers = #tpu.dot_dimension_numbers<[1], [0], [0], [1], [0, 0, 1, 1], [], []>} : vector<192x32xf32>, vector<32x64xf32>, vector<192x64xf32> -> vector<192x64xf32>
    %352 = arith.addf %346, %351 : vector<192x64xf32>
    %353 = vector.extract_strided_slice %243 {offsets = [0, 1, 0], sizes = [12, 16, 32], strides = [1, 1, 1]} : vector<13x17x32xf32> to vector<12x16x32xf32>
    %354 = vector.shape_cast %353 : vector<12x16x32xf32> to vector<192x32xf32>
    %c1_155 = arith.constant 1 : index
    %c2_156 = arith.constant 2 : index
    %c0_157 = arith.constant 0 : index
    %c0_158 = arith.constant 0 : index
    %355 = vector.load %arg4[%c1_155, %c2_156, %c0_157, %c0_158] : memref<3x3x32x64xf32, #tpu.memory_space<vmem>>, vector<1x1x32x64xf32>
    %356 = vector.shape_cast %355 : vector<1x1x32x64xf32> to vector<32x64xf32>
    %cst_159 = arith.constant dense<0.000000e+00> : vector<192x64xf32>
    %357 = tpu.matmul %354, %356, %cst_159 {dimension_numbers = #tpu.dot_dimension_numbers<[1], [0], [0], [1], [0, 0, 1, 1], [], []>} : vector<192x32xf32>, vector<32x64xf32>, vector<192x64xf32> -> vector<192x64xf32>
    %358 = arith.addf %352, %357 : vector<192x64xf32>
    %359 = vector.extract_strided_slice %87 {offsets = [1, 0, 0], sizes = [12, 16, 32], strides = [1, 1, 1]} : vector<13x17x32xf32> to vector<12x16x32xf32>
    %360 = vector.shape_cast %359 : vector<12x16x32xf32> to vector<192x32xf32>
    %c2_160 = arith.constant 2 : index
    %c0_161 = arith.constant 0 : index
    %c0_162 = arith.constant 0 : index
    %c0_163 = arith.constant 0 : index
    %361 = vector.load %arg4[%c2_160, %c0_161, %c0_162, %c0_163] : memref<3x3x32x64xf32, #tpu.memory_space<vmem>>, vector<1x1x32x64xf32>
    %362 = vector.shape_cast %361 : vector<1x1x32x64xf32> to vector<32x64xf32>
    %cst_164 = arith.constant dense<0.000000e+00> : vector<192x64xf32>
    %363 = tpu.matmul %360, %362, %cst_164 {dimension_numbers = #tpu.dot_dimension_numbers<[1], [0], [0], [1], [0, 0, 1, 1], [], []>} : vector<192x32xf32>, vector<32x64xf32>, vector<192x64xf32> -> vector<192x64xf32>
    %364 = arith.addf %358, %363 : vector<192x64xf32>
    %365 = vector.extract_strided_slice %165 {offsets = [1, 0, 0], sizes = [12, 16, 32], strides = [1, 1, 1]} : vector<13x17x32xf32> to vector<12x16x32xf32>
    %366 = vector.shape_cast %365 : vector<12x16x32xf32> to vector<192x32xf32>
    %c2_165 = arith.constant 2 : index
    %c1_166 = arith.constant 1 : index
    %c0_167 = arith.constant 0 : index
    %c0_168 = arith.constant 0 : index
    %367 = vector.load %arg4[%c2_165, %c1_166, %c0_167, %c0_168] : memref<3x3x32x64xf32, #tpu.memory_space<vmem>>, vector<1x1x32x64xf32>
    %368 = vector.shape_cast %367 : vector<1x1x32x64xf32> to vector<32x64xf32>
    %cst_169 = arith.constant dense<0.000000e+00> : vector<192x64xf32>
    %369 = tpu.matmul %366, %368, %cst_169 {dimension_numbers = #tpu.dot_dimension_numbers<[1], [0], [0], [1], [0, 0, 1, 1], [], []>} : vector<192x32xf32>, vector<32x64xf32>, vector<192x64xf32> -> vector<192x64xf32>
    %370 = arith.addf %364, %369 : vector<192x64xf32>
    %371 = vector.extract_strided_slice %87 {offsets = [1, 1, 0], sizes = [12, 16, 32], strides = [1, 1, 1]} : vector<13x17x32xf32> to vector<12x16x32xf32>
    %372 = vector.shape_cast %371 : vector<12x16x32xf32> to vector<192x32xf32>
    %c2_170 = arith.constant 2 : index
    %c2_171 = arith.constant 2 : index
    %c0_172 = arith.constant 0 : index
    %c0_173 = arith.constant 0 : index
    %373 = vector.load %arg4[%c2_170, %c2_171, %c0_172, %c0_173] : memref<3x3x32x64xf32, #tpu.memory_space<vmem>>, vector<1x1x32x64xf32>
    %374 = vector.shape_cast %373 : vector<1x1x32x64xf32> to vector<32x64xf32>
    %cst_174 = arith.constant dense<0.000000e+00> : vector<192x64xf32>
    %375 = tpu.matmul %372, %374, %cst_174 {dimension_numbers = #tpu.dot_dimension_numbers<[1], [0], [0], [1], [0, 0, 1, 1], [], []>} : vector<192x32xf32>, vector<32x64xf32>, vector<192x64xf32> -> vector<192x64xf32>
    %376 = arith.addf %370, %375 : vector<192x64xf32>
    %cst_175 = arith.constant 0.000000e+00 : f32
    %377 = vector.broadcast %cst_175 : f32 to vector<192x64xf32>
    %378 = vector.extract_strided_slice %165 {offsets = [0, 0, 0], sizes = [12, 16, 32], strides = [1, 1, 1]} : vector<13x17x32xf32> to vector<12x16x32xf32>
    %379 = vector.shape_cast %378 : vector<12x16x32xf32> to vector<192x32xf32>
    %c0_176 = arith.constant 0 : index
    %c0_177 = arith.constant 0 : index
    %c0_178 = arith.constant 0 : index
    %c0_179 = arith.constant 0 : index
    %380 = vector.load %arg4[%c0_176, %c0_177, %c0_178, %c0_179] : memref<3x3x32x64xf32, #tpu.memory_space<vmem>>, vector<1x1x32x64xf32>
    %381 = vector.shape_cast %380 : vector<1x1x32x64xf32> to vector<32x64xf32>
    %cst_180 = arith.constant dense<0.000000e+00> : vector<192x64xf32>
    %382 = tpu.matmul %379, %381, %cst_180 {dimension_numbers = #tpu.dot_dimension_numbers<[1], [0], [0], [1], [0, 0, 1, 1], [], []>} : vector<192x32xf32>, vector<32x64xf32>, vector<192x64xf32> -> vector<192x64xf32>
    %383 = arith.addf %377, %382 : vector<192x64xf32>
    %384 = vector.extract_strided_slice %87 {offsets = [0, 1, 0], sizes = [12, 16, 32], strides = [1, 1, 1]} : vector<13x17x32xf32> to vector<12x16x32xf32>
    %385 = vector.shape_cast %384 : vector<12x16x32xf32> to vector<192x32xf32>
    %c0_181 = arith.constant 0 : index
    %c1_182 = arith.constant 1 : index
    %c0_183 = arith.constant 0 : index
    %c0_184 = arith.constant 0 : index
    %386 = vector.load %arg4[%c0_181, %c1_182, %c0_183, %c0_184] : memref<3x3x32x64xf32, #tpu.memory_space<vmem>>, vector<1x1x32x64xf32>
    %387 = vector.shape_cast %386 : vector<1x1x32x64xf32> to vector<32x64xf32>
    %cst_185 = arith.constant dense<0.000000e+00> : vector<192x64xf32>
    %388 = tpu.matmul %385, %387, %cst_185 {dimension_numbers = #tpu.dot_dimension_numbers<[1], [0], [0], [1], [0, 0, 1, 1], [], []>} : vector<192x32xf32>, vector<32x64xf32>, vector<192x64xf32> -> vector<192x64xf32>
    %389 = arith.addf %383, %388 : vector<192x64xf32>
    %390 = vector.extract_strided_slice %165 {offsets = [0, 1, 0], sizes = [12, 16, 32], strides = [1, 1, 1]} : vector<13x17x32xf32> to vector<12x16x32xf32>
    %391 = vector.shape_cast %390 : vector<12x16x32xf32> to vector<192x32xf32>
    %c0_186 = arith.constant 0 : index
    %c2_187 = arith.constant 2 : index
    %c0_188 = arith.constant 0 : index
    %c0_189 = arith.constant 0 : index
    %392 = vector.load %arg4[%c0_186, %c2_187, %c0_188, %c0_189] : memref<3x3x32x64xf32, #tpu.memory_space<vmem>>, vector<1x1x32x64xf32>
    %393 = vector.shape_cast %392 : vector<1x1x32x64xf32> to vector<32x64xf32>
    %cst_190 = arith.constant dense<0.000000e+00> : vector<192x64xf32>
    %394 = tpu.matmul %391, %393, %cst_190 {dimension_numbers = #tpu.dot_dimension_numbers<[1], [0], [0], [1], [0, 0, 1, 1], [], []>} : vector<192x32xf32>, vector<32x64xf32>, vector<192x64xf32> -> vector<192x64xf32>
    %395 = arith.addf %389, %394 : vector<192x64xf32>
    %396 = vector.extract_strided_slice %321 {offsets = [0, 0, 0], sizes = [12, 16, 32], strides = [1, 1, 1]} : vector<13x17x32xf32> to vector<12x16x32xf32>
    %397 = vector.shape_cast %396 : vector<12x16x32xf32> to vector<192x32xf32>
    %c1_191 = arith.constant 1 : index
    %c0_192 = arith.constant 0 : index
    %c0_193 = arith.constant 0 : index
    %c0_194 = arith.constant 0 : index
    %398 = vector.load %arg4[%c1_191, %c0_192, %c0_193, %c0_194] : memref<3x3x32x64xf32, #tpu.memory_space<vmem>>, vector<1x1x32x64xf32>
    %399 = vector.shape_cast %398 : vector<1x1x32x64xf32> to vector<32x64xf32>
    %cst_195 = arith.constant dense<0.000000e+00> : vector<192x64xf32>
    %400 = tpu.matmul %397, %399, %cst_195 {dimension_numbers = #tpu.dot_dimension_numbers<[1], [0], [0], [1], [0, 0, 1, 1], [], []>} : vector<192x32xf32>, vector<32x64xf32>, vector<192x64xf32> -> vector<192x64xf32>
    %401 = arith.addf %395, %400 : vector<192x64xf32>
    %402 = vector.extract_strided_slice %243 {offsets = [0, 1, 0], sizes = [12, 16, 32], strides = [1, 1, 1]} : vector<13x17x32xf32> to vector<12x16x32xf32>
    %403 = vector.shape_cast %402 : vector<12x16x32xf32> to vector<192x32xf32>
    %c1_196 = arith.constant 1 : index
    %c1_197 = arith.constant 1 : index
    %c0_198 = arith.constant 0 : index
    %c0_199 = arith.constant 0 : index
    %404 = vector.load %arg4[%c1_196, %c1_197, %c0_198, %c0_199] : memref<3x3x32x64xf32, #tpu.memory_space<vmem>>, vector<1x1x32x64xf32>
    %405 = vector.shape_cast %404 : vector<1x1x32x64xf32> to vector<32x64xf32>
    %cst_200 = arith.constant dense<0.000000e+00> : vector<192x64xf32>
    %406 = tpu.matmul %403, %405, %cst_200 {dimension_numbers = #tpu.dot_dimension_numbers<[1], [0], [0], [1], [0, 0, 1, 1], [], []>} : vector<192x32xf32>, vector<32x64xf32>, vector<192x64xf32> -> vector<192x64xf32>
    %407 = arith.addf %401, %406 : vector<192x64xf32>
    %408 = vector.extract_strided_slice %321 {offsets = [0, 1, 0], sizes = [12, 16, 32], strides = [1, 1, 1]} : vector<13x17x32xf32> to vector<12x16x32xf32>
    %409 = vector.shape_cast %408 : vector<12x16x32xf32> to vector<192x32xf32>
    %c1_201 = arith.constant 1 : index
    %c2_202 = arith.constant 2 : index
    %c0_203 = arith.constant 0 : index
    %c0_204 = arith.constant 0 : index
    %410 = vector.load %arg4[%c1_201, %c2_202, %c0_203, %c0_204] : memref<3x3x32x64xf32, #tpu.memory_space<vmem>>, vector<1x1x32x64xf32>
    %411 = vector.shape_cast %410 : vector<1x1x32x64xf32> to vector<32x64xf32>
    %cst_205 = arith.constant dense<0.000000e+00> : vector<192x64xf32>
    %412 = tpu.matmul %409, %411, %cst_205 {dimension_numbers = #tpu.dot_dimension_numbers<[1], [0], [0], [1], [0, 0, 1, 1], [], []>} : vector<192x32xf32>, vector<32x64xf32>, vector<192x64xf32> -> vector<192x64xf32>
    %413 = arith.addf %407, %412 : vector<192x64xf32>
    %414 = vector.extract_strided_slice %165 {offsets = [1, 0, 0], sizes = [12, 16, 32], strides = [1, 1, 1]} : vector<13x17x32xf32> to vector<12x16x32xf32>
    %415 = vector.shape_cast %414 : vector<12x16x32xf32> to vector<192x32xf32>
    %c2_206 = arith.constant 2 : index
    %c0_207 = arith.constant 0 : index
    %c0_208 = arith.constant 0 : index
    %c0_209 = arith.constant 0 : index
    %416 = vector.load %arg4[%c2_206, %c0_207, %c0_208, %c0_209] : memref<3x3x32x64xf32, #tpu.memory_space<vmem>>, vector<1x1x32x64xf32>
    %417 = vector.shape_cast %416 : vector<1x1x32x64xf32> to vector<32x64xf32>
    %cst_210 = arith.constant dense<0.000000e+00> : vector<192x64xf32>
    %418 = tpu.matmul %415, %417, %cst_210 {dimension_numbers = #tpu.dot_dimension_numbers<[1], [0], [0], [1], [0, 0, 1, 1], [], []>} : vector<192x32xf32>, vector<32x64xf32>, vector<192x64xf32> -> vector<192x64xf32>
    %419 = arith.addf %413, %418 : vector<192x64xf32>
    %420 = vector.extract_strided_slice %87 {offsets = [1, 1, 0], sizes = [12, 16, 32], strides = [1, 1, 1]} : vector<13x17x32xf32> to vector<12x16x32xf32>
    %421 = vector.shape_cast %420 : vector<12x16x32xf32> to vector<192x32xf32>
    %c2_211 = arith.constant 2 : index
    %c1_212 = arith.constant 1 : index
    %c0_213 = arith.constant 0 : index
    %c0_214 = arith.constant 0 : index
    %422 = vector.load %arg4[%c2_211, %c1_212, %c0_213, %c0_214] : memref<3x3x32x64xf32, #tpu.memory_space<vmem>>, vector<1x1x32x64xf32>
    %423 = vector.shape_cast %422 : vector<1x1x32x64xf32> to vector<32x64xf32>
    %cst_215 = arith.constant dense<0.000000e+00> : vector<192x64xf32>
    %424 = tpu.matmul %421, %423, %cst_215 {dimension_numbers = #tpu.dot_dimension_numbers<[1], [0], [0], [1], [0, 0, 1, 1], [], []>} : vector<192x32xf32>, vector<32x64xf32>, vector<192x64xf32> -> vector<192x64xf32>
    %425 = arith.addf %419, %424 : vector<192x64xf32>
    %426 = vector.extract_strided_slice %165 {offsets = [1, 1, 0], sizes = [12, 16, 32], strides = [1, 1, 1]} : vector<13x17x32xf32> to vector<12x16x32xf32>
    %427 = vector.shape_cast %426 : vector<12x16x32xf32> to vector<192x32xf32>
    %c2_216 = arith.constant 2 : index
    %c2_217 = arith.constant 2 : index
    %c0_218 = arith.constant 0 : index
    %c0_219 = arith.constant 0 : index
    %428 = vector.load %arg4[%c2_216, %c2_217, %c0_218, %c0_219] : memref<3x3x32x64xf32, #tpu.memory_space<vmem>>, vector<1x1x32x64xf32>
    %429 = vector.shape_cast %428 : vector<1x1x32x64xf32> to vector<32x64xf32>
    %cst_220 = arith.constant dense<0.000000e+00> : vector<192x64xf32>
    %430 = tpu.matmul %427, %429, %cst_220 {dimension_numbers = #tpu.dot_dimension_numbers<[1], [0], [0], [1], [0, 0, 1, 1], [], []>} : vector<192x32xf32>, vector<32x64xf32>, vector<192x64xf32> -> vector<192x64xf32>
    %431 = arith.addf %425, %430 : vector<192x64xf32>
    %cst_221 = arith.constant 0.000000e+00 : f32
    %432 = vector.broadcast %cst_221 : f32 to vector<192x64xf32>
    %433 = vector.extract_strided_slice %243 {offsets = [0, 0, 0], sizes = [12, 16, 32], strides = [1, 1, 1]} : vector<13x17x32xf32> to vector<12x16x32xf32>
    %434 = vector.shape_cast %433 : vector<12x16x32xf32> to vector<192x32xf32>
    %c0_222 = arith.constant 0 : index
    %c0_223 = arith.constant 0 : index
    %c0_224 = arith.constant 0 : index
    %c0_225 = arith.constant 0 : index
    %435 = vector.load %arg4[%c0_222, %c0_223, %c0_224, %c0_225] : memref<3x3x32x64xf32, #tpu.memory_space<vmem>>, vector<1x1x32x64xf32>
    %436 = vector.shape_cast %435 : vector<1x1x32x64xf32> to vector<32x64xf32>
    %cst_226 = arith.constant dense<0.000000e+00> : vector<192x64xf32>
    %437 = tpu.matmul %434, %436, %cst_226 {dimension_numbers = #tpu.dot_dimension_numbers<[1], [0], [0], [1], [0, 0, 1, 1], [], []>} : vector<192x32xf32>, vector<32x64xf32>, vector<192x64xf32> -> vector<192x64xf32>
    %438 = arith.addf %432, %437 : vector<192x64xf32>
    %439 = vector.extract_strided_slice %321 {offsets = [0, 0, 0], sizes = [12, 16, 32], strides = [1, 1, 1]} : vector<13x17x32xf32> to vector<12x16x32xf32>
    %440 = vector.shape_cast %439 : vector<12x16x32xf32> to vector<192x32xf32>
    %c0_227 = arith.constant 0 : index
    %c1_228 = arith.constant 1 : index
    %c0_229 = arith.constant 0 : index
    %c0_230 = arith.constant 0 : index
    %441 = vector.load %arg4[%c0_227, %c1_228, %c0_229, %c0_230] : memref<3x3x32x64xf32, #tpu.memory_space<vmem>>, vector<1x1x32x64xf32>
    %442 = vector.shape_cast %441 : vector<1x1x32x64xf32> to vector<32x64xf32>
    %cst_231 = arith.constant dense<0.000000e+00> : vector<192x64xf32>
    %443 = tpu.matmul %440, %442, %cst_231 {dimension_numbers = #tpu.dot_dimension_numbers<[1], [0], [0], [1], [0, 0, 1, 1], [], []>} : vector<192x32xf32>, vector<32x64xf32>, vector<192x64xf32> -> vector<192x64xf32>
    %444 = arith.addf %438, %443 : vector<192x64xf32>
    %445 = vector.extract_strided_slice %243 {offsets = [0, 1, 0], sizes = [12, 16, 32], strides = [1, 1, 1]} : vector<13x17x32xf32> to vector<12x16x32xf32>
    %446 = vector.shape_cast %445 : vector<12x16x32xf32> to vector<192x32xf32>
    %c0_232 = arith.constant 0 : index
    %c2_233 = arith.constant 2 : index
    %c0_234 = arith.constant 0 : index
    %c0_235 = arith.constant 0 : index
    %447 = vector.load %arg4[%c0_232, %c2_233, %c0_234, %c0_235] : memref<3x3x32x64xf32, #tpu.memory_space<vmem>>, vector<1x1x32x64xf32>
    %448 = vector.shape_cast %447 : vector<1x1x32x64xf32> to vector<32x64xf32>
    %cst_236 = arith.constant dense<0.000000e+00> : vector<192x64xf32>
    %449 = tpu.matmul %446, %448, %cst_236 {dimension_numbers = #tpu.dot_dimension_numbers<[1], [0], [0], [1], [0, 0, 1, 1], [], []>} : vector<192x32xf32>, vector<32x64xf32>, vector<192x64xf32> -> vector<192x64xf32>
    %450 = arith.addf %444, %449 : vector<192x64xf32>
    %451 = vector.extract_strided_slice %87 {offsets = [1, 0, 0], sizes = [12, 16, 32], strides = [1, 1, 1]} : vector<13x17x32xf32> to vector<12x16x32xf32>
    %452 = vector.shape_cast %451 : vector<12x16x32xf32> to vector<192x32xf32>
    %c1_237 = arith.constant 1 : index
    %c0_238 = arith.constant 0 : index
    %c0_239 = arith.constant 0 : index
    %c0_240 = arith.constant 0 : index
    %453 = vector.load %arg4[%c1_237, %c0_238, %c0_239, %c0_240] : memref<3x3x32x64xf32, #tpu.memory_space<vmem>>, vector<1x1x32x64xf32>
    %454 = vector.shape_cast %453 : vector<1x1x32x64xf32> to vector<32x64xf32>
    %cst_241 = arith.constant dense<0.000000e+00> : vector<192x64xf32>
    %455 = tpu.matmul %452, %454, %cst_241 {dimension_numbers = #tpu.dot_dimension_numbers<[1], [0], [0], [1], [0, 0, 1, 1], [], []>} : vector<192x32xf32>, vector<32x64xf32>, vector<192x64xf32> -> vector<192x64xf32>
    %456 = arith.addf %450, %455 : vector<192x64xf32>
    %457 = vector.extract_strided_slice %165 {offsets = [1, 0, 0], sizes = [12, 16, 32], strides = [1, 1, 1]} : vector<13x17x32xf32> to vector<12x16x32xf32>
    %458 = vector.shape_cast %457 : vector<12x16x32xf32> to vector<192x32xf32>
    %c1_242 = arith.constant 1 : index
    %c1_243 = arith.constant 1 : index
    %c0_244 = arith.constant 0 : index
    %c0_245 = arith.constant 0 : index
    %459 = vector.load %arg4[%c1_242, %c1_243, %c0_244, %c0_245] : memref<3x3x32x64xf32, #tpu.memory_space<vmem>>, vector<1x1x32x64xf32>
    %460 = vector.shape_cast %459 : vector<1x1x32x64xf32> to vector<32x64xf32>
    %cst_246 = arith.constant dense<0.000000e+00> : vector<192x64xf32>
    %461 = tpu.matmul %458, %460, %cst_246 {dimension_numbers = #tpu.dot_dimension_numbers<[1], [0], [0], [1], [0, 0, 1, 1], [], []>} : vector<192x32xf32>, vector<32x64xf32>, vector<192x64xf32> -> vector<192x64xf32>
    %462 = arith.addf %456, %461 : vector<192x64xf32>
    %463 = vector.extract_strided_slice %87 {offsets = [1, 1, 0], sizes = [12, 16, 32], strides = [1, 1, 1]} : vector<13x17x32xf32> to vector<12x16x32xf32>
    %464 = vector.shape_cast %463 : vector<12x16x32xf32> to vector<192x32xf32>
    %c1_247 = arith.constant 1 : index
    %c2_248 = arith.constant 2 : index
    %c0_249 = arith.constant 0 : index
    %c0_250 = arith.constant 0 : index
    %465 = vector.load %arg4[%c1_247, %c2_248, %c0_249, %c0_250] : memref<3x3x32x64xf32, #tpu.memory_space<vmem>>, vector<1x1x32x64xf32>
    %466 = vector.shape_cast %465 : vector<1x1x32x64xf32> to vector<32x64xf32>
    %cst_251 = arith.constant dense<0.000000e+00> : vector<192x64xf32>
    %467 = tpu.matmul %464, %466, %cst_251 {dimension_numbers = #tpu.dot_dimension_numbers<[1], [0], [0], [1], [0, 0, 1, 1], [], []>} : vector<192x32xf32>, vector<32x64xf32>, vector<192x64xf32> -> vector<192x64xf32>
    %468 = arith.addf %462, %467 : vector<192x64xf32>
    %469 = vector.extract_strided_slice %243 {offsets = [1, 0, 0], sizes = [12, 16, 32], strides = [1, 1, 1]} : vector<13x17x32xf32> to vector<12x16x32xf32>
    %470 = vector.shape_cast %469 : vector<12x16x32xf32> to vector<192x32xf32>
    %c2_252 = arith.constant 2 : index
    %c0_253 = arith.constant 0 : index
    %c0_254 = arith.constant 0 : index
    %c0_255 = arith.constant 0 : index
    %471 = vector.load %arg4[%c2_252, %c0_253, %c0_254, %c0_255] : memref<3x3x32x64xf32, #tpu.memory_space<vmem>>, vector<1x1x32x64xf32>
    %472 = vector.shape_cast %471 : vector<1x1x32x64xf32> to vector<32x64xf32>
    %cst_256 = arith.constant dense<0.000000e+00> : vector<192x64xf32>
    %473 = tpu.matmul %470, %472, %cst_256 {dimension_numbers = #tpu.dot_dimension_numbers<[1], [0], [0], [1], [0, 0, 1, 1], [], []>} : vector<192x32xf32>, vector<32x64xf32>, vector<192x64xf32> -> vector<192x64xf32>
    %474 = arith.addf %468, %473 : vector<192x64xf32>
    %475 = vector.extract_strided_slice %321 {offsets = [1, 0, 0], sizes = [12, 16, 32], strides = [1, 1, 1]} : vector<13x17x32xf32> to vector<12x16x32xf32>
    %476 = vector.shape_cast %475 : vector<12x16x32xf32> to vector<192x32xf32>
    %c2_257 = arith.constant 2 : index
    %c1_258 = arith.constant 1 : index
    %c0_259 = arith.constant 0 : index
    %c0_260 = arith.constant 0 : index
    %477 = vector.load %arg4[%c2_257, %c1_258, %c0_259, %c0_260] : memref<3x3x32x64xf32, #tpu.memory_space<vmem>>, vector<1x1x32x64xf32>
    %478 = vector.shape_cast %477 : vector<1x1x32x64xf32> to vector<32x64xf32>
    %cst_261 = arith.constant dense<0.000000e+00> : vector<192x64xf32>
    %479 = tpu.matmul %476, %478, %cst_261 {dimension_numbers = #tpu.dot_dimension_numbers<[1], [0], [0], [1], [0, 0, 1, 1], [], []>} : vector<192x32xf32>, vector<32x64xf32>, vector<192x64xf32> -> vector<192x64xf32>
    %480 = arith.addf %474, %479 : vector<192x64xf32>
    %481 = vector.extract_strided_slice %243 {offsets = [1, 1, 0], sizes = [12, 16, 32], strides = [1, 1, 1]} : vector<13x17x32xf32> to vector<12x16x32xf32>
    %482 = vector.shape_cast %481 : vector<12x16x32xf32> to vector<192x32xf32>
    %c2_262 = arith.constant 2 : index
    %c2_263 = arith.constant 2 : index
    %c0_264 = arith.constant 0 : index
    %c0_265 = arith.constant 0 : index
    %483 = vector.load %arg4[%c2_262, %c2_263, %c0_264, %c0_265] : memref<3x3x32x64xf32, #tpu.memory_space<vmem>>, vector<1x1x32x64xf32>
    %484 = vector.shape_cast %483 : vector<1x1x32x64xf32> to vector<32x64xf32>
    %cst_266 = arith.constant dense<0.000000e+00> : vector<192x64xf32>
    %485 = tpu.matmul %482, %484, %cst_266 {dimension_numbers = #tpu.dot_dimension_numbers<[1], [0], [0], [1], [0, 0, 1, 1], [], []>} : vector<192x32xf32>, vector<32x64xf32>, vector<192x64xf32> -> vector<192x64xf32>
    %486 = arith.addf %480, %485 : vector<192x64xf32>
    %cst_267 = arith.constant 0.000000e+00 : f32
    %487 = vector.broadcast %cst_267 : f32 to vector<192x64xf32>
    %488 = vector.extract_strided_slice %321 {offsets = [0, 0, 0], sizes = [12, 16, 32], strides = [1, 1, 1]} : vector<13x17x32xf32> to vector<12x16x32xf32>
    %489 = vector.shape_cast %488 : vector<12x16x32xf32> to vector<192x32xf32>
    %c0_268 = arith.constant 0 : index
    %c0_269 = arith.constant 0 : index
    %c0_270 = arith.constant 0 : index
    %c0_271 = arith.constant 0 : index
    %490 = vector.load %arg4[%c0_268, %c0_269, %c0_270, %c0_271] : memref<3x3x32x64xf32, #tpu.memory_space<vmem>>, vector<1x1x32x64xf32>
    %491 = vector.shape_cast %490 : vector<1x1x32x64xf32> to vector<32x64xf32>
    %cst_272 = arith.constant dense<0.000000e+00> : vector<192x64xf32>
    %492 = tpu.matmul %489, %491, %cst_272 {dimension_numbers = #tpu.dot_dimension_numbers<[1], [0], [0], [1], [0, 0, 1, 1], [], []>} : vector<192x32xf32>, vector<32x64xf32>, vector<192x64xf32> -> vector<192x64xf32>
    %493 = arith.addf %487, %492 : vector<192x64xf32>
    %494 = vector.extract_strided_slice %243 {offsets = [0, 1, 0], sizes = [12, 16, 32], strides = [1, 1, 1]} : vector<13x17x32xf32> to vector<12x16x32xf32>
    %495 = vector.shape_cast %494 : vector<12x16x32xf32> to vector<192x32xf32>
    %c0_273 = arith.constant 0 : index
    %c1_274 = arith.constant 1 : index
    %c0_275 = arith.constant 0 : index
    %c0_276 = arith.constant 0 : index
    %496 = vector.load %arg4[%c0_273, %c1_274, %c0_275, %c0_276] : memref<3x3x32x64xf32, #tpu.memory_space<vmem>>, vector<1x1x32x64xf32>
    %497 = vector.shape_cast %496 : vector<1x1x32x64xf32> to vector<32x64xf32>
    %cst_277 = arith.constant dense<0.000000e+00> : vector<192x64xf32>
    %498 = tpu.matmul %495, %497, %cst_277 {dimension_numbers = #tpu.dot_dimension_numbers<[1], [0], [0], [1], [0, 0, 1, 1], [], []>} : vector<192x32xf32>, vector<32x64xf32>, vector<192x64xf32> -> vector<192x64xf32>
    %499 = arith.addf %493, %498 : vector<192x64xf32>
    %500 = vector.extract_strided_slice %321 {offsets = [0, 1, 0], sizes = [12, 16, 32], strides = [1, 1, 1]} : vector<13x17x32xf32> to vector<12x16x32xf32>
    %501 = vector.shape_cast %500 : vector<12x16x32xf32> to vector<192x32xf32>
    %c0_278 = arith.constant 0 : index
    %c2_279 = arith.constant 2 : index
    %c0_280 = arith.constant 0 : index
    %c0_281 = arith.constant 0 : index
    %502 = vector.load %arg4[%c0_278, %c2_279, %c0_280, %c0_281] : memref<3x3x32x64xf32, #tpu.memory_space<vmem>>, vector<1x1x32x64xf32>
    %503 = vector.shape_cast %502 : vector<1x1x32x64xf32> to vector<32x64xf32>
    %cst_282 = arith.constant dense<0.000000e+00> : vector<192x64xf32>
    %504 = tpu.matmul %501, %503, %cst_282 {dimension_numbers = #tpu.dot_dimension_numbers<[1], [0], [0], [1], [0, 0, 1, 1], [], []>} : vector<192x32xf32>, vector<32x64xf32>, vector<192x64xf32> -> vector<192x64xf32>
    %505 = arith.addf %499, %504 : vector<192x64xf32>
    %506 = vector.extract_strided_slice %165 {offsets = [1, 0, 0], sizes = [12, 16, 32], strides = [1, 1, 1]} : vector<13x17x32xf32> to vector<12x16x32xf32>
    %507 = vector.shape_cast %506 : vector<12x16x32xf32> to vector<192x32xf32>
    %c1_283 = arith.constant 1 : index
    %c0_284 = arith.constant 0 : index
    %c0_285 = arith.constant 0 : index
    %c0_286 = arith.constant 0 : index
    %508 = vector.load %arg4[%c1_283, %c0_284, %c0_285, %c0_286] : memref<3x3x32x64xf32, #tpu.memory_space<vmem>>, vector<1x1x32x64xf32>
    %509 = vector.shape_cast %508 : vector<1x1x32x64xf32> to vector<32x64xf32>
    %cst_287 = arith.constant dense<0.000000e+00> : vector<192x64xf32>
    %510 = tpu.matmul %507, %509, %cst_287 {dimension_numbers = #tpu.dot_dimension_numbers<[1], [0], [0], [1], [0, 0, 1, 1], [], []>} : vector<192x32xf32>, vector<32x64xf32>, vector<192x64xf32> -> vector<192x64xf32>
    %511 = arith.addf %505, %510 : vector<192x64xf32>
    %512 = vector.extract_strided_slice %87 {offsets = [1, 1, 0], sizes = [12, 16, 32], strides = [1, 1, 1]} : vector<13x17x32xf32> to vector<12x16x32xf32>
    %513 = vector.shape_cast %512 : vector<12x16x32xf32> to vector<192x32xf32>
    %c1_288 = arith.constant 1 : index
    %c1_289 = arith.constant 1 : index
    %c0_290 = arith.constant 0 : index
    %c0_291 = arith.constant 0 : index
    %514 = vector.load %arg4[%c1_288, %c1_289, %c0_290, %c0_291] : memref<3x3x32x64xf32, #tpu.memory_space<vmem>>, vector<1x1x32x64xf32>
    %515 = vector.shape_cast %514 : vector<1x1x32x64xf32> to vector<32x64xf32>
    %cst_292 = arith.constant dense<0.000000e+00> : vector<192x64xf32>
    %516 = tpu.matmul %513, %515, %cst_292 {dimension_numbers = #tpu.dot_dimension_numbers<[1], [0], [0], [1], [0, 0, 1, 1], [], []>} : vector<192x32xf32>, vector<32x64xf32>, vector<192x64xf32> -> vector<192x64xf32>
    %517 = arith.addf %511, %516 : vector<192x64xf32>
    %518 = vector.extract_strided_slice %165 {offsets = [1, 1, 0], sizes = [12, 16, 32], strides = [1, 1, 1]} : vector<13x17x32xf32> to vector<12x16x32xf32>
    %519 = vector.shape_cast %518 : vector<12x16x32xf32> to vector<192x32xf32>
    %c1_293 = arith.constant 1 : index
    %c2_294 = arith.constant 2 : index
    %c0_295 = arith.constant 0 : index
    %c0_296 = arith.constant 0 : index
    %520 = vector.load %arg4[%c1_293, %c2_294, %c0_295, %c0_296] : memref<3x3x32x64xf32, #tpu.memory_space<vmem>>, vector<1x1x32x64xf32>
    %521 = vector.shape_cast %520 : vector<1x1x32x64xf32> to vector<32x64xf32>
    %cst_297 = arith.constant dense<0.000000e+00> : vector<192x64xf32>
    %522 = tpu.matmul %519, %521, %cst_297 {dimension_numbers = #tpu.dot_dimension_numbers<[1], [0], [0], [1], [0, 0, 1, 1], [], []>} : vector<192x32xf32>, vector<32x64xf32>, vector<192x64xf32> -> vector<192x64xf32>
    %523 = arith.addf %517, %522 : vector<192x64xf32>
    %524 = vector.extract_strided_slice %321 {offsets = [1, 0, 0], sizes = [12, 16, 32], strides = [1, 1, 1]} : vector<13x17x32xf32> to vector<12x16x32xf32>
    %525 = vector.shape_cast %524 : vector<12x16x32xf32> to vector<192x32xf32>
    %c2_298 = arith.constant 2 : index
    %c0_299 = arith.constant 0 : index
    %c0_300 = arith.constant 0 : index
    %c0_301 = arith.constant 0 : index
    %526 = vector.load %arg4[%c2_298, %c0_299, %c0_300, %c0_301] : memref<3x3x32x64xf32, #tpu.memory_space<vmem>>, vector<1x1x32x64xf32>
    %527 = vector.shape_cast %526 : vector<1x1x32x64xf32> to vector<32x64xf32>
    %cst_302 = arith.constant dense<0.000000e+00> : vector<192x64xf32>
    %528 = tpu.matmul %525, %527, %cst_302 {dimension_numbers = #tpu.dot_dimension_numbers<[1], [0], [0], [1], [0, 0, 1, 1], [], []>} : vector<192x32xf32>, vector<32x64xf32>, vector<192x64xf32> -> vector<192x64xf32>
    %529 = arith.addf %523, %528 : vector<192x64xf32>
    %530 = vector.extract_strided_slice %243 {offsets = [1, 1, 0], sizes = [12, 16, 32], strides = [1, 1, 1]} : vector<13x17x32xf32> to vector<12x16x32xf32>
    %531 = vector.shape_cast %530 : vector<12x16x32xf32> to vector<192x32xf32>
    %c2_303 = arith.constant 2 : index
    %c1_304 = arith.constant 1 : index
    %c0_305 = arith.constant 0 : index
    %c0_306 = arith.constant 0 : index
    %532 = vector.load %arg4[%c2_303, %c1_304, %c0_305, %c0_306] : memref<3x3x32x64xf32, #tpu.memory_space<vmem>>, vector<1x1x32x64xf32>
    %533 = vector.shape_cast %532 : vector<1x1x32x64xf32> to vector<32x64xf32>
    %cst_307 = arith.constant dense<0.000000e+00> : vector<192x64xf32>
    %534 = tpu.matmul %531, %533, %cst_307 {dimension_numbers = #tpu.dot_dimension_numbers<[1], [0], [0], [1], [0, 0, 1, 1], [], []>} : vector<192x32xf32>, vector<32x64xf32>, vector<192x64xf32> -> vector<192x64xf32>
    %535 = arith.addf %529, %534 : vector<192x64xf32>
    %536 = vector.extract_strided_slice %321 {offsets = [1, 1, 0], sizes = [12, 16, 32], strides = [1, 1, 1]} : vector<13x17x32xf32> to vector<12x16x32xf32>
    %537 = vector.shape_cast %536 : vector<12x16x32xf32> to vector<192x32xf32>
    %c2_308 = arith.constant 2 : index
    %c2_309 = arith.constant 2 : index
    %c0_310 = arith.constant 0 : index
    %c0_311 = arith.constant 0 : index
    %538 = vector.load %arg4[%c2_308, %c2_309, %c0_310, %c0_311] : memref<3x3x32x64xf32, #tpu.memory_space<vmem>>, vector<1x1x32x64xf32>
    %539 = vector.shape_cast %538 : vector<1x1x32x64xf32> to vector<32x64xf32>
    %cst_312 = arith.constant dense<0.000000e+00> : vector<192x64xf32>
    %540 = tpu.matmul %537, %539, %cst_312 {dimension_numbers = #tpu.dot_dimension_numbers<[1], [0], [0], [1], [0, 0, 1, 1], [], []>} : vector<192x32xf32>, vector<32x64xf32>, vector<192x64xf32> -> vector<192x64xf32>
    %541 = arith.addf %535, %540 : vector<192x64xf32>
    %542 = arith.maximumf %376, %431 : vector<192x64xf32>
    %543 = arith.maximumf %486, %541 : vector<192x64xf32>
    %544 = arith.maximumf %542, %543 : vector<192x64xf32>
    %c0_313 = arith.constant 0 : index
    %c0_314 = arith.constant 0 : index
    %545 = vector.load %arg5[%c0_313, %c0_314] : memref<1x64xf32, #tpu.memory_space<vmem>>, vector<1x64xf32>
    %546 = vector.broadcast %545 : vector<1x64xf32> to vector<192x64xf32>
    %547 = arith.addf %544, %546 : vector<192x64xf32>
    %c0_315 = arith.constant 0 : index
    %c0_316 = arith.constant 0 : index
    %c0_317 = arith.constant 0 : index
    %548 = vector.load %arg6[%c0_315, %c0_316, %c0_317] : memref<1x192x64xf32, #tpu.memory_space<vmem>>, vector<1x192x64xf32>
    %549 = vector.shape_cast %548 : vector<1x192x64xf32> to vector<192x64xf32>
    %550 = vector.shape_cast %547 : vector<192x64xf32> to vector<1x192x64xf32>
    tpu.vector_store %arg6[%c0_315, %c0_316, %c0_317], %550 {strides = array<i32>} : memref<1x192x64xf32, #tpu.memory_space<vmem>>, vector<1x192x64xf32>,
    return
  }
  func.func @transform_0(%arg0: i32) -> (i32, i32, i32, i32) {
    %c0_i32 = arith.constant 0 : i32
    %c0_i32_0 = arith.constant 0 : i32
    %c0_i32_1 = arith.constant 0 : i32
    %c0_i32_2 = arith.constant 0 : i32
    return %arg0, %c0_i32, %c0_i32_0, %c0_i32_1 : i32, i32, i32, i32
  }
  func.func @transform_1(%arg0: i32) -> (i32, i32, i32) {
    %c0_i32 = arith.constant 0 : i32
    %c0_i32_0 = arith.constant 0 : i32
    %c0_i32_1 = arith.constant 0 : i32
    %c0_i32_2 = arith.constant 0 : i32
    return %c0_i32, %c0_i32_0, %c0_i32_1 : i32, i32, i32
  }
  func.func @transform_2(%arg0: i32) -> (i32, i32) {
    %c0_i32 = arith.constant 0 : i32
    %c0_i32_0 = arith.constant 0 : i32
    %c0_i32_1 = arith.constant 0 : i32
    return %c0_i32, %c0_i32_0 : i32, i32
  }
  func.func @transform_3(%arg0: i32) -> (i32, i32, i32, i32) {
    %c0_i32 = arith.constant 0 : i32
    %c0_i32_0 = arith.constant 0 : i32
    %c0_i32_1 = arith.constant 0 : i32
    %c0_i32_2 = arith.constant 0 : i32
    %c0_i32_3 = arith.constant 0 : i32
    return %c0_i32, %c0_i32_0, %c0_i32_1, %c0_i32_2 : i32, i32, i32, i32
  }
  func.func @transform_4(%arg0: i32) -> (i32, i32) {
    %c0_i32 = arith.constant 0 : i32
    %c0_i32_0 = arith.constant 0 : i32
    %c0_i32_1 = arith.constant 0 : i32
    return %c0_i32, %c0_i32_0 : i32, i32
  }
  func.func @transform_5(%arg0: i32) -> (i32, i32, i32) {
    %c0_i32 = arith.constant 0 : i32
    %c0_i32_0 = arith.constant 0 : i32
    %c0_i32_1 = arith.constant 0 : i32
    return %arg0, %c0_i32, %c0_i32_0 : i32, i32, i32
  }
}

</mosaic_0001>

<llo_original>
// kernel: tpu_custom_call.1
$region0: #{tpu_custom_call.1}
  #allocation0 [shape = 'u32[]', space=smem, size = 0x4, offset = 0x4, fixed_abs, tag = 'smem constant byte address 0x4 - core index']
  #allocation1 [shape = 'u32[72,128]{1,0:T(1,128)}', space=vmem, size = 0x9000, scoped, tag = 'internal scratch']
  %s0 = inlined_call_operand.vmem [shape: f32[8,14,18,1], index: 0, kind: input, shape index: {}]
  %s1 = inlined_call_operand.vmem [shape: f32[3,3,32], index: 1, kind: input, shape index: {}]
  %s2 = inlined_call_operand.vmem [shape: f32[1,32], index: 2, kind: input, shape index: {}]
  %s3 = inlined_call_operand.vmem [shape: f32[3,3,32,64], index: 3, kind: input, shape index: {}]
  %s4 = inlined_call_operand.vmem [shape: f32[1,64], index: 4, kind: input, shape index: {}]
  %s5 = inlined_call_operand.vmem [shape: f32[2,192,64], index: 5, kind: output, shape index: {}]
  %s6 = sld [smem:[#allocation0]]
  $region53: #{tpu_custom_call.1} parent=0
    _
  %s8 = ssub.s32 1, %s6
  %s9 = scalar_select 0, %s8, %s6
  loop: start=0, step=1, limit=4
  $region2: #{tpu_custom_call.1} parent=0 // loop_pre_header
    _
  $region3: #{tpu_custom_call.1} parent=0 // loop_header
    %s11 = sphi 0, %s15
    %p12 = scmp.ge.s32.totalorder %s11, 4
    %s21 = sphi 0, %s23
    %s24 = sphi 0, %s21
    %s25 = sphi 0, %s24
    %s41 = sphi 0, %s25
    %s45 = sphi 0, %s45
    %s47 = sphi 0, %s45
    %s48 = sphi 0, %s47
    %s62 = sphi 0, %s48
    %s66 = sphi 0, %s66
    %s68 = sphi 0, %s66
    %s69 = sphi 0, %s68
    %s83 = sphi 0, %s69
    %s87 = sphi 0, %s87
    %s89 = sphi 0, %s87
    %s90 = sphi 0, %s89
    %s104 = sphi 0, %s90
    %s108 = sphi 0, %s108
    %s110 = sphi 0, %s108
    %s111 = sphi 0, %s110
    %s125 = sphi 0, %s111
    %s131 = sphi 0, %s133
    %s134 = sphi 0, %s131
    %s135 = sphi 0, %s134
    %s151 = sphi 0, %s135
  $region4: #{tpu_custom_call.1} parent=0 // loop_header_branch
    %14 = sbr.rel (%p12) target = $region8
  $region5: #{tpu_custom_call.1} parent=0 // loop_body
    %s16 = ssub.s32 %s11, 1
    %s17 = ssub.s32 %s11, 2
    %s18 = sadd.s32 %s11, 1
    %s19 = ssub.s32 %s11, %s18
    %p20 = scmp.eq.s32.totalorder %s19, 0
    %s22 = sadd.s32 %s21, 1
    %s23 = scalar_select %p20, %s21, %s22
    %p26 = pneg %p20
    %p27 = scmp.eq.s32.totalorder %s11, 1
    %p28 = por %p26, %p27
    %p29 = scmp.ne.s32.totalorder %s21, %s24
    %p30 = scmp.eq.s32.totalorder %s11, 0
    %p31 = por %p29, %p30
    %p32 = scmp.ne.s32.totalorder %s21, %s24
    %p33 = scmp.eq.s32.totalorder %s16, 1
    %p34 = por %p32, %p33
    %p35 = scmp.ne.s32.totalorder %s24, %s25
    %p36 = scmp.eq.s32.totalorder %s16, 0
    %p37 = por %p35, %p36
    %p38 = scmp.ne.s32.totalorder %s24, %s25
    %p39 = scmp.eq.s32.totalorder %s17, 1
    %p40 = por %p38, %p39
    %p42 = scmp.ne.s32.totalorder %s25, %s41
    %p43 = scmp.eq.s32.totalorder %s17, 0
    %p44 = por %p42, %p43
    %s46 = sadd.s32 %s45, 1
    %p49 = scmp.eq.s32.totalorder %s11, 1
    %p50 = scmp.ne.s32.totalorder %s45, %s47
    %p51 = scmp.eq.s32.totalorder %s11, 0
    %p52 = por %p50, %p51
    %p53 = scmp.ne.s32.totalorder %s45, %s47
    %p54 = scmp.eq.s32.totalorder %s16, 1
    %p55 = por %p53, %p54
    %p56 = scmp.ne.s32.totalorder %s47, %s48
    %p57 = scmp.eq.s32.totalorder %s16, 0
    %p58 = por %p56, %p57
    %p59 = scmp.ne.s32.totalorder %s47, %s48
    %p60 = scmp.eq.s32.totalorder %s17, 1
    %p61 = por %p59, %p60
    %p63 = scmp.ne.s32.totalorder %s48, %s62
    %p64 = scmp.eq.s32.totalorder %s17, 0
    %p65 = por %p63, %p64
    %s67 = sadd.s32 %s66, 1
    %p70 = scmp.eq.s32.totalorder %s11, 1
    %p71 = scmp.ne.s32.totalorder %s66, %s68
    %p72 = scmp.eq.s32.totalorder %s11, 0
    %p73 = por %p71, %p72
    %p74 = scmp.ne.s32.totalorder %s66, %s68
    %p75 = scmp.eq.s32.totalorder %s16, 1
    %p76 = por %p74, %p75
    %p77 = scmp.ne.s32.totalorder %s68, %s69
    %p78 = scmp.eq.s32.totalorder %s16, 0
    %p79 = por %p77, %p78
    %p80 = scmp.ne.s32.totalorder %s68, %s69
    %p81 = scmp.eq.s32.totalorder %s17, 1
    %p82 = por %p80, %p81
    %p84 = scmp.ne.s32.totalorder %s69, %s83
    %p85 = scmp.eq.s32.totalorder %s17, 0
    %p86 = por %p84, %p85
    %s88 = sadd.s32 %s87, 1
    %p91 = scmp.eq.s32.totalorder %s11, 1
    %p92 = scmp.ne.s32.totalorder %s87, %s89
    %p93 = scmp.eq.s32.totalorder %s11, 0
    %p94 = por %p92, %p93
    %p95 = scmp.ne.s32.totalorder %s87, %s89
    %p96 = scmp.eq.s32.totalorder %s16, 1
    %p97 = por %p95, %p96
    %p98 = scmp.ne.s32.totalorder %s89, %s90
    %p99 = scmp.eq.s32.totalorder %s16, 0
    %p100 = por %p98, %p99
    %p101 = scmp.ne.s32.totalorder %s89, %s90
    %p102 = scmp.eq.s32.totalorder %s17, 1
    %p103 = por %p101, %p102
    %p105 = scmp.ne.s32.totalorder %s90, %s104
    %p106 = scmp.eq.s32.totalorder %s17, 0
    %p107 = por %p105, %p106
    %s109 = sadd.s32 %s108, 1
    %p112 = scmp.eq.s32.totalorder %s11, 1
    %p113 = scmp.ne.s32.totalorder %s108, %s110
    %p114 = scmp.eq.s32.totalorder %s11, 0
    %p115 = por %p113, %p114
    %p116 = scmp.ne.s32.totalorder %s108, %s110
    %p117 = scmp.eq.s32.totalorder %s16, 1
    %p118 = por %p116, %p117
    %p119 = scmp.ne.s32.totalorder %s110, %s111
    %p120 = scmp.eq.s32.totalorder %s16, 0
    %p121 = por %p119, %p120
    %p122 = scmp.ne.s32.totalorder %s110, %s111
    %p123 = scmp.eq.s32.totalorder %s17, 1
    %p124 = por %p122, %p123
    %p126 = scmp.ne.s32.totalorder %s111, %s125
    %p127 = scmp.eq.s32.totalorder %s17, 0
    %p128 = por %p126, %p127
    %s129 = ssub.s32 %s11, %s18
    %p130 = scmp.eq.s32.totalorder %s129, 0
    %s132 = sadd.s32 %s131, 1
    %s133 = scalar_select %p130, %s131, %s132
    %p136 = pneg %p130
    %p137 = scmp.eq.s32.totalorder %s11, 1
    %p138 = por %p136, %p137
    %p139 = scmp.ne.s32.totalorder %s131, %s134
    %p140 = scmp.eq.s32.totalorder %s11, 0
    %p141 = por %p139, %p140
    %p142 = scmp.ne.s32.totalorder %s131, %s134
    %p143 = scmp.eq.s32.totalorder %s16, 1
    %p144 = por %p142, %p143
    %p145 = scmp.ne.s32.totalorder %s134, %s135
    %p146 = scmp.eq.s32.totalorder %s16, 0
    %p147 = por %p145, %p146
    %p148 = scmp.ne.s32.totalorder %s134, %s135
    %p149 = scmp.eq.s32.totalorder %s17, 1
    %p150 = por %p148, %p149
    %p152 = scmp.ne.s32.totalorder %s135, %s151
    %p153 = scmp.eq.s32.totalorder %s17, 0
    %p154 = por %p152, %p153
    %p155 = scmp.le.s32.totalorder 1, %s11
    %p156 = scmp.lt.s32.totalorder %s11, 3
    %p157 = pnand %p155, %p156
    %p158 = pneg %p157
    // Predicated region
    $region9: #{tpu_custom_call.1} parent=5 // pred_check
      _
    $region10: #{tpu_custom_call.1} parent=5 // pred_check_branch
      %160 = sbr.rel (%p157) target = $region12
    $region11: #{tpu_custom_call.1} parent=5 // pred_region
      %s161 = ssub.s32 %s11, 1
      // Predicated region
      $region13: #{tpu_custom_call.1} parent=11 // pred_check
        %p162 = pneg %p58
      $region14: #{tpu_custom_call.1} parent=11 // pred_check_branch
        %164 = sbr.rel (%p162) target = $region16
      $region15: #{tpu_custom_call.1} parent=11 // pred_region
        _
      $region16: #{tpu_custom_call.1} parent=11 // pred_fallthru
        _
      // Predicated region
      $region17: #{tpu_custom_call.1} parent=11 // pred_check
        %p165 = pneg %p79
      $region18: #{tpu_custom_call.1} parent=11 // pred_check_branch
        %167 = sbr.rel (%p165) target = $region20
      $region19: #{tpu_custom_call.1} parent=11 // pred_region
        _
      $region20: #{tpu_custom_call.1} parent=11 // pred_fallthru
        _
      // Predicated region
      $region21: #{tpu_custom_call.1} parent=11 // pred_check
        %p168 = pneg %p100
      $region22: #{tpu_custom_call.1} parent=11 // pred_check_branch
        %170 = sbr.rel (%p168) target = $region24
      $region23: #{tpu_custom_call.1} parent=11 // pred_region
        _
      $region24: #{tpu_custom_call.1} parent=11 // pred_fallthru
        _
      // Predicated region
      $region25: #{tpu_custom_call.1} parent=11 // pred_check
        %p171 = pneg %p121
      $region26: #{tpu_custom_call.1} parent=11 // pred_check_branch
        %173 = sbr.rel (%p171) target = $region28
      $region27: #{tpu_custom_call.1} parent=11 // pred_region
        _
      $region28: #{tpu_custom_call.1} parent=11 // pred_fallthru
        _
    $region12: #{tpu_custom_call.1} parent=5 // pred_fallthru
      _
    %p174 = scmp.lt.s32.totalorder %s11, 2
    // Predicated region
    $region29: #{tpu_custom_call.1} parent=5 // pred_check
      %p175 = pneg %p174
    $region30: #{tpu_custom_call.1} parent=5 // pred_check_branch
      %177 = sbr.rel (%p175) target = $region32
    $region31: #{tpu_custom_call.1} parent=5 // pred_region
      // Predicated region
      $region33: #{tpu_custom_call.1} parent=31 // pred_check
        %p178 = pneg %p31
      $region34: #{tpu_custom_call.1} parent=31 // pred_check_branch
        %180 = sbr.rel (%p178) target = $region36
      $region35: #{tpu_custom_call.1} parent=31 // pred_region
        %s181 = smul.u32 4, %s11
        %p182 = scmp.lt.s32.totalorder %s181, 7
        %s183 = scalar_select %p182, %s181, 7
        %s184 = smul.addr %s183, 42
        %s185 = smul.addr %s184, 8
        %s186 = scalar_lea.vmem %s0, %s185
        %s187 = smul.u32 4, %s11
      $region36: #{tpu_custom_call.1} parent=31 // pred_fallthru
        _
    $region32: #{tpu_custom_call.1} parent=5 // pred_fallthru
      _
    %p188 = scmp.le.s32.totalorder 1, %s11
    %p189 = scmp.lt.s32.totalorder %s11, 3
    %p190 = pnand %p188, %p189
    %p191 = pneg %p190
    // Predicated region
    $region37: #{tpu_custom_call.1} parent=5 // pred_check
      _
    $region38: #{tpu_custom_call.1} parent=5 // pred_check_branch
      %193 = sbr.rel (%p190) target = $region40
    $region39: #{tpu_custom_call.1} parent=5 // pred_region
      %s194 = ssub.s32 %s11, 1
      %s195 = smul.u32 4, %s16
      %p196 = scmp.lt.s32.totalorder %s195, 7
      %s197 = scalar_select %p196, %s195, 7
      %s198 = smul.addr %s197, 42
      %s199 = smul.addr %s198, 8
      %s200 = scalar_lea.vmem %s0, %s199
      %p201 = pneg %p37
      %p202 = pneg %p34
      %p203 = pneg %p58
      %p204 = pneg %p55
      %p205 = pneg %p79
      %p206 = pneg %p76
      %p207 = pneg %p100
      %p208 = pneg %p97
      %p209 = pneg %p121
      %p210 = pneg %p118
      %p211 = pneg %p147
      %p212 = pneg %p144
      %p213 = scmp.lt.s32.totalorder %s16, 1
      %s214 = scalar_select %p213, %s16, 1
      %s215 = smul.addr %s214, 24
      %s216 = smul.addr %s215, 8
      %s217 = scalar_lea.vmem %s5, %s216
      %s218 = smul.u32 4, %s16
      %p219 = scmp.lt.s32.totalorder %s218, 7
      %s220 = scalar_select %p219, %s218, 7
      %s221 = smul.addr %s220, 42
      %s222 = smul.addr %s221, 8
      %s223 = scalar_lea.vmem %s0, %s222
      %s224 = smul.u32 4, %s16
      %p225 = scmp.lt.s32.totalorder %s16, 1
      %s226 = scalar_select %p225, %s16, 1
      %s227 = smul.addr %s226, 24
      %s228 = smul.addr %s227, 8
      %s229 = scalar_lea.vmem %s5, %s228
      %v230 = vld [vmem:[%s223] sm:$0xff]
      %v231 = vld [vmem:[%s223 + $0x8] sm:$0xff]
      %v232 = vld [vmem:[%s223 + $0x10] sm:$0x3]
      %v233 = vld [vmem:[%s223 + $0x18] sm:$0xff]
      %v234 = vld [vmem:[%s223 + $0x20] sm:$0xff]
      %v235 = vld [vmem:[%s223 + $0x28] sm:$0x3]
      %v236 = vld [vmem:[%s223 + $0x30] sm:$0xff]
      %v237 = vld [vmem:[%s223 + $0x38] sm:$0xff]
      %v238 = vld [vmem:[%s223 + $0x40] sm:$0x3]
      %v239 = vld [vmem:[%s223 + $0x48] sm:$0xff]
      %v240 = vld [vmem:[%s223 + $0x50] sm:$0xff]
      %v241 = vld [vmem:[%s223 + $0x58] sm:$0x3]
      %v242 = vld [vmem:[%s223 + $0x60] sm:$0xff]
      %v243 = vld [vmem:[%s223 + $0x68] sm:$0xff]
      %v244 = vld [vmem:[%s223 + $0x70] sm:$0x3]
      %v245 = vld [vmem:[%s223 + $0x78] sm:$0xff]
      %v246 = vld [vmem:[%s223 + $0x80] sm:$0xff]
      %v247 = vld [vmem:[%s223 + $0x88] sm:$0x3]
      %v248 = vld [vmem:[%s223 + $0x90] sm:$0xff]
      %v249 = vld [vmem:[%s223 + $0x98] sm:$0xff]
      %v250 = vld [vmem:[%s223 + $0xa0] sm:$0x3]
      %v251 = vld [vmem:[%s223 + $0xa8] sm:$0xff]
      %v252 = vld [vmem:[%s223 + $0xb0] sm:$0xff]
      %v253 = vld [vmem:[%s223 + $0xb8] sm:$0x3]
      %v254 = vld [vmem:[%s223 + $0xc0] sm:$0xff]
      %v255 = vld [vmem:[%s223 + $0xc8] sm:$0xff]
      %v256 = vld [vmem:[%s223 + $0xd0] sm:$0x3]
      %v257 = vld [vmem:[%s223 + $0xd8] sm:$0xff]
      %v258 = vld [vmem:[%s223 + $0xe0] sm:$0xff]
      %v259 = vld [vmem:[%s223 + $0xe8] sm:$0x3]
      %v260 = vld [vmem:[%s223 + $0xf0] sm:$0xff]
      %v261 = vld [vmem:[%s223 + $0xf8] sm:$0xff]
      %v262 = vld [vmem:[%s223 + $0x100] sm:$0x3]
      %v263 = vld [vmem:[%s223 + $0x108] sm:$0xff]
      %v264 = vld [vmem:[%s223 + $0x110] sm:$0xff]
      %v265 = vld [vmem:[%s223 + $0x118] sm:$0x3]
      %v266 = vld [vmem:[%s223 + $0x120] sm:$0xff]
      %v267 = vld [vmem:[%s223 + $0x128] sm:$0xff]
      %v268 = vld [vmem:[%s223 + $0x130] sm:$0x3]
      %v269 = vld [vmem:[%s223 + $0x138] sm:$0xff]
      %v270 = vld [vmem:[%s223 + $0x140] sm:$0xff]
      %v271 = vld [vmem:[%s223 + $0x148] sm:$0x3]
      %s272 = scalar_lea.vmem %s223, 336
      %v273 = vld [vmem:[%s272] sm:$0xff]
      %v274 = vld [vmem:[%s272 + $0x8] sm:$0xff]
      %v275 = vld [vmem:[%s272 + $0x10] sm:$0x3]
      %v276 = vld [vmem:[%s272 + $0x18] sm:$0xff]
      %v277 = vld [vmem:[%s272 + $0x20] sm:$0xff]
      %v278 = vld [vmem:[%s272 + $0x28] sm:$0x3]
      %v279 = vld [vmem:[%s272 + $0x30] sm:$0xff]
      %v280 = vld [vmem:[%s272 + $0x38] sm:$0xff]
      %v281 = vld [vmem:[%s272 + $0x40] sm:$0x3]
      %v282 = vld [vmem:[%s272 + $0x48] sm:$0xff]
      %v283 = vld [vmem:[%s272 + $0x50] sm:$0xff]
      %v284 = vld [vmem:[%s272 + $0x58] sm:$0x3]
      %v285 = vld [vmem:[%s272 + $0x60] sm:$0xff]
      %v286 = vld [vmem:[%s272 + $0x68] sm:$0xff]
      %v287 = vld [vmem:[%s272 + $0x70] sm:$0x3]
      %v288 = vld [vmem:[%s272 + $0x78] sm:$0xff]
      %v289 = vld [vmem:[%s272 + $0x80] sm:$0xff]
      %v290 = vld [vmem:[%s272 + $0x88] sm:$0x3]
      %v291 = vld [vmem:[%s272 + $0x90] sm:$0xff]
      %v292 = vld [vmem:[%s272 + $0x98] sm:$0xff]
      %v293 = vld [vmem:[%s272 + $0xa0] sm:$0x3]
      %v294 = vld [vmem:[%s272 + $0xa8] sm:$0xff]
      %v295 = vld [vmem:[%s272 + $0xb0] sm:$0xff]
      %v296 = vld [vmem:[%s272 + $0xb8] sm:$0x3]
      %v297 = vld [vmem:[%s272 + $0xc0] sm:$0xff]
      %v298 = vld [vmem:[%s272 + $0xc8] sm:$0xff]
      %v299 = vld [vmem:[%s272 + $0xd0] sm:$0x3]
      %v300 = vld [vmem:[%s272 + $0xd8] sm:$0xff]
      %v301 = vld [vmem:[%s272 + $0xe0] sm:$0xff]
      %v302 = vld [vmem:[%s272 + $0xe8] sm:$0x3]
      %v303 = vld [vmem:[%s272 + $0xf0] sm:$0xff]
      %v304 = vld [vmem:[%s272 + $0xf8] sm:$0xff]
      %v305 = vld [vmem:[%s272 + $0x100] sm:$0x3]
      %v306 = vld [vmem:[%s272 + $0x108] sm:$0xff]
      %v307 = vld [vmem:[%s272 + $0x110] sm:$0xff]
      %v308 = vld [vmem:[%s272 + $0x118] sm:$0x3]
      %v309 = vld [vmem:[%s272 + $0x120] sm:$0xff]
      %v310 = vld [vmem:[%s272 + $0x128] sm:$0xff]
      %v311 = vld [vmem:[%s272 + $0x130] sm:$0x3]
      %v312 = vld [vmem:[%s272 + $0x138] sm:$0xff]
      %v313 = vld [vmem:[%s272 + $0x140] sm:$0xff]
      %v314 = vld [vmem:[%s272 + $0x148] sm:$0x3]
      %s315 = scalar_lea.vmem %s223, 672
      %v316 = vld [vmem:[%s315] sm:$0xff]
      %v317 = vld [vmem:[%s315 + $0x8] sm:$0xff]
      %v318 = vld [vmem:[%s315 + $0x10] sm:$0x3]
      %v319 = vld [vmem:[%s315 + $0x18] sm:$0xff]
      %v320 = vld [vmem:[%s315 + $0x20] sm:$0xff]
      %v321 = vld [vmem:[%s315 + $0x28] sm:$0x3]
      %v322 = vld [vmem:[%s315 + $0x30] sm:$0xff]
      %v323 = vld [vmem:[%s315 + $0x38] sm:$0xff]
      %v324 = vld [vmem:[%s315 + $0x40] sm:$0x3]
      %v325 = vld [vmem:[%s315 + $0x48] sm:$0xff]
      %v326 = vld [vmem:[%s315 + $0x50] sm:$0xff]
      %v327 = vld [vmem:[%s315 + $0x58] sm:$0x3]
      %v328 = vld [vmem:[%s315 + $0x60] sm:$0xff]
      %v329 = vld [vmem:[%s315 + $0x68] sm:$0xff]
      %v330 = vld [vmem:[%s315 + $0x70] sm:$0x3]
      %v331 = vld [vmem:[%s315 + $0x78] sm:$0xff]
      %v332 = vld [vmem:[%s315 + $0x80] sm:$0xff]
      %v333 = vld [vmem:[%s315 + $0x88] sm:$0x3]
      %v334 = vld [vmem:[%s315 + $0x90] sm:$0xff]
      %v335 = vld [vmem:[%s315 + $0x98] sm:$0xff]
      %v336 = vld [vmem:[%s315 + $0xa0] sm:$0x3]
      %v337 = vld [vmem:[%s315 + $0xa8] sm:$0xff]
      %v338 = vld [vmem:[%s315 + $0xb0] sm:$0xff]
      %v339 = vld [vmem:[%s315 + $0xb8] sm:$0x3]
      %v340 = vld [vmem:[%s315 + $0xc0] sm:$0xff]
      %v341 = vld [vmem:[%s315 + $0xc8] sm:$0xff]
      %v342 = vld [vmem:[%s315 + $0xd0] sm:$0x3]
      %v343 = vld [vmem:[%s315 + $0xd8] sm:$0xff]
      %v344 = vld [vmem:[%s315 + $0xe0] sm:$0xff]
      %v345 = vld [vmem:[%s315 + $0xe8] sm:$0x3]
      %v346 = vld [vmem:[%s315 + $0xf0] sm:$0xff]
      %v347 = vld [vmem:[%s315 + $0xf8] sm:$0xff]
      %v348 = vld [vmem:[%s315 + $0x100] sm:$0x3]
      %v349 = vld [vmem:[%s315 + $0x108] sm:$0xff]
      %v350 = vld [vmem:[%s315 + $0x110] sm:$0xff]
      %v351 = vld [vmem:[%s315 + $0x118] sm:$0x3]
      %v352 = vld [vmem:[%s315 + $0x120] sm:$0xff]
      %v353 = vld [vmem:[%s315 + $0x128] sm:$0xff]
      %v354 = vld [vmem:[%s315 + $0x130] sm:$0x3]
      %v355 = vld [vmem:[%s315 + $0x138] sm:$0xff]
      %v356 = vld [vmem:[%s315 + $0x140] sm:$0xff]
      %v357 = vld [vmem:[%s315 + $0x148] sm:$0x3]
      %s358 = scalar_lea.vmem %s223, 1008
      %v359 = vld [vmem:[%s358] sm:$0xff]
      %v360 = vld [vmem:[%s358 + $0x8] sm:$0xff]
      %v361 = vld [vmem:[%s358 + $0x10] sm:$0x3]
      %v362 = vld [vmem:[%s358 + $0x18] sm:$0xff]
      %v363 = vld [vmem:[%s358 + $0x20] sm:$0xff]
      %v364 = vld [vmem:[%s358 + $0x28] sm:$0x3]
      %v365 = vld [vmem:[%s358 + $0x30] sm:$0xff]
      %v366 = vld [vmem:[%s358 + $0x38] sm:$0xff]
      %v367 = vld [vmem:[%s358 + $0x40] sm:$0x3]
      %v368 = vld [vmem:[%s358 + $0x48] sm:$0xff]
      %v369 = vld [vmem:[%s358 + $0x50] sm:$0xff]
      %v370 = vld [vmem:[%s358 + $0x58] sm:$0x3]
      %v371 = vld [vmem:[%s358 + $0x60] sm:$0xff]
      %v372 = vld [vmem:[%s358 + $0x68] sm:$0xff]
      %v373 = vld [vmem:[%s358 + $0x70] sm:$0x3]
      %v374 = vld [vmem:[%s358 + $0x78] sm:$0xff]
      %v375 = vld [vmem:[%s358 + $0x80] sm:$0xff]
      %v376 = vld [vmem:[%s358 + $0x88] sm:$0x3]
      %v377 = vld [vmem:[%s358 + $0x90] sm:$0xff]
      %v378 = vld [vmem:[%s358 + $0x98] sm:$0xff]
      %v379 = vld [vmem:[%s358 + $0xa0] sm:$0x3]
      %v380 = vld [vmem:[%s358 + $0xa8] sm:$0xff]
      %v381 = vld [vmem:[%s358 + $0xb0] sm:$0xff]
      %v382 = vld [vmem:[%s358 + $0xb8] sm:$0x3]
      %v383 = vld [vmem:[%s358 + $0xc0] sm:$0xff]
      %v384 = vld [vmem:[%s358 + $0xc8] sm:$0xff]
      %v385 = vld [vmem:[%s358 + $0xd0] sm:$0x3]
      %v386 = vld [vmem:[%s358 + $0xd8] sm:$0xff]
      %v387 = vld [vmem:[%s358 + $0xe0] sm:$0xff]
      %v388 = vld [vmem:[%s358 + $0xe8] sm:$0x3]
      %v389 = vld [vmem:[%s358 + $0xf0] sm:$0xff]
      %v390 = vld [vmem:[%s358 + $0xf8] sm:$0xff]
      %v391 = vld [vmem:[%s358 + $0x100] sm:$0x3]
      %v392 = vld [vmem:[%s358 + $0x108] sm:$0xff]
      %v393 = vld [vmem:[%s358 + $0x110] sm:$0xff]
      %v394 = vld [vmem:[%s358 + $0x118] sm:$0x3]
      %v395 = vld [vmem:[%s358 + $0x120] sm:$0xff]
      %v396 = vld [vmem:[%s358 + $0x128] sm:$0xff]
      %v397 = vld [vmem:[%s358 + $0x130] sm:$0x3]
      %v398 = vld [vmem:[%s358 + $0x138] sm:$0xff]
      %v399 = vld [vmem:[%s358 + $0x140] sm:$0xff]
      %v400 = vld [vmem:[%s358 + $0x148] sm:$0x3]
      %v401 = vld [vmem:[%s2] sm:$0x1]
      %v402 = vld [vmem:[%s1] sm:$0x1]
      %404 = vset.pattern.permute.xlu0 0
      %405 = vperm.xlu0 %404, %v230
      %v406 = vpop.permute.xlu0 %405
      %409 = vset.pattern.permute.xlu0 0
      %410 = vperm.xlu0 %409, %v231
      %v411 = vpop.permute.xlu0 %410
      %414 = vset.pattern.permute.xlu0 0
      %415 = vperm.xlu0 %414, %v232
      %v416 = vpop.permute.xlu0 %415
      %419 = vset.pattern.permute.xlu0 0
      %420 = vperm.xlu0 %419, %v233
      %v421 = vpop.permute.xlu0 %420
      %424 = vset.pattern.permute.xlu0 0
      %425 = vperm.xlu0 %424, %v234
      %v426 = vpop.permute.xlu0 %425
      %429 = vset.pattern.permute.xlu0 0
      %430 = vperm.xlu0 %429, %v235
      %v431 = vpop.permute.xlu0 %430
      %434 = vset.pattern.permute.xlu0 0
      %435 = vperm.xlu0 %434, %v236
      %v436 = vpop.permute.xlu0 %435
      %439 = vset.pattern.permute.xlu0 0
      %440 = vperm.xlu0 %439, %v237
      %v441 = vpop.permute.xlu0 %440
      %444 = vset.pattern.permute.xlu0 0
      %445 = vperm.xlu0 %444, %v238
      %v446 = vpop.permute.xlu0 %445
      %449 = vset.pattern.permute.xlu0 0
      %450 = vperm.xlu0 %449, %v239
      %v451 = vpop.permute.xlu0 %450
      %454 = vset.pattern.permute.xlu0 0
      %455 = vperm.xlu0 %454, %v240
      %v456 = vpop.permute.xlu0 %455
      %459 = vset.pattern.permute.xlu0 0
      %460 = vperm.xlu0 %459, %v241
      %v461 = vpop.permute.xlu0 %460
      %464 = vset.pattern.permute.xlu0 0
      %465 = vperm.xlu0 %464, %v242
      %v466 = vpop.permute.xlu0 %465
      %469 = vset.pattern.permute.xlu0 0
      %470 = vperm.xlu0 %469, %v243
      %v471 = vpop.permute.xlu0 %470
      %474 = vset.pattern.permute.xlu0 0
      %475 = vperm.xlu0 %474, %v244
      %v476 = vpop.permute.xlu0 %475
      %479 = vset.pattern.permute.xlu0 0
      %480 = vperm.xlu0 %479, %v245
      %v481 = vpop.permute.xlu0 %480
      %484 = vset.pattern.permute.xlu0 0
      %485 = vperm.xlu0 %484, %v246
      %v486 = vpop.permute.xlu0 %485
      %489 = vset.pattern.permute.xlu0 0
      %490 = vperm.xlu0 %489, %v247
      %v491 = vpop.permute.xlu0 %490
      %494 = vset.pattern.permute.xlu0 0
      %495 = vperm.xlu0 %494, %v248
      %v496 = vpop.permute.xlu0 %495
      %499 = vset.pattern.permute.xlu0 0
      %500 = vperm.xlu0 %499, %v249
      %v501 = vpop.permute.xlu0 %500
      %504 = vset.pattern.permute.xlu0 0
      %505 = vperm.xlu0 %504, %v250
      %v506 = vpop.permute.xlu0 %505
      %509 = vset.pattern.permute.xlu0 0
      %510 = vperm.xlu0 %509, %v251
      %v511 = vpop.permute.xlu0 %510
      %514 = vset.pattern.permute.xlu0 0
      %515 = vperm.xlu0 %514, %v252
      %v516 = vpop.permute.xlu0 %515
      %519 = vset.pattern.permute.xlu0 0
      %520 = vperm.xlu0 %519, %v253
      %v521 = vpop.permute.xlu0 %520
      %524 = vset.pattern.permute.xlu0 0
      %525 = vperm.xlu0 %524, %v254
      %v526 = vpop.permute.xlu0 %525
      %529 = vset.pattern.permute.xlu0 0
      %530 = vperm.xlu0 %529, %v255
      %v531 = vpop.permute.xlu0 %530
      %534 = vset.pattern.permute.xlu0 0
      %535 = vperm.xlu0 %534, %v256
      %v536 = vpop.permute.xlu0 %535
      %539 = vset.pattern.permute.xlu0 0
      %540 = vperm.xlu0 %539, %v257
      %v541 = vpop.permute.xlu0 %540
      %544 = vset.pattern.permute.xlu0 0
      %545 = vperm.xlu0 %544, %v258
      %v546 = vpop.permute.xlu0 %545
      %549 = vset.pattern.permute.xlu0 0
      %550 = vperm.xlu0 %549, %v259
      %v551 = vpop.permute.xlu0 %550
      %554 = vset.pattern.permute.xlu0 0
      %555 = vperm.xlu0 %554, %v260
      %v556 = vpop.permute.xlu0 %555
      %559 = vset.pattern.permute.xlu0 0
      %560 = vperm.xlu0 %559, %v261
      %v561 = vpop.permute.xlu0 %560
      %564 = vset.pattern.permute.xlu0 0
      %565 = vperm.xlu0 %564, %v262
      %v566 = vpop.permute.xlu0 %565
      %569 = vset.pattern.permute.xlu0 0
      %570 = vperm.xlu0 %569, %v263
      %v571 = vpop.permute.xlu0 %570
      %574 = vset.pattern.permute.xlu0 0
      %575 = vperm.xlu0 %574, %v264
      %v576 = vpop.permute.xlu0 %575
      %579 = vset.pattern.permute.xlu0 0
      %580 = vperm.xlu0 %579, %v265
      %v581 = vpop.permute.xlu0 %580
      %584 = vset.pattern.permute.xlu0 0
      %585 = vperm.xlu0 %584, %v266
      %v586 = vpop.permute.xlu0 %585
      %589 = vset.pattern.permute.xlu0 0
      %590 = vperm.xlu0 %589, %v267
      %v591 = vpop.permute.xlu0 %590
      %594 = vset.pattern.permute.xlu0 0
      %595 = vperm.xlu0 %594, %v268
      %v596 = vpop.permute.xlu0 %595
      %v598 = vperm.slane %v402, 0
      %v599 = vmul.f32 %v406, %v598
      %v600 = vmul.f32 %v411, %v598
      %v601 = vmul.f32 %v416, %v598
      %v602 = vmul.f32 %v421, %v598
      %v603 = vmul.f32 %v426, %v598
      %v604 = vmul.f32 %v431, %v598
      %v605 = vmul.f32 %v436, %v598
      %v606 = vmul.f32 %v441, %v598
      %v607 = vmul.f32 %v446, %v598
      %v608 = vmul.f32 %v451, %v598
      %v609 = vmul.f32 %v456, %v598
      %v610 = vmul.f32 %v461, %v598
      %v611 = vmul.f32 %v466, %v598
      %v612 = vmul.f32 %v471, %v598
      %v613 = vmul.f32 %v476, %v598
      %v614 = vmul.f32 %v481, %v598
      %v615 = vmul.f32 %v486, %v598
      %v616 = vmul.f32 %v491, %v598
      %v617 = vmul.f32 %v496, %v598
      %v618 = vmul.f32 %v501, %v598
      %v619 = vmul.f32 %v506, %v598
      %v620 = vmul.f32 %v511, %v598
      %v621 = vmul.f32 %v516, %v598
      %v622 = vmul.f32 %v521, %v598
      %v623 = vmul.f32 %v526, %v598
      %v624 = vmul.f32 %v531, %v598
      %v625 = vmul.f32 %v536, %v598
      %v626 = vmul.f32 %v541, %v598
      %v627 = vmul.f32 %v546, %v598
      %v628 = vmul.f32 %v551, %v598
      %v629 = vmul.f32 %v556, %v598
      %v630 = vmul.f32 %v561, %v598
      %v631 = vmul.f32 %v566, %v598
      %v632 = vmul.f32 %v571, %v598
      %v633 = vmul.f32 %v576, %v598
      %v634 = vmul.f32 %v581, %v598
      %v635 = vmul.f32 %v586, %v598
      %v636 = vmul.f32 %v591, %v598
      %v637 = vmul.f32 %v596, %v598
      %v638 = vadd.f32 %v599, 0.0
      %v639 = vadd.f32 %v600, 0.0
      %v640 = vadd.f32 %v601, 0.0
      %v641 = vadd.f32 %v602, 0.0
      %v642 = vadd.f32 %v603, 0.0
      %v643 = vadd.f32 %v604, 0.0
      %v644 = vadd.f32 %v605, 0.0
      %v645 = vadd.f32 %v606, 0.0
      %v646 = vadd.f32 %v607, 0.0
      %v647 = vadd.f32 %v608, 0.0
      %v648 = vadd.f32 %v609, 0.0
      %v649 = vadd.f32 %v610, 0.0
      %v650 = vadd.f32 %v611, 0.0
      %v651 = vadd.f32 %v612, 0.0
      %v652 = vadd.f32 %v613, 0.0
      %v653 = vadd.f32 %v614, 0.0
      %v654 = vadd.f32 %v615, 0.0
      %v655 = vadd.f32 %v616, 0.0
      %v656 = vadd.f32 %v617, 0.0
      %v657 = vadd.f32 %v618, 0.0
      %v658 = vadd.f32 %v619, 0.0
      %v659 = vadd.f32 %v620, 0.0
      %v660 = vadd.f32 %v621, 0.0
      %v661 = vadd.f32 %v622, 0.0
      %v662 = vadd.f32 %v623, 0.0
      %v663 = vadd.f32 %v624, 0.0
      %v664 = vadd.f32 %v625, 0.0
      %v665 = vadd.f32 %v626, 0.0
      %v666 = vadd.f32 %v627, 0.0
      %v667 = vadd.f32 %v628, 0.0
      %v668 = vadd.f32 %v629, 0.0
      %v669 = vadd.f32 %v630, 0.0
      %v670 = vadd.f32 %v631, 0.0
      %v671 = vadd.f32 %v632, 0.0
      %v672 = vadd.f32 %v633, 0.0
      %v673 = vadd.f32 %v634, 0.0
      %v674 = vadd.f32 %v635, 0.0
      %v675 = vadd.f32 %v636, 0.0
      %v676 = vadd.f32 %v637, 0.0
      %v677 = vld [vmem:[%s1 + $0x1] sm:$0x1]
      %679 = vset.pattern.permute.xlu0 0
      %680 = vperm.xlu0 %679, %v273
      %v681 = vpop.permute.xlu0 %680
      %684 = vset.pattern.permute.xlu0 0
      %685 = vperm.xlu0 %684, %v274
      %v686 = vpop.permute.xlu0 %685
      %689 = vset.pattern.permute.xlu0 0
      %690 = vperm.xlu0 %689, %v275
      %v691 = vpop.permute.xlu0 %690
      %694 = vset.pattern.permute.xlu0 0
      %695 = vperm.xlu0 %694, %v276
      %v696 = vpop.permute.xlu0 %695
      %699 = vset.pattern.permute.xlu0 0
      %700 = vperm.xlu0 %699, %v277
      %v701 = vpop.permute.xlu0 %700
      %704 = vset.pattern.permute.xlu0 0
      %705 = vperm.xlu0 %704, %v278
      %v706 = vpop.permute.xlu0 %705
      %709 = vset.pattern.permute.xlu0 0
      %710 = vperm.xlu0 %709, %v279
      %v711 = vpop.permute.xlu0 %710
      %714 = vset.pattern.permute.xlu0 0
      %715 = vperm.xlu0 %714, %v280
      %v716 = vpop.permute.xlu0 %715
      %719 = vset.pattern.permute.xlu0 0
      %720 = vperm.xlu0 %719, %v281
      %v721 = vpop.permute.xlu0 %720
      %724 = vset.pattern.permute.xlu0 0
      %725 = vperm.xlu0 %724, %v282
      %v726 = vpop.permute.xlu0 %725
      %729 = vset.pattern.permute.xlu0 0
      %730 = vperm.xlu0 %729, %v283
      %v731 = vpop.permute.xlu0 %730
      %734 = vset.pattern.permute.xlu0 0
      %735 = vperm.xlu0 %734, %v284
      %v736 = vpop.permute.xlu0 %735
      %739 = vset.pattern.permute.xlu0 0
      %740 = vperm.xlu0 %739, %v285
      %v741 = vpop.permute.xlu0 %740
      %744 = vset.pattern.permute.xlu0 0
      %745 = vperm.xlu0 %744, %v286
      %v746 = vpop.permute.xlu0 %745
      %749 = vset.pattern.permute.xlu0 0
      %750 = vperm.xlu0 %749, %v287
      %v751 = vpop.permute.xlu0 %750
      %754 = vset.pattern.permute.xlu0 0
      %755 = vperm.xlu0 %754, %v288
      %v756 = vpop.permute.xlu0 %755
      %759 = vset.pattern.permute.xlu0 0
      %760 = vperm.xlu0 %759, %v289
      %v761 = vpop.permute.xlu0 %760
      %764 = vset.pattern.permute.xlu0 0
      %765 = vperm.xlu0 %764, %v290
      %v766 = vpop.permute.xlu0 %765
      %769 = vset.pattern.permute.xlu0 0
      %770 = vperm.xlu0 %769, %v291
      %v771 = vpop.permute.xlu0 %770
      %774 = vset.pattern.permute.xlu0 0
      %775 = vperm.xlu0 %774, %v292
      %v776 = vpop.permute.xlu0 %775
      %779 = vset.pattern.permute.xlu0 0
      %780 = vperm.xlu0 %779, %v293
      %v781 = vpop.permute.xlu0 %780
      %784 = vset.pattern.permute.xlu0 0
      %785 = vperm.xlu0 %784, %v294
      %v786 = vpop.permute.xlu0 %785
      %789 = vset.pattern.permute.xlu0 0
      %790 = vperm.xlu0 %789, %v295
      %v791 = vpop.permute.xlu0 %790
      %794 = vset.pattern.permute.xlu0 0
      %795 = vperm.xlu0 %794, %v296
      %v796 = vpop.permute.xlu0 %795
      %799 = vset.pattern.permute.xlu0 0
      %800 = vperm.xlu0 %799, %v297
      %v801 = vpop.permute.xlu0 %800
      %804 = vset.pattern.permute.xlu0 0
      %805 = vperm.xlu0 %804, %v298
      %v806 = vpop.permute.xlu0 %805
      %809 = vset.pattern.permute.xlu0 0
      %810 = vperm.xlu0 %809, %v299
      %v811 = vpop.permute.xlu0 %810
      %814 = vset.pattern.permute.xlu0 0
      %815 = vperm.xlu0 %814, %v300
      %v816 = vpop.permute.xlu0 %815
      %819 = vset.pattern.permute.xlu0 0
      %820 = vperm.xlu0 %819, %v301
      %v821 = vpop.permute.xlu0 %820
      %824 = vset.pattern.permute.xlu0 0
      %825 = vperm.xlu0 %824, %v302
      %v826 = vpop.permute.xlu0 %825
      %829 = vset.pattern.permute.xlu0 0
      %830 = vperm.xlu0 %829, %v303
      %v831 = vpop.permute.xlu0 %830
      %834 = vset.pattern.permute.xlu0 0
      %835 = vperm.xlu0 %834, %v304
      %v836 = vpop.permute.xlu0 %835
      %839 = vset.pattern.permute.xlu0 0
      %840 = vperm.xlu0 %839, %v305
      %v841 = vpop.permute.xlu0 %840
      %844 = vset.pattern.permute.xlu0 0
      %845 = vperm.xlu0 %844, %v306
      %v846 = vpop.permute.xlu0 %845
      %849 = vset.pattern.permute.xlu0 0
      %850 = vperm.xlu0 %849, %v307
      %v851 = vpop.permute.xlu0 %850
      %854 = vset.pattern.permute.xlu0 0
      %855 = vperm.xlu0 %854, %v308
      %v856 = vpop.permute.xlu0 %855
      %859 = vset.pattern.permute.xlu0 0
      %860 = vperm.xlu0 %859, %v309
      %v861 = vpop.permute.xlu0 %860
      %864 = vset.pattern.permute.xlu0 0
      %865 = vperm.xlu0 %864, %v310
      %v866 = vpop.permute.xlu0 %865
      %869 = vset.pattern.permute.xlu0 0
      %870 = vperm.xlu0 %869, %v311
      %v871 = vpop.permute.xlu0 %870
      %v873 = vperm.slane %v677, 0
      %v874 = vmul.f32 %v681, %v873
      %v875 = vmul.f32 %v686, %v873
      %v876 = vmul.f32 %v691, %v873
      %v877 = vmul.f32 %v696, %v873
      %v878 = vmul.f32 %v701, %v873
      %v879 = vmul.f32 %v706, %v873
      %v880 = vmul.f32 %v711, %v873
      %v881 = vmul.f32 %v716, %v873
      %v882 = vmul.f32 %v721, %v873
      %v883 = vmul.f32 %v726, %v873
      %v884 = vmul.f32 %v731, %v873
      %v885 = vmul.f32 %v736, %v873
      %v886 = vmul.f32 %v741, %v873
      %v887 = vmul.f32 %v746, %v873
      %v888 = vmul.f32 %v751, %v873
      %v889 = vmul.f32 %v756, %v873
      %v890 = vmul.f32 %v761, %v873
      %v891 = vmul.f32 %v766, %v873
      %v892 = vmul.f32 %v771, %v873
      %v893 = vmul.f32 %v776, %v873
      %v894 = vmul.f32 %v781, %v873
      %v895 = vmul.f32 %v786, %v873
      %v896 = vmul.f32 %v791, %v873
      %v897 = vmul.f32 %v796, %v873
      %v898 = vmul.f32 %v801, %v873
      %v899 = vmul.f32 %v806, %v873
      %v900 = vmul.f32 %v811, %v873
      %v901 = vmul.f32 %v816, %v873
      %v902 = vmul.f32 %v821, %v873
      %v903 = vmul.f32 %v826, %v873
      %v904 = vmul.f32 %v831, %v873
      %v905 = vmul.f32 %v836, %v873
      %v906 = vmul.f32 %v841, %v873
      %v907 = vmul.f32 %v846, %v873
      %v908 = vmul.f32 %v851, %v873
      %v909 = vmul.f32 %v856, %v873
      %v910 = vmul.f32 %v861, %v873
      %v911 = vmul.f32 %v866, %v873
      %v912 = vmul.f32 %v871, %v873
      %v913 = vadd.f32 %v638, %v874
      %v914 = vadd.f32 %v639, %v875
      %v915 = vadd.f32 %v640, %v876
      %v916 = vadd.f32 %v641, %v877
      %v917 = vadd.f32 %v642, %v878
      %v918 = vadd.f32 %v643, %v879
      %v919 = vadd.f32 %v644, %v880
      %v920 = vadd.f32 %v645, %v881
      %v921 = vadd.f32 %v646, %v882
      %v922 = vadd.f32 %v647, %v883
      %v923 = vadd.f32 %v648, %v884
      %v924 = vadd.f32 %v649, %v885
      %v925 = vadd.f32 %v650, %v886
      %v926 = vadd.f32 %v651, %v887
      %v927 = vadd.f32 %v652, %v888
      %v928 = vadd.f32 %v653, %v889
      %v929 = vadd.f32 %v654, %v890
      %v930 = vadd.f32 %v655, %v891
      %v931 = vadd.f32 %v656, %v892
      %v932 = vadd.f32 %v657, %v893
      %v933 = vadd.f32 %v658, %v894
      %v934 = vadd.f32 %v659, %v895
      %v935 = vadd.f32 %v660, %v896
      %v936 = vadd.f32 %v661, %v897
      %v937 = vadd.f32 %v662, %v898
      %v938 = vadd.f32 %v663, %v899
      %v939 = vadd.f32 %v664, %v900
      %v940 = vadd.f32 %v665, %v901
      %v941 = vadd.f32 %v666, %v902
      %v942 = vadd.f32 %v667, %v903
      %v943 = vadd.f32 %v668, %v904
      %v944 = vadd.f32 %v669, %v905
      %v945 = vadd.f32 %v670, %v906
      %v946 = vadd.f32 %v671, %v907
      %v947 = vadd.f32 %v672, %v908
      %v948 = vadd.f32 %v673, %v909
      %v949 = vadd.f32 %v674, %v910
      %v950 = vadd.f32 %v675, %v911
      %v951 = vadd.f32 %v676, %v912
      %v952 = vld [vmem:[%s1 + $0x2] sm:$0x1]
      %v953 = vperm.slane %v952, 0
      %v954 = vmul.f32 %v406, %v953
      %v955 = vmul.f32 %v411, %v953
      %v956 = vmul.f32 %v416, %v953
      %v957 = vmul.f32 %v421, %v953
      %v958 = vmul.f32 %v426, %v953
      %v959 = vmul.f32 %v431, %v953
      %v960 = vmul.f32 %v436, %v953
      %v961 = vmul.f32 %v441, %v953
      %v962 = vmul.f32 %v446, %v953
      %v963 = vmul.f32 %v451, %v953
      %v964 = vmul.f32 %v456, %v953
      %v965 = vmul.f32 %v461, %v953
      %v966 = vmul.f32 %v466, %v953
      %v967 = vmul.f32 %v471, %v953
      %v968 = vmul.f32 %v476, %v953
      %v969 = vmul.f32 %v481, %v953
      %v970 = vmul.f32 %v486, %v953
      %v971 = vmul.f32 %v491, %v953
      %v972 = vmul.f32 %v496, %v953
      %v973 = vmul.f32 %v501, %v953
      %v974 = vmul.f32 %v506, %v953
      %v975 = vmul.f32 %v511, %v953
      %v976 = vmul.f32 %v516, %v953
      %v977 = vmul.f32 %v521, %v953
      %v978 = vmul.f32 %v526, %v953
      %v979 = vmul.f32 %v531, %v953
      %v980 = vmul.f32 %v536, %v953
      %v981 = vmul.f32 %v541, %v953
      %v982 = vmul.f32 %v546, %v953
      %v983 = vmul.f32 %v551, %v953
      %v984 = vmul.f32 %v556, %v953
      %v985 = vmul.f32 %v561, %v953
      %v986 = vmul.f32 %v566, %v953
      %v987 = vmul.f32 %v571, %v953
      %v988 = vmul.f32 %v576, %v953
      %v989 = vmul.f32 %v581, %v953
      %v990 = vmul.f32 %v586, %v953
      %v991 = vmul.f32 %v591, %v953
      %v992 = vmul.f32 %v596, %v953
      %vm1032 = vcmask 1046528
      %v1033 = vrot.slane %v954, 1
      %v1034 = vrot.slane %v955, 1
      %v1035 = vsel %vm1032, %v1033, %v1034
      %v1036 = vrot.slane %v956, 1
      %v1037 = vsel %vm1032, %v1034, %v1036
      %v1038 = vrot.slane %v957, 1
      %v1039 = vrot.slane %v958, 1
      %v1040 = vsel %vm1032, %v1038, %v1039
      %v1041 = vrot.slane %v959, 1
      %v1042 = vsel %vm1032, %v1039, %v1041
      %v1043 = vrot.slane %v960, 1
      %v1044 = vrot.slane %v961, 1
      %v1045 = vsel %vm1032, %v1043, %v1044
      %v1046 = vrot.slane %v962, 1
      %v1047 = vsel %vm1032, %v1044, %v1046
      %v1048 = vrot.slane %v963, 1
      %v1049 = vrot.slane %v964, 1
      %v1050 = vsel %vm1032, %v1048, %v1049
      %v1051 = vrot.slane %v965, 1
      %v1052 = vsel %vm1032, %v1049, %v1051
      %v1053 = vrot.slane %v966, 1
      %v1054 = vrot.slane %v967, 1
      %v1055 = vsel %vm1032, %v1053, %v1054
      %v1056 = vrot.slane %v968, 1
      %v1057 = vsel %vm1032, %v1054, %v1056
      %v1058 = vrot.slane %v969, 1
      %v1059 = vrot.slane %v970, 1
      %v1060 = vsel %vm1032, %v1058, %v1059
      %v1061 = vrot.slane %v971, 1
      %v1062 = vsel %vm1032, %v1059, %v1061
      %v1063 = vrot.slane %v972, 1
      %v1064 = vrot.slane %v973, 1
      %v1065 = vsel %vm1032, %v1063, %v1064
      %v1066 = vrot.slane %v974, 1
      %v1067 = vsel %vm1032, %v1064, %v1066
      %v1068 = vrot.slane %v975, 1
      %v1069 = vrot.slane %v976, 1
      %v1070 = vsel %vm1032, %v1068, %v1069
      %v1071 = vrot.slane %v977, 1
      %v1072 = vsel %vm1032, %v1069, %v1071
      %v1073 = vrot.slane %v978, 1
      %v1074 = vrot.slane %v979, 1
      %v1075 = vsel %vm1032, %v1073, %v1074
      %v1076 = vrot.slane %v980, 1
      %v1077 = vsel %vm1032, %v1074, %v1076
      %v1078 = vrot.slane %v981, 1
      %v1079 = vrot.slane %v982, 1
      %v1080 = vsel %vm1032, %v1078, %v1079
      %v1081 = vrot.slane %v983, 1
      %v1082 = vsel %vm1032, %v1079, %v1081
      %v1083 = vrot.slane %v984, 1
      %v1084 = vrot.slane %v985, 1
      %v1085 = vsel %vm1032, %v1083, %v1084
      %v1086 = vrot.slane %v986, 1
      %v1087 = vsel %vm1032, %v1084, %v1086
      %v1088 = vrot.slane %v987, 1
      %v1089 = vrot.slane %v988, 1
      %v1090 = vsel %vm1032, %v1088, %v1089
      %v1091 = vrot.slane %v989, 1
      %v1092 = vsel %vm1032, %v1089, %v1091
      %v1093 = vrot.slane %v990, 1
      %v1094 = vrot.slane %v991, 1
      %v1095 = vsel %vm1032, %v1093, %v1094
      %v1096 = vrot.slane %v992, 1
      %v1097 = vsel %vm1032, %v1094, %v1096
      %v1137 = vadd.f32 %v913, %v1035
      %v1138 = vadd.f32 %v914, %v1037
      %v1139 = vadd.f32 %v915, %v1036
      %v1140 = vadd.f32 %v916, %v1040
      %v1141 = vadd.f32 %v917, %v1042
      %v1142 = vadd.f32 %v918, %v1041
      %v1143 = vadd.f32 %v919, %v1045
      %v1144 = vadd.f32 %v920, %v1047
      %v1145 = vadd.f32 %v921, %v1046
      %v1146 = vadd.f32 %v922, %v1050
      %v1147 = vadd.f32 %v923, %v1052
      %v1148 = vadd.f32 %v924, %v1051
      %v1149 = vadd.f32 %v925, %v1055
      %v1150 = vadd.f32 %v926, %v1057
      %v1151 = vadd.f32 %v927, %v1056
      %v1152 = vadd.f32 %v928, %v1060
      %v1153 = vadd.f32 %v929, %v1062
      %v1154 = vadd.f32 %v930, %v1061
      %v1155 = vadd.f32 %v931, %v1065
      %v1156 = vadd.f32 %v932, %v1067
      %v1157 = vadd.f32 %v933, %v1066
      %v1158 = vadd.f32 %v934, %v1070
      %v1159 = vadd.f32 %v935, %v1072
      %v1160 = vadd.f32 %v936, %v1071
      %v1161 = vadd.f32 %v937, %v1075
      %v1162 = vadd.f32 %v938, %v1077
      %v1163 = vadd.f32 %v939, %v1076
      %v1164 = vadd.f32 %v940, %v1080
      %v1165 = vadd.f32 %v941, %v1082
      %v1166 = vadd.f32 %v942, %v1081
      %v1167 = vadd.f32 %v943, %v1085
      %v1168 = vadd.f32 %v944, %v1087
      %v1169 = vadd.f32 %v945, %v1086
      %v1170 = vadd.f32 %v946, %v1090
      %v1171 = vadd.f32 %v947, %v1092
      %v1172 = vadd.f32 %v948, %v1091
      %v1173 = vadd.f32 %v949, %v1095
      %v1174 = vadd.f32 %v950, %v1097
      %v1175 = vadd.f32 %v951, %v1096
      %s1176 = scalar_lea.vmem %s1, 4
      %v1177 = vld [vmem:[%s1176] sm:$0x1]
      %1179 = vset.pattern.permute.xlu0 0
      %1180 = vperm.xlu0 %1179, %v316
      %v1181 = vpop.permute.xlu0 %1180
      %1184 = vset.pattern.permute.xlu0 0
      %1185 = vperm.xlu0 %1184, %v317
      %v1186 = vpop.permute.xlu0 %1185
      %1189 = vset.pattern.permute.xlu0 0
      %1190 = vperm.xlu0 %1189, %v318
      %v1191 = vpop.permute.xlu0 %1190
      %1194 = vset.pattern.permute.xlu0 0
      %1195 = vperm.xlu0 %1194, %v319
      %v1196 = vpop.permute.xlu0 %1195
      %1199 = vset.pattern.permute.xlu0 0
      %1200 = vperm.xlu0 %1199, %v320
      %v1201 = vpop.permute.xlu0 %1200
      %1204 = vset.pattern.permute.xlu0 0
      %1205 = vperm.xlu0 %1204, %v321
      %v1206 = vpop.permute.xlu0 %1205
      %1209 = vset.pattern.permute.xlu0 0
      %1210 = vperm.xlu0 %1209, %v322
      %v1211 = vpop.permute.xlu0 %1210
      %1214 = vset.pattern.permute.xlu0 0
      %1215 = vperm.xlu0 %1214, %v323
      %v1216 = vpop.permute.xlu0 %1215
      %1219 = vset.pattern.permute.xlu0 0
      %1220 = vperm.xlu0 %1219, %v324
      %v1221 = vpop.permute.xlu0 %1220
      %1224 = vset.pattern.permute.xlu0 0
      %1225 = vperm.xlu0 %1224, %v325
      %v1226 = vpop.permute.xlu0 %1225
      %1229 = vset.pattern.permute.xlu0 0
      %1230 = vperm.xlu0 %1229, %v326
      %v1231 = vpop.permute.xlu0 %1230
      %1234 = vset.pattern.permute.xlu0 0
      %1235 = vperm.xlu0 %1234, %v327
      %v1236 = vpop.permute.xlu0 %1235
      %1239 = vset.pattern.permute.xlu0 0
      %1240 = vperm.xlu0 %1239, %v328
      %v1241 = vpop.permute.xlu0 %1240
      %1244 = vset.pattern.permute.xlu0 0
      %1245 = vperm.xlu0 %1244, %v329
      %v1246 = vpop.permute.xlu0 %1245
      %1249 = vset.pattern.permute.xlu0 0
      %1250 = vperm.xlu0 %1249, %v330
      %v1251 = vpop.permute.xlu0 %1250
      %1254 = vset.pattern.permute.xlu0 0
      %1255 = vperm.xlu0 %1254, %v331
      %v1256 = vpop.permute.xlu0 %1255
      %1259 = vset.pattern.permute.xlu0 0
      %1260 = vperm.xlu0 %1259, %v332
      %v1261 = vpop.permute.xlu0 %1260
      %1264 = vset.pattern.permute.xlu0 0
      %1265 = vperm.xlu0 %1264, %v333
      %v1266 = vpop.permute.xlu0 %1265
      %1269 = vset.pattern.permute.xlu0 0
      %1270 = vperm.xlu0 %1269, %v334
      %v1271 = vpop.permute.xlu0 %1270
      %1274 = vset.pattern.permute.xlu0 0
      %1275 = vperm.xlu0 %1274, %v335
      %v1276 = vpop.permute.xlu0 %1275
      %1279 = vset.pattern.permute.xlu0 0
      %1280 = vperm.xlu0 %1279, %v336
      %v1281 = vpop.permute.xlu0 %1280
      %1284 = vset.pattern.permute.xlu0 0
      %1285 = vperm.xlu0 %1284, %v337
      %v1286 = vpop.permute.xlu0 %1285
      %1289 = vset.pattern.permute.xlu0 0
      %1290 = vperm.xlu0 %1289, %v338
      %v1291 = vpop.permute.xlu0 %1290
      %1294 = vset.pattern.permute.xlu0 0
      %1295 = vperm.xlu0 %1294, %v339
      %v1296 = vpop.permute.xlu0 %1295
      %1299 = vset.pattern.permute.xlu0 0
      %1300 = vperm.xlu0 %1299, %v340
      %v1301 = vpop.permute.xlu0 %1300
      %1304 = vset.pattern.permute.xlu0 0
      %1305 = vperm.xlu0 %1304, %v341
      %v1306 = vpop.permute.xlu0 %1305
      %1309 = vset.pattern.permute.xlu0 0
      %1310 = vperm.xlu0 %1309, %v342
      %v1311 = vpop.permute.xlu0 %1310
      %1314 = vset.pattern.permute.xlu0 0
      %1315 = vperm.xlu0 %1314, %v343
      %v1316 = vpop.permute.xlu0 %1315
      %1319 = vset.pattern.permute.xlu0 0
      %1320 = vperm.xlu0 %1319, %v344
      %v1321 = vpop.permute.xlu0 %1320
      %1324 = vset.pattern.permute.xlu0 0
      %1325 = vperm.xlu0 %1324, %v345
      %v1326 = vpop.permute.xlu0 %1325
      %1329 = vset.pattern.permute.xlu0 0
      %1330 = vperm.xlu0 %1329, %v346
      %v1331 = vpop.permute.xlu0 %1330
      %1334 = vset.pattern.permute.xlu0 0
      %1335 = vperm.xlu0 %1334, %v347
      %v1336 = vpop.permute.xlu0 %1335
      %1339 = vset.pattern.permute.xlu0 0
      %1340 = vperm.xlu0 %1339, %v348
      %v1341 = vpop.permute.xlu0 %1340
      %1344 = vset.pattern.permute.xlu0 0
      %1345 = vperm.xlu0 %1344, %v349
      %v1346 = vpop.permute.xlu0 %1345
      %1349 = vset.pattern.permute.xlu0 0
      %1350 = vperm.xlu0 %1349, %v350
      %v1351 = vpop.permute.xlu0 %1350
      %1354 = vset.pattern.permute.xlu0 0
      %1355 = vperm.xlu0 %1354, %v351
      %v1356 = vpop.permute.xlu0 %1355
      %1359 = vset.pattern.permute.xlu0 0
      %1360 = vperm.xlu0 %1359, %v352
      %v1361 = vpop.permute.xlu0 %1360
      %1364 = vset.pattern.permute.xlu0 0
      %1365 = vperm.xlu0 %1364, %v353
      %v1366 = vpop.permute.xlu0 %1365
      %1369 = vset.pattern.permute.xlu0 0
      %1370 = vperm.xlu0 %1369, %v354
      %v1371 = vpop.permute.xlu0 %1370
      %v1373 = vperm.slane %v1177, 0
      %v1374 = vmul.f32 %v1181, %v1373
      %v1375 = vmul.f32 %v1186, %v1373
      %v1376 = vmul.f32 %v1191, %v1373
      %v1377 = vmul.f32 %v1196, %v1373
      %v1378 = vmul.f32 %v1201, %v1373
      %v1379 = vmul.f32 %v1206, %v1373
      %v1380 = vmul.f32 %v1211, %v1373
      %v1381 = vmul.f32 %v1216, %v1373
      %v1382 = vmul.f32 %v1221, %v1373
      %v1383 = vmul.f32 %v1226, %v1373
      %v1384 = vmul.f32 %v1231, %v1373
      %v1385 = vmul.f32 %v1236, %v1373
      %v1386 = vmul.f32 %v1241, %v1373
      %v1387 = vmul.f32 %v1246, %v1373
      %v1388 = vmul.f32 %v1251, %v1373
      %v1389 = vmul.f32 %v1256, %v1373
      %v1390 = vmul.f32 %v1261, %v1373
      %v1391 = vmul.f32 %v1266, %v1373
      %v1392 = vmul.f32 %v1271, %v1373
      %v1393 = vmul.f32 %v1276, %v1373
      %v1394 = vmul.f32 %v1281, %v1373
      %v1395 = vmul.f32 %v1286, %v1373
      %v1396 = vmul.f32 %v1291, %v1373
      %v1397 = vmul.f32 %v1296, %v1373
      %v1398 = vmul.f32 %v1301, %v1373
      %v1399 = vmul.f32 %v1306, %v1373
      %v1400 = vmul.f32 %v1311, %v1373
      %v1401 = vmul.f32 %v1316, %v1373
      %v1402 = vmul.f32 %v1321, %v1373
      %v1403 = vmul.f32 %v1326, %v1373
      %v1404 = vmul.f32 %v1331, %v1373
      %v1405 = vmul.f32 %v1336, %v1373
      %v1406 = vmul.f32 %v1341, %v1373
      %v1407 = vmul.f32 %v1346, %v1373
      %v1408 = vmul.f32 %v1351, %v1373
      %v1409 = vmul.f32 %v1356, %v1373
      %v1410 = vmul.f32 %v1361, %v1373
      %v1411 = vmul.f32 %v1366, %v1373
      %v1412 = vmul.f32 %v1371, %v1373
      %v1413 = vadd.f32 %v1137, %v1374
      %v1414 = vadd.f32 %v1138, %v1375
      %v1415 = vadd.f32 %v1139, %v1376
      %v1416 = vadd.f32 %v1140, %v1377
      %v1417 = vadd.f32 %v1141, %v1378
      %v1418 = vadd.f32 %v1142, %v1379
      %v1419 = vadd.f32 %v1143, %v1380
      %v1420 = vadd.f32 %v1144, %v1381
      %v1421 = vadd.f32 %v1145, %v1382
      %v1422 = vadd.f32 %v1146, %v1383
      %v1423 = vadd.f32 %v1147, %v1384
      %v1424 = vadd.f32 %v1148, %v1385
      %v1425 = vadd.f32 %v1149, %v1386
      %v1426 = vadd.f32 %v1150, %v1387
      %v1427 = vadd.f32 %v1151, %v1388
      %v1428 = vadd.f32 %v1152, %v1389
      %v1429 = vadd.f32 %v1153, %v1390
      %v1430 = vadd.f32 %v1154, %v1391
      %v1431 = vadd.f32 %v1155, %v1392
      %v1432 = vadd.f32 %v1156, %v1393
      %v1433 = vadd.f32 %v1157, %v1394
      %v1434 = vadd.f32 %v1158, %v1395
      %v1435 = vadd.f32 %v1159, %v1396
      %v1436 = vadd.f32 %v1160, %v1397
      %v1437 = vadd.f32 %v1161, %v1398
      %v1438 = vadd.f32 %v1162, %v1399
      %v1439 = vadd.f32 %v1163, %v1400
      %v1440 = vadd.f32 %v1164, %v1401
      %v1441 = vadd.f32 %v1165, %v1402
      %v1442 = vadd.f32 %v1166, %v1403
      %v1443 = vadd.f32 %v1167, %v1404
      %v1444 = vadd.f32 %v1168, %v1405
      %v1445 = vadd.f32 %v1169, %v1406
      %v1446 = vadd.f32 %v1170, %v1407
      %v1447 = vadd.f32 %v1171, %v1408
      %v1448 = vadd.f32 %v1172, %v1409
      %v1449 = vadd.f32 %v1173, %v1410
      %v1450 = vadd.f32 %v1174, %v1411
      %v1451 = vadd.f32 %v1175, %v1412
      %v1452 = vld [vmem:[%s1176 + $0x1] sm:$0x1]
      %1454 = vset.pattern.permute.xlu0 0
      %1455 = vperm.xlu0 %1454, %v359
      %v1456 = vpop.permute.xlu0 %1455
      %1459 = vset.pattern.permute.xlu0 0
      %1460 = vperm.xlu0 %1459, %v360
      %v1461 = vpop.permute.xlu0 %1460
      %1464 = vset.pattern.permute.xlu0 0
      %1465 = vperm.xlu0 %1464, %v361
      %v1466 = vpop.permute.xlu0 %1465
      %1469 = vset.pattern.permute.xlu0 0
      %1470 = vperm.xlu0 %1469, %v362
      %v1471 = vpop.permute.xlu0 %1470
      %1474 = vset.pattern.permute.xlu0 0
      %1475 = vperm.xlu0 %1474, %v363
      %v1476 = vpop.permute.xlu0 %1475
      %1479 = vset.pattern.permute.xlu0 0
      %1480 = vperm.xlu0 %1479, %v364
      %v1481 = vpop.permute.xlu0 %1480
      %1484 = vset.pattern.permute.xlu0 0
      %1485 = vperm.xlu0 %1484, %v365
      %v1486 = vpop.permute.xlu0 %1485
      %1489 = vset.pattern.permute.xlu0 0
      %1490 = vperm.xlu0 %1489, %v366
      %v1491 = vpop.permute.xlu0 %1490
      %1494 = vset.pattern.permute.xlu0 0
      %1495 = vperm.xlu0 %1494, %v367
      %v1496 = vpop.permute.xlu0 %1495
      %1499 = vset.pattern.permute.xlu0 0
      %1500 = vperm.xlu0 %1499, %v368
      %v1501 = vpop.permute.xlu0 %1500
      %1504 = vset.pattern.permute.xlu0 0
      %1505 = vperm.xlu0 %1504, %v369
      %v1506 = vpop.permute.xlu0 %1505
      %1509 = vset.pattern.permute.xlu0 0
      %1510 = vperm.xlu0 %1509, %v370
      %v1511 = vpop.permute.xlu0 %1510
      %1514 = vset.pattern.permute.xlu0 0
      %1515 = vperm.xlu0 %1514, %v371
      %v1516 = vpop.permute.xlu0 %1515
      %1519 = vset.pattern.permute.xlu0 0
      %1520 = vperm.xlu0 %1519, %v372
      %v1521 = vpop.permute.xlu0 %1520
      %1524 = vset.pattern.permute.xlu0 0
      %1525 = vperm.xlu0 %1524, %v373
      %v1526 = vpop.permute.xlu0 %1525
      %1529 = vset.pattern.permute.xlu0 0
      %1530 = vperm.xlu0 %1529, %v374
      %v1531 = vpop.permute.xlu0 %1530
      %1534 = vset.pattern.permute.xlu0 0
      %1535 = vperm.xlu0 %1534, %v375
      %v1536 = vpop.permute.xlu0 %1535
      %1539 = vset.pattern.permute.xlu0 0
      %1540 = vperm.xlu0 %1539, %v376
      %v1541 = vpop.permute.xlu0 %1540
      %1544 = vset.pattern.permute.xlu0 0
      %1545 = vperm.xlu0 %1544, %v377
      %v1546 = vpop.permute.xlu0 %1545
      %1549 = vset.pattern.permute.xlu0 0
      %1550 = vperm.xlu0 %1549, %v378
      %v1551 = vpop.permute.xlu0 %1550
      %1554 = vset.pattern.permute.xlu0 0
      %1555 = vperm.xlu0 %1554, %v379
      %v1556 = vpop.permute.xlu0 %1555
      %1559 = vset.pattern.permute.xlu0 0
      %1560 = vperm.xlu0 %1559, %v380
      %v1561 = vpop.permute.xlu0 %1560
      %1564 = vset.pattern.permute.xlu0 0
      %1565 = vperm.xlu0 %1564, %v381
      %v1566 = vpop.permute.xlu0 %1565
      %1569 = vset.pattern.permute.xlu0 0
      %1570 = vperm.xlu0 %1569, %v382
      %v1571 = vpop.permute.xlu0 %1570
      %1574 = vset.pattern.permute.xlu0 0
      %1575 = vperm.xlu0 %1574, %v383
      %v1576 = vpop.permute.xlu0 %1575
      %1579 = vset.pattern.permute.xlu0 0
      %1580 = vperm.xlu0 %1579, %v384
      %v1581 = vpop.permute.xlu0 %1580
      %1584 = vset.pattern.permute.xlu0 0
      %1585 = vperm.xlu0 %1584, %v385
      %v1586 = vpop.permute.xlu0 %1585
      %1589 = vset.pattern.permute.xlu0 0
      %1590 = vperm.xlu0 %1589, %v386
      %v1591 = vpop.permute.xlu0 %1590
      %1594 = vset.pattern.permute.xlu0 0
      %1595 = vperm.xlu0 %1594, %v387
      %v1596 = vpop.permute.xlu0 %1595
      %1599 = vset.pattern.permute.xlu0 0
      %1600 = vperm.xlu0 %1599, %v388
      %v1601 = vpop.permute.xlu0 %1600
      %1604 = vset.pattern.permute.xlu0 0
      %1605 = vperm.xlu0 %1604, %v389
      %v1606 = vpop.permute.xlu0 %1605
      %1609 = vset.pattern.permute.xlu0 0
      %1610 = vperm.xlu0 %1609, %v390
      %v1611 = vpop.permute.xlu0 %1610
      %1614 = vset.pattern.permute.xlu0 0
      %1615 = vperm.xlu0 %1614, %v391
      %v1616 = vpop.permute.xlu0 %1615
      %1619 = vset.pattern.permute.xlu0 0
      %1620 = vperm.xlu0 %1619, %v392
      %v1621 = vpop.permute.xlu0 %1620
      %1624 = vset.pattern.permute.xlu0 0
      %1625 = vperm.xlu0 %1624, %v393
      %v1626 = vpop.permute.xlu0 %1625
      %1629 = vset.pattern.permute.xlu0 0
      %1630 = vperm.xlu0 %1629, %v394
      %v1631 = vpop.permute.xlu0 %1630
      %1634 = vset.pattern.permute.xlu0 0
      %1635 = vperm.xlu0 %1634, %v395
      %v1636 = vpop.permute.xlu0 %1635
      %1639 = vset.pattern.permute.xlu0 0
      %1640 = vperm.xlu0 %1639, %v396
      %v1641 = vpop.permute.xlu0 %1640
      %1644 = vset.pattern.permute.xlu0 0
      %1645 = vperm.xlu0 %1644, %v397
      %v1646 = vpop.permute.xlu0 %1645
      %v1648 = vperm.slane %v1452, 0
      %v1649 = vmul.f32 %v1456, %v1648
      %v1650 = vmul.f32 %v1461, %v1648
      %v1651 = vmul.f32 %v1466, %v1648
      %v1652 = vmul.f32 %v1471, %v1648
      %v1653 = vmul.f32 %v1476, %v1648
      %v1654 = vmul.f32 %v1481, %v1648
      %v1655 = vmul.f32 %v1486, %v1648
      %v1656 = vmul.f32 %v1491, %v1648
      %v1657 = vmul.f32 %v1496, %v1648
      %v1658 = vmul.f32 %v1501, %v1648
      %v1659 = vmul.f32 %v1506, %v1648
      %v1660 = vmul.f32 %v1511, %v1648
      %v1661 = vmul.f32 %v1516, %v1648
      %v1662 = vmul.f32 %v1521, %v1648
      %v1663 = vmul.f32 %v1526, %v1648
      %v1664 = vmul.f32 %v1531, %v1648
      %v1665 = vmul.f32 %v1536, %v1648
      %v1666 = vmul.f32 %v1541, %v1648
      %v1667 = vmul.f32 %v1546, %v1648
      %v1668 = vmul.f32 %v1551, %v1648
      %v1669 = vmul.f32 %v1556, %v1648
      %v1670 = vmul.f32 %v1561, %v1648
      %v1671 = vmul.f32 %v1566, %v1648
      %v1672 = vmul.f32 %v1571, %v1648
      %v1673 = vmul.f32 %v1576, %v1648
      %v1674 = vmul.f32 %v1581, %v1648
      %v1675 = vmul.f32 %v1586, %v1648
      %v1676 = vmul.f32 %v1591, %v1648
      %v1677 = vmul.f32 %v1596, %v1648
      %v1678 = vmul.f32 %v1601, %v1648
      %v1679 = vmul.f32 %v1606, %v1648
      %v1680 = vmul.f32 %v1611, %v1648
      %v1681 = vmul.f32 %v1616, %v1648
      %v1682 = vmul.f32 %v1621, %v1648
      %v1683 = vmul.f32 %v1626, %v1648
      %v1684 = vmul.f32 %v1631, %v1648
      %v1685 = vmul.f32 %v1636, %v1648
      %v1686 = vmul.f32 %v1641, %v1648
      %v1687 = vmul.f32 %v1646, %v1648
      %v1688 = vadd.f32 %v1413, %v1649
      %v1689 = vadd.f32 %v1414, %v1650
      %v1690 = vadd.f32 %v1415, %v1651
      %v1691 = vadd.f32 %v1416, %v1652
      %v1692 = vadd.f32 %v1417, %v1653
      %v1693 = vadd.f32 %v1418, %v1654
      %v1694 = vadd.f32 %v1419, %v1655
      %v1695 = vadd.f32 %v1420, %v1656
      %v1696 = vadd.f32 %v1421, %v1657
      %v1697 = vadd.f32 %v1422, %v1658
      %v1698 = vadd.f32 %v1423, %v1659
      %v1699 = vadd.f32 %v1424, %v1660
      %v1700 = vadd.f32 %v1425, %v1661
      %v1701 = vadd.f32 %v1426, %v1662
      %v1702 = vadd.f32 %v1427, %v1663
      %v1703 = vadd.f32 %v1428, %v1664
      %v1704 = vadd.f32 %v1429, %v1665
      %v1705 = vadd.f32 %v1430, %v1666
      %v1706 = vadd.f32 %v1431, %v1667
      %v1707 = vadd.f32 %v1432, %v1668
      %v1708 = vadd.f32 %v1433, %v1669
      %v1709 = vadd.f32 %v1434, %v1670
      %v1710 = vadd.f32 %v1435, %v1671
      %v1711 = vadd.f32 %v1436, %v1672
      %v1712 = vadd.f32 %v1437, %v1673
      %v1713 = vadd.f32 %v1438, %v1674
      %v1714 = vadd.f32 %v1439, %v1675
      %v1715 = vadd.f32 %v1440, %v1676
      %v1716 = vadd.f32 %v1441, %v1677
      %v1717 = vadd.f32 %v1442, %v1678
      %v1718 = vadd.f32 %v1443, %v1679
      %v1719 = vadd.f32 %v1444, %v1680
      %v1720 = vadd.f32 %v1445, %v1681
      %v1721 = vadd.f32 %v1446, %v1682
      %v1722 = vadd.f32 %v1447, %v1683
      %v1723 = vadd.f32 %v1448, %v1684
      %v1724 = vadd.f32 %v1449, %v1685
      %v1725 = vadd.f32 %v1450, %v1686
      %v1726 = vadd.f32 %v1451, %v1687
      %v1727 = vld [vmem:[%s1176 + $0x2] sm:$0x1]
      %v1728 = vperm.slane %v1727, 0
      %v1729 = vmul.f32 %v1181, %v1728
      %v1730 = vmul.f32 %v1186, %v1728
      %v1731 = vmul.f32 %v1191, %v1728
      %v1732 = vmul.f32 %v1196, %v1728
      %v1733 = vmul.f32 %v1201, %v1728
      %v1734 = vmul.f32 %v1206, %v1728
      %v1735 = vmul.f32 %v1211, %v1728
      %v1736 = vmul.f32 %v1216, %v1728
      %v1737 = vmul.f32 %v1221, %v1728
      %v1738 = vmul.f32 %v1226, %v1728
      %v1739 = vmul.f32 %v1231, %v1728
      %v1740 = vmul.f32 %v1236, %v1728
      %v1741 = vmul.f32 %v1241, %v1728
      %v1742 = vmul.f32 %v1246, %v1728
      %v1743 = vmul.f32 %v1251, %v1728
      %v1744 = vmul.f32 %v1256, %v1728
      %v1745 = vmul.f32 %v1261, %v1728
      %v1746 = vmul.f32 %v1266, %v1728
      %v1747 = vmul.f32 %v1271, %v1728
      %v1748 = vmul.f32 %v1276, %v1728
      %v1749 = vmul.f32 %v1281, %v1728
      %v1750 = vmul.f32 %v1286, %v1728
      %v1751 = vmul.f32 %v1291, %v1728
      %v1752 = vmul.f32 %v1296, %v1728
      %v1753 = vmul.f32 %v1301, %v1728
      %v1754 = vmul.f32 %v1306, %v1728
      %v1755 = vmul.f32 %v1311, %v1728
      %v1756 = vmul.f32 %v1316, %v1728
      %v1757 = vmul.f32 %v1321, %v1728
      %v1758 = vmul.f32 %v1326, %v1728
      %v1759 = vmul.f32 %v1331, %v1728
      %v1760 = vmul.f32 %v1336, %v1728
      %v1761 = vmul.f32 %v1341, %v1728
      %v1762 = vmul.f32 %v1346, %v1728
      %v1763 = vmul.f32 %v1351, %v1728
      %v1764 = vmul.f32 %v1356, %v1728
      %v1765 = vmul.f32 %v1361, %v1728
      %v1766 = vmul.f32 %v1366, %v1728
      %v1767 = vmul.f32 %v1371, %v1728
      %v1807 = vrot.slane %v1729, 1
      %v1808 = vrot.slane %v1730, 1
      %v1809 = vsel %vm1032, %v1807, %v1808
      %v1810 = vrot.slane %v1731, 1
      %v1811 = vsel %vm1032, %v1808, %v1810
      %v1812 = vrot.slane %v1732, 1
      %v1813 = vrot.slane %v1733, 1
      %v1814 = vsel %vm1032, %v1812, %v1813
      %v1815 = vrot.slane %v1734, 1
      %v1816 = vsel %vm1032, %v1813, %v1815
      %v1817 = vrot.slane %v1735, 1
      %v1818 = vrot.slane %v1736, 1
      %v1819 = vsel %vm1032, %v1817, %v1818
      %v1820 = vrot.slane %v1737, 1
      %v1821 = vsel %vm1032, %v1818, %v1820
      %v1822 = vrot.slane %v1738, 1
      %v1823 = vrot.slane %v1739, 1
      %v1824 = vsel %vm1032, %v1822, %v1823
      %v1825 = vrot.slane %v1740, 1
      %v1826 = vsel %vm1032, %v1823, %v1825
      %v1827 = vrot.slane %v1741, 1
      %v1828 = vrot.slane %v1742, 1
      %v1829 = vsel %vm1032, %v1827, %v1828
      %v1830 = vrot.slane %v1743, 1
      %v1831 = vsel %vm1032, %v1828, %v1830
      %v1832 = vrot.slane %v1744, 1
      %v1833 = vrot.slane %v1745, 1
      %v1834 = vsel %vm1032, %v1832, %v1833
      %v1835 = vrot.slane %v1746, 1
      %v1836 = vsel %vm1032, %v1833, %v1835
      %v1837 = vrot.slane %v1747, 1
      %v1838 = vrot.slane %v1748, 1
      %v1839 = vsel %vm1032, %v1837, %v1838
      %v1840 = vrot.slane %v1749, 1
      %v1841 = vsel %vm1032, %v1838, %v1840
      %v1842 = vrot.slane %v1750, 1
      %v1843 = vrot.slane %v1751, 1
      %v1844 = vsel %vm1032, %v1842, %v1843
      %v1845 = vrot.slane %v1752, 1
      %v1846 = vsel %vm1032, %v1843, %v1845
      %v1847 = vrot.slane %v1753, 1
      %v1848 = vrot.slane %v1754, 1
      %v1849 = vsel %vm1032, %v1847, %v1848
      %v1850 = vrot.slane %v1755, 1
      %v1851 = vsel %vm1032, %v1848, %v1850
      %v1852 = vrot.slane %v1756, 1
      %v1853 = vrot.slane %v1757, 1
      %v1854 = vsel %vm1032, %v1852, %v1853
      %v1855 = vrot.slane %v1758, 1
      %v1856 = vsel %vm1032, %v1853, %v1855
      %v1857 = vrot.slane %v1759, 1
      %v1858 = vrot.slane %v1760, 1
      %v1859 = vsel %vm1032, %v1857, %v1858
      %v1860 = vrot.slane %v1761, 1
      %v1861 = vsel %vm1032, %v1858, %v1860
      %v1862 = vrot.slane %v1762, 1
      %v1863 = vrot.slane %v1763, 1
      %v1864 = vsel %vm1032, %v1862, %v1863
      %v1865 = vrot.slane %v1764, 1
      %v1866 = vsel %vm1032, %v1863, %v1865
      %v1867 = vrot.slane %v1765, 1
      %v1868 = vrot.slane %v1766, 1
      %v1869 = vsel %vm1032, %v1867, %v1868
      %v1870 = vrot.slane %v1767, 1
      %v1871 = vsel %vm1032, %v1868, %v1870
      %v1911 = vadd.f32 %v1688, %v1809
      %v1912 = vadd.f32 %v1689, %v1811
      %v1913 = vadd.f32 %v1690, %v1810
      %v1914 = vadd.f32 %v1691, %v1814
      %v1915 = vadd.f32 %v1692, %v1816
      %v1916 = vadd.f32 %v1693, %v1815
      %v1917 = vadd.f32 %v1694, %v1819
      %v1918 = vadd.f32 %v1695, %v1821
      %v1919 = vadd.f32 %v1696, %v1820
      %v1920 = vadd.f32 %v1697, %v1824
      %v1921 = vadd.f32 %v1698, %v1826
      %v1922 = vadd.f32 %v1699, %v1825
      %v1923 = vadd.f32 %v1700, %v1829
      %v1924 = vadd.f32 %v1701, %v1831
      %v1925 = vadd.f32 %v1702, %v1830
      %v1926 = vadd.f32 %v1703, %v1834
      %v1927 = vadd.f32 %v1704, %v1836
      %v1928 = vadd.f32 %v1705, %v1835
      %v1929 = vadd.f32 %v1706, %v1839
      %v1930 = vadd.f32 %v1707, %v1841
      %v1931 = vadd.f32 %v1708, %v1840
      %v1932 = vadd.f32 %v1709, %v1844
      %v1933 = vadd.f32 %v1710, %v1846
      %v1934 = vadd.f32 %v1711, %v1845
      %v1935 = vadd.f32 %v1712, %v1849
      %v1936 = vadd.f32 %v1713, %v1851
      %v1937 = vadd.f32 %v1714, %v1850
      %v1938 = vadd.f32 %v1715, %v1854
      %v1939 = vadd.f32 %v1716, %v1856
      %v1940 = vadd.f32 %v1717, %v1855
      %v1941 = vadd.f32 %v1718, %v1859
      %v1942 = vadd.f32 %v1719, %v1861
      %v1943 = vadd.f32 %v1720, %v1860
      %v1944 = vadd.f32 %v1721, %v1864
      %v1945 = vadd.f32 %v1722, %v1866
      %v1946 = vadd.f32 %v1723, %v1865
      %v1947 = vadd.f32 %v1724, %v1869
      %v1948 = vadd.f32 %v1725, %v1871
      %v1949 = vadd.f32 %v1726, %v1870
      %s1950 = scalar_lea.vmem %s1, 8
      %v1951 = vld [vmem:[%s1950] sm:$0x1]
      %1953 = vset.pattern.permute.xlu0 0
      %1954 = vperm.xlu0 %1953, %v269
      %v1955 = vpop.permute.xlu0 %1954
      %1958 = vset.pattern.permute.xlu0 0
      %1959 = vperm.xlu0 %1958, %v270
      %v1960 = vpop.permute.xlu0 %1959
      %1963 = vset.pattern.permute.xlu0 0
      %1964 = vperm.xlu0 %1963, %v271
      %v1965 = vpop.permute.xlu0 %1964
      %v1967 = vperm.slane %v1951, 0
      %v1968 = vmul.f32 %v421, %v1967
      %v1969 = vmul.f32 %v426, %v1967
      %v1970 = vmul.f32 %v431, %v1967
      %v1971 = vmul.f32 %v436, %v1967
      %v1972 = vmul.f32 %v441, %v1967
      %v1973 = vmul.f32 %v446, %v1967
      %v1974 = vmul.f32 %v451, %v1967
      %v1975 = vmul.f32 %v456, %v1967
      %v1976 = vmul.f32 %v461, %v1967
      %v1977 = vmul.f32 %v466, %v1967
      %v1978 = vmul.f32 %v471, %v1967
      %v1979 = vmul.f32 %v476, %v1967
      %v1980 = vmul.f32 %v481, %v1967
      %v1981 = vmul.f32 %v486, %v1967
      %v1982 = vmul.f32 %v491, %v1967
      %v1983 = vmul.f32 %v496, %v1967
      %v1984 = vmul.f32 %v501, %v1967
      %v1985 = vmul.f32 %v506, %v1967
      %v1986 = vmul.f32 %v511, %v1967
      %v1987 = vmul.f32 %v516, %v1967
      %v1988 = vmul.f32 %v521, %v1967
      %v1989 = vmul.f32 %v526, %v1967
      %v1990 = vmul.f32 %v531, %v1967
      %v1991 = vmul.f32 %v536, %v1967
      %v1992 = vmul.f32 %v541, %v1967
      %v1993 = vmul.f32 %v546, %v1967
      %v1994 = vmul.f32 %v551, %v1967
      %v1995 = vmul.f32 %v556, %v1967
      %v1996 = vmul.f32 %v561, %v1967
      %v1997 = vmul.f32 %v566, %v1967
      %v1998 = vmul.f32 %v571, %v1967
      %v1999 = vmul.f32 %v576, %v1967
      %v2000 = vmul.f32 %v581, %v1967
      %v2001 = vmul.f32 %v586, %v1967
      %v2002 = vmul.f32 %v591, %v1967
      %v2003 = vmul.f32 %v596, %v1967
      %v2004 = vmul.f32 %v1955, %v1967
      %v2005 = vmul.f32 %v1960, %v1967
      %v2006 = vmul.f32 %v1965, %v1967
      %v2007 = vadd.f32 %v1911, %v1968
      %v2008 = vadd.f32 %v1912, %v1969
      %v2009 = vadd.f32 %v1913, %v1970
      %v2010 = vadd.f32 %v1914, %v1971
      %v2011 = vadd.f32 %v1915, %v1972
      %v2012 = vadd.f32 %v1916, %v1973
      %v2013 = vadd.f32 %v1917, %v1974
      %v2014 = vadd.f32 %v1918, %v1975
      %v2015 = vadd.f32 %v1919, %v1976
      %v2016 = vadd.f32 %v1920, %v1977
      %v2017 = vadd.f32 %v1921, %v1978
      %v2018 = vadd.f32 %v1922, %v1979
      %v2019 = vadd.f32 %v1923, %v1980
      %v2020 = vadd.f32 %v1924, %v1981
      %v2021 = vadd.f32 %v1925, %v1982
      %v2022 = vadd.f32 %v1926, %v1983
      %v2023 = vadd.f32 %v1927, %v1984
      %v2024 = vadd.f32 %v1928, %v1985
      %v2025 = vadd.f32 %v1929, %v1986
      %v2026 = vadd.f32 %v1930, %v1987
      %v2027 = vadd.f32 %v1931, %v1988
      %v2028 = vadd.f32 %v1932, %v1989
      %v2029 = vadd.f32 %v1933, %v1990
      %v2030 = vadd.f32 %v1934, %v1991
      %v2031 = vadd.f32 %v1935, %v1992
      %v2032 = vadd.f32 %v1936, %v1993
      %v2033 = vadd.f32 %v1937, %v1994
      %v2034 = vadd.f32 %v1938, %v1995
      %v2035 = vadd.f32 %v1939, %v1996
      %v2036 = vadd.f32 %v1940, %v1997
      %v2037 = vadd.f32 %v1941, %v1998
      %v2038 = vadd.f32 %v1942, %v1999
      %v2039 = vadd.f32 %v1943, %v2000
      %v2040 = vadd.f32 %v1944, %v2001
      %v2041 = vadd.f32 %v1945, %v2002
      %v2042 = vadd.f32 %v1946, %v2003
      %v2043 = vadd.f32 %v1947, %v2004
      %v2044 = vadd.f32 %v1948, %v2005
      %v2045 = vadd.f32 %v1949, %v2006
      %v2046 = vld [vmem:[%s1950 + $0x1] sm:$0x1]
      %2048 = vset.pattern.permute.xlu0 0
      %2049 = vperm.xlu0 %2048, %v312
      %v2050 = vpop.permute.xlu0 %2049
      %2053 = vset.pattern.permute.xlu0 0
      %2054 = vperm.xlu0 %2053, %v313
      %v2055 = vpop.permute.xlu0 %2054
      %2058 = vset.pattern.permute.xlu0 0
      %2059 = vperm.xlu0 %2058, %v314
      %v2060 = vpop.permute.xlu0 %2059
      %v2062 = vperm.slane %v2046, 0
      %v2063 = vmul.f32 %v696, %v2062
      %v2064 = vmul.f32 %v701, %v2062
      %v2065 = vmul.f32 %v706, %v2062
      %v2066 = vmul.f32 %v711, %v2062
      %v2067 = vmul.f32 %v716, %v2062
      %v2068 = vmul.f32 %v721, %v2062
      %v2069 = vmul.f32 %v726, %v2062
      %v2070 = vmul.f32 %v731, %v2062
      %v2071 = vmul.f32 %v736, %v2062
      %v2072 = vmul.f32 %v741, %v2062
      %v2073 = vmul.f32 %v746, %v2062
      %v2074 = vmul.f32 %v751, %v2062
      %v2075 = vmul.f32 %v756, %v2062
      %v2076 = vmul.f32 %v761, %v2062
      %v2077 = vmul.f32 %v766, %v2062
      %v2078 = vmul.f32 %v771, %v2062
      %v2079 = vmul.f32 %v776, %v2062
      %v2080 = vmul.f32 %v781, %v2062
      %v2081 = vmul.f32 %v786, %v2062
      %v2082 = vmul.f32 %v791, %v2062
      %v2083 = vmul.f32 %v796, %v2062
      %v2084 = vmul.f32 %v801, %v2062
      %v2085 = vmul.f32 %v806, %v2062
      %v2086 = vmul.f32 %v811, %v2062
      %v2087 = vmul.f32 %v816, %v2062
      %v2088 = vmul.f32 %v821, %v2062
      %v2089 = vmul.f32 %v826, %v2062
      %v2090 = vmul.f32 %v831, %v2062
      %v2091 = vmul.f32 %v836, %v2062
      %v2092 = vmul.f32 %v841, %v2062
      %v2093 = vmul.f32 %v846, %v2062
      %v2094 = vmul.f32 %v851, %v2062
      %v2095 = vmul.f32 %v856, %v2062
      %v2096 = vmul.f32 %v861, %v2062
      %v2097 = vmul.f32 %v866, %v2062
      %v2098 = vmul.f32 %v871, %v2062
      %v2099 = vmul.f32 %v2050, %v2062
      %v2100 = vmul.f32 %v2055, %v2062
      %v2101 = vmul.f32 %v2060, %v2062
      %v2102 = vadd.f32 %v2007, %v2063
      %v2103 = vadd.f32 %v2008, %v2064
      %v2104 = vadd.f32 %v2009, %v2065
      %v2105 = vadd.f32 %v2010, %v2066
      %v2106 = vadd.f32 %v2011, %v2067
      %v2107 = vadd.f32 %v2012, %v2068
      %v2108 = vadd.f32 %v2013, %v2069
      %v2109 = vadd.f32 %v2014, %v2070
      %v2110 = vadd.f32 %v2015, %v2071
      %v2111 = vadd.f32 %v2016, %v2072
      %v2112 = vadd.f32 %v2017, %v2073
      %v2113 = vadd.f32 %v2018, %v2074
      %v2114 = vadd.f32 %v2019, %v2075
      %v2115 = vadd.f32 %v2020, %v2076
      %v2116 = vadd.f32 %v2021, %v2077
      %v2117 = vadd.f32 %v2022, %v2078
      %v2118 = vadd.f32 %v2023, %v2079
      %v2119 = vadd.f32 %v2024, %v2080
      %v2120 = vadd.f32 %v2025, %v2081
      %v2121 = vadd.f32 %v2026, %v2082
      %v2122 = vadd.f32 %v2027, %v2083
      %v2123 = vadd.f32 %v2028, %v2084
      %v2124 = vadd.f32 %v2029, %v2085
      %v2125 = vadd.f32 %v2030, %v2086
      %v2126 = vadd.f32 %v2031, %v2087
      %v2127 = vadd.f32 %v2032, %v2088
      %v2128 = vadd.f32 %v2033, %v2089
      %v2129 = vadd.f32 %v2034, %v2090
      %v2130 = vadd.f32 %v2035, %v2091
      %v2131 = vadd.f32 %v2036, %v2092
      %v2132 = vadd.f32 %v2037, %v2093
      %v2133 = vadd.f32 %v2038, %v2094
      %v2134 = vadd.f32 %v2039, %v2095
      %v2135 = vadd.f32 %v2040, %v2096
      %v2136 = vadd.f32 %v2041, %v2097
      %v2137 = vadd.f32 %v2042, %v2098
      %v2138 = vadd.f32 %v2043, %v2099
      %v2139 = vadd.f32 %v2044, %v2100
      %v2140 = vadd.f32 %v2045, %v2101
      %v2141 = vld [vmem:[%s1950 + $0x2] sm:$0x1]
      %v2142 = vperm.slane %v2141, 0
      %v2143 = vmul.f32 %v421, %v2142
      %v2144 = vmul.f32 %v426, %v2142
      %v2145 = vmul.f32 %v431, %v2142
      %v2146 = vmul.f32 %v436, %v2142
      %v2147 = vmul.f32 %v441, %v2142
      %v2148 = vmul.f32 %v446, %v2142
      %v2149 = vmul.f32 %v451, %v2142
      %v2150 = vmul.f32 %v456, %v2142
      %v2151 = vmul.f32 %v461, %v2142
      %v2152 = vmul.f32 %v466, %v2142
      %v2153 = vmul.f32 %v471, %v2142
      %v2154 = vmul.f32 %v476, %v2142
      %v2155 = vmul.f32 %v481, %v2142
      %v2156 = vmul.f32 %v486, %v2142
      %v2157 = vmul.f32 %v491, %v2142
      %v2158 = vmul.f32 %v496, %v2142
      %v2159 = vmul.f32 %v501, %v2142
      %v2160 = vmul.f32 %v506, %v2142
      %v2161 = vmul.f32 %v511, %v2142
      %v2162 = vmul.f32 %v516, %v2142
      %v2163 = vmul.f32 %v521, %v2142
      %v2164 = vmul.f32 %v526, %v2142
      %v2165 = vmul.f32 %v531, %v2142
      %v2166 = vmul.f32 %v536, %v2142
      %v2167 = vmul.f32 %v541, %v2142
      %v2168 = vmul.f32 %v546, %v2142
      %v2169 = vmul.f32 %v551, %v2142
      %v2170 = vmul.f32 %v556, %v2142
      %v2171 = vmul.f32 %v561, %v2142
      %v2172 = vmul.f32 %v566, %v2142
      %v2173 = vmul.f32 %v571, %v2142
      %v2174 = vmul.f32 %v576, %v2142
      %v2175 = vmul.f32 %v581, %v2142
      %v2176 = vmul.f32 %v586, %v2142
      %v2177 = vmul.f32 %v591, %v2142
      %v2178 = vmul.f32 %v596, %v2142
      %v2179 = vmul.f32 %v1955, %v2142
      %v2180 = vmul.f32 %v1960, %v2142
      %v2181 = vmul.f32 %v1965, %v2142
      %v2221 = vrot.slane %v2143, 1
      %v2222 = vrot.slane %v2144, 1
      %v2223 = vsel %vm1032, %v2221, %v2222
      %v2224 = vrot.slane %v2145, 1
      %v2225 = vsel %vm1032, %v2222, %v2224
      %v2226 = vrot.slane %v2146, 1
      %v2227 = vrot.slane %v2147, 1
      %v2228 = vsel %vm1032, %v2226, %v2227
      %v2229 = vrot.slane %v2148, 1
      %v2230 = vsel %vm1032, %v2227, %v2229
      %v2231 = vrot.slane %v2149, 1
      %v2232 = vrot.slane %v2150, 1
      %v2233 = vsel %vm1032, %v2231, %v2232
      %v2234 = vrot.slane %v2151, 1
      %v2235 = vsel %vm1032, %v2232, %v2234
      %v2236 = vrot.slane %v2152, 1
      %v2237 = vrot.slane %v2153, 1
      %v2238 = vsel %vm1032, %v2236, %v2237
      %v2239 = vrot.slane %v2154, 1
      %v2240 = vsel %vm1032, %v2237, %v2239
      %v2241 = vrot.slane %v2155, 1
      %v2242 = vrot.slane %v2156, 1
      %v2243 = vsel %vm1032, %v2241, %v2242
      %v2244 = vrot.slane %v2157, 1
      %v2245 = vsel %vm1032, %v2242, %v2244
      %v2246 = vrot.slane %v2158, 1
      %v2247 = vrot.slane %v2159, 1
      %v2248 = vsel %vm1032, %v2246, %v2247
      %v2249 = vrot.slane %v2160, 1
      %v2250 = vsel %vm1032, %v2247, %v2249
      %v2251 = vrot.slane %v2161, 1
      %v2252 = vrot.slane %v2162, 1
      %v2253 = vsel %vm1032, %v2251, %v2252
      %v2254 = vrot.slane %v2163, 1
      %v2255 = vsel %vm1032, %v2252, %v2254
      %v2256 = vrot.slane %v2164, 1
      %v2257 = vrot.slane %v2165, 1
      %v2258 = vsel %vm1032, %v2256, %v2257
      %v2259 = vrot.slane %v2166, 1
      %v2260 = vsel %vm1032, %v2257, %v2259
      %v2261 = vrot.slane %v2167, 1
      %v2262 = vrot.slane %v2168, 1
      %v2263 = vsel %vm1032, %v2261, %v2262
      %v2264 = vrot.slane %v2169, 1
      %v2265 = vsel %vm1032, %v2262, %v2264
      %v2266 = vrot.slane %v2170, 1
      %v2267 = vrot.slane %v2171, 1
      %v2268 = vsel %vm1032, %v2266, %v2267
      %v2269 = vrot.slane %v2172, 1
      %v2270 = vsel %vm1032, %v2267, %v2269
      %v2271 = vrot.slane %v2173, 1
      %v2272 = vrot.slane %v2174, 1
      %v2273 = vsel %vm1032, %v2271, %v2272
      %v2274 = vrot.slane %v2175, 1
      %v2275 = vsel %vm1032, %v2272, %v2274
      %v2276 = vrot.slane %v2176, 1
      %v2277 = vrot.slane %v2177, 1
      %v2278 = vsel %vm1032, %v2276, %v2277
      %v2279 = vrot.slane %v2178, 1
      %v2280 = vsel %vm1032, %v2277, %v2279
      %v2281 = vrot.slane %v2179, 1
      %v2282 = vrot.slane %v2180, 1
      %v2283 = vsel %vm1032, %v2281, %v2282
      %v2284 = vrot.slane %v2181, 1
      %v2285 = vsel %vm1032, %v2282, %v2284
      %v2325 = vadd.f32 %v2102, %v2223
      %v2326 = vadd.f32 %v2103, %v2225
      %v2327 = vadd.f32 %v2104, %v2224
      %v2328 = vadd.f32 %v2105, %v2228
      %v2329 = vadd.f32 %v2106, %v2230
      %v2330 = vadd.f32 %v2107, %v2229
      %v2331 = vadd.f32 %v2108, %v2233
      %v2332 = vadd.f32 %v2109, %v2235
      %v2333 = vadd.f32 %v2110, %v2234
      %v2334 = vadd.f32 %v2111, %v2238
      %v2335 = vadd.f32 %v2112, %v2240
      %v2336 = vadd.f32 %v2113, %v2239
      %v2337 = vadd.f32 %v2114, %v2243
      %v2338 = vadd.f32 %v2115, %v2245
      %v2339 = vadd.f32 %v2116, %v2244
      %v2340 = vadd.f32 %v2117, %v2248
      %v2341 = vadd.f32 %v2118, %v2250
      %v2342 = vadd.f32 %v2119, %v2249
      %v2343 = vadd.f32 %v2120, %v2253
      %v2344 = vadd.f32 %v2121, %v2255
      %v2345 = vadd.f32 %v2122, %v2254
      %v2346 = vadd.f32 %v2123, %v2258
      %v2347 = vadd.f32 %v2124, %v2260
      %v2348 = vadd.f32 %v2125, %v2259
      %v2349 = vadd.f32 %v2126, %v2263
      %v2350 = vadd.f32 %v2127, %v2265
      %v2351 = vadd.f32 %v2128, %v2264
      %v2352 = vadd.f32 %v2129, %v2268
      %v2353 = vadd.f32 %v2130, %v2270
      %v2354 = vadd.f32 %v2131, %v2269
      %v2355 = vadd.f32 %v2132, %v2273
      %v2356 = vadd.f32 %v2133, %v2275
      %v2357 = vadd.f32 %v2134, %v2274
      %v2358 = vadd.f32 %v2135, %v2278
      %v2359 = vadd.f32 %v2136, %v2280
      %v2360 = vadd.f32 %v2137, %v2279
      %v2361 = vadd.f32 %v2138, %v2283
      %v2362 = vadd.f32 %v2139, %v2285
      %v2363 = vadd.f32 %v2140, %v2284
      %v2365 = vperm.slane %v401, 0
      %v2367 = vadd.f32 %v2325, %v2365
      %v2368 = vadd.f32 %v2326, %v2365
      %v2369 = vadd.f32 %v2327, %v2365
      %v2370 = vadd.f32 %v2328, %v2365
      %v2371 = vadd.f32 %v2329, %v2365
      %v2372 = vadd.f32 %v2330, %v2365
      %v2373 = vadd.f32 %v2331, %v2365
      %v2374 = vadd.f32 %v2332, %v2365
      %v2375 = vadd.f32 %v2333, %v2365
      %v2376 = vadd.f32 %v2334, %v2365
      %v2377 = vadd.f32 %v2335, %v2365
      %v2378 = vadd.f32 %v2336, %v2365
      %v2379 = vadd.f32 %v2337, %v2365
      %v2380 = vadd.f32 %v2338, %v2365
      %v2381 = vadd.f32 %v2339, %v2365
      %v2382 = vadd.f32 %v2340, %v2365
      %v2383 = vadd.f32 %v2341, %v2365
      %v2384 = vadd.f32 %v2342, %v2365
      %v2385 = vadd.f32 %v2343, %v2365
      %v2386 = vadd.f32 %v2344, %v2365
      %v2387 = vadd.f32 %v2345, %v2365
      %v2388 = vadd.f32 %v2346, %v2365
      %v2389 = vadd.f32 %v2347, %v2365
      %v2390 = vadd.f32 %v2348, %v2365
      %v2391 = vadd.f32 %v2349, %v2365
      %v2392 = vadd.f32 %v2350, %v2365
      %v2393 = vadd.f32 %v2351, %v2365
      %v2394 = vadd.f32 %v2352, %v2365
      %v2395 = vadd.f32 %v2353, %v2365
      %v2396 = vadd.f32 %v2354, %v2365
      %v2397 = vadd.f32 %v2355, %v2365
      %v2398 = vadd.f32 %v2356, %v2365
      %v2399 = vadd.f32 %v2357, %v2365
      %v2400 = vadd.f32 %v2358, %v2365
      %v2401 = vadd.f32 %v2359, %v2365
      %v2402 = vadd.f32 %v2360, %v2365
      %v2403 = vadd.f32 %v2361, %v2365
      %v2404 = vadd.f32 %v2362, %v2365
      %v2405 = vadd.f32 %v2363, %v2365
      %v2406 = vmax.f32 %v2367, 0.0
      %v2407 = vmax.f32 %v2368, 0.0
      %v2408 = vmax.f32 %v2369, 0.0
      %v2409 = vmax.f32 %v2370, 0.0
      %v2410 = vmax.f32 %v2371, 0.0
      %v2411 = vmax.f32 %v2372, 0.0
      %v2412 = vmax.f32 %v2373, 0.0
      %v2413 = vmax.f32 %v2374, 0.0
      %v2414 = vmax.f32 %v2375, 0.0
      %v2415 = vmax.f32 %v2376, 0.0
      %v2416 = vmax.f32 %v2377, 0.0
      %v2417 = vmax.f32 %v2378, 0.0
      %v2418 = vmax.f32 %v2379, 0.0
      %v2419 = vmax.f32 %v2380, 0.0
      %v2420 = vmax.f32 %v2381, 0.0
      %v2421 = vmax.f32 %v2382, 0.0
      %v2422 = vmax.f32 %v2383, 0.0
      %v2423 = vmax.f32 %v2384, 0.0
      %v2424 = vmax.f32 %v2385, 0.0
      %v2425 = vmax.f32 %v2386, 0.0
      %v2426 = vmax.f32 %v2387, 0.0
      %v2427 = vmax.f32 %v2388, 0.0
      %v2428 = vmax.f32 %v2389, 0.0
      %v2429 = vmax.f32 %v2390, 0.0
      %v2430 = vmax.f32 %v2391, 0.0
      %v2431 = vmax.f32 %v2392, 0.0
      %v2432 = vmax.f32 %v2393, 0.0
      %v2433 = vmax.f32 %v2394, 0.0
      %v2434 = vmax.f32 %v2395, 0.0
      %v2435 = vmax.f32 %v2396, 0.0
      %v2436 = vmax.f32 %v2397, 0.0
      %v2437 = vmax.f32 %v2398, 0.0
      %v2438 = vmax.f32 %v2399, 0.0
      %v2439 = vmax.f32 %v2400, 0.0
      %v2440 = vmax.f32 %v2401, 0.0
      %v2441 = vmax.f32 %v2402, 0.0
      %v2442 = vmax.f32 %v2403, 0.0
      %v2443 = vmax.f32 %v2404, 0.0
      %v2444 = vmax.f32 %v2405, 0.0
      %v2445 = vmul.f32 %v681, %v598
      %v2446 = vmul.f32 %v686, %v598
      %v2447 = vmul.f32 %v691, %v598
      %v2448 = vmul.f32 %v696, %v598
      %v2449 = vmul.f32 %v701, %v598
      %v2450 = vmul.f32 %v706, %v598
      %v2451 = vmul.f32 %v711, %v598
      %v2452 = vmul.f32 %v716, %v598
      %v2453 = vmul.f32 %v721, %v598
      %v2454 = vmul.f32 %v726, %v598
      %v2455 = vmul.f32 %v731, %v598
      %v2456 = vmul.f32 %v736, %v598
      %v2457 = vmul.f32 %v741, %v598
      %v2458 = vmul.f32 %v746, %v598
      %v2459 = vmul.f32 %v751, %v598
      %v2460 = vmul.f32 %v756, %v598
      %v2461 = vmul.f32 %v761, %v598
      %v2462 = vmul.f32 %v766, %v598
      %v2463 = vmul.f32 %v771, %v598
      %v2464 = vmul.f32 %v776, %v598
      %v2465 = vmul.f32 %v781, %v598
      %v2466 = vmul.f32 %v786, %v598
      %v2467 = vmul.f32 %v791, %v598
      %v2468 = vmul.f32 %v796, %v598
      %v2469 = vmul.f32 %v801, %v598
      %v2470 = vmul.f32 %v806, %v598
      %v2471 = vmul.f32 %v811, %v598
      %v2472 = vmul.f32 %v816, %v598
      %v2473 = vmul.f32 %v821, %v598
      %v2474 = vmul.f32 %v826, %v598
      %v2475 = vmul.f32 %v831, %v598
      %v2476 = vmul.f32 %v836, %v598
      %v2477 = vmul.f32 %v841, %v598
      %v2478 = vmul.f32 %v846, %v598
      %v2479 = vmul.f32 %v851, %v598
      %v2480 = vmul.f32 %v856, %v598
      %v2481 = vmul.f32 %v861, %v598
      %v2482 = vmul.f32 %v866, %v598
      %v2483 = vmul.f32 %v871, %v598
      %v2484 = vadd.f32 %v2445, 0.0
      %v2485 = vadd.f32 %v2446, 0.0
      %v2486 = vadd.f32 %v2447, 0.0
      %v2487 = vadd.f32 %v2448, 0.0
      %v2488 = vadd.f32 %v2449, 0.0
      %v2489 = vadd.f32 %v2450, 0.0
      %v2490 = vadd.f32 %v2451, 0.0
      %v2491 = vadd.f32 %v2452, 0.0
      %v2492 = vadd.f32 %v2453, 0.0
      %v2493 = vadd.f32 %v2454, 0.0
      %v2494 = vadd.f32 %v2455, 0.0
      %v2495 = vadd.f32 %v2456, 0.0
      %v2496 = vadd.f32 %v2457, 0.0
      %v2497 = vadd.f32 %v2458, 0.0
      %v2498 = vadd.f32 %v2459, 0.0
      %v2499 = vadd.f32 %v2460, 0.0
      %v2500 = vadd.f32 %v2461, 0.0
      %v2501 = vadd.f32 %v2462, 0.0
      %v2502 = vadd.f32 %v2463, 0.0
      %v2503 = vadd.f32 %v2464, 0.0
      %v2504 = vadd.f32 %v2465, 0.0
      %v2505 = vadd.f32 %v2466, 0.0
      %v2506 = vadd.f32 %v2467, 0.0
      %v2507 = vadd.f32 %v2468, 0.0
      %v2508 = vadd.f32 %v2469, 0.0
      %v2509 = vadd.f32 %v2470, 0.0
      %v2510 = vadd.f32 %v2471, 0.0
      %v2511 = vadd.f32 %v2472, 0.0
      %v2512 = vadd.f32 %v2473, 0.0
      %v2513 = vadd.f32 %v2474, 0.0
      %v2514 = vadd.f32 %v2475, 0.0
      %v2515 = vadd.f32 %v2476, 0.0
      %v2516 = vadd.f32 %v2477, 0.0
      %v2517 = vadd.f32 %v2478, 0.0
      %v2518 = vadd.f32 %v2479, 0.0
      %v2519 = vadd.f32 %v2480, 0.0
      %v2520 = vadd.f32 %v2481, 0.0
      %v2521 = vadd.f32 %v2482, 0.0
      %v2522 = vadd.f32 %v2483, 0.0
      %v2523 = vmul.f32 %v406, %v873
      %v2524 = vmul.f32 %v411, %v873
      %v2525 = vmul.f32 %v416, %v873
      %v2526 = vmul.f32 %v421, %v873
      %v2527 = vmul.f32 %v426, %v873
      %v2528 = vmul.f32 %v431, %v873
      %v2529 = vmul.f32 %v436, %v873
      %v2530 = vmul.f32 %v441, %v873
      %v2531 = vmul.f32 %v446, %v873
      %v2532 = vmul.f32 %v451, %v873
      %v2533 = vmul.f32 %v456, %v873
      %v2534 = vmul.f32 %v461, %v873
      %v2535 = vmul.f32 %v466, %v873
      %v2536 = vmul.f32 %v471, %v873
      %v2537 = vmul.f32 %v476, %v873
      %v2538 = vmul.f32 %v481, %v873
      %v2539 = vmul.f32 %v486, %v873
      %v2540 = vmul.f32 %v491, %v873
      %v2541 = vmul.f32 %v496, %v873
      %v2542 = vmul.f32 %v501, %v873
      %v2543 = vmul.f32 %v506, %v873
      %v2544 = vmul.f32 %v511, %v873
      %v2545 = vmul.f32 %v516, %v873
      %v2546 = vmul.f32 %v521, %v873
      %v2547 = vmul.f32 %v526, %v873
      %v2548 = vmul.f32 %v531, %v873
      %v2549 = vmul.f32 %v536, %v873
      %v2550 = vmul.f32 %v541, %v873
      %v2551 = vmul.f32 %v546, %v873
      %v2552 = vmul.f32 %v551, %v873
      %v2553 = vmul.f32 %v556, %v873
      %v2554 = vmul.f32 %v561, %v873
      %v2555 = vmul.f32 %v566, %v873
      %v2556 = vmul.f32 %v571, %v873
      %v2557 = vmul.f32 %v576, %v873
      %v2558 = vmul.f32 %v581, %v873
      %v2559 = vmul.f32 %v586, %v873
      %v2560 = vmul.f32 %v591, %v873
      %v2561 = vmul.f32 %v596, %v873
      %v2601 = vrot.slane %v2523, 1
      %v2602 = vrot.slane %v2524, 1
      %v2603 = vsel %vm1032, %v2601, %v2602
      %v2604 = vrot.slane %v2525, 1
      %v2605 = vsel %vm1032, %v2602, %v2604
      %v2606 = vrot.slane %v2526, 1
      %v2607 = vrot.slane %v2527, 1
      %v2608 = vsel %vm1032, %v2606, %v2607
      %v2609 = vrot.slane %v2528, 1
      %v2610 = vsel %vm1032, %v2607, %v2609
      %v2611 = vrot.slane %v2529, 1
      %v2612 = vrot.slane %v2530, 1
      %v2613 = vsel %vm1032, %v2611, %v2612
      %v2614 = vrot.slane %v2531, 1
      %v2615 = vsel %vm1032, %v2612, %v2614
      %v2616 = vrot.slane %v2532, 1
      %v2617 = vrot.slane %v2533, 1
      %v2618 = vsel %vm1032, %v2616, %v2617
      %v2619 = vrot.slane %v2534, 1
      %v2620 = vsel %vm1032, %v2617, %v2619
      %v2621 = vrot.slane %v2535, 1
      %v2622 = vrot.slane %v2536, 1
      %v2623 = vsel %vm1032, %v2621, %v2622
      %v2624 = vrot.slane %v2537, 1
      %v2625 = vsel %vm1032, %v2622, %v2624
      %v2626 = vrot.slane %v2538, 1
      %v2627 = vrot.slane %v2539, 1
      %v2628 = vsel %vm1032, %v2626, %v2627
      %v2629 = vrot.slane %v2540, 1
      %v2630 = vsel %vm1032, %v2627, %v2629
      %v2631 = vrot.slane %v2541, 1
      %v2632 = vrot.slane %v2542, 1
      %v2633 = vsel %vm1032, %v2631, %v2632
      %v2634 = vrot.slane %v2543, 1
      %v2635 = vsel %vm1032, %v2632, %v2634
      %v2636 = vrot.slane %v2544, 1
      %v2637 = vrot.slane %v2545, 1
      %v2638 = vsel %vm1032, %v2636, %v2637
      %v2639 = vrot.slane %v2546, 1
      %v2640 = vsel %vm1032, %v2637, %v2639
      %v2641 = vrot.slane %v2547, 1
      %v2642 = vrot.slane %v2548, 1
      %v2643 = vsel %vm1032, %v2641, %v2642
      %v2644 = vrot.slane %v2549, 1
      %v2645 = vsel %vm1032, %v2642, %v2644
      %v2646 = vrot.slane %v2550, 1
      %v2647 = vrot.slane %v2551, 1
      %v2648 = vsel %vm1032, %v2646, %v2647
      %v2649 = vrot.slane %v2552, 1
      %v2650 = vsel %vm1032, %v2647, %v2649
      %v2651 = vrot.slane %v2553, 1
      %v2652 = vrot.slane %v2554, 1
      %v2653 = vsel %vm1032, %v2651, %v2652
      %v2654 = vrot.slane %v2555, 1
      %v2655 = vsel %vm1032, %v2652, %v2654
      %v2656 = vrot.slane %v2556, 1
      %v2657 = vrot.slane %v2557, 1
      %v2658 = vsel %vm1032, %v2656, %v2657
      %v2659 = vrot.slane %v2558, 1
      %v2660 = vsel %vm1032, %v2657, %v2659
      %v2661 = vrot.slane %v2559, 1
      %v2662 = vrot.slane %v2560, 1
      %v2663 = vsel %vm1032, %v2661, %v2662
      %v2664 = vrot.slane %v2561, 1
      %v2665 = vsel %vm1032, %v2662, %v2664
      %v2705 = vadd.f32 %v2484, %v2603
      %v2706 = vadd.f32 %v2485, %v2605
      %v2707 = vadd.f32 %v2486, %v2604
      %v2708 = vadd.f32 %v2487, %v2608
      %v2709 = vadd.f32 %v2488, %v2610
      %v2710 = vadd.f32 %v2489, %v2609
      %v2711 = vadd.f32 %v2490, %v2613
      %v2712 = vadd.f32 %v2491, %v2615
      %v2713 = vadd.f32 %v2492, %v2614
      %v2714 = vadd.f32 %v2493, %v2618
      %v2715 = vadd.f32 %v2494, %v2620
      %v2716 = vadd.f32 %v2495, %v2619
      %v2717 = vadd.f32 %v2496, %v2623
      %v2718 = vadd.f32 %v2497, %v2625
      %v2719 = vadd.f32 %v2498, %v2624
      %v2720 = vadd.f32 %v2499, %v2628
      %v2721 = vadd.f32 %v2500, %v2630
      %v2722 = vadd.f32 %v2501, %v2629
      %v2723 = vadd.f32 %v2502, %v2633
      %v2724 = vadd.f32 %v2503, %v2635
      %v2725 = vadd.f32 %v2504, %v2634
      %v2726 = vadd.f32 %v2505, %v2638
      %v2727 = vadd.f32 %v2506, %v2640
      %v2728 = vadd.f32 %v2507, %v2639
      %v2729 = vadd.f32 %v2508, %v2643
      %v2730 = vadd.f32 %v2509, %v2645
      %v2731 = vadd.f32 %v2510, %v2644
      %v2732 = vadd.f32 %v2511, %v2648
      %v2733 = vadd.f32 %v2512, %v2650
      %v2734 = vadd.f32 %v2513, %v2649
      %v2735 = vadd.f32 %v2514, %v2653
      %v2736 = vadd.f32 %v2515, %v2655
      %v2737 = vadd.f32 %v2516, %v2654
      %v2738 = vadd.f32 %v2517, %v2658
      %v2739 = vadd.f32 %v2518, %v2660
      %v2740 = vadd.f32 %v2519, %v2659
      %v2741 = vadd.f32 %v2520, %v2663
      %v2742 = vadd.f32 %v2521, %v2665
      %v2743 = vadd.f32 %v2522, %v2664
      %v2744 = vmul.f32 %v681, %v953
      %v2745 = vmul.f32 %v686, %v953
      %v2746 = vmul.f32 %v691, %v953
      %v2747 = vmul.f32 %v696, %v953
      %v2748 = vmul.f32 %v701, %v953
      %v2749 = vmul.f32 %v706, %v953
      %v2750 = vmul.f32 %v711, %v953
      %v2751 = vmul.f32 %v716, %v953
      %v2752 = vmul.f32 %v721, %v953
      %v2753 = vmul.f32 %v726, %v953
      %v2754 = vmul.f32 %v731, %v953
      %v2755 = vmul.f32 %v736, %v953
      %v2756 = vmul.f32 %v741, %v953
      %v2757 = vmul.f32 %v746, %v953
      %v2758 = vmul.f32 %v751, %v953
      %v2759 = vmul.f32 %v756, %v953
      %v2760 = vmul.f32 %v761, %v953
      %v2761 = vmul.f32 %v766, %v953
      %v2762 = vmul.f32 %v771, %v953
      %v2763 = vmul.f32 %v776, %v953
      %v2764 = vmul.f32 %v781, %v953
      %v2765 = vmul.f32 %v786, %v953
      %v2766 = vmul.f32 %v791, %v953
      %v2767 = vmul.f32 %v796, %v953
      %v2768 = vmul.f32 %v801, %v953
      %v2769 = vmul.f32 %v806, %v953
      %v2770 = vmul.f32 %v811, %v953
      %v2771 = vmul.f32 %v816, %v953
      %v2772 = vmul.f32 %v821, %v953
      %v2773 = vmul.f32 %v826, %v953
      %v2774 = vmul.f32 %v831, %v953
      %v2775 = vmul.f32 %v836, %v953
      %v2776 = vmul.f32 %v841, %v953
      %v2777 = vmul.f32 %v846, %v953
      %v2778 = vmul.f32 %v851, %v953
      %v2779 = vmul.f32 %v856, %v953
      %v2780 = vmul.f32 %v861, %v953
      %v2781 = vmul.f32 %v866, %v953
      %v2782 = vmul.f32 %v871, %v953
      %v2822 = vrot.slane %v2744, 1
      %v2823 = vrot.slane %v2745, 1
      %v2824 = vsel %vm1032, %v2822, %v2823
      %v2825 = vrot.slane %v2746, 1
      %v2826 = vsel %vm1032, %v2823, %v2825
      %v2827 = vrot.slane %v2747, 1
      %v2828 = vrot.slane %v2748, 1
      %v2829 = vsel %vm1032, %v2827, %v2828
      %v2830 = vrot.slane %v2749, 1
      %v2831 = vsel %vm1032, %v2828, %v2830
      %v2832 = vrot.slane %v2750, 1
      %v2833 = vrot.slane %v2751, 1
      %v2834 = vsel %vm1032, %v2832, %v2833
      %v2835 = vrot.slane %v2752, 1
      %v2836 = vsel %vm1032, %v2833, %v2835
      %v2837 = vrot.slane %v2753, 1
      %v2838 = vrot.slane %v2754, 1
      %v2839 = vsel %vm1032, %v2837, %v2838
      %v2840 = vrot.slane %v2755, 1
      %v2841 = vsel %vm1032, %v2838, %v2840
      %v2842 = vrot.slane %v2756, 1
      %v2843 = vrot.slane %v2757, 1
      %v2844 = vsel %vm1032, %v2842, %v2843
      %v2845 = vrot.slane %v2758, 1
      %v2846 = vsel %vm1032, %v2843, %v2845
      %v2847 = vrot.slane %v2759, 1
      %v2848 = vrot.slane %v2760, 1
      %v2849 = vsel %vm1032, %v2847, %v2848
      %v2850 = vrot.slane %v2761, 1
      %v2851 = vsel %vm1032, %v2848, %v2850
      %v2852 = vrot.slane %v2762, 1
      %v2853 = vrot.slane %v2763, 1
      %v2854 = vsel %vm1032, %v2852, %v2853
      %v2855 = vrot.slane %v2764, 1
      %v2856 = vsel %vm1032, %v2853, %v2855
      %v2857 = vrot.slane %v2765, 1
      %v2858 = vrot.slane %v2766, 1
      %v2859 = vsel %vm1032, %v2857, %v2858
      %v2860 = vrot.slane %v2767, 1
      %v2861 = vsel %vm1032, %v2858, %v2860
      %v2862 = vrot.slane %v2768, 1
      %v2863 = vrot.slane %v2769, 1
      %v2864 = vsel %vm1032, %v2862, %v2863
      %v2865 = vrot.slane %v2770, 1
      %v2866 = vsel %vm1032, %v2863, %v2865
      %v2867 = vrot.slane %v2771, 1
      %v2868 = vrot.slane %v2772, 1
      %v2869 = vsel %vm1032, %v2867, %v2868
      %v2870 = vrot.slane %v2773, 1
      %v2871 = vsel %vm1032, %v2868, %v2870
      %v2872 = vrot.slane %v2774, 1
      %v2873 = vrot.slane %v2775, 1
      %v2874 = vsel %vm1032, %v2872, %v2873
      %v2875 = vrot.slane %v2776, 1
      %v2876 = vsel %vm1032, %v2873, %v2875
      %v2877 = vrot.slane %v2777, 1
      %v2878 = vrot.slane %v2778, 1
      %v2879 = vsel %vm1032, %v2877, %v2878
      %v2880 = vrot.slane %v2779, 1
      %v2881 = vsel %vm1032, %v2878, %v2880
      %v2882 = vrot.slane %v2780, 1
      %v2883 = vrot.slane %v2781, 1
      %v2884 = vsel %vm1032, %v2882, %v2883
      %v2885 = vrot.slane %v2782, 1
      %v2886 = vsel %vm1032, %v2883, %v2885
      %v2926 = vadd.f32 %v2705, %v2824
      %v2927 = vadd.f32 %v2706, %v2826
      %v2928 = vadd.f32 %v2707, %v2825
      %v2929 = vadd.f32 %v2708, %v2829
      %v2930 = vadd.f32 %v2709, %v2831
      %v2931 = vadd.f32 %v2710, %v2830
      %v2932 = vadd.f32 %v2711, %v2834
      %v2933 = vadd.f32 %v2712, %v2836
      %v2934 = vadd.f32 %v2713, %v2835
      %v2935 = vadd.f32 %v2714, %v2839
      %v2936 = vadd.f32 %v2715, %v2841
      %v2937 = vadd.f32 %v2716, %v2840
      %v2938 = vadd.f32 %v2717, %v2844
      %v2939 = vadd.f32 %v2718, %v2846
      %v2940 = vadd.f32 %v2719, %v2845
      %v2941 = vadd.f32 %v2720, %v2849
      %v2942 = vadd.f32 %v2721, %v2851
      %v2943 = vadd.f32 %v2722, %v2850
      %v2944 = vadd.f32 %v2723, %v2854
      %v2945 = vadd.f32 %v2724, %v2856
      %v2946 = vadd.f32 %v2725, %v2855
      %v2947 = vadd.f32 %v2726, %v2859
      %v2948 = vadd.f32 %v2727, %v2861
      %v2949 = vadd.f32 %v2728, %v2860
      %v2950 = vadd.f32 %v2729, %v2864
      %v2951 = vadd.f32 %v2730, %v2866
      %v2952 = vadd.f32 %v2731, %v2865
      %v2953 = vadd.f32 %v2732, %v2869
      %v2954 = vadd.f32 %v2733, %v2871
      %v2955 = vadd.f32 %v2734, %v2870
      %v2956 = vadd.f32 %v2735, %v2874
      %v2957 = vadd.f32 %v2736, %v2876
      %v2958 = vadd.f32 %v2737, %v2875
      %v2959 = vadd.f32 %v2738, %v2879
      %v2960 = vadd.f32 %v2739, %v2881
      %v2961 = vadd.f32 %v2740, %v2880
      %v2962 = vadd.f32 %v2741, %v2884
      %v2963 = vadd.f32 %v2742, %v2886
      %v2964 = vadd.f32 %v2743, %v2885
      %v2965 = vmul.f32 %v1456, %v1373
      %v2966 = vmul.f32 %v1461, %v1373
      %v2967 = vmul.f32 %v1466, %v1373
      %v2968 = vmul.f32 %v1471, %v1373
      %v2969 = vmul.f32 %v1476, %v1373
      %v2970 = vmul.f32 %v1481, %v1373
      %v2971 = vmul.f32 %v1486, %v1373
      %v2972 = vmul.f32 %v1491, %v1373
      %v2973 = vmul.f32 %v1496, %v1373
      %v2974 = vmul.f32 %v1501, %v1373
      %v2975 = vmul.f32 %v1506, %v1373
      %v2976 = vmul.f32 %v1511, %v1373
      %v2977 = vmul.f32 %v1516, %v1373
      %v2978 = vmul.f32 %v1521, %v1373
      %v2979 = vmul.f32 %v1526, %v1373
      %v2980 = vmul.f32 %v1531, %v1373
      %v2981 = vmul.f32 %v1536, %v1373
      %v2982 = vmul.f32 %v1541, %v1373
      %v2983 = vmul.f32 %v1546, %v1373
      %v2984 = vmul.f32 %v1551, %v1373
      %v2985 = vmul.f32 %v1556, %v1373
      %v2986 = vmul.f32 %v1561, %v1373
      %v2987 = vmul.f32 %v1566, %v1373
      %v2988 = vmul.f32 %v1571, %v1373
      %v2989 = vmul.f32 %v1576, %v1373
      %v2990 = vmul.f32 %v1581, %v1373
      %v2991 = vmul.f32 %v1586, %v1373
      %v2992 = vmul.f32 %v1591, %v1373
      %v2993 = vmul.f32 %v1596, %v1373
      %v2994 = vmul.f32 %v1601, %v1373
      %v2995 = vmul.f32 %v1606, %v1373
      %v2996 = vmul.f32 %v1611, %v1373
      %v2997 = vmul.f32 %v1616, %v1373
      %v2998 = vmul.f32 %v1621, %v1373
      %v2999 = vmul.f32 %v1626, %v1373
      %v3000 = vmul.f32 %v1631, %v1373
      %v3001 = vmul.f32 %v1636, %v1373
      %v3002 = vmul.f32 %v1641, %v1373
      %v3003 = vmul.f32 %v1646, %v1373
      %v3004 = vadd.f32 %v2926, %v2965
      %v3005 = vadd.f32 %v2927, %v2966
      %v3006 = vadd.f32 %v2928, %v2967
      %v3007 = vadd.f32 %v2929, %v2968
      %v3008 = vadd.f32 %v2930, %v2969
      %v3009 = vadd.f32 %v2931, %v2970
      %v3010 = vadd.f32 %v2932, %v2971
      %v3011 = vadd.f32 %v2933, %v2972
      %v3012 = vadd.f32 %v2934, %v2973
      %v3013 = vadd.f32 %v2935, %v2974
      %v3014 = vadd.f32 %v2936, %v2975
      %v3015 = vadd.f32 %v2937, %v2976
      %v3016 = vadd.f32 %v2938, %v2977
      %v3017 = vadd.f32 %v2939, %v2978
      %v3018 = vadd.f32 %v2940, %v2979
      %v3019 = vadd.f32 %v2941, %v2980
      %v3020 = vadd.f32 %v2942, %v2981
      %v3021 = vadd.f32 %v2943, %v2982
      %v3022 = vadd.f32 %v2944, %v2983
      %v3023 = vadd.f32 %v2945, %v2984
      %v3024 = vadd.f32 %v2946, %v2985
      %v3025 = vadd.f32 %v2947, %v2986
      %v3026 = vadd.f32 %v2948, %v2987
      %v3027 = vadd.f32 %v2949, %v2988
      %v3028 = vadd.f32 %v2950, %v2989
      %v3029 = vadd.f32 %v2951, %v2990
      %v3030 = vadd.f32 %v2952, %v2991
      %v3031 = vadd.f32 %v2953, %v2992
      %v3032 = vadd.f32 %v2954, %v2993
      %v3033 = vadd.f32 %v2955, %v2994
      %v3034 = vadd.f32 %v2956, %v2995
      %v3035 = vadd.f32 %v2957, %v2996
      %v3036 = vadd.f32 %v2958, %v2997
      %v3037 = vadd.f32 %v2959, %v2998
      %v3038 = vadd.f32 %v2960, %v2999
      %v3039 = vadd.f32 %v2961, %v3000
      %v3040 = vadd.f32 %v2962, %v3001
      %v3041 = vadd.f32 %v2963, %v3002
      %v3042 = vadd.f32 %v2964, %v3003
      %v3043 = vmul.f32 %v1181, %v1648
      %v3044 = vmul.f32 %v1186, %v1648
      %v3045 = vmul.f32 %v1191, %v1648
      %v3046 = vmul.f32 %v1196, %v1648
      %v3047 = vmul.f32 %v1201, %v1648
      %v3048 = vmul.f32 %v1206, %v1648
      %v3049 = vmul.f32 %v1211, %v1648
      %v3050 = vmul.f32 %v1216, %v1648
      %v3051 = vmul.f32 %v1221, %v1648
      %v3052 = vmul.f32 %v1226, %v1648
      %v3053 = vmul.f32 %v1231, %v1648
      %v3054 = vmul.f32 %v1236, %v1648
      %v3055 = vmul.f32 %v1241, %v1648
      %v3056 = vmul.f32 %v1246, %v1648
      %v3057 = vmul.f32 %v1251, %v1648
      %v3058 = vmul.f32 %v1256, %v1648
      %v3059 = vmul.f32 %v1261, %v1648
      %v3060 = vmul.f32 %v1266, %v1648
      %v3061 = vmul.f32 %v1271, %v1648
      %v3062 = vmul.f32 %v1276, %v1648
      %v3063 = vmul.f32 %v1281, %v1648
      %v3064 = vmul.f32 %v1286, %v1648
      %v3065 = vmul.f32 %v1291, %v1648
      %v3066 = vmul.f32 %v1296, %v1648
      %v3067 = vmul.f32 %v1301, %v1648
      %v3068 = vmul.f32 %v1306, %v1648
      %v3069 = vmul.f32 %v1311, %v1648
      %v3070 = vmul.f32 %v1316, %v1648
      %v3071 = vmul.f32 %v1321, %v1648
      %v3072 = vmul.f32 %v1326, %v1648
      %v3073 = vmul.f32 %v1331, %v1648
      %v3074 = vmul.f32 %v1336, %v1648
      %v3075 = vmul.f32 %v1341, %v1648
      %v3076 = vmul.f32 %v1346, %v1648
      %v3077 = vmul.f32 %v1351, %v1648
      %v3078 = vmul.f32 %v1356, %v1648
      %v3079 = vmul.f32 %v1361, %v1648
      %v3080 = vmul.f32 %v1366, %v1648
      %v3081 = vmul.f32 %v1371, %v1648
      %v3121 = vrot.slane %v3043, 1
      %v3122 = vrot.slane %v3044, 1
      %v3123 = vsel %vm1032, %v3121, %v3122
      %v3124 = vrot.slane %v3045, 1
      %v3125 = vsel %vm1032, %v3122, %v3124
      %v3126 = vrot.slane %v3046, 1
      %v3127 = vrot.slane %v3047, 1
      %v3128 = vsel %vm1032, %v3126, %v3127
      %v3129 = vrot.slane %v3048, 1
      %v3130 = vsel %vm1032, %v3127, %v3129
      %v3131 = vrot.slane %v3049, 1
      %v3132 = vrot.slane %v3050, 1
      %v3133 = vsel %vm1032, %v3131, %v3132
      %v3134 = vrot.slane %v3051, 1
      %v3135 = vsel %vm1032, %v3132, %v3134
      %v3136 = vrot.slane %v3052, 1
      %v3137 = vrot.slane %v3053, 1
      %v3138 = vsel %vm1032, %v3136, %v3137
      %v3139 = vrot.slane %v3054, 1
      %v3140 = vsel %vm1032, %v3137, %v3139
      %v3141 = vrot.slane %v3055, 1
      %v3142 = vrot.slane %v3056, 1
      %v3143 = vsel %vm1032, %v3141, %v3142
      %v3144 = vrot.slane %v3057, 1
      %v3145 = vsel %vm1032, %v3142, %v3144
      %v3146 = vrot.slane %v3058, 1
      %v3147 = vrot.slane %v3059, 1
      %v3148 = vsel %vm1032, %v3146, %v3147
      %v3149 = vrot.slane %v3060, 1
      %v3150 = vsel %vm1032, %v3147, %v3149
      %v3151 = vrot.slane %v3061, 1
      %v3152 = vrot.slane %v3062, 1
      %v3153 = vsel %vm1032, %v3151, %v3152
      %v3154 = vrot.slane %v3063, 1
      %v3155 = vsel %vm1032, %v3152, %v3154
      %v3156 = vrot.slane %v3064, 1
      %v3157 = vrot.slane %v3065, 1
      %v3158 = vsel %vm1032, %v3156, %v3157
      %v3159 = vrot.slane %v3066, 1
      %v3160 = vsel %vm1032, %v3157, %v3159
      %v3161 = vrot.slane %v3067, 1
      %v3162 = vrot.slane %v3068, 1
      %v3163 = vsel %vm1032, %v3161, %v3162
      %v3164 = vrot.slane %v3069, 1
      %v3165 = vsel %vm1032, %v3162, %v3164
      %v3166 = vrot.slane %v3070, 1
      %v3167 = vrot.slane %v3071, 1
      %v3168 = vsel %vm1032, %v3166, %v3167
      %v3169 = vrot.slane %v3072, 1
      %v3170 = vsel %vm1032, %v3167, %v3169
      %v3171 = vrot.slane %v3073, 1
      %v3172 = vrot.slane %v3074, 1
      %v3173 = vsel %vm1032, %v3171, %v3172
      %v3174 = vrot.slane %v3075, 1
      %v3175 = vsel %vm1032, %v3172, %v3174
      %v3176 = vrot.slane %v3076, 1
      %v3177 = vrot.slane %v3077, 1
      %v3178 = vsel %vm1032, %v3176, %v3177
      %v3179 = vrot.slane %v3078, 1
      %v3180 = vsel %vm1032, %v3177, %v3179
      %v3181 = vrot.slane %v3079, 1
      %v3182 = vrot.slane %v3080, 1
      %v3183 = vsel %vm1032, %v3181, %v3182
      %v3184 = vrot.slane %v3081, 1
      %v3185 = vsel %vm1032, %v3182, %v3184
      %v3225 = vadd.f32 %v3004, %v3123
      %v3226 = vadd.f32 %v3005, %v3125
      %v3227 = vadd.f32 %v3006, %v3124
      %v3228 = vadd.f32 %v3007, %v3128
      %v3229 = vadd.f32 %v3008, %v3130
      %v3230 = vadd.f32 %v3009, %v3129
      %v3231 = vadd.f32 %v3010, %v3133
      %v3232 = vadd.f32 %v3011, %v3135
      %v3233 = vadd.f32 %v3012, %v3134
      %v3234 = vadd.f32 %v3013, %v3138
      %v3235 = vadd.f32 %v3014, %v3140
      %v3236 = vadd.f32 %v3015, %v3139
      %v3237 = vadd.f32 %v3016, %v3143
      %v3238 = vadd.f32 %v3017, %v3145
      %v3239 = vadd.f32 %v3018, %v3144
      %v3240 = vadd.f32 %v3019, %v3148
      %v3241 = vadd.f32 %v3020, %v3150
      %v3242 = vadd.f32 %v3021, %v3149
      %v3243 = vadd.f32 %v3022, %v3153
      %v3244 = vadd.f32 %v3023, %v3155
      %v3245 = vadd.f32 %v3024, %v3154
      %v3246 = vadd.f32 %v3025, %v3158
      %v3247 = vadd.f32 %v3026, %v3160
      %v3248 = vadd.f32 %v3027, %v3159
      %v3249 = vadd.f32 %v3028, %v3163
      %v3250 = vadd.f32 %v3029, %v3165
      %v3251 = vadd.f32 %v3030, %v3164
      %v3252 = vadd.f32 %v3031, %v3168
      %v3253 = vadd.f32 %v3032, %v3170
      %v3254 = vadd.f32 %v3033, %v3169
      %v3255 = vadd.f32 %v3034, %v3173
      %v3256 = vadd.f32 %v3035, %v3175
      %v3257 = vadd.f32 %v3036, %v3174
      %v3258 = vadd.f32 %v3037, %v3178
      %v3259 = vadd.f32 %v3038, %v3180
      %v3260 = vadd.f32 %v3039, %v3179
      %v3261 = vadd.f32 %v3040, %v3183
      %v3262 = vadd.f32 %v3041, %v3185
      %v3263 = vadd.f32 %v3042, %v3184
      %v3264 = vmul.f32 %v1456, %v1728
      %v3265 = vmul.f32 %v1461, %v1728
      %v3266 = vmul.f32 %v1466, %v1728
      %v3267 = vmul.f32 %v1471, %v1728
      %v3268 = vmul.f32 %v1476, %v1728
      %v3269 = vmul.f32 %v1481, %v1728
      %v3270 = vmul.f32 %v1486, %v1728
      %v3271 = vmul.f32 %v1491, %v1728
      %v3272 = vmul.f32 %v1496, %v1728
      %v3273 = vmul.f32 %v1501, %v1728
      %v3274 = vmul.f32 %v1506, %v1728
      %v3275 = vmul.f32 %v1511, %v1728
      %v3276 = vmul.f32 %v1516, %v1728
      %v3277 = vmul.f32 %v1521, %v1728
      %v3278 = vmul.f32 %v1526, %v1728
      %v3279 = vmul.f32 %v1531, %v1728
      %v3280 = vmul.f32 %v1536, %v1728
      %v3281 = vmul.f32 %v1541, %v1728
      %v3282 = vmul.f32 %v1546, %v1728
      %v3283 = vmul.f32 %v1551, %v1728
      %v3284 = vmul.f32 %v1556, %v1728
      %v3285 = vmul.f32 %v1561, %v1728
      %v3286 = vmul.f32 %v1566, %v1728
      %v3287 = vmul.f32 %v1571, %v1728
      %v3288 = vmul.f32 %v1576, %v1728
      %v3289 = vmul.f32 %v1581, %v1728
      %v3290 = vmul.f32 %v1586, %v1728
      %v3291 = vmul.f32 %v1591, %v1728
      %v3292 = vmul.f32 %v1596, %v1728
      %v3293 = vmul.f32 %v1601, %v1728
      %v3294 = vmul.f32 %v1606, %v1728
      %v3295 = vmul.f32 %v1611, %v1728
      %v3296 = vmul.f32 %v1616, %v1728
      %v3297 = vmul.f32 %v1621, %v1728
      %v3298 = vmul.f32 %v1626, %v1728
      %v3299 = vmul.f32 %v1631, %v1728
      %v3300 = vmul.f32 %v1636, %v1728
      %v3301 = vmul.f32 %v1641, %v1728
      %v3302 = vmul.f32 %v1646, %v1728
      %v3342 = vrot.slane %v3264, 1
      %v3343 = vrot.slane %v3265, 1
      %v3344 = vsel %vm1032, %v3342, %v3343
      %v3345 = vrot.slane %v3266, 1
      %v3346 = vsel %vm1032, %v3343, %v3345
      %v3347 = vrot.slane %v3267, 1
      %v3348 = vrot.slane %v3268, 1
      %v3349 = vsel %vm1032, %v3347, %v3348
      %v3350 = vrot.slane %v3269, 1
      %v3351 = vsel %vm1032, %v3348, %v3350
      %v3352 = vrot.slane %v3270, 1
      %v3353 = vrot.slane %v3271, 1
      %v3354 = vsel %vm1032, %v3352, %v3353
      %v3355 = vrot.slane %v3272, 1
      %v3356 = vsel %vm1032, %v3353, %v3355
      %v3357 = vrot.slane %v3273, 1
      %v3358 = vrot.slane %v3274, 1
      %v3359 = vsel %vm1032, %v3357, %v3358
      %v3360 = vrot.slane %v3275, 1
      %v3361 = vsel %vm1032, %v3358, %v3360
      %v3362 = vrot.slane %v3276, 1
      %v3363 = vrot.slane %v3277, 1
      %v3364 = vsel %vm1032, %v3362, %v3363
      %v3365 = vrot.slane %v3278, 1
      %v3366 = vsel %vm1032, %v3363, %v3365
      %v3367 = vrot.slane %v3279, 1
      %v3368 = vrot.slane %v3280, 1
      %v3369 = vsel %vm1032, %v3367, %v3368
      %v3370 = vrot.slane %v3281, 1
      %v3371 = vsel %vm1032, %v3368, %v3370
      %v3372 = vrot.slane %v3282, 1
      %v3373 = vrot.slane %v3283, 1
      %v3374 = vsel %vm1032, %v3372, %v3373
      %v3375 = vrot.slane %v3284, 1
      %v3376 = vsel %vm1032, %v3373, %v3375
      %v3377 = vrot.slane %v3285, 1
      %v3378 = vrot.slane %v3286, 1
      %v3379 = vsel %vm1032, %v3377, %v3378
      %v3380 = vrot.slane %v3287, 1
      %v3381 = vsel %vm1032, %v3378, %v3380
      %v3382 = vrot.slane %v3288, 1
      %v3383 = vrot.slane %v3289, 1
      %v3384 = vsel %vm1032, %v3382, %v3383
      %v3385 = vrot.slane %v3290, 1
      %v3386 = vsel %vm1032, %v3383, %v3385
      %v3387 = vrot.slane %v3291, 1
      %v3388 = vrot.slane %v3292, 1
      %v3389 = vsel %vm1032, %v3387, %v3388
      %v3390 = vrot.slane %v3293, 1
      %v3391 = vsel %vm1032, %v3388, %v3390
      %v3392 = vrot.slane %v3294, 1
      %v3393 = vrot.slane %v3295, 1
      %v3394 = vsel %vm1032, %v3392, %v3393
      %v3395 = vrot.slane %v3296, 1
      %v3396 = vsel %vm1032, %v3393, %v3395
      %v3397 = vrot.slane %v3297, 1
      %v3398 = vrot.slane %v3298, 1
      %v3399 = vsel %vm1032, %v3397, %v3398
      %v3400 = vrot.slane %v3299, 1
      %v3401 = vsel %vm1032, %v3398, %v3400
      %v3402 = vrot.slane %v3300, 1
      %v3403 = vrot.slane %v3301, 1
      %v3404 = vsel %vm1032, %v3402, %v3403
      %v3405 = vrot.slane %v3302, 1
      %v3406 = vsel %vm1032, %v3403, %v3405
      %v3446 = vadd.f32 %v3225, %v3344
      %v3447 = vadd.f32 %v3226, %v3346
      %v3448 = vadd.f32 %v3227, %v3345
      %v3449 = vadd.f32 %v3228, %v3349
      %v3450 = vadd.f32 %v3229, %v3351
      %v3451 = vadd.f32 %v3230, %v3350
      %v3452 = vadd.f32 %v3231, %v3354
      %v3453 = vadd.f32 %v3232, %v3356
      %v3454 = vadd.f32 %v3233, %v3355
      %v3455 = vadd.f32 %v3234, %v3359
      %v3456 = vadd.f32 %v3235, %v3361
      %v3457 = vadd.f32 %v3236, %v3360
      %v3458 = vadd.f32 %v3237, %v3364
      %v3459 = vadd.f32 %v3238, %v3366
      %v3460 = vadd.f32 %v3239, %v3365
      %v3461 = vadd.f32 %v3240, %v3369
      %v3462 = vadd.f32 %v3241, %v3371
      %v3463 = vadd.f32 %v3242, %v3370
      %v3464 = vadd.f32 %v3243, %v3374
      %v3465 = vadd.f32 %v3244, %v3376
      %v3466 = vadd.f32 %v3245, %v3375
      %v3467 = vadd.f32 %v3246, %v3379
      %v3468 = vadd.f32 %v3247, %v3381
      %v3469 = vadd.f32 %v3248, %v3380
      %v3470 = vadd.f32 %v3249, %v3384
      %v3471 = vadd.f32 %v3250, %v3386
      %v3472 = vadd.f32 %v3251, %v3385
      %v3473 = vadd.f32 %v3252, %v3389
      %v3474 = vadd.f32 %v3253, %v3391
      %v3475 = vadd.f32 %v3254, %v3390
      %v3476 = vadd.f32 %v3255, %v3394
      %v3477 = vadd.f32 %v3256, %v3396
      %v3478 = vadd.f32 %v3257, %v3395
      %v3479 = vadd.f32 %v3258, %v3399
      %v3480 = vadd.f32 %v3259, %v3401
      %v3481 = vadd.f32 %v3260, %v3400
      %v3482 = vadd.f32 %v3261, %v3404
      %v3483 = vadd.f32 %v3262, %v3406
      %v3484 = vadd.f32 %v3263, %v3405
      %v3485 = vmul.f32 %v696, %v1967
      %v3486 = vmul.f32 %v701, %v1967
      %v3487 = vmul.f32 %v706, %v1967
      %v3488 = vmul.f32 %v711, %v1967
      %v3489 = vmul.f32 %v716, %v1967
      %v3490 = vmul.f32 %v721, %v1967
      %v3491 = vmul.f32 %v726, %v1967
      %v3492 = vmul.f32 %v731, %v1967
      %v3493 = vmul.f32 %v736, %v1967
      %v3494 = vmul.f32 %v741, %v1967
      %v3495 = vmul.f32 %v746, %v1967
      %v3496 = vmul.f32 %v751, %v1967
      %v3497 = vmul.f32 %v756, %v1967
      %v3498 = vmul.f32 %v761, %v1967
      %v3499 = vmul.f32 %v766, %v1967
      %v3500 = vmul.f32 %v771, %v1967
      %v3501 = vmul.f32 %v776, %v1967
      %v3502 = vmul.f32 %v781, %v1967
      %v3503 = vmul.f32 %v786, %v1967
      %v3504 = vmul.f32 %v791, %v1967
      %v3505 = vmul.f32 %v796, %v1967
      %v3506 = vmul.f32 %v801, %v1967
      %v3507 = vmul.f32 %v806, %v1967
      %v3508 = vmul.f32 %v811, %v1967
      %v3509 = vmul.f32 %v816, %v1967
      %v3510 = vmul.f32 %v821, %v1967
      %v3511 = vmul.f32 %v826, %v1967
      %v3512 = vmul.f32 %v831, %v1967
      %v3513 = vmul.f32 %v836, %v1967
      %v3514 = vmul.f32 %v841, %v1967
      %v3515 = vmul.f32 %v846, %v1967
      %v3516 = vmul.f32 %v851, %v1967
      %v3517 = vmul.f32 %v856, %v1967
      %v3518 = vmul.f32 %v861, %v1967
      %v3519 = vmul.f32 %v866, %v1967
      %v3520 = vmul.f32 %v871, %v1967
      %v3521 = vmul.f32 %v2050, %v1967
      %v3522 = vmul.f32 %v2055, %v1967
      %v3523 = vmul.f32 %v2060, %v1967
      %v3524 = vadd.f32 %v3446, %v3485
      %v3525 = vadd.f32 %v3447, %v3486
      %v3526 = vadd.f32 %v3448, %v3487
      %v3527 = vadd.f32 %v3449, %v3488
      %v3528 = vadd.f32 %v3450, %v3489
      %v3529 = vadd.f32 %v3451, %v3490
      %v3530 = vadd.f32 %v3452, %v3491
      %v3531 = vadd.f32 %v3453, %v3492
      %v3532 = vadd.f32 %v3454, %v3493
      %v3533 = vadd.f32 %v3455, %v3494
      %v3534 = vadd.f32 %v3456, %v3495
      %v3535 = vadd.f32 %v3457, %v3496
      %v3536 = vadd.f32 %v3458, %v3497
      %v3537 = vadd.f32 %v3459, %v3498
      %v3538 = vadd.f32 %v3460, %v3499
      %v3539 = vadd.f32 %v3461, %v3500
      %v3540 = vadd.f32 %v3462, %v3501
      %v3541 = vadd.f32 %v3463, %v3502
      %v3542 = vadd.f32 %v3464, %v3503
      %v3543 = vadd.f32 %v3465, %v3504
      %v3544 = vadd.f32 %v3466, %v3505
      %v3545 = vadd.f32 %v3467, %v3506
      %v3546 = vadd.f32 %v3468, %v3507
      %v3547 = vadd.f32 %v3469, %v3508
      %v3548 = vadd.f32 %v3470, %v3509
      %v3549 = vadd.f32 %v3471, %v3510
      %v3550 = vadd.f32 %v3472, %v3511
      %v3551 = vadd.f32 %v3473, %v3512
      %v3552 = vadd.f32 %v3474, %v3513
      %v3553 = vadd.f32 %v3475, %v3514
      %v3554 = vadd.f32 %v3476, %v3515
      %v3555 = vadd.f32 %v3477, %v3516
      %v3556 = vadd.f32 %v3478, %v3517
      %v3557 = vadd.f32 %v3479, %v3518
      %v3558 = vadd.f32 %v3480, %v3519
      %v3559 = vadd.f32 %v3481, %v3520
      %v3560 = vadd.f32 %v3482, %v3521
      %v3561 = vadd.f32 %v3483, %v3522
      %v3562 = vadd.f32 %v3484, %v3523
      %v3563 = vmul.f32 %v421, %v2062
      %v3564 = vmul.f32 %v426, %v2062
      %v3565 = vmul.f32 %v431, %v2062
      %v3566 = vmul.f32 %v436, %v2062
      %v3567 = vmul.f32 %v441, %v2062
      %v3568 = vmul.f32 %v446, %v2062
      %v3569 = vmul.f32 %v451, %v2062
      %v3570 = vmul.f32 %v456, %v2062
      %v3571 = vmul.f32 %v461, %v2062
      %v3572 = vmul.f32 %v466, %v2062
      %v3573 = vmul.f32 %v471, %v2062
      %v3574 = vmul.f32 %v476, %v2062
      %v3575 = vmul.f32 %v481, %v2062
      %v3576 = vmul.f32 %v486, %v2062
      %v3577 = vmul.f32 %v491, %v2062
      %v3578 = vmul.f32 %v496, %v2062
      %v3579 = vmul.f32 %v501, %v2062
      %v3580 = vmul.f32 %v506, %v2062
      %v3581 = vmul.f32 %v511, %v2062
      %v3582 = vmul.f32 %v516, %v2062
      %v3583 = vmul.f32 %v521, %v2062
      %v3584 = vmul.f32 %v526, %v2062
      %v3585 = vmul.f32 %v531, %v2062
      %v3586 = vmul.f32 %v536, %v2062
      %v3587 = vmul.f32 %v541, %v2062
      %v3588 = vmul.f32 %v546, %v2062
      %v3589 = vmul.f32 %v551, %v2062
      %v3590 = vmul.f32 %v556, %v2062
      %v3591 = vmul.f32 %v561, %v2062
      %v3592 = vmul.f32 %v566, %v2062
      %v3593 = vmul.f32 %v571, %v2062
      %v3594 = vmul.f32 %v576, %v2062
      %v3595 = vmul.f32 %v581, %v2062
      %v3596 = vmul.f32 %v586, %v2062
      %v3597 = vmul.f32 %v591, %v2062
      %v3598 = vmul.f32 %v596, %v2062
      %v3599 = vmul.f32 %v1955, %v2062
      %v3600 = vmul.f32 %v1960, %v2062
      %v3601 = vmul.f32 %v1965, %v2062
      %v3641 = vrot.slane %v3563, 1
      %v3642 = vrot.slane %v3564, 1
      %v3643 = vsel %vm1032, %v3641, %v3642
      %v3644 = vrot.slane %v3565, 1
      %v3645 = vsel %vm1032, %v3642, %v3644
      %v3646 = vrot.slane %v3566, 1
      %v3647 = vrot.slane %v3567, 1
      %v3648 = vsel %vm1032, %v3646, %v3647
      %v3649 = vrot.slane %v3568, 1
      %v3650 = vsel %vm1032, %v3647, %v3649
      %v3651 = vrot.slane %v3569, 1
      %v3652 = vrot.slane %v3570, 1
      %v3653 = vsel %vm1032, %v3651, %v3652
      %v3654 = vrot.slane %v3571, 1
      %v3655 = vsel %vm1032, %v3652, %v3654
      %v3656 = vrot.slane %v3572, 1
      %v3657 = vrot.slane %v3573, 1
      %v3658 = vsel %vm1032, %v3656, %v3657
      %v3659 = vrot.slane %v3574, 1
      %v3660 = vsel %vm1032, %v3657, %v3659
      %v3661 = vrot.slane %v3575, 1
      %v3662 = vrot.slane %v3576, 1
      %v3663 = vsel %vm1032, %v3661, %v3662
      %v3664 = vrot.slane %v3577, 1
      %v3665 = vsel %vm1032, %v3662, %v3664
      %v3666 = vrot.slane %v3578, 1
      %v3667 = vrot.slane %v3579, 1
      %v3668 = vsel %vm1032, %v3666, %v3667
      %v3669 = vrot.slane %v3580, 1
      %v3670 = vsel %vm1032, %v3667, %v3669
      %v3671 = vrot.slane %v3581, 1
      %v3672 = vrot.slane %v3582, 1
      %v3673 = vsel %vm1032, %v3671, %v3672
      %v3674 = vrot.slane %v3583, 1
      %v3675 = vsel %vm1032, %v3672, %v3674
      %v3676 = vrot.slane %v3584, 1
      %v3677 = vrot.slane %v3585, 1
      %v3678 = vsel %vm1032, %v3676, %v3677
      %v3679 = vrot.slane %v3586, 1
      %v3680 = vsel %vm1032, %v3677, %v3679
      %v3681 = vrot.slane %v3587, 1
      %v3682 = vrot.slane %v3588, 1
      %v3683 = vsel %vm1032, %v3681, %v3682
      %v3684 = vrot.slane %v3589, 1
      %v3685 = vsel %vm1032, %v3682, %v3684
      %v3686 = vrot.slane %v3590, 1
      %v3687 = vrot.slane %v3591, 1
      %v3688 = vsel %vm1032, %v3686, %v3687
      %v3689 = vrot.slane %v3592, 1
      %v3690 = vsel %vm1032, %v3687, %v3689
      %v3691 = vrot.slane %v3593, 1
      %v3692 = vrot.slane %v3594, 1
      %v3693 = vsel %vm1032, %v3691, %v3692
      %v3694 = vrot.slane %v3595, 1
      %v3695 = vsel %vm1032, %v3692, %v3694
      %v3696 = vrot.slane %v3596, 1
      %v3697 = vrot.slane %v3597, 1
      %v3698 = vsel %vm1032, %v3696, %v3697
      %v3699 = vrot.slane %v3598, 1
      %v3700 = vsel %vm1032, %v3697, %v3699
      %v3701 = vrot.slane %v3599, 1
      %v3702 = vrot.slane %v3600, 1
      %v3703 = vsel %vm1032, %v3701, %v3702
      %v3704 = vrot.slane %v3601, 1
      %v3705 = vsel %vm1032, %v3702, %v3704
      %v3745 = vadd.f32 %v3524, %v3643
      %v3746 = vadd.f32 %v3525, %v3645
      %v3747 = vadd.f32 %v3526, %v3644
      %v3748 = vadd.f32 %v3527, %v3648
      %v3749 = vadd.f32 %v3528, %v3650
      %v3750 = vadd.f32 %v3529, %v3649
      %v3751 = vadd.f32 %v3530, %v3653
      %v3752 = vadd.f32 %v3531, %v3655
      %v3753 = vadd.f32 %v3532, %v3654
      %v3754 = vadd.f32 %v3533, %v3658
      %v3755 = vadd.f32 %v3534, %v3660
      %v3756 = vadd.f32 %v3535, %v3659
      %v3757 = vadd.f32 %v3536, %v3663
      %v3758 = vadd.f32 %v3537, %v3665
      %v3759 = vadd.f32 %v3538, %v3664
      %v3760 = vadd.f32 %v3539, %v3668
      %v3761 = vadd.f32 %v3540, %v3670
      %v3762 = vadd.f32 %v3541, %v3669
      %v3763 = vadd.f32 %v3542, %v3673
      %v3764 = vadd.f32 %v3543, %v3675
      %v3765 = vadd.f32 %v3544, %v3674
      %v3766 = vadd.f32 %v3545, %v3678
      %v3767 = vadd.f32 %v3546, %v3680
      %v3768 = vadd.f32 %v3547, %v3679
      %v3769 = vadd.f32 %v3548, %v3683
      %v3770 = vadd.f32 %v3549, %v3685
      %v3771 = vadd.f32 %v3550, %v3684
      %v3772 = vadd.f32 %v3551, %v3688
      %v3773 = vadd.f32 %v3552, %v3690
      %v3774 = vadd.f32 %v3553, %v3689
      %v3775 = vadd.f32 %v3554, %v3693
      %v3776 = vadd.f32 %v3555, %v3695
      %v3777 = vadd.f32 %v3556, %v3694
      %v3778 = vadd.f32 %v3557, %v3698
      %v3779 = vadd.f32 %v3558, %v3700
      %v3780 = vadd.f32 %v3559, %v3699
      %v3781 = vadd.f32 %v3560, %v3703
      %v3782 = vadd.f32 %v3561, %v3705
      %v3783 = vadd.f32 %v3562, %v3704
      %v3784 = vmul.f32 %v696, %v2142
      %v3785 = vmul.f32 %v701, %v2142
      %v3786 = vmul.f32 %v706, %v2142
      %v3787 = vmul.f32 %v711, %v2142
      %v3788 = vmul.f32 %v716, %v2142
      %v3789 = vmul.f32 %v721, %v2142
      %v3790 = vmul.f32 %v726, %v2142
      %v3791 = vmul.f32 %v731, %v2142
      %v3792 = vmul.f32 %v736, %v2142
      %v3793 = vmul.f32 %v741, %v2142
      %v3794 = vmul.f32 %v746, %v2142
      %v3795 = vmul.f32 %v751, %v2142
      %v3796 = vmul.f32 %v756, %v2142
      %v3797 = vmul.f32 %v761, %v2142
      %v3798 = vmul.f32 %v766, %v2142
      %v3799 = vmul.f32 %v771, %v2142
      %v3800 = vmul.f32 %v776, %v2142
      %v3801 = vmul.f32 %v781, %v2142
      %v3802 = vmul.f32 %v786, %v2142
      %v3803 = vmul.f32 %v791, %v2142
      %v3804 = vmul.f32 %v796, %v2142
      %v3805 = vmul.f32 %v801, %v2142
      %v3806 = vmul.f32 %v806, %v2142
      %v3807 = vmul.f32 %v811, %v2142
      %v3808 = vmul.f32 %v816, %v2142
      %v3809 = vmul.f32 %v821, %v2142
      %v3810 = vmul.f32 %v826, %v2142
      %v3811 = vmul.f32 %v831, %v2142
      %v3812 = vmul.f32 %v836, %v2142
      %v3813 = vmul.f32 %v841, %v2142
      %v3814 = vmul.f32 %v846, %v2142
      %v3815 = vmul.f32 %v851, %v2142
      %v3816 = vmul.f32 %v856, %v2142
      %v3817 = vmul.f32 %v861, %v2142
      %v3818 = vmul.f32 %v866, %v2142
      %v3819 = vmul.f32 %v871, %v2142
      %v3820 = vmul.f32 %v2050, %v2142
      %v3821 = vmul.f32 %v2055, %v2142
      %v3822 = vmul.f32 %v2060, %v2142
      %v3862 = vrot.slane %v3784, 1
      %v3863 = vrot.slane %v3785, 1
      %v3864 = vsel %vm1032, %v3862, %v3863
      %v3865 = vrot.slane %v3786, 1
      %v3866 = vsel %vm1032, %v3863, %v3865
      %v3867 = vrot.slane %v3787, 1
      %v3868 = vrot.slane %v3788, 1
      %v3869 = vsel %vm1032, %v3867, %v3868
      %v3870 = vrot.slane %v3789, 1
      %v3871 = vsel %vm1032, %v3868, %v3870
      %v3872 = vrot.slane %v3790, 1
      %v3873 = vrot.slane %v3791, 1
      %v3874 = vsel %vm1032, %v3872, %v3873
      %v3875 = vrot.slane %v3792, 1
      %v3876 = vsel %vm1032, %v3873, %v3875
      %v3877 = vrot.slane %v3793, 1
      %v3878 = vrot.slane %v3794, 1
      %v3879 = vsel %vm1032, %v3877, %v3878
      %v3880 = vrot.slane %v3795, 1
      %v3881 = vsel %vm1032, %v3878, %v3880
      %v3882 = vrot.slane %v3796, 1
      %v3883 = vrot.slane %v3797, 1
      %v3884 = vsel %vm1032, %v3882, %v3883
      %v3885 = vrot.slane %v3798, 1
      %v3886 = vsel %vm1032, %v3883, %v3885
      %v3887 = vrot.slane %v3799, 1
      %v3888 = vrot.slane %v3800, 1
      %v3889 = vsel %vm1032, %v3887, %v3888
      %v3890 = vrot.slane %v3801, 1
      %v3891 = vsel %vm1032, %v3888, %v3890
      %v3892 = vrot.slane %v3802, 1
      %v3893 = vrot.slane %v3803, 1
      %v3894 = vsel %vm1032, %v3892, %v3893
      %v3895 = vrot.slane %v3804, 1
      %v3896 = vsel %vm1032, %v3893, %v3895
      %v3897 = vrot.slane %v3805, 1
      %v3898 = vrot.slane %v3806, 1
      %v3899 = vsel %vm1032, %v3897, %v3898
      %v3900 = vrot.slane %v3807, 1
      %v3901 = vsel %vm1032, %v3898, %v3900
      %v3902 = vrot.slane %v3808, 1
      %v3903 = vrot.slane %v3809, 1
      %v3904 = vsel %vm1032, %v3902, %v3903
      %v3905 = vrot.slane %v3810, 1
      %v3906 = vsel %vm1032, %v3903, %v3905
      %v3907 = vrot.slane %v3811, 1
      %v3908 = vrot.slane %v3812, 1
      %v3909 = vsel %vm1032, %v3907, %v3908
      %v3910 = vrot.slane %v3813, 1
      %v3911 = vsel %vm1032, %v3908, %v3910
      %v3912 = vrot.slane %v3814, 1
      %v3913 = vrot.slane %v3815, 1
      %v3914 = vsel %vm1032, %v3912, %v3913
      %v3915 = vrot.slane %v3816, 1
      %v3916 = vsel %vm1032, %v3913, %v3915
      %v3917 = vrot.slane %v3817, 1
      %v3918 = vrot.slane %v3818, 1
      %v3919 = vsel %vm1032, %v3917, %v3918
      %v3920 = vrot.slane %v3819, 1
      %v3921 = vsel %vm1032, %v3918, %v3920
      %v3922 = vrot.slane %v3820, 1
      %v3923 = vrot.slane %v3821, 1
      %v3924 = vsel %vm1032, %v3922, %v3923
      %v3925 = vrot.slane %v3822, 1
      %v3926 = vsel %vm1032, %v3923, %v3925
      %v3966 = vadd.f32 %v3745, %v3864
      %v3967 = vadd.f32 %v3746, %v3866
      %v3968 = vadd.f32 %v3747, %v3865
      %v3969 = vadd.f32 %v3748, %v3869
      %v3970 = vadd.f32 %v3749, %v3871
      %v3971 = vadd.f32 %v3750, %v3870
      %v3972 = vadd.f32 %v3751, %v3874
      %v3973 = vadd.f32 %v3752, %v3876
      %v3974 = vadd.f32 %v3753, %v3875
      %v3975 = vadd.f32 %v3754, %v3879
      %v3976 = vadd.f32 %v3755, %v3881
      %v3977 = vadd.f32 %v3756, %v3880
      %v3978 = vadd.f32 %v3757, %v3884
      %v3979 = vadd.f32 %v3758, %v3886
      %v3980 = vadd.f32 %v3759, %v3885
      %v3981 = vadd.f32 %v3760, %v3889
      %v3982 = vadd.f32 %v3761, %v3891
      %v3983 = vadd.f32 %v3762, %v3890
      %v3984 = vadd.f32 %v3763, %v3894
      %v3985 = vadd.f32 %v3764, %v3896
      %v3986 = vadd.f32 %v3765, %v3895
      %v3987 = vadd.f32 %v3766, %v3899
      %v3988 = vadd.f32 %v3767, %v3901
      %v3989 = vadd.f32 %v3768, %v3900
      %v3990 = vadd.f32 %v3769, %v3904
      %v3991 = vadd.f32 %v3770, %v3906
      %v3992 = vadd.f32 %v3771, %v3905
      %v3993 = vadd.f32 %v3772, %v3909
      %v3994 = vadd.f32 %v3773, %v3911
      %v3995 = vadd.f32 %v3774, %v3910
      %v3996 = vadd.f32 %v3775, %v3914
      %v3997 = vadd.f32 %v3776, %v3916
      %v3998 = vadd.f32 %v3777, %v3915
      %v3999 = vadd.f32 %v3778, %v3919
      %v4000 = vadd.f32 %v3779, %v3921
      %v4001 = vadd.f32 %v3780, %v3920
      %v4002 = vadd.f32 %v3781, %v3924
      %v4003 = vadd.f32 %v3782, %v3926
      %v4004 = vadd.f32 %v3783, %v3925
      %v4005 = vadd.f32 %v3966, %v2365
      %v4006 = vadd.f32 %v3967, %v2365
      %v4007 = vadd.f32 %v3968, %v2365
      %v4008 = vadd.f32 %v3969, %v2365
      %v4009 = vadd.f32 %v3970, %v2365
      %v4010 = vadd.f32 %v3971, %v2365
      %v4011 = vadd.f32 %v3972, %v2365
      %v4012 = vadd.f32 %v3973, %v2365
      %v4013 = vadd.f32 %v3974, %v2365
      %v4014 = vadd.f32 %v3975, %v2365
      %v4015 = vadd.f32 %v3976, %v2365
      %v4016 = vadd.f32 %v3977, %v2365
      %v4017 = vadd.f32 %v3978, %v2365
      %v4018 = vadd.f32 %v3979, %v2365
      %v4019 = vadd.f32 %v3980, %v2365
      %v4020 = vadd.f32 %v3981, %v2365
      %v4021 = vadd.f32 %v3982, %v2365
      %v4022 = vadd.f32 %v3983, %v2365
      %v4023 = vadd.f32 %v3984, %v2365
      %v4024 = vadd.f32 %v3985, %v2365
      %v4025 = vadd.f32 %v3986, %v2365
      %v4026 = vadd.f32 %v3987, %v2365
      %v4027 = vadd.f32 %v3988, %v2365
      %v4028 = vadd.f32 %v3989, %v2365
      %v4029 = vadd.f32 %v3990, %v2365
      %v4030 = vadd.f32 %v3991, %v2365
      %v4031 = vadd.f32 %v3992, %v2365
      %v4032 = vadd.f32 %v3993, %v2365
      %v4033 = vadd.f32 %v3994, %v2365
      %v4034 = vadd.f32 %v3995, %v2365
      %v4035 = vadd.f32 %v3996, %v2365
      %v4036 = vadd.f32 %v3997, %v2365
      %v4037 = vadd.f32 %v3998, %v2365
      %v4038 = vadd.f32 %v3999, %v2365
      %v4039 = vadd.f32 %v4000, %v2365
      %v4040 = vadd.f32 %v4001, %v2365
      %v4041 = vadd.f32 %v4002, %v2365
      %v4042 = vadd.f32 %v4003, %v2365
      %v4043 = vadd.f32 %v4004, %v2365
      %v4044 = vmax.f32 %v4005, 0.0
      %v4045 = vmax.f32 %v4006, 0.0
      %v4046 = vmax.f32 %v4007, 0.0
      %v4047 = vmax.f32 %v4008, 0.0
      %v4048 = vmax.f32 %v4009, 0.0
      %v4049 = vmax.f32 %v4010, 0.0
      %v4050 = vmax.f32 %v4011, 0.0
      %v4051 = vmax.f32 %v4012, 0.0
      %v4052 = vmax.f32 %v4013, 0.0
      %v4053 = vmax.f32 %v4014, 0.0
      %v4054 = vmax.f32 %v4015, 0.0
      %v4055 = vmax.f32 %v4016, 0.0
      %v4056 = vmax.f32 %v4017, 0.0
      %v4057 = vmax.f32 %v4018, 0.0
      %v4058 = vmax.f32 %v4019, 0.0
      %v4059 = vmax.f32 %v4020, 0.0
      %v4060 = vmax.f32 %v4021, 0.0
      %v4061 = vmax.f32 %v4022, 0.0
      %v4062 = vmax.f32 %v4023, 0.0
      %v4063 = vmax.f32 %v4024, 0.0
      %v4064 = vmax.f32 %v4025, 0.0
      %v4065 = vmax.f32 %v4026, 0.0
      %v4066 = vmax.f32 %v4027, 0.0
      %v4067 = vmax.f32 %v4028, 0.0
      %v4068 = vmax.f32 %v4029, 0.0
      %v4069 = vmax.f32 %v4030, 0.0
      %v4070 = vmax.f32 %v4031, 0.0
      %v4071 = vmax.f32 %v4032, 0.0
      %v4072 = vmax.f32 %v4033, 0.0
      %v4073 = vmax.f32 %v4034, 0.0
      %v4074 = vmax.f32 %v4035, 0.0
      %v4075 = vmax.f32 %v4036, 0.0
      %v4076 = vmax.f32 %v4037, 0.0
      %v4077 = vmax.f32 %v4038, 0.0
      %v4078 = vmax.f32 %v4039, 0.0
      %v4079 = vmax.f32 %v4040, 0.0
      %v4080 = vmax.f32 %v4041, 0.0
      %v4081 = vmax.f32 %v4042, 0.0
      %v4082 = vmax.f32 %v4043, 0.0
      %v4083 = vmul.f32 %v1181, %v598
      %v4084 = vmul.f32 %v1186, %v598
      %v4085 = vmul.f32 %v1191, %v598
      %v4086 = vmul.f32 %v1196, %v598
      %v4087 = vmul.f32 %v1201, %v598
      %v4088 = vmul.f32 %v1206, %v598
      %v4089 = vmul.f32 %v1211, %v598
      %v4090 = vmul.f32 %v1216, %v598
      %v4091 = vmul.f32 %v1221, %v598
      %v4092 = vmul.f32 %v1226, %v598
      %v4093 = vmul.f32 %v1231, %v598
      %v4094 = vmul.f32 %v1236, %v598
      %v4095 = vmul.f32 %v1241, %v598
      %v4096 = vmul.f32 %v1246, %v598
      %v4097 = vmul.f32 %v1251, %v598
      %v4098 = vmul.f32 %v1256, %v598
      %v4099 = vmul.f32 %v1261, %v598
      %v4100 = vmul.f32 %v1266, %v598
      %v4101 = vmul.f32 %v1271, %v598
      %v4102 = vmul.f32 %v1276, %v598
      %v4103 = vmul.f32 %v1281, %v598
      %v4104 = vmul.f32 %v1286, %v598
      %v4105 = vmul.f32 %v1291, %v598
      %v4106 = vmul.f32 %v1296, %v598
      %v4107 = vmul.f32 %v1301, %v598
      %v4108 = vmul.f32 %v1306, %v598
      %v4109 = vmul.f32 %v1311, %v598
      %v4110 = vmul.f32 %v1316, %v598
      %v4111 = vmul.f32 %v1321, %v598
      %v4112 = vmul.f32 %v1326, %v598
      %v4113 = vmul.f32 %v1331, %v598
      %v4114 = vmul.f32 %v1336, %v598
      %v4115 = vmul.f32 %v1341, %v598
      %v4116 = vmul.f32 %v1346, %v598
      %v4117 = vmul.f32 %v1351, %v598
      %v4118 = vmul.f32 %v1356, %v598
      %v4119 = vmul.f32 %v1361, %v598
      %v4120 = vmul.f32 %v1366, %v598
      %v4121 = vmul.f32 %v1371, %v598
      %v4122 = vadd.f32 %v4083, 0.0
      %v4123 = vadd.f32 %v4084, 0.0
      %v4124 = vadd.f32 %v4085, 0.0
      %v4125 = vadd.f32 %v4086, 0.0
      %v4126 = vadd.f32 %v4087, 0.0
      %v4127 = vadd.f32 %v4088, 0.0
      %v4128 = vadd.f32 %v4089, 0.0
      %v4129 = vadd.f32 %v4090, 0.0
      %v4130 = vadd.f32 %v4091, 0.0
      %v4131 = vadd.f32 %v4092, 0.0
      %v4132 = vadd.f32 %v4093, 0.0
      %v4133 = vadd.f32 %v4094, 0.0
      %v4134 = vadd.f32 %v4095, 0.0
      %v4135 = vadd.f32 %v4096, 0.0
      %v4136 = vadd.f32 %v4097, 0.0
      %v4137 = vadd.f32 %v4098, 0.0
      %v4138 = vadd.f32 %v4099, 0.0
      %v4139 = vadd.f32 %v4100, 0.0
      %v4140 = vadd.f32 %v4101, 0.0
      %v4141 = vadd.f32 %v4102, 0.0
      %v4142 = vadd.f32 %v4103, 0.0
      %v4143 = vadd.f32 %v4104, 0.0
      %v4144 = vadd.f32 %v4105, 0.0
      %v4145 = vadd.f32 %v4106, 0.0
      %v4146 = vadd.f32 %v4107, 0.0
      %v4147 = vadd.f32 %v4108, 0.0
      %v4148 = vadd.f32 %v4109, 0.0
      %v4149 = vadd.f32 %v4110, 0.0
      %v4150 = vadd.f32 %v4111, 0.0
      %v4151 = vadd.f32 %v4112, 0.0
      %v4152 = vadd.f32 %v4113, 0.0
      %v4153 = vadd.f32 %v4114, 0.0
      %v4154 = vadd.f32 %v4115, 0.0
      %v4155 = vadd.f32 %v4116, 0.0
      %v4156 = vadd.f32 %v4117, 0.0
      %v4157 = vadd.f32 %v4118, 0.0
      %v4158 = vadd.f32 %v4119, 0.0
      %v4159 = vadd.f32 %v4120, 0.0
      %v4160 = vadd.f32 %v4121, 0.0
      %v4161 = vmul.f32 %v1456, %v873
      %v4162 = vmul.f32 %v1461, %v873
      %v4163 = vmul.f32 %v1466, %v873
      %v4164 = vmul.f32 %v1471, %v873
      %v4165 = vmul.f32 %v1476, %v873
      %v4166 = vmul.f32 %v1481, %v873
      %v4167 = vmul.f32 %v1486, %v873
      %v4168 = vmul.f32 %v1491, %v873
      %v4169 = vmul.f32 %v1496, %v873
      %v4170 = vmul.f32 %v1501, %v873
      %v4171 = vmul.f32 %v1506, %v873
      %v4172 = vmul.f32 %v1511, %v873
      %v4173 = vmul.f32 %v1516, %v873
      %v4174 = vmul.f32 %v1521, %v873
      %v4175 = vmul.f32 %v1526, %v873
      %v4176 = vmul.f32 %v1531, %v873
      %v4177 = vmul.f32 %v1536, %v873
      %v4178 = vmul.f32 %v1541, %v873
      %v4179 = vmul.f32 %v1546, %v873
      %v4180 = vmul.f32 %v1551, %v873
      %v4181 = vmul.f32 %v1556, %v873
      %v4182 = vmul.f32 %v1561, %v873
      %v4183 = vmul.f32 %v1566, %v873
      %v4184 = vmul.f32 %v1571, %v873
      %v4185 = vmul.f32 %v1576, %v873
      %v4186 = vmul.f32 %v1581, %v873
      %v4187 = vmul.f32 %v1586, %v873
      %v4188 = vmul.f32 %v1591, %v873
      %v4189 = vmul.f32 %v1596, %v873
      %v4190 = vmul.f32 %v1601, %v873
      %v4191 = vmul.f32 %v1606, %v873
      %v4192 = vmul.f32 %v1611, %v873
      %v4193 = vmul.f32 %v1616, %v873
      %v4194 = vmul.f32 %v1621, %v873
      %v4195 = vmul.f32 %v1626, %v873
      %v4196 = vmul.f32 %v1631, %v873
      %v4197 = vmul.f32 %v1636, %v873
      %v4198 = vmul.f32 %v1641, %v873
      %v4199 = vmul.f32 %v1646, %v873
      %v4200 = vadd.f32 %v4122, %v4161
      %v4201 = vadd.f32 %v4123, %v4162
      %v4202 = vadd.f32 %v4124, %v4163
      %v4203 = vadd.f32 %v4125, %v4164
      %v4204 = vadd.f32 %v4126, %v4165
      %v4205 = vadd.f32 %v4127, %v4166
      %v4206 = vadd.f32 %v4128, %v4167
      %v4207 = vadd.f32 %v4129, %v4168
      %v4208 = vadd.f32 %v4130, %v4169
      %v4209 = vadd.f32 %v4131, %v4170
      %v4210 = vadd.f32 %v4132, %v4171
      %v4211 = vadd.f32 %v4133, %v4172
      %v4212 = vadd.f32 %v4134, %v4173
      %v4213 = vadd.f32 %v4135, %v4174
      %v4214 = vadd.f32 %v4136, %v4175
      %v4215 = vadd.f32 %v4137, %v4176
      %v4216 = vadd.f32 %v4138, %v4177
      %v4217 = vadd.f32 %v4139, %v4178
      %v4218 = vadd.f32 %v4140, %v4179
      %v4219 = vadd.f32 %v4141, %v4180
      %v4220 = vadd.f32 %v4142, %v4181
      %v4221 = vadd.f32 %v4143, %v4182
      %v4222 = vadd.f32 %v4144, %v4183
      %v4223 = vadd.f32 %v4145, %v4184
      %v4224 = vadd.f32 %v4146, %v4185
      %v4225 = vadd.f32 %v4147, %v4186
      %v4226 = vadd.f32 %v4148, %v4187
      %v4227 = vadd.f32 %v4149, %v4188
      %v4228 = vadd.f32 %v4150, %v4189
      %v4229 = vadd.f32 %v4151, %v4190
      %v4230 = vadd.f32 %v4152, %v4191
      %v4231 = vadd.f32 %v4153, %v4192
      %v4232 = vadd.f32 %v4154, %v4193
      %v4233 = vadd.f32 %v4155, %v4194
      %v4234 = vadd.f32 %v4156, %v4195
      %v4235 = vadd.f32 %v4157, %v4196
      %v4236 = vadd.f32 %v4158, %v4197
      %v4237 = vadd.f32 %v4159, %v4198
      %v4238 = vadd.f32 %v4160, %v4199
      %v4239 = vmul.f32 %v1181, %v953
      %v4240 = vmul.f32 %v1186, %v953
      %v4241 = vmul.f32 %v1191, %v953
      %v4242 = vmul.f32 %v1196, %v953
      %v4243 = vmul.f32 %v1201, %v953
      %v4244 = vmul.f32 %v1206, %v953
      %v4245 = vmul.f32 %v1211, %v953
      %v4246 = vmul.f32 %v1216, %v953
      %v4247 = vmul.f32 %v1221, %v953
      %v4248 = vmul.f32 %v1226, %v953
      %v4249 = vmul.f32 %v1231, %v953
      %v4250 = vmul.f32 %v1236, %v953
      %v4251 = vmul.f32 %v1241, %v953
      %v4252 = vmul.f32 %v1246, %v953
      %v4253 = vmul.f32 %v1251, %v953
      %v4254 = vmul.f32 %v1256, %v953
      %v4255 = vmul.f32 %v1261, %v953
      %v4256 = vmul.f32 %v1266, %v953
      %v4257 = vmul.f32 %v1271, %v953
      %v4258 = vmul.f32 %v1276, %v953
      %v4259 = vmul.f32 %v1281, %v953
      %v4260 = vmul.f32 %v1286, %v953
      %v4261 = vmul.f32 %v1291, %v953
      %v4262 = vmul.f32 %v1296, %v953
      %v4263 = vmul.f32 %v1301, %v953
      %v4264 = vmul.f32 %v1306, %v953
      %v4265 = vmul.f32 %v1311, %v953
      %v4266 = vmul.f32 %v1316, %v953
      %v4267 = vmul.f32 %v1321, %v953
      %v4268 = vmul.f32 %v1326, %v953
      %v4269 = vmul.f32 %v1331, %v953
      %v4270 = vmul.f32 %v1336, %v953
      %v4271 = vmul.f32 %v1341, %v953
      %v4272 = vmul.f32 %v1346, %v953
      %v4273 = vmul.f32 %v1351, %v953
      %v4274 = vmul.f32 %v1356, %v953
      %v4275 = vmul.f32 %v1361, %v953
      %v4276 = vmul.f32 %v1366, %v953
      %v4277 = vmul.f32 %v1371, %v953
      %v4317 = vrot.slane %v4239, 1
      %v4318 = vrot.slane %v4240, 1
      %v4319 = vsel %vm1032, %v4317, %v4318
      %v4320 = vrot.slane %v4241, 1
      %v4321 = vsel %vm1032, %v4318, %v4320
      %v4322 = vrot.slane %v4242, 1
      %v4323 = vrot.slane %v4243, 1
      %v4324 = vsel %vm1032, %v4322, %v4323
      %v4325 = vrot.slane %v4244, 1
      %v4326 = vsel %vm1032, %v4323, %v4325
      %v4327 = vrot.slane %v4245, 1
      %v4328 = vrot.slane %v4246, 1
      %v4329 = vsel %vm1032, %v4327, %v4328
      %v4330 = vrot.slane %v4247, 1
      %v4331 = vsel %vm1032, %v4328, %v4330
      %v4332 = vrot.slane %v4248, 1
      %v4333 = vrot.slane %v4249, 1
      %v4334 = vsel %vm1032, %v4332, %v4333
      %v4335 = vrot.slane %v4250, 1
      %v4336 = vsel %vm1032, %v4333, %v4335
      %v4337 = vrot.slane %v4251, 1
      %v4338 = vrot.slane %v4252, 1
      %v4339 = vsel %vm1032, %v4337, %v4338
      %v4340 = vrot.slane %v4253, 1
      %v4341 = vsel %vm1032, %v4338, %v4340
      %v4342 = vrot.slane %v4254, 1
      %v4343 = vrot.slane %v4255, 1
      %v4344 = vsel %vm1032, %v4342, %v4343
      %v4345 = vrot.slane %v4256, 1
      %v4346 = vsel %vm1032, %v4343, %v4345
      %v4347 = vrot.slane %v4257, 1
      %v4348 = vrot.slane %v4258, 1
      %v4349 = vsel %vm1032, %v4347, %v4348
      %v4350 = vrot.slane %v4259, 1
      %v4351 = vsel %vm1032, %v4348, %v4350
      %v4352 = vrot.slane %v4260, 1
      %v4353 = vrot.slane %v4261, 1
      %v4354 = vsel %vm1032, %v4352, %v4353
      %v4355 = vrot.slane %v4262, 1
      %v4356 = vsel %vm1032, %v4353, %v4355
      %v4357 = vrot.slane %v4263, 1
      %v4358 = vrot.slane %v4264, 1
      %v4359 = vsel %vm1032, %v4357, %v4358
      %v4360 = vrot.slane %v4265, 1
      %v4361 = vsel %vm1032, %v4358, %v4360
      %v4362 = vrot.slane %v4266, 1
      %v4363 = vrot.slane %v4267, 1
      %v4364 = vsel %vm1032, %v4362, %v4363
      %v4365 = vrot.slane %v4268, 1
      %v4366 = vsel %vm1032, %v4363, %v4365
      %v4367 = vrot.slane %v4269, 1
      %v4368 = vrot.slane %v4270, 1
      %v4369 = vsel %vm1032, %v4367, %v4368
      %v4370 = vrot.slane %v4271, 1
      %v4371 = vsel %vm1032, %v4368, %v4370
      %v4372 = vrot.slane %v4272, 1
      %v4373 = vrot.slane %v4273, 1
      %v4374 = vsel %vm1032, %v4372, %v4373
      %v4375 = vrot.slane %v4274, 1
      %v4376 = vsel %vm1032, %v4373, %v4375
      %v4377 = vrot.slane %v4275, 1
      %v4378 = vrot.slane %v4276, 1
      %v4379 = vsel %vm1032, %v4377, %v4378
      %v4380 = vrot.slane %v4277, 1
      %v4381 = vsel %vm1032, %v4378, %v4380
      %v4421 = vadd.f32 %v4200, %v4319
      %v4422 = vadd.f32 %v4201, %v4321
      %v4423 = vadd.f32 %v4202, %v4320
      %v4424 = vadd.f32 %v4203, %v4324
      %v4425 = vadd.f32 %v4204, %v4326
      %v4426 = vadd.f32 %v4205, %v4325
      %v4427 = vadd.f32 %v4206, %v4329
      %v4428 = vadd.f32 %v4207, %v4331
      %v4429 = vadd.f32 %v4208, %v4330
      %v4430 = vadd.f32 %v4209, %v4334
      %v4431 = vadd.f32 %v4210, %v4336
      %v4432 = vadd.f32 %v4211, %v4335
      %v4433 = vadd.f32 %v4212, %v4339
      %v4434 = vadd.f32 %v4213, %v4341
      %v4435 = vadd.f32 %v4214, %v4340
      %v4436 = vadd.f32 %v4215, %v4344
      %v4437 = vadd.f32 %v4216, %v4346
      %v4438 = vadd.f32 %v4217, %v4345
      %v4439 = vadd.f32 %v4218, %v4349
      %v4440 = vadd.f32 %v4219, %v4351
      %v4441 = vadd.f32 %v4220, %v4350
      %v4442 = vadd.f32 %v4221, %v4354
      %v4443 = vadd.f32 %v4222, %v4356
      %v4444 = vadd.f32 %v4223, %v4355
      %v4445 = vadd.f32 %v4224, %v4359
      %v4446 = vadd.f32 %v4225, %v4361
      %v4447 = vadd.f32 %v4226, %v4360
      %v4448 = vadd.f32 %v4227, %v4364
      %v4449 = vadd.f32 %v4228, %v4366
      %v4450 = vadd.f32 %v4229, %v4365
      %v4451 = vadd.f32 %v4230, %v4369
      %v4452 = vadd.f32 %v4231, %v4371
      %v4453 = vadd.f32 %v4232, %v4370
      %v4454 = vadd.f32 %v4233, %v4374
      %v4455 = vadd.f32 %v4234, %v4376
      %v4456 = vadd.f32 %v4235, %v4375
      %v4457 = vadd.f32 %v4236, %v4379
      %v4458 = vadd.f32 %v4237, %v4381
      %v4459 = vadd.f32 %v4238, %v4380
      %v4460 = vmul.f32 %v421, %v1373
      %v4461 = vmul.f32 %v426, %v1373
      %v4462 = vmul.f32 %v431, %v1373
      %v4463 = vmul.f32 %v436, %v1373
      %v4464 = vmul.f32 %v441, %v1373
      %v4465 = vmul.f32 %v446, %v1373
      %v4466 = vmul.f32 %v451, %v1373
      %v4467 = vmul.f32 %v456, %v1373
      %v4468 = vmul.f32 %v461, %v1373
      %v4469 = vmul.f32 %v466, %v1373
      %v4470 = vmul.f32 %v471, %v1373
      %v4471 = vmul.f32 %v476, %v1373
      %v4472 = vmul.f32 %v481, %v1373
      %v4473 = vmul.f32 %v486, %v1373
      %v4474 = vmul.f32 %v491, %v1373
      %v4475 = vmul.f32 %v496, %v1373
      %v4476 = vmul.f32 %v501, %v1373
      %v4477 = vmul.f32 %v506, %v1373
      %v4478 = vmul.f32 %v511, %v1373
      %v4479 = vmul.f32 %v516, %v1373
      %v4480 = vmul.f32 %v521, %v1373
      %v4481 = vmul.f32 %v526, %v1373
      %v4482 = vmul.f32 %v531, %v1373
      %v4483 = vmul.f32 %v536, %v1373
      %v4484 = vmul.f32 %v541, %v1373
      %v4485 = vmul.f32 %v546, %v1373
      %v4486 = vmul.f32 %v551, %v1373
      %v4487 = vmul.f32 %v556, %v1373
      %v4488 = vmul.f32 %v561, %v1373
      %v4489 = vmul.f32 %v566, %v1373
      %v4490 = vmul.f32 %v571, %v1373
      %v4491 = vmul.f32 %v576, %v1373
      %v4492 = vmul.f32 %v581, %v1373
      %v4493 = vmul.f32 %v586, %v1373
      %v4494 = vmul.f32 %v591, %v1373
      %v4495 = vmul.f32 %v596, %v1373
      %v4496 = vmul.f32 %v1955, %v1373
      %v4497 = vmul.f32 %v1960, %v1373
      %v4498 = vmul.f32 %v1965, %v1373
      %v4499 = vadd.f32 %v4421, %v4460
      %v4500 = vadd.f32 %v4422, %v4461
      %v4501 = vadd.f32 %v4423, %v4462
      %v4502 = vadd.f32 %v4424, %v4463
      %v4503 = vadd.f32 %v4425, %v4464
      %v4504 = vadd.f32 %v4426, %v4465
      %v4505 = vadd.f32 %v4427, %v4466
      %v4506 = vadd.f32 %v4428, %v4467
      %v4507 = vadd.f32 %v4429, %v4468
      %v4508 = vadd.f32 %v4430, %v4469
      %v4509 = vadd.f32 %v4431, %v4470
      %v4510 = vadd.f32 %v4432, %v4471
      %v4511 = vadd.f32 %v4433, %v4472
      %v4512 = vadd.f32 %v4434, %v4473
      %v4513 = vadd.f32 %v4435, %v4474
      %v4514 = vadd.f32 %v4436, %v4475
      %v4515 = vadd.f32 %v4437, %v4476
      %v4516 = vadd.f32 %v4438, %v4477
      %v4517 = vadd.f32 %v4439, %v4478
      %v4518 = vadd.f32 %v4440, %v4479
      %v4519 = vadd.f32 %v4441, %v4480
      %v4520 = vadd.f32 %v4442, %v4481
      %v4521 = vadd.f32 %v4443, %v4482
      %v4522 = vadd.f32 %v4444, %v4483
      %v4523 = vadd.f32 %v4445, %v4484
      %v4524 = vadd.f32 %v4446, %v4485
      %v4525 = vadd.f32 %v4447, %v4486
      %v4526 = vadd.f32 %v4448, %v4487
      %v4527 = vadd.f32 %v4449, %v4488
      %v4528 = vadd.f32 %v4450, %v4489
      %v4529 = vadd.f32 %v4451, %v4490
      %v4530 = vadd.f32 %v4452, %v4491
      %v4531 = vadd.f32 %v4453, %v4492
      %v4532 = vadd.f32 %v4454, %v4493
      %v4533 = vadd.f32 %v4455, %v4494
      %v4534 = vadd.f32 %v4456, %v4495
      %v4535 = vadd.f32 %v4457, %v4496
      %v4536 = vadd.f32 %v4458, %v4497
      %v4537 = vadd.f32 %v4459, %v4498
      %v4538 = vmul.f32 %v696, %v1648
      %v4539 = vmul.f32 %v701, %v1648
      %v4540 = vmul.f32 %v706, %v1648
      %v4541 = vmul.f32 %v711, %v1648
      %v4542 = vmul.f32 %v716, %v1648
      %v4543 = vmul.f32 %v721, %v1648
      %v4544 = vmul.f32 %v726, %v1648
      %v4545 = vmul.f32 %v731, %v1648
      %v4546 = vmul.f32 %v736, %v1648
      %v4547 = vmul.f32 %v741, %v1648
      %v4548 = vmul.f32 %v746, %v1648
      %v4549 = vmul.f32 %v751, %v1648
      %v4550 = vmul.f32 %v756, %v1648
      %v4551 = vmul.f32 %v761, %v1648
      %v4552 = vmul.f32 %v766, %v1648
      %v4553 = vmul.f32 %v771, %v1648
      %v4554 = vmul.f32 %v776, %v1648
      %v4555 = vmul.f32 %v781, %v1648
      %v4556 = vmul.f32 %v786, %v1648
      %v4557 = vmul.f32 %v791, %v1648
      %v4558 = vmul.f32 %v796, %v1648
      %v4559 = vmul.f32 %v801, %v1648
      %v4560 = vmul.f32 %v806, %v1648
      %v4561 = vmul.f32 %v811, %v1648
      %v4562 = vmul.f32 %v816, %v1648
      %v4563 = vmul.f32 %v821, %v1648
      %v4564 = vmul.f32 %v826, %v1648
      %v4565 = vmul.f32 %v831, %v1648
      %v4566 = vmul.f32 %v836, %v1648
      %v4567 = vmul.f32 %v841, %v1648
      %v4568 = vmul.f32 %v846, %v1648
      %v4569 = vmul.f32 %v851, %v1648
      %v4570 = vmul.f32 %v856, %v1648
      %v4571 = vmul.f32 %v861, %v1648
      %v4572 = vmul.f32 %v866, %v1648
      %v4573 = vmul.f32 %v871, %v1648
      %v4574 = vmul.f32 %v2050, %v1648
      %v4575 = vmul.f32 %v2055, %v1648
      %v4576 = vmul.f32 %v2060, %v1648
      %v4577 = vadd.f32 %v4499, %v4538
      %v4578 = vadd.f32 %v4500, %v4539
      %v4579 = vadd.f32 %v4501, %v4540
      %v4580 = vadd.f32 %v4502, %v4541
      %v4581 = vadd.f32 %v4503, %v4542
      %v4582 = vadd.f32 %v4504, %v4543
      %v4583 = vadd.f32 %v4505, %v4544
      %v4584 = vadd.f32 %v4506, %v4545
      %v4585 = vadd.f32 %v4507, %v4546
      %v4586 = vadd.f32 %v4508, %v4547
      %v4587 = vadd.f32 %v4509, %v4548
      %v4588 = vadd.f32 %v4510, %v4549
      %v4589 = vadd.f32 %v4511, %v4550
      %v4590 = vadd.f32 %v4512, %v4551
      %v4591 = vadd.f32 %v4513, %v4552
      %v4592 = vadd.f32 %v4514, %v4553
      %v4593 = vadd.f32 %v4515, %v4554
      %v4594 = vadd.f32 %v4516, %v4555
      %v4595 = vadd.f32 %v4517, %v4556
      %v4596 = vadd.f32 %v4518, %v4557
      %v4597 = vadd.f32 %v4519, %v4558
      %v4598 = vadd.f32 %v4520, %v4559
      %v4599 = vadd.f32 %v4521, %v4560
      %v4600 = vadd.f32 %v4522, %v4561
      %v4601 = vadd.f32 %v4523, %v4562
      %v4602 = vadd.f32 %v4524, %v4563
      %v4603 = vadd.f32 %v4525, %v4564
      %v4604 = vadd.f32 %v4526, %v4565
      %v4605 = vadd.f32 %v4527, %v4566
      %v4606 = vadd.f32 %v4528, %v4567
      %v4607 = vadd.f32 %v4529, %v4568
      %v4608 = vadd.f32 %v4530, %v4569
      %v4609 = vadd.f32 %v4531, %v4570
      %v4610 = vadd.f32 %v4532, %v4571
      %v4611 = vadd.f32 %v4533, %v4572
      %v4612 = vadd.f32 %v4534, %v4573
      %v4613 = vadd.f32 %v4535, %v4574
      %v4614 = vadd.f32 %v4536, %v4575
      %v4615 = vadd.f32 %v4537, %v4576
      %v4616 = vmul.f32 %v421, %v1728
      %v4617 = vmul.f32 %v426, %v1728
      %v4618 = vmul.f32 %v431, %v1728
      %v4619 = vmul.f32 %v436, %v1728
      %v4620 = vmul.f32 %v441, %v1728
      %v4621 = vmul.f32 %v446, %v1728
      %v4622 = vmul.f32 %v451, %v1728
      %v4623 = vmul.f32 %v456, %v1728
      %v4624 = vmul.f32 %v461, %v1728
      %v4625 = vmul.f32 %v466, %v1728
      %v4626 = vmul.f32 %v471, %v1728
      %v4627 = vmul.f32 %v476, %v1728
      %v4628 = vmul.f32 %v481, %v1728
      %v4629 = vmul.f32 %v486, %v1728
      %v4630 = vmul.f32 %v491, %v1728
      %v4631 = vmul.f32 %v496, %v1728
      %v4632 = vmul.f32 %v501, %v1728
      %v4633 = vmul.f32 %v506, %v1728
      %v4634 = vmul.f32 %v511, %v1728
      %v4635 = vmul.f32 %v516, %v1728
      %v4636 = vmul.f32 %v521, %v1728
      %v4637 = vmul.f32 %v526, %v1728
      %v4638 = vmul.f32 %v531, %v1728
      %v4639 = vmul.f32 %v536, %v1728
      %v4640 = vmul.f32 %v541, %v1728
      %v4641 = vmul.f32 %v546, %v1728
      %v4642 = vmul.f32 %v551, %v1728
      %v4643 = vmul.f32 %v556, %v1728
      %v4644 = vmul.f32 %v561, %v1728
      %v4645 = vmul.f32 %v566, %v1728
      %v4646 = vmul.f32 %v571, %v1728
      %v4647 = vmul.f32 %v576, %v1728
      %v4648 = vmul.f32 %v581, %v1728
      %v4649 = vmul.f32 %v586, %v1728
      %v4650 = vmul.f32 %v591, %v1728
      %v4651 = vmul.f32 %v596, %v1728
      %v4652 = vmul.f32 %v1955, %v1728
      %v4653 = vmul.f32 %v1960, %v1728
      %v4654 = vmul.f32 %v1965, %v1728
      %v4694 = vrot.slane %v4616, 1
      %v4695 = vrot.slane %v4617, 1
      %v4696 = vsel %vm1032, %v4694, %v4695
      %v4697 = vrot.slane %v4618, 1
      %v4698 = vsel %vm1032, %v4695, %v4697
      %v4699 = vrot.slane %v4619, 1
      %v4700 = vrot.slane %v4620, 1
      %v4701 = vsel %vm1032, %v4699, %v4700
      %v4702 = vrot.slane %v4621, 1
      %v4703 = vsel %vm1032, %v4700, %v4702
      %v4704 = vrot.slane %v4622, 1
      %v4705 = vrot.slane %v4623, 1
      %v4706 = vsel %vm1032, %v4704, %v4705
      %v4707 = vrot.slane %v4624, 1
      %v4708 = vsel %vm1032, %v4705, %v4707
      %v4709 = vrot.slane %v4625, 1
      %v4710 = vrot.slane %v4626, 1
      %v4711 = vsel %vm1032, %v4709, %v4710
      %v4712 = vrot.slane %v4627, 1
      %v4713 = vsel %vm1032, %v4710, %v4712
      %v4714 = vrot.slane %v4628, 1
      %v4715 = vrot.slane %v4629, 1
      %v4716 = vsel %vm1032, %v4714, %v4715
      %v4717 = vrot.slane %v4630, 1
      %v4718 = vsel %vm1032, %v4715, %v4717
      %v4719 = vrot.slane %v4631, 1
      %v4720 = vrot.slane %v4632, 1
      %v4721 = vsel %vm1032, %v4719, %v4720
      %v4722 = vrot.slane %v4633, 1
      %v4723 = vsel %vm1032, %v4720, %v4722
      %v4724 = vrot.slane %v4634, 1
      %v4725 = vrot.slane %v4635, 1
      %v4726 = vsel %vm1032, %v4724, %v4725
      %v4727 = vrot.slane %v4636, 1
      %v4728 = vsel %vm1032, %v4725, %v4727
      %v4729 = vrot.slane %v4637, 1
      %v4730 = vrot.slane %v4638, 1
      %v4731 = vsel %vm1032, %v4729, %v4730
      %v4732 = vrot.slane %v4639, 1
      %v4733 = vsel %vm1032, %v4730, %v4732
      %v4734 = vrot.slane %v4640, 1
      %v4735 = vrot.slane %v4641, 1
      %v4736 = vsel %vm1032, %v4734, %v4735
      %v4737 = vrot.slane %v4642, 1
      %v4738 = vsel %vm1032, %v4735, %v4737
      %v4739 = vrot.slane %v4643, 1
      %v4740 = vrot.slane %v4644, 1
      %v4741 = vsel %vm1032, %v4739, %v4740
      %v4742 = vrot.slane %v4645, 1
      %v4743 = vsel %vm1032, %v4740, %v4742
      %v4744 = vrot.slane %v4646, 1
      %v4745 = vrot.slane %v4647, 1
      %v4746 = vsel %vm1032, %v4744, %v4745
      %v4747 = vrot.slane %v4648, 1
      %v4748 = vsel %vm1032, %v4745, %v4747
      %v4749 = vrot.slane %v4649, 1
      %v4750 = vrot.slane %v4650, 1
      %v4751 = vsel %vm1032, %v4749, %v4750
      %v4752 = vrot.slane %v4651, 1
      %v4753 = vsel %vm1032, %v4750, %v4752
      %v4754 = vrot.slane %v4652, 1
      %v4755 = vrot.slane %v4653, 1
      %v4756 = vsel %vm1032, %v4754, %v4755
      %v4757 = vrot.slane %v4654, 1
      %v4758 = vsel %vm1032, %v4755, %v4757
      %v4798 = vadd.f32 %v4577, %v4696
      %v4799 = vadd.f32 %v4578, %v4698
      %v4800 = vadd.f32 %v4579, %v4697
      %v4801 = vadd.f32 %v4580, %v4701
      %v4802 = vadd.f32 %v4581, %v4703
      %v4803 = vadd.f32 %v4582, %v4702
      %v4804 = vadd.f32 %v4583, %v4706
      %v4805 = vadd.f32 %v4584, %v4708
      %v4806 = vadd.f32 %v4585, %v4707
      %v4807 = vadd.f32 %v4586, %v4711
      %v4808 = vadd.f32 %v4587, %v4713
      %v4809 = vadd.f32 %v4588, %v4712
      %v4810 = vadd.f32 %v4589, %v4716
      %v4811 = vadd.f32 %v4590, %v4718
      %v4812 = vadd.f32 %v4591, %v4717
      %v4813 = vadd.f32 %v4592, %v4721
      %v4814 = vadd.f32 %v4593, %v4723
      %v4815 = vadd.f32 %v4594, %v4722
      %v4816 = vadd.f32 %v4595, %v4726
      %v4817 = vadd.f32 %v4596, %v4728
      %v4818 = vadd.f32 %v4597, %v4727
      %v4819 = vadd.f32 %v4598, %v4731
      %v4820 = vadd.f32 %v4599, %v4733
      %v4821 = vadd.f32 %v4600, %v4732
      %v4822 = vadd.f32 %v4601, %v4736
      %v4823 = vadd.f32 %v4602, %v4738
      %v4824 = vadd.f32 %v4603, %v4737
      %v4825 = vadd.f32 %v4604, %v4741
      %v4826 = vadd.f32 %v4605, %v4743
      %v4827 = vadd.f32 %v4606, %v4742
      %v4828 = vadd.f32 %v4607, %v4746
      %v4829 = vadd.f32 %v4608, %v4748
      %v4830 = vadd.f32 %v4609, %v4747
      %v4831 = vadd.f32 %v4610, %v4751
      %v4832 = vadd.f32 %v4611, %v4753
      %v4833 = vadd.f32 %v4612, %v4752
      %v4834 = vadd.f32 %v4613, %v4756
      %v4835 = vadd.f32 %v4614, %v4758
      %v4836 = vadd.f32 %v4615, %v4757
      %4838 = vset.pattern.permute.xlu0 0
      %4839 = vperm.xlu0 %4838, %v355
      %v4840 = vpop.permute.xlu0 %4839
      %4843 = vset.pattern.permute.xlu0 0
      %4844 = vperm.xlu0 %4843, %v356
      %v4845 = vpop.permute.xlu0 %4844
      %4848 = vset.pattern.permute.xlu0 0
      %4849 = vperm.xlu0 %4848, %v357
      %v4850 = vpop.permute.xlu0 %4849
      %v4852 = vmul.f32 %v1196, %v1967
      %v4853 = vmul.f32 %v1201, %v1967
      %v4854 = vmul.f32 %v1206, %v1967
      %v4855 = vmul.f32 %v1211, %v1967
      %v4856 = vmul.f32 %v1216, %v1967
      %v4857 = vmul.f32 %v1221, %v1967
      %v4858 = vmul.f32 %v1226, %v1967
      %v4859 = vmul.f32 %v1231, %v1967
      %v4860 = vmul.f32 %v1236, %v1967
      %v4861 = vmul.f32 %v1241, %v1967
      %v4862 = vmul.f32 %v1246, %v1967
      %v4863 = vmul.f32 %v1251, %v1967
      %v4864 = vmul.f32 %v1256, %v1967
      %v4865 = vmul.f32 %v1261, %v1967
      %v4866 = vmul.f32 %v1266, %v1967
      %v4867 = vmul.f32 %v1271, %v1967
      %v4868 = vmul.f32 %v1276, %v1967
      %v4869 = vmul.f32 %v1281, %v1967
      %v4870 = vmul.f32 %v1286, %v1967
      %v4871 = vmul.f32 %v1291, %v1967
      %v4872 = vmul.f32 %v1296, %v1967
      %v4873 = vmul.f32 %v1301, %v1967
      %v4874 = vmul.f32 %v1306, %v1967
      %v4875 = vmul.f32 %v1311, %v1967
      %v4876 = vmul.f32 %v1316, %v1967
      %v4877 = vmul.f32 %v1321, %v1967
      %v4878 = vmul.f32 %v1326, %v1967
      %v4879 = vmul.f32 %v1331, %v1967
      %v4880 = vmul.f32 %v1336, %v1967
      %v4881 = vmul.f32 %v1341, %v1967
      %v4882 = vmul.f32 %v1346, %v1967
      %v4883 = vmul.f32 %v1351, %v1967
      %v4884 = vmul.f32 %v1356, %v1967
      %v4885 = vmul.f32 %v1361, %v1967
      %v4886 = vmul.f32 %v1366, %v1967
      %v4887 = vmul.f32 %v1371, %v1967
      %v4888 = vmul.f32 %v4840, %v1967
      %v4889 = vmul.f32 %v4845, %v1967
      %v4890 = vmul.f32 %v4850, %v1967
      %v4891 = vadd.f32 %v4798, %v4852
      %v4892 = vadd.f32 %v4799, %v4853
      %v4893 = vadd.f32 %v4800, %v4854
      %v4894 = vadd.f32 %v4801, %v4855
      %v4895 = vadd.f32 %v4802, %v4856
      %v4896 = vadd.f32 %v4803, %v4857
      %v4897 = vadd.f32 %v4804, %v4858
      %v4898 = vadd.f32 %v4805, %v4859
      %v4899 = vadd.f32 %v4806, %v4860
      %v4900 = vadd.f32 %v4807, %v4861
      %v4901 = vadd.f32 %v4808, %v4862
      %v4902 = vadd.f32 %v4809, %v4863
      %v4903 = vadd.f32 %v4810, %v4864
      %v4904 = vadd.f32 %v4811, %v4865
      %v4905 = vadd.f32 %v4812, %v4866
      %v4906 = vadd.f32 %v4813, %v4867
      %v4907 = vadd.f32 %v4814, %v4868
      %v4908 = vadd.f32 %v4815, %v4869
      %v4909 = vadd.f32 %v4816, %v4870
      %v4910 = vadd.f32 %v4817, %v4871
      %v4911 = vadd.f32 %v4818, %v4872
      %v4912 = vadd.f32 %v4819, %v4873
      %v4913 = vadd.f32 %v4820, %v4874
      %v4914 = vadd.f32 %v4821, %v4875
      %v4915 = vadd.f32 %v4822, %v4876
      %v4916 = vadd.f32 %v4823, %v4877
      %v4917 = vadd.f32 %v4824, %v4878
      %v4918 = vadd.f32 %v4825, %v4879
      %v4919 = vadd.f32 %v4826, %v4880
      %v4920 = vadd.f32 %v4827, %v4881
      %v4921 = vadd.f32 %v4828, %v4882
      %v4922 = vadd.f32 %v4829, %v4883
      %v4923 = vadd.f32 %v4830, %v4884
      %v4924 = vadd.f32 %v4831, %v4885
      %v4925 = vadd.f32 %v4832, %v4886
      %v4926 = vadd.f32 %v4833, %v4887
      %v4927 = vadd.f32 %v4834, %v4888
      %v4928 = vadd.f32 %v4835, %v4889
      %v4929 = vadd.f32 %v4836, %v4890
      %4931 = vset.pattern.permute.xlu0 0
      %4932 = vperm.xlu0 %4931, %v398
      %v4933 = vpop.permute.xlu0 %4932
      %4936 = vset.pattern.permute.xlu0 0
      %4937 = vperm.xlu0 %4936, %v399
      %v4938 = vpop.permute.xlu0 %4937
      %4941 = vset.pattern.permute.xlu0 0
      %4942 = vperm.xlu0 %4941, %v400
      %v4943 = vpop.permute.xlu0 %4942
      %v4945 = vmul.f32 %v1471, %v2062
      %v4946 = vmul.f32 %v1476, %v2062
      %v4947 = vmul.f32 %v1481, %v2062
      %v4948 = vmul.f32 %v1486, %v2062
      %v4949 = vmul.f32 %v1491, %v2062
      %v4950 = vmul.f32 %v1496, %v2062
      %v4951 = vmul.f32 %v1501, %v2062
      %v4952 = vmul.f32 %v1506, %v2062
      %v4953 = vmul.f32 %v1511, %v2062
      %v4954 = vmul.f32 %v1516, %v2062
      %v4955 = vmul.f32 %v1521, %v2062
      %v4956 = vmul.f32 %v1526, %v2062
      %v4957 = vmul.f32 %v1531, %v2062
      %v4958 = vmul.f32 %v1536, %v2062
      %v4959 = vmul.f32 %v1541, %v2062
      %v4960 = vmul.f32 %v1546, %v2062
      %v4961 = vmul.f32 %v1551, %v2062
      %v4962 = vmul.f32 %v1556, %v2062
      %v4963 = vmul.f32 %v1561, %v2062
      %v4964 = vmul.f32 %v1566, %v2062
      %v4965 = vmul.f32 %v1571, %v2062
      %v4966 = vmul.f32 %v1576, %v2062
      %v4967 = vmul.f32 %v1581, %v2062
      %v4968 = vmul.f32 %v1586, %v2062
      %v4969 = vmul.f32 %v1591, %v2062
      %v4970 = vmul.f32 %v1596, %v2062
      %v4971 = vmul.f32 %v1601, %v2062
      %v4972 = vmul.f32 %v1606, %v2062
      %v4973 = vmul.f32 %v1611, %v2062
      %v4974 = vmul.f32 %v1616, %v2062
      %v4975 = vmul.f32 %v1621, %v2062
      %v4976 = vmul.f32 %v1626, %v2062
      %v4977 = vmul.f32 %v1631, %v2062
      %v4978 = vmul.f32 %v1636, %v2062
      %v4979 = vmul.f32 %v1641, %v2062
      %v4980 = vmul.f32 %v1646, %v2062
      %v4981 = vmul.f32 %v4933, %v2062
      %v4982 = vmul.f32 %v4938, %v2062
      %v4983 = vmul.f32 %v4943, %v2062
      %v4984 = vadd.f32 %v4891, %v4945
      %v4985 = vadd.f32 %v4892, %v4946
      %v4986 = vadd.f32 %v4893, %v4947
      %v4987 = vadd.f32 %v4894, %v4948
      %v4988 = vadd.f32 %v4895, %v4949
      %v4989 = vadd.f32 %v4896, %v4950
      %v4990 = vadd.f32 %v4897, %v4951
      %v4991 = vadd.f32 %v4898, %v4952
      %v4992 = vadd.f32 %v4899, %v4953
      %v4993 = vadd.f32 %v4900, %v4954
      %v4994 = vadd.f32 %v4901, %v4955
      %v4995 = vadd.f32 %v4902, %v4956
      %v4996 = vadd.f32 %v4903, %v4957
      %v4997 = vadd.f32 %v4904, %v4958
      %v4998 = vadd.f32 %v4905, %v4959
      %v4999 = vadd.f32 %v4906, %v4960
      %v5000 = vadd.f32 %v4907, %v4961
      %v5001 = vadd.f32 %v4908, %v4962
      %v5002 = vadd.f32 %v4909, %v4963
      %v5003 = vadd.f32 %v4910, %v4964
      %v5004 = vadd.f32 %v4911, %v4965
      %v5005 = vadd.f32 %v4912, %v4966
      %v5006 = vadd.f32 %v4913, %v4967
      %v5007 = vadd.f32 %v4914, %v4968
      %v5008 = vadd.f32 %v4915, %v4969
      %v5009 = vadd.f32 %v4916, %v4970
      %v5010 = vadd.f32 %v4917, %v4971
      %v5011 = vadd.f32 %v4918, %v4972
      %v5012 = vadd.f32 %v4919, %v4973
      %v5013 = vadd.f32 %v4920, %v4974
      %v5014 = vadd.f32 %v4921, %v4975
      %v5015 = vadd.f32 %v4922, %v4976
      %v5016 = vadd.f32 %v4923, %v4977
      %v5017 = vadd.f32 %v4924, %v4978
      %v5018 = vadd.f32 %v4925, %v4979
      %v5019 = vadd.f32 %v4926, %v4980
      %v5020 = vadd.f32 %v4927, %v4981
      %v5021 = vadd.f32 %v4928, %v4982
      %v5022 = vadd.f32 %v4929, %v4983
      %v5023 = vmul.f32 %v1196, %v2142
      %v5024 = vmul.f32 %v1201, %v2142
      %v5025 = vmul.f32 %v1206, %v2142
      %v5026 = vmul.f32 %v1211, %v2142
      %v5027 = vmul.f32 %v1216, %v2142
      %v5028 = vmul.f32 %v1221, %v2142
      %v5029 = vmul.f32 %v1226, %v2142
      %v5030 = vmul.f32 %v1231, %v2142
      %v5031 = vmul.f32 %v1236, %v2142
      %v5032 = vmul.f32 %v1241, %v2142
      %v5033 = vmul.f32 %v1246, %v2142
      %v5034 = vmul.f32 %v1251, %v2142
      %v5035 = vmul.f32 %v1256, %v2142
      %v5036 = vmul.f32 %v1261, %v2142
      %v5037 = vmul.f32 %v1266, %v2142
      %v5038 = vmul.f32 %v1271, %v2142
      %v5039 = vmul.f32 %v1276, %v2142
      %v5040 = vmul.f32 %v1281, %v2142
      %v5041 = vmul.f32 %v1286, %v2142
      %v5042 = vmul.f32 %v1291, %v2142
      %v5043 = vmul.f32 %v1296, %v2142
      %v5044 = vmul.f32 %v1301, %v2142
      %v5045 = vmul.f32 %v1306, %v2142
      %v5046 = vmul.f32 %v1311, %v2142
      %v5047 = vmul.f32 %v1316, %v2142
      %v5048 = vmul.f32 %v1321, %v2142
      %v5049 = vmul.f32 %v1326, %v2142
      %v5050 = vmul.f32 %v1331, %v2142
      %v5051 = vmul.f32 %v1336, %v2142
      %v5052 = vmul.f32 %v1341, %v2142
      %v5053 = vmul.f32 %v1346, %v2142
      %v5054 = vmul.f32 %v1351, %v2142
      %v5055 = vmul.f32 %v1356, %v2142
      %v5056 = vmul.f32 %v1361, %v2142
      %v5057 = vmul.f32 %v1366, %v2142
      %v5058 = vmul.f32 %v1371, %v2142
      %v5059 = vmul.f32 %v4840, %v2142
      %v5060 = vmul.f32 %v4845, %v2142
      %v5061 = vmul.f32 %v4850, %v2142
      %v5101 = vrot.slane %v5023, 1
      %v5102 = vrot.slane %v5024, 1
      %v5103 = vsel %vm1032, %v5101, %v5102
      %v5104 = vrot.slane %v5025, 1
      %v5105 = vsel %vm1032, %v5102, %v5104
      %v5106 = vrot.slane %v5026, 1
      %v5107 = vrot.slane %v5027, 1
      %v5108 = vsel %vm1032, %v5106, %v5107
      %v5109 = vrot.slane %v5028, 1
      %v5110 = vsel %vm1032, %v5107, %v5109
      %v5111 = vrot.slane %v5029, 1
      %v5112 = vrot.slane %v5030, 1
      %v5113 = vsel %vm1032, %v5111, %v5112
      %v5114 = vrot.slane %v5031, 1
      %v5115 = vsel %vm1032, %v5112, %v5114
      %v5116 = vrot.slane %v5032, 1
      %v5117 = vrot.slane %v5033, 1
      %v5118 = vsel %vm1032, %v5116, %v5117
      %v5119 = vrot.slane %v5034, 1
      %v5120 = vsel %vm1032, %v5117, %v5119
      %v5121 = vrot.slane %v5035, 1
      %v5122 = vrot.slane %v5036, 1
      %v5123 = vsel %vm1032, %v5121, %v5122
      %v5124 = vrot.slane %v5037, 1
      %v5125 = vsel %vm1032, %v5122, %v5124
      %v5126 = vrot.slane %v5038, 1
      %v5127 = vrot.slane %v5039, 1
      %v5128 = vsel %vm1032, %v5126, %v5127
      %v5129 = vrot.slane %v5040, 1
      %v5130 = vsel %vm1032, %v5127, %v5129
      %v5131 = vrot.slane %v5041, 1
      %v5132 = vrot.slane %v5042, 1
      %v5133 = vsel %vm1032, %v5131, %v5132
      %v5134 = vrot.slane %v5043, 1
      %v5135 = vsel %vm1032, %v5132, %v5134
      %v5136 = vrot.slane %v5044, 1
      %v5137 = vrot.slane %v5045, 1
      %v5138 = vsel %vm1032, %v5136, %v5137
      %v5139 = vrot.slane %v5046, 1
      %v5140 = vsel %vm1032, %v5137, %v5139
      %v5141 = vrot.slane %v5047, 1
      %v5142 = vrot.slane %v5048, 1
      %v5143 = vsel %vm1032, %v5141, %v5142
      %v5144 = vrot.slane %v5049, 1
      %v5145 = vsel %vm1032, %v5142, %v5144
      %v5146 = vrot.slane %v5050, 1
      %v5147 = vrot.slane %v5051, 1
      %v5148 = vsel %vm1032, %v5146, %v5147
      %v5149 = vrot.slane %v5052, 1
      %v5150 = vsel %vm1032, %v5147, %v5149
      %v5151 = vrot.slane %v5053, 1
      %v5152 = vrot.slane %v5054, 1
      %v5153 = vsel %vm1032, %v5151, %v5152
      %v5154 = vrot.slane %v5055, 1
      %v5155 = vsel %vm1032, %v5152, %v5154
      %v5156 = vrot.slane %v5056, 1
      %v5157 = vrot.slane %v5057, 1
      %v5158 = vsel %vm1032, %v5156, %v5157
      %v5159 = vrot.slane %v5058, 1
      %v5160 = vsel %vm1032, %v5157, %v5159
      %v5161 = vrot.slane %v5059, 1
      %v5162 = vrot.slane %v5060, 1
      %v5163 = vsel %vm1032, %v5161, %v5162
      %v5164 = vrot.slane %v5061, 1
      %v5165 = vsel %vm1032, %v5162, %v5164
      %v5205 = vadd.f32 %v4984, %v5103
      %v5206 = vadd.f32 %v4985, %v5105
      %v5207 = vadd.f32 %v4986, %v5104
      %v5208 = vadd.f32 %v4987, %v5108
      %v5209 = vadd.f32 %v4988, %v5110
      %v5210 = vadd.f32 %v4989, %v5109
      %v5211 = vadd.f32 %v4990, %v5113
      %v5212 = vadd.f32 %v4991, %v5115
      %v5213 = vadd.f32 %v4992, %v5114
      %v5214 = vadd.f32 %v4993, %v5118
      %v5215 = vadd.f32 %v4994, %v5120
      %v5216 = vadd.f32 %v4995, %v5119
      %v5217 = vadd.f32 %v4996, %v5123
      %v5218 = vadd.f32 %v4997, %v5125
      %v5219 = vadd.f32 %v4998, %v5124
      %v5220 = vadd.f32 %v4999, %v5128
      %v5221 = vadd.f32 %v5000, %v5130
      %v5222 = vadd.f32 %v5001, %v5129
      %v5223 = vadd.f32 %v5002, %v5133
      %v5224 = vadd.f32 %v5003, %v5135
      %v5225 = vadd.f32 %v5004, %v5134
      %v5226 = vadd.f32 %v5005, %v5138
      %v5227 = vadd.f32 %v5006, %v5140
      %v5228 = vadd.f32 %v5007, %v5139
      %v5229 = vadd.f32 %v5008, %v5143
      %v5230 = vadd.f32 %v5009, %v5145
      %v5231 = vadd.f32 %v5010, %v5144
      %v5232 = vadd.f32 %v5011, %v5148
      %v5233 = vadd.f32 %v5012, %v5150
      %v5234 = vadd.f32 %v5013, %v5149
      %v5235 = vadd.f32 %v5014, %v5153
      %v5236 = vadd.f32 %v5015, %v5155
      %v5237 = vadd.f32 %v5016, %v5154
      %v5238 = vadd.f32 %v5017, %v5158
      %v5239 = vadd.f32 %v5018, %v5160
      %v5240 = vadd.f32 %v5019, %v5159
      %v5241 = vadd.f32 %v5020, %v5163
      %v5242 = vadd.f32 %v5021, %v5165
      %v5243 = vadd.f32 %v5022, %v5164
      %v5244 = vadd.f32 %v5205, %v2365
      %v5245 = vadd.f32 %v5206, %v2365
      %v5246 = vadd.f32 %v5207, %v2365
      %v5247 = vadd.f32 %v5208, %v2365
      %v5248 = vadd.f32 %v5209, %v2365
      %v5249 = vadd.f32 %v5210, %v2365
      %v5250 = vadd.f32 %v5211, %v2365
      %v5251 = vadd.f32 %v5212, %v2365
      %v5252 = vadd.f32 %v5213, %v2365
      %v5253 = vadd.f32 %v5214, %v2365
      %v5254 = vadd.f32 %v5215, %v2365
      %v5255 = vadd.f32 %v5216, %v2365
      %v5256 = vadd.f32 %v5217, %v2365
      %v5257 = vadd.f32 %v5218, %v2365
      %v5258 = vadd.f32 %v5219, %v2365
      %v5259 = vadd.f32 %v5220, %v2365
      %v5260 = vadd.f32 %v5221, %v2365
      %v5261 = vadd.f32 %v5222, %v2365
      %v5262 = vadd.f32 %v5223, %v2365
      %v5263 = vadd.f32 %v5224, %v2365
      %v5264 = vadd.f32 %v5225, %v2365
      %v5265 = vadd.f32 %v5226, %v2365
      %v5266 = vadd.f32 %v5227, %v2365
      %v5267 = vadd.f32 %v5228, %v2365
      %v5268 = vadd.f32 %v5229, %v2365
      %v5269 = vadd.f32 %v5230, %v2365
      %v5270 = vadd.f32 %v5231, %v2365
      %v5271 = vadd.f32 %v5232, %v2365
      %v5272 = vadd.f32 %v5233, %v2365
      %v5273 = vadd.f32 %v5234, %v2365
      %v5274 = vadd.f32 %v5235, %v2365
      %v5275 = vadd.f32 %v5236, %v2365
      %v5276 = vadd.f32 %v5237, %v2365
      %v5277 = vadd.f32 %v5238, %v2365
      %v5278 = vadd.f32 %v5239, %v2365
      %v5279 = vadd.f32 %v5240, %v2365
      %v5280 = vadd.f32 %v5241, %v2365
      %v5281 = vadd.f32 %v5242, %v2365
      %v5282 = vadd.f32 %v5243, %v2365
      %v5283 = vmax.f32 %v5244, 0.0
      %v5284 = vmax.f32 %v5245, 0.0
      %v5285 = vmax.f32 %v5246, 0.0
      %v5286 = vmax.f32 %v5247, 0.0
      %v5287 = vmax.f32 %v5248, 0.0
      %v5288 = vmax.f32 %v5249, 0.0
      %v5289 = vmax.f32 %v5250, 0.0
      %v5290 = vmax.f32 %v5251, 0.0
      %v5291 = vmax.f32 %v5252, 0.0
      %v5292 = vmax.f32 %v5253, 0.0
      %v5293 = vmax.f32 %v5254, 0.0
      %v5294 = vmax.f32 %v5255, 0.0
      %v5295 = vmax.f32 %v5256, 0.0
      %v5296 = vmax.f32 %v5257, 0.0
      %v5297 = vmax.f32 %v5258, 0.0
      %v5298 = vmax.f32 %v5259, 0.0
      %v5299 = vmax.f32 %v5260, 0.0
      %v5300 = vmax.f32 %v5261, 0.0
      %v5301 = vmax.f32 %v5262, 0.0
      %v5302 = vmax.f32 %v5263, 0.0
      %v5303 = vmax.f32 %v5264, 0.0
      %v5304 = vmax.f32 %v5265, 0.0
      %v5305 = vmax.f32 %v5266, 0.0
      %v5306 = vmax.f32 %v5267, 0.0
      %v5307 = vmax.f32 %v5268, 0.0
      %v5308 = vmax.f32 %v5269, 0.0
      %v5309 = vmax.f32 %v5270, 0.0
      %v5310 = vmax.f32 %v5271, 0.0
      %v5311 = vmax.f32 %v5272, 0.0
      %v5312 = vmax.f32 %v5273, 0.0
      %v5313 = vmax.f32 %v5274, 0.0
      %v5314 = vmax.f32 %v5275, 0.0
      %v5315 = vmax.f32 %v5276, 0.0
      %v5316 = vmax.f32 %v5277, 0.0
      %v5317 = vmax.f32 %v5278, 0.0
      %v5318 = vmax.f32 %v5279, 0.0
      %v5319 = vmax.f32 %v5280, 0.0
      %v5320 = vmax.f32 %v5281, 0.0
      %v5321 = vmax.f32 %v5282, 0.0
      %v5322 = vmul.f32 %v1456, %v598
      %v5323 = vmul.f32 %v1461, %v598
      %v5324 = vmul.f32 %v1466, %v598
      %v5325 = vmul.f32 %v1471, %v598
      %v5326 = vmul.f32 %v1476, %v598
      %v5327 = vmul.f32 %v1481, %v598
      %v5328 = vmul.f32 %v1486, %v598
      %v5329 = vmul.f32 %v1491, %v598
      %v5330 = vmul.f32 %v1496, %v598
      %v5331 = vmul.f32 %v1501, %v598
      %v5332 = vmul.f32 %v1506, %v598
      %v5333 = vmul.f32 %v1511, %v598
      %v5334 = vmul.f32 %v1516, %v598
      %v5335 = vmul.f32 %v1521, %v598
      %v5336 = vmul.f32 %v1526, %v598
      %v5337 = vmul.f32 %v1531, %v598
      %v5338 = vmul.f32 %v1536, %v598
      %v5339 = vmul.f32 %v1541, %v598
      %v5340 = vmul.f32 %v1546, %v598
      %v5341 = vmul.f32 %v1551, %v598
      %v5342 = vmul.f32 %v1556, %v598
      %v5343 = vmul.f32 %v1561, %v598
      %v5344 = vmul.f32 %v1566, %v598
      %v5345 = vmul.f32 %v1571, %v598
      %v5346 = vmul.f32 %v1576, %v598
      %v5347 = vmul.f32 %v1581, %v598
      %v5348 = vmul.f32 %v1586, %v598
      %v5349 = vmul.f32 %v1591, %v598
      %v5350 = vmul.f32 %v1596, %v598
      %v5351 = vmul.f32 %v1601, %v598
      %v5352 = vmul.f32 %v1606, %v598
      %v5353 = vmul.f32 %v1611, %v598
      %v5354 = vmul.f32 %v1616, %v598
      %v5355 = vmul.f32 %v1621, %v598
      %v5356 = vmul.f32 %v1626, %v598
      %v5357 = vmul.f32 %v1631, %v598
      %v5358 = vmul.f32 %v1636, %v598
      %v5359 = vmul.f32 %v1641, %v598
      %v5360 = vmul.f32 %v1646, %v598
      %v5361 = vadd.f32 %v5322, 0.0
      %v5362 = vadd.f32 %v5323, 0.0
      %v5363 = vadd.f32 %v5324, 0.0
      %v5364 = vadd.f32 %v5325, 0.0
      %v5365 = vadd.f32 %v5326, 0.0
      %v5366 = vadd.f32 %v5327, 0.0
      %v5367 = vadd.f32 %v5328, 0.0
      %v5368 = vadd.f32 %v5329, 0.0
      %v5369 = vadd.f32 %v5330, 0.0
      %v5370 = vadd.f32 %v5331, 0.0
      %v5371 = vadd.f32 %v5332, 0.0
      %v5372 = vadd.f32 %v5333, 0.0
      %v5373 = vadd.f32 %v5334, 0.0
      %v5374 = vadd.f32 %v5335, 0.0
      %v5375 = vadd.f32 %v5336, 0.0
      %v5376 = vadd.f32 %v5337, 0.0
      %v5377 = vadd.f32 %v5338, 0.0
      %v5378 = vadd.f32 %v5339, 0.0
      %v5379 = vadd.f32 %v5340, 0.0
      %v5380 = vadd.f32 %v5341, 0.0
      %v5381 = vadd.f32 %v5342, 0.0
      %v5382 = vadd.f32 %v5343, 0.0
      %v5383 = vadd.f32 %v5344, 0.0
      %v5384 = vadd.f32 %v5345, 0.0
      %v5385 = vadd.f32 %v5346, 0.0
      %v5386 = vadd.f32 %v5347, 0.0
      %v5387 = vadd.f32 %v5348, 0.0
      %v5388 = vadd.f32 %v5349, 0.0
      %v5389 = vadd.f32 %v5350, 0.0
      %v5390 = vadd.f32 %v5351, 0.0
      %v5391 = vadd.f32 %v5352, 0.0
      %v5392 = vadd.f32 %v5353, 0.0
      %v5393 = vadd.f32 %v5354, 0.0
      %v5394 = vadd.f32 %v5355, 0.0
      %v5395 = vadd.f32 %v5356, 0.0
      %v5396 = vadd.f32 %v5357, 0.0
      %v5397 = vadd.f32 %v5358, 0.0
      %v5398 = vadd.f32 %v5359, 0.0
      %v5399 = vadd.f32 %v5360, 0.0
      %v5400 = vmul.f32 %v1181, %v873
      %v5401 = vmul.f32 %v1186, %v873
      %v5402 = vmul.f32 %v1191, %v873
      %v5403 = vmul.f32 %v1196, %v873
      %v5404 = vmul.f32 %v1201, %v873
      %v5405 = vmul.f32 %v1206, %v873
      %v5406 = vmul.f32 %v1211, %v873
      %v5407 = vmul.f32 %v1216, %v873
      %v5408 = vmul.f32 %v1221, %v873
      %v5409 = vmul.f32 %v1226, %v873
      %v5410 = vmul.f32 %v1231, %v873
      %v5411 = vmul.f32 %v1236, %v873
      %v5412 = vmul.f32 %v1241, %v873
      %v5413 = vmul.f32 %v1246, %v873
      %v5414 = vmul.f32 %v1251, %v873
      %v5415 = vmul.f32 %v1256, %v873
      %v5416 = vmul.f32 %v1261, %v873
      %v5417 = vmul.f32 %v1266, %v873
      %v5418 = vmul.f32 %v1271, %v873
      %v5419 = vmul.f32 %v1276, %v873
      %v5420 = vmul.f32 %v1281, %v873
      %v5421 = vmul.f32 %v1286, %v873
      %v5422 = vmul.f32 %v1291, %v873
      %v5423 = vmul.f32 %v1296, %v873
      %v5424 = vmul.f32 %v1301, %v873
      %v5425 = vmul.f32 %v1306, %v873
      %v5426 = vmul.f32 %v1311, %v873
      %v5427 = vmul.f32 %v1316, %v873
      %v5428 = vmul.f32 %v1321, %v873
      %v5429 = vmul.f32 %v1326, %v873
      %v5430 = vmul.f32 %v1331, %v873
      %v5431 = vmul.f32 %v1336, %v873
      %v5432 = vmul.f32 %v1341, %v873
      %v5433 = vmul.f32 %v1346, %v873
      %v5434 = vmul.f32 %v1351, %v873
      %v5435 = vmul.f32 %v1356, %v873
      %v5436 = vmul.f32 %v1361, %v873
      %v5437 = vmul.f32 %v1366, %v873
      %v5438 = vmul.f32 %v1371, %v873
      %v5478 = vrot.slane %v5400, 1
      %v5479 = vrot.slane %v5401, 1
      %v5480 = vsel %vm1032, %v5478, %v5479
      %v5481 = vrot.slane %v5402, 1
      %v5482 = vsel %vm1032, %v5479, %v5481
      %v5483 = vrot.slane %v5403, 1
      %v5484 = vrot.slane %v5404, 1
      %v5485 = vsel %vm1032, %v5483, %v5484
      %v5486 = vrot.slane %v5405, 1
      %v5487 = vsel %vm1032, %v5484, %v5486
      %v5488 = vrot.slane %v5406, 1
      %v5489 = vrot.slane %v5407, 1
      %v5490 = vsel %vm1032, %v5488, %v5489
      %v5491 = vrot.slane %v5408, 1
      %v5492 = vsel %vm1032, %v5489, %v5491
      %v5493 = vrot.slane %v5409, 1
      %v5494 = vrot.slane %v5410, 1
      %v5495 = vsel %vm1032, %v5493, %v5494
      %v5496 = vrot.slane %v5411, 1
      %v5497 = vsel %vm1032, %v5494, %v5496
      %v5498 = vrot.slane %v5412, 1
      %v5499 = vrot.slane %v5413, 1
      %v5500 = vsel %vm1032, %v5498, %v5499
      %v5501 = vrot.slane %v5414, 1
      %v5502 = vsel %vm1032, %v5499, %v5501
      %v5503 = vrot.slane %v5415, 1
      %v5504 = vrot.slane %v5416, 1
      %v5505 = vsel %vm1032, %v5503, %v5504
      %v5506 = vrot.slane %v5417, 1
      %v5507 = vsel %vm1032, %v5504, %v5506
      %v5508 = vrot.slane %v5418, 1
      %v5509 = vrot.slane %v5419, 1
      %v5510 = vsel %vm1032, %v5508, %v5509
      %v5511 = vrot.slane %v5420, 1
      %v5512 = vsel %vm1032, %v5509, %v5511
      %v5513 = vrot.slane %v5421, 1
      %v5514 = vrot.slane %v5422, 1
      %v5515 = vsel %vm1032, %v5513, %v5514
      %v5516 = vrot.slane %v5423, 1
      %v5517 = vsel %vm1032, %v5514, %v5516
      %v5518 = vrot.slane %v5424, 1
      %v5519 = vrot.slane %v5425, 1
      %v5520 = vsel %vm1032, %v5518, %v5519
      %v5521 = vrot.slane %v5426, 1
      %v5522 = vsel %vm1032, %v5519, %v5521
      %v5523 = vrot.slane %v5427, 1
      %v5524 = vrot.slane %v5428, 1
      %v5525 = vsel %vm1032, %v5523, %v5524
      %v5526 = vrot.slane %v5429, 1
      %v5527 = vsel %vm1032, %v5524, %v5526
      %v5528 = vrot.slane %v5430, 1
      %v5529 = vrot.slane %v5431, 1
      %v5530 = vsel %vm1032, %v5528, %v5529
      %v5531 = vrot.slane %v5432, 1
      %v5532 = vsel %vm1032, %v5529, %v5531
      %v5533 = vrot.slane %v5433, 1
      %v5534 = vrot.slane %v5434, 1
      %v5535 = vsel %vm1032, %v5533, %v5534
      %v5536 = vrot.slane %v5435, 1
      %v5537 = vsel %vm1032, %v5534, %v5536
      %v5538 = vrot.slane %v5436, 1
      %v5539 = vrot.slane %v5437, 1
      %v5540 = vsel %vm1032, %v5538, %v5539
      %v5541 = vrot.slane %v5438, 1
      %v5542 = vsel %vm1032, %v5539, %v5541
      %v5582 = vadd.f32 %v5361, %v5480
      %v5583 = vadd.f32 %v5362, %v5482
      %v5584 = vadd.f32 %v5363, %v5481
      %v5585 = vadd.f32 %v5364, %v5485
      %v5586 = vadd.f32 %v5365, %v5487
      %v5587 = vadd.f32 %v5366, %v5486
      %v5588 = vadd.f32 %v5367, %v5490
      %v5589 = vadd.f32 %v5368, %v5492
      %v5590 = vadd.f32 %v5369, %v5491
      %v5591 = vadd.f32 %v5370, %v5495
      %v5592 = vadd.f32 %v5371, %v5497
      %v5593 = vadd.f32 %v5372, %v5496
      %v5594 = vadd.f32 %v5373, %v5500
      %v5595 = vadd.f32 %v5374, %v5502
      %v5596 = vadd.f32 %v5375, %v5501
      %v5597 = vadd.f32 %v5376, %v5505
      %v5598 = vadd.f32 %v5377, %v5507
      %v5599 = vadd.f32 %v5378, %v5506
      %v5600 = vadd.f32 %v5379, %v5510
      %v5601 = vadd.f32 %v5380, %v5512
      %v5602 = vadd.f32 %v5381, %v5511
      %v5603 = vadd.f32 %v5382, %v5515
      %v5604 = vadd.f32 %v5383, %v5517
      %v5605 = vadd.f32 %v5384, %v5516
      %v5606 = vadd.f32 %v5385, %v5520
      %v5607 = vadd.f32 %v5386, %v5522
      %v5608 = vadd.f32 %v5387, %v5521
      %v5609 = vadd.f32 %v5388, %v5525
      %v5610 = vadd.f32 %v5389, %v5527
      %v5611 = vadd.f32 %v5390, %v5526
      %v5612 = vadd.f32 %v5391, %v5530
      %v5613 = vadd.f32 %v5392, %v5532
      %v5614 = vadd.f32 %v5393, %v5531
      %v5615 = vadd.f32 %v5394, %v5535
      %v5616 = vadd.f32 %v5395, %v5537
      %v5617 = vadd.f32 %v5396, %v5536
      %v5618 = vadd.f32 %v5397, %v5540
      %v5619 = vadd.f32 %v5398, %v5542
      %v5620 = vadd.f32 %v5399, %v5541
      %v5621 = vmul.f32 %v1456, %v953
      %v5622 = vmul.f32 %v1461, %v953
      %v5623 = vmul.f32 %v1466, %v953
      %v5624 = vmul.f32 %v1471, %v953
      %v5625 = vmul.f32 %v1476, %v953
      %v5626 = vmul.f32 %v1481, %v953
      %v5627 = vmul.f32 %v1486, %v953
      %v5628 = vmul.f32 %v1491, %v953
      %v5629 = vmul.f32 %v1496, %v953
      %v5630 = vmul.f32 %v1501, %v953
      %v5631 = vmul.f32 %v1506, %v953
      %v5632 = vmul.f32 %v1511, %v953
      %v5633 = vmul.f32 %v1516, %v953
      %v5634 = vmul.f32 %v1521, %v953
      %v5635 = vmul.f32 %v1526, %v953
      %v5636 = vmul.f32 %v1531, %v953
      %v5637 = vmul.f32 %v1536, %v953
      %v5638 = vmul.f32 %v1541, %v953
      %v5639 = vmul.f32 %v1546, %v953
      %v5640 = vmul.f32 %v1551, %v953
      %v5641 = vmul.f32 %v1556, %v953
      %v5642 = vmul.f32 %v1561, %v953
      %v5643 = vmul.f32 %v1566, %v953
      %v5644 = vmul.f32 %v1571, %v953
      %v5645 = vmul.f32 %v1576, %v953
      %v5646 = vmul.f32 %v1581, %v953
      %v5647 = vmul.f32 %v1586, %v953
      %v5648 = vmul.f32 %v1591, %v953
      %v5649 = vmul.f32 %v1596, %v953
      %v5650 = vmul.f32 %v1601, %v953
      %v5651 = vmul.f32 %v1606, %v953
      %v5652 = vmul.f32 %v1611, %v953
      %v5653 = vmul.f32 %v1616, %v953
      %v5654 = vmul.f32 %v1621, %v953
      %v5655 = vmul.f32 %v1626, %v953
      %v5656 = vmul.f32 %v1631, %v953
      %v5657 = vmul.f32 %v1636, %v953
      %v5658 = vmul.f32 %v1641, %v953
      %v5659 = vmul.f32 %v1646, %v953
      %v5699 = vrot.slane %v5621, 1
      %v5700 = vrot.slane %v5622, 1
      %v5701 = vsel %vm1032, %v5699, %v5700
      %v5702 = vrot.slane %v5623, 1
      %v5703 = vsel %vm1032, %v5700, %v5702
      %v5704 = vrot.slane %v5624, 1
      %v5705 = vrot.slane %v5625, 1
      %v5706 = vsel %vm1032, %v5704, %v5705
      %v5707 = vrot.slane %v5626, 1
      %v5708 = vsel %vm1032, %v5705, %v5707
      %v5709 = vrot.slane %v5627, 1
      %v5710 = vrot.slane %v5628, 1
      %v5711 = vsel %vm1032, %v5709, %v5710
      %v5712 = vrot.slane %v5629, 1
      %v5713 = vsel %vm1032, %v5710, %v5712
      %v5714 = vrot.slane %v5630, 1
      %v5715 = vrot.slane %v5631, 1
      %v5716 = vsel %vm1032, %v5714, %v5715
      %v5717 = vrot.slane %v5632, 1
      %v5718 = vsel %vm1032, %v5715, %v5717
      %v5719 = vrot.slane %v5633, 1
      %v5720 = vrot.slane %v5634, 1
      %v5721 = vsel %vm1032, %v5719, %v5720
      %v5722 = vrot.slane %v5635, 1
      %v5723 = vsel %vm1032, %v5720, %v5722
      %v5724 = vrot.slane %v5636, 1
      %v5725 = vrot.slane %v5637, 1
      %v5726 = vsel %vm1032, %v5724, %v5725
      %v5727 = vrot.slane %v5638, 1
      %v5728 = vsel %vm1032, %v5725, %v5727
      %v5729 = vrot.slane %v5639, 1
      %v5730 = vrot.slane %v5640, 1
      %v5731 = vsel %vm1032, %v5729, %v5730
      %v5732 = vrot.slane %v5641, 1
      %v5733 = vsel %vm1032, %v5730, %v5732
      %v5734 = vrot.slane %v5642, 1
      %v5735 = vrot.slane %v5643, 1
      %v5736 = vsel %vm1032, %v5734, %v5735
      %v5737 = vrot.slane %v5644, 1
      %v5738 = vsel %vm1032, %v5735, %v5737
      %v5739 = vrot.slane %v5645, 1
      %v5740 = vrot.slane %v5646, 1
      %v5741 = vsel %vm1032, %v5739, %v5740
      %v5742 = vrot.slane %v5647, 1
      %v5743 = vsel %vm1032, %v5740, %v5742
      %v5744 = vrot.slane %v5648, 1
      %v5745 = vrot.slane %v5649, 1
      %v5746 = vsel %vm1032, %v5744, %v5745
      %v5747 = vrot.slane %v5650, 1
      %v5748 = vsel %vm1032, %v5745, %v5747
      %v5749 = vrot.slane %v5651, 1
      %v5750 = vrot.slane %v5652, 1
      %v5751 = vsel %vm1032, %v5749, %v5750
      %v5752 = vrot.slane %v5653, 1
      %v5753 = vsel %vm1032, %v5750, %v5752
      %v5754 = vrot.slane %v5654, 1
      %v5755 = vrot.slane %v5655, 1
      %v5756 = vsel %vm1032, %v5754, %v5755
      %v5757 = vrot.slane %v5656, 1
      %v5758 = vsel %vm1032, %v5755, %v5757
      %v5759 = vrot.slane %v5657, 1
      %v5760 = vrot.slane %v5658, 1
      %v5761 = vsel %vm1032, %v5759, %v5760
      %v5762 = vrot.slane %v5659, 1
      %v5763 = vsel %vm1032, %v5760, %v5762
      %v5803 = vadd.f32 %v5582, %v5701
      %v5804 = vadd.f32 %v5583, %v5703
      %v5805 = vadd.f32 %v5584, %v5702
      %v5806 = vadd.f32 %v5585, %v5706
      %v5807 = vadd.f32 %v5586, %v5708
      %v5808 = vadd.f32 %v5587, %v5707
      %v5809 = vadd.f32 %v5588, %v5711
      %v5810 = vadd.f32 %v5589, %v5713
      %v5811 = vadd.f32 %v5590, %v5712
      %v5812 = vadd.f32 %v5591, %v5716
      %v5813 = vadd.f32 %v5592, %v5718
      %v5814 = vadd.f32 %v5593, %v5717
      %v5815 = vadd.f32 %v5594, %v5721
      %v5816 = vadd.f32 %v5595, %v5723
      %v5817 = vadd.f32 %v5596, %v5722
      %v5818 = vadd.f32 %v5597, %v5726
      %v5819 = vadd.f32 %v5598, %v5728
      %v5820 = vadd.f32 %v5599, %v5727
      %v5821 = vadd.f32 %v5600, %v5731
      %v5822 = vadd.f32 %v5601, %v5733
      %v5823 = vadd.f32 %v5602, %v5732
      %v5824 = vadd.f32 %v5603, %v5736
      %v5825 = vadd.f32 %v5604, %v5738
      %v5826 = vadd.f32 %v5605, %v5737
      %v5827 = vadd.f32 %v5606, %v5741
      %v5828 = vadd.f32 %v5607, %v5743
      %v5829 = vadd.f32 %v5608, %v5742
      %v5830 = vadd.f32 %v5609, %v5746
      %v5831 = vadd.f32 %v5610, %v5748
      %v5832 = vadd.f32 %v5611, %v5747
      %v5833 = vadd.f32 %v5612, %v5751
      %v5834 = vadd.f32 %v5613, %v5753
      %v5835 = vadd.f32 %v5614, %v5752
      %v5836 = vadd.f32 %v5615, %v5756
      %v5837 = vadd.f32 %v5616, %v5758
      %v5838 = vadd.f32 %v5617, %v5757
      %v5839 = vadd.f32 %v5618, %v5761
      %v5840 = vadd.f32 %v5619, %v5763
      %v5841 = vadd.f32 %v5620, %v5762
      %v5842 = vmul.f32 %v696, %v1373
      %v5843 = vmul.f32 %v701, %v1373
      %v5844 = vmul.f32 %v706, %v1373
      %v5845 = vmul.f32 %v711, %v1373
      %v5846 = vmul.f32 %v716, %v1373
      %v5847 = vmul.f32 %v721, %v1373
      %v5848 = vmul.f32 %v726, %v1373
      %v5849 = vmul.f32 %v731, %v1373
      %v5850 = vmul.f32 %v736, %v1373
      %v5851 = vmul.f32 %v741, %v1373
      %v5852 = vmul.f32 %v746, %v1373
      %v5853 = vmul.f32 %v751, %v1373
      %v5854 = vmul.f32 %v756, %v1373
      %v5855 = vmul.f32 %v761, %v1373
      %v5856 = vmul.f32 %v766, %v1373
      %v5857 = vmul.f32 %v771, %v1373
      %v5858 = vmul.f32 %v776, %v1373
      %v5859 = vmul.f32 %v781, %v1373
      %v5860 = vmul.f32 %v786, %v1373
      %v5861 = vmul.f32 %v791, %v1373
      %v5862 = vmul.f32 %v796, %v1373
      %v5863 = vmul.f32 %v801, %v1373
      %v5864 = vmul.f32 %v806, %v1373
      %v5865 = vmul.f32 %v811, %v1373
      %v5866 = vmul.f32 %v816, %v1373
      %v5867 = vmul.f32 %v821, %v1373
      %v5868 = vmul.f32 %v826, %v1373
      %v5869 = vmul.f32 %v831, %v1373
      %v5870 = vmul.f32 %v836, %v1373
      %v5871 = vmul.f32 %v841, %v1373
      %v5872 = vmul.f32 %v846, %v1373
      %v5873 = vmul.f32 %v851, %v1373
      %v5874 = vmul.f32 %v856, %v1373
      %v5875 = vmul.f32 %v861, %v1373
      %v5876 = vmul.f32 %v866, %v1373
      %v5877 = vmul.f32 %v871, %v1373
      %v5878 = vmul.f32 %v2050, %v1373
      %v5879 = vmul.f32 %v2055, %v1373
      %v5880 = vmul.f32 %v2060, %v1373
      %v5881 = vadd.f32 %v5803, %v5842
      %v5882 = vadd.f32 %v5804, %v5843
      %v5883 = vadd.f32 %v5805, %v5844
      %v5884 = vadd.f32 %v5806, %v5845
      %v5885 = vadd.f32 %v5807, %v5846
      %v5886 = vadd.f32 %v5808, %v5847
      %v5887 = vadd.f32 %v5809, %v5848
      %v5888 = vadd.f32 %v5810, %v5849
      %v5889 = vadd.f32 %v5811, %v5850
      %v5890 = vadd.f32 %v5812, %v5851
      %v5891 = vadd.f32 %v5813, %v5852
      %v5892 = vadd.f32 %v5814, %v5853
      %v5893 = vadd.f32 %v5815, %v5854
      %v5894 = vadd.f32 %v5816, %v5855
      %v5895 = vadd.f32 %v5817, %v5856
      %v5896 = vadd.f32 %v5818, %v5857
      %v5897 = vadd.f32 %v5819, %v5858
      %v5898 = vadd.f32 %v5820, %v5859
      %v5899 = vadd.f32 %v5821, %v5860
      %v5900 = vadd.f32 %v5822, %v5861
      %v5901 = vadd.f32 %v5823, %v5862
      %v5902 = vadd.f32 %v5824, %v5863
      %v5903 = vadd.f32 %v5825, %v5864
      %v5904 = vadd.f32 %v5826, %v5865
      %v5905 = vadd.f32 %v5827, %v5866
      %v5906 = vadd.f32 %v5828, %v5867
      %v5907 = vadd.f32 %v5829, %v5868
      %v5908 = vadd.f32 %v5830, %v5869
      %v5909 = vadd.f32 %v5831, %v5870
      %v5910 = vadd.f32 %v5832, %v5871
      %v5911 = vadd.f32 %v5833, %v5872
      %v5912 = vadd.f32 %v5834, %v5873
      %v5913 = vadd.f32 %v5835, %v5874
      %v5914 = vadd.f32 %v5836, %v5875
      %v5915 = vadd.f32 %v5837, %v5876
      %v5916 = vadd.f32 %v5838, %v5877
      %v5917 = vadd.f32 %v5839, %v5878
      %v5918 = vadd.f32 %v5840, %v5879
      %v5919 = vadd.f32 %v5841, %v5880
      %v5920 = vmul.f32 %v421, %v1648
      %v5921 = vmul.f32 %v426, %v1648
      %v5922 = vmul.f32 %v431, %v1648
      %v5923 = vmul.f32 %v436, %v1648
      %v5924 = vmul.f32 %v441, %v1648
      %v5925 = vmul.f32 %v446, %v1648
      %v5926 = vmul.f32 %v451, %v1648
      %v5927 = vmul.f32 %v456, %v1648
      %v5928 = vmul.f32 %v461, %v1648
      %v5929 = vmul.f32 %v466, %v1648
      %v5930 = vmul.f32 %v471, %v1648
      %v5931 = vmul.f32 %v476, %v1648
      %v5932 = vmul.f32 %v481, %v1648
      %v5933 = vmul.f32 %v486, %v1648
      %v5934 = vmul.f32 %v491, %v1648
      %v5935 = vmul.f32 %v496, %v1648
      %v5936 = vmul.f32 %v501, %v1648
      %v5937 = vmul.f32 %v506, %v1648
      %v5938 = vmul.f32 %v511, %v1648
      %v5939 = vmul.f32 %v516, %v1648
      %v5940 = vmul.f32 %v521, %v1648
      %v5941 = vmul.f32 %v526, %v1648
      %v5942 = vmul.f32 %v531, %v1648
      %v5943 = vmul.f32 %v536, %v1648
      %v5944 = vmul.f32 %v541, %v1648
      %v5945 = vmul.f32 %v546, %v1648
      %v5946 = vmul.f32 %v551, %v1648
      %v5947 = vmul.f32 %v556, %v1648
      %v5948 = vmul.f32 %v561, %v1648
      %v5949 = vmul.f32 %v566, %v1648
      %v5950 = vmul.f32 %v571, %v1648
      %v5951 = vmul.f32 %v576, %v1648
      %v5952 = vmul.f32 %v581, %v1648
      %v5953 = vmul.f32 %v586, %v1648
      %v5954 = vmul.f32 %v591, %v1648
      %v5955 = vmul.f32 %v596, %v1648
      %v5956 = vmul.f32 %v1955, %v1648
      %v5957 = vmul.f32 %v1960, %v1648
      %v5958 = vmul.f32 %v1965, %v1648
      %v5998 = vrot.slane %v5920, 1
      %v5999 = vrot.slane %v5921, 1
      %v6000 = vsel %vm1032, %v5998, %v5999
      %v6001 = vrot.slane %v5922, 1
      %v6002 = vsel %vm1032, %v5999, %v6001
      %v6003 = vrot.slane %v5923, 1
      %v6004 = vrot.slane %v5924, 1
      %v6005 = vsel %vm1032, %v6003, %v6004
      %v6006 = vrot.slane %v5925, 1
      %v6007 = vsel %vm1032, %v6004, %v6006
      %v6008 = vrot.slane %v5926, 1
      %v6009 = vrot.slane %v5927, 1
      %v6010 = vsel %vm1032, %v6008, %v6009
      %v6011 = vrot.slane %v5928, 1
      %v6012 = vsel %vm1032, %v6009, %v6011
      %v6013 = vrot.slane %v5929, 1
      %v6014 = vrot.slane %v5930, 1
      %v6015 = vsel %vm1032, %v6013, %v6014
      %v6016 = vrot.slane %v5931, 1
      %v6017 = vsel %vm1032, %v6014, %v6016
      %v6018 = vrot.slane %v5932, 1
      %v6019 = vrot.slane %v5933, 1
      %v6020 = vsel %vm1032, %v6018, %v6019
      %v6021 = vrot.slane %v5934, 1
      %v6022 = vsel %vm1032, %v6019, %v6021
      %v6023 = vrot.slane %v5935, 1
      %v6024 = vrot.slane %v5936, 1
      %v6025 = vsel %vm1032, %v6023, %v6024
      %v6026 = vrot.slane %v5937, 1
      %v6027 = vsel %vm1032, %v6024, %v6026
      %v6028 = vrot.slane %v5938, 1
      %v6029 = vrot.slane %v5939, 1
      %v6030 = vsel %vm1032, %v6028, %v6029
      %v6031 = vrot.slane %v5940, 1
      %v6032 = vsel %vm1032, %v6029, %v6031
      %v6033 = vrot.slane %v5941, 1
      %v6034 = vrot.slane %v5942, 1
      %v6035 = vsel %vm1032, %v6033, %v6034
      %v6036 = vrot.slane %v5943, 1
      %v6037 = vsel %vm1032, %v6034, %v6036
      %v6038 = vrot.slane %v5944, 1
      %v6039 = vrot.slane %v5945, 1
      %v6040 = vsel %vm1032, %v6038, %v6039
      %v6041 = vrot.slane %v5946, 1
      %v6042 = vsel %vm1032, %v6039, %v6041
      %v6043 = vrot.slane %v5947, 1
      %v6044 = vrot.slane %v5948, 1
      %v6045 = vsel %vm1032, %v6043, %v6044
      %v6046 = vrot.slane %v5949, 1
      %v6047 = vsel %vm1032, %v6044, %v6046
      %v6048 = vrot.slane %v5950, 1
      %v6049 = vrot.slane %v5951, 1
      %v6050 = vsel %vm1032, %v6048, %v6049
      %v6051 = vrot.slane %v5952, 1
      %v6052 = vsel %vm1032, %v6049, %v6051
      %v6053 = vrot.slane %v5953, 1
      %v6054 = vrot.slane %v5954, 1
      %v6055 = vsel %vm1032, %v6053, %v6054
      %v6056 = vrot.slane %v5955, 1
      %v6057 = vsel %vm1032, %v6054, %v6056
      %v6058 = vrot.slane %v5956, 1
      %v6059 = vrot.slane %v5957, 1
      %v6060 = vsel %vm1032, %v6058, %v6059
      %v6061 = vrot.slane %v5958, 1
      %v6062 = vsel %vm1032, %v6059, %v6061
      %v6102 = vadd.f32 %v5881, %v6000
      %v6103 = vadd.f32 %v5882, %v6002
      %v6104 = vadd.f32 %v5883, %v6001
      %v6105 = vadd.f32 %v5884, %v6005
      %v6106 = vadd.f32 %v5885, %v6007
      %v6107 = vadd.f32 %v5886, %v6006
      %v6108 = vadd.f32 %v5887, %v6010
      %v6109 = vadd.f32 %v5888, %v6012
      %v6110 = vadd.f32 %v5889, %v6011
      %v6111 = vadd.f32 %v5890, %v6015
      %v6112 = vadd.f32 %v5891, %v6017
      %v6113 = vadd.f32 %v5892, %v6016
      %v6114 = vadd.f32 %v5893, %v6020
      %v6115 = vadd.f32 %v5894, %v6022
      %v6116 = vadd.f32 %v5895, %v6021
      %v6117 = vadd.f32 %v5896, %v6025
      %v6118 = vadd.f32 %v5897, %v6027
      %v6119 = vadd.f32 %v5898, %v6026
      %v6120 = vadd.f32 %v5899, %v6030
      %v6121 = vadd.f32 %v5900, %v6032
      %v6122 = vadd.f32 %v5901, %v6031
      %v6123 = vadd.f32 %v5902, %v6035
      %v6124 = vadd.f32 %v5903, %v6037
      %v6125 = vadd.f32 %v5904, %v6036
      %v6126 = vadd.f32 %v5905, %v6040
      %v6127 = vadd.f32 %v5906, %v6042
      %v6128 = vadd.f32 %v5907, %v6041
      %v6129 = vadd.f32 %v5908, %v6045
      %v6130 = vadd.f32 %v5909, %v6047
      %v6131 = vadd.f32 %v5910, %v6046
      %v6132 = vadd.f32 %v5911, %v6050
      %v6133 = vadd.f32 %v5912, %v6052
      %v6134 = vadd.f32 %v5913, %v6051
      %v6135 = vadd.f32 %v5914, %v6055
      %v6136 = vadd.f32 %v5915, %v6057
      %v6137 = vadd.f32 %v5916, %v6056
      %v6138 = vadd.f32 %v5917, %v6060
      %v6139 = vadd.f32 %v5918, %v6062
      %v6140 = vadd.f32 %v5919, %v6061
      %v6141 = vmul.f32 %v696, %v1728
      %v6142 = vmul.f32 %v701, %v1728
      %v6143 = vmul.f32 %v706, %v1728
      %v6144 = vmul.f32 %v711, %v1728
      %v6145 = vmul.f32 %v716, %v1728
      %v6146 = vmul.f32 %v721, %v1728
      %v6147 = vmul.f32 %v726, %v1728
      %v6148 = vmul.f32 %v731, %v1728
      %v6149 = vmul.f32 %v736, %v1728
      %v6150 = vmul.f32 %v741, %v1728
      %v6151 = vmul.f32 %v746, %v1728
      %v6152 = vmul.f32 %v751, %v1728
      %v6153 = vmul.f32 %v756, %v1728
      %v6154 = vmul.f32 %v761, %v1728
      %v6155 = vmul.f32 %v766, %v1728
      %v6156 = vmul.f32 %v771, %v1728
      %v6157 = vmul.f32 %v776, %v1728
      %v6158 = vmul.f32 %v781, %v1728
      %v6159 = vmul.f32 %v786, %v1728
      %v6160 = vmul.f32 %v791, %v1728
      %v6161 = vmul.f32 %v796, %v1728
      %v6162 = vmul.f32 %v801, %v1728
      %v6163 = vmul.f32 %v806, %v1728
      %v6164 = vmul.f32 %v811, %v1728
      %v6165 = vmul.f32 %v816, %v1728
      %v6166 = vmul.f32 %v821, %v1728
      %v6167 = vmul.f32 %v826, %v1728
      %v6168 = vmul.f32 %v831, %v1728
      %v6169 = vmul.f32 %v836, %v1728
      %v6170 = vmul.f32 %v841, %v1728
      %v6171 = vmul.f32 %v846, %v1728
      %v6172 = vmul.f32 %v851, %v1728
      %v6173 = vmul.f32 %v856, %v1728
      %v6174 = vmul.f32 %v861, %v1728
      %v6175 = vmul.f32 %v866, %v1728
      %v6176 = vmul.f32 %v871, %v1728
      %v6177 = vmul.f32 %v2050, %v1728
      %v6178 = vmul.f32 %v2055, %v1728
      %v6179 = vmul.f32 %v2060, %v1728
      %v6219 = vrot.slane %v6141, 1
      %v6220 = vrot.slane %v6142, 1
      %v6221 = vsel %vm1032, %v6219, %v6220
      %v6222 = vrot.slane %v6143, 1
      %v6223 = vsel %vm1032, %v6220, %v6222
      %v6224 = vrot.slane %v6144, 1
      %v6225 = vrot.slane %v6145, 1
      %v6226 = vsel %vm1032, %v6224, %v6225
      %v6227 = vrot.slane %v6146, 1
      %v6228 = vsel %vm1032, %v6225, %v6227
      %v6229 = vrot.slane %v6147, 1
      %v6230 = vrot.slane %v6148, 1
      %v6231 = vsel %vm1032, %v6229, %v6230
      %v6232 = vrot.slane %v6149, 1
      %v6233 = vsel %vm1032, %v6230, %v6232
      %v6234 = vrot.slane %v6150, 1
      %v6235 = vrot.slane %v6151, 1
      %v6236 = vsel %vm1032, %v6234, %v6235
      %v6237 = vrot.slane %v6152, 1
      %v6238 = vsel %vm1032, %v6235, %v6237
      %v6239 = vrot.slane %v6153, 1
      %v6240 = vrot.slane %v6154, 1
      %v6241 = vsel %vm1032, %v6239, %v6240
      %v6242 = vrot.slane %v6155, 1
      %v6243 = vsel %vm1032, %v6240, %v6242
      %v6244 = vrot.slane %v6156, 1
      %v6245 = vrot.slane %v6157, 1
      %v6246 = vsel %vm1032, %v6244, %v6245
      %v6247 = vrot.slane %v6158, 1
      %v6248 = vsel %vm1032, %v6245, %v6247
      %v6249 = vrot.slane %v6159, 1
      %v6250 = vrot.slane %v6160, 1
      %v6251 = vsel %vm1032, %v6249, %v6250
      %v6252 = vrot.slane %v6161, 1
      %v6253 = vsel %vm1032, %v6250, %v6252
      %v6254 = vrot.slane %v6162, 1
      %v6255 = vrot.slane %v6163, 1
      %v6256 = vsel %vm1032, %v6254, %v6255
      %v6257 = vrot.slane %v6164, 1
      %v6258 = vsel %vm1032, %v6255, %v6257
      %v6259 = vrot.slane %v6165, 1
      %v6260 = vrot.slane %v6166, 1
      %v6261 = vsel %vm1032, %v6259, %v6260
      %v6262 = vrot.slane %v6167, 1
      %v6263 = vsel %vm1032, %v6260, %v6262
      %v6264 = vrot.slane %v6168, 1
      %v6265 = vrot.slane %v6169, 1
      %v6266 = vsel %vm1032, %v6264, %v6265
      %v6267 = vrot.slane %v6170, 1
      %v6268 = vsel %vm1032, %v6265, %v6267
      %v6269 = vrot.slane %v6171, 1
      %v6270 = vrot.slane %v6172, 1
      %v6271 = vsel %vm1032, %v6269, %v6270
      %v6272 = vrot.slane %v6173, 1
      %v6273 = vsel %vm1032, %v6270, %v6272
      %v6274 = vrot.slane %v6174, 1
      %v6275 = vrot.slane %v6175, 1
      %v6276 = vsel %vm1032, %v6274, %v6275
      %v6277 = vrot.slane %v6176, 1
      %v6278 = vsel %vm1032, %v6275, %v6277
      %v6279 = vrot.slane %v6177, 1
      %v6280 = vrot.slane %v6178, 1
      %v6281 = vsel %vm1032, %v6279, %v6280
      %v6282 = vrot.slane %v6179, 1
      %v6283 = vsel %vm1032, %v6280, %v6282
      %v6323 = vadd.f32 %v6102, %v6221
      %v6324 = vadd.f32 %v6103, %v6223
      %v6325 = vadd.f32 %v6104, %v6222
      %v6326 = vadd.f32 %v6105, %v6226
      %v6327 = vadd.f32 %v6106, %v6228
      %v6328 = vadd.f32 %v6107, %v6227
      %v6329 = vadd.f32 %v6108, %v6231
      %v6330 = vadd.f32 %v6109, %v6233
      %v6331 = vadd.f32 %v6110, %v6232
      %v6332 = vadd.f32 %v6111, %v6236
      %v6333 = vadd.f32 %v6112, %v6238
      %v6334 = vadd.f32 %v6113, %v6237
      %v6335 = vadd.f32 %v6114, %v6241
      %v6336 = vadd.f32 %v6115, %v6243
      %v6337 = vadd.f32 %v6116, %v6242
      %v6338 = vadd.f32 %v6117, %v6246
      %v6339 = vadd.f32 %v6118, %v6248
      %v6340 = vadd.f32 %v6119, %v6247
      %v6341 = vadd.f32 %v6120, %v6251
      %v6342 = vadd.f32 %v6121, %v6253
      %v6343 = vadd.f32 %v6122, %v6252
      %v6344 = vadd.f32 %v6123, %v6256
      %v6345 = vadd.f32 %v6124, %v6258
      %v6346 = vadd.f32 %v6125, %v6257
      %v6347 = vadd.f32 %v6126, %v6261
      %v6348 = vadd.f32 %v6127, %v6263
      %v6349 = vadd.f32 %v6128, %v6262
      %v6350 = vadd.f32 %v6129, %v6266
      %v6351 = vadd.f32 %v6130, %v6268
      %v6352 = vadd.f32 %v6131, %v6267
      %v6353 = vadd.f32 %v6132, %v6271
      %v6354 = vadd.f32 %v6133, %v6273
      %v6355 = vadd.f32 %v6134, %v6272
      %v6356 = vadd.f32 %v6135, %v6276
      %v6357 = vadd.f32 %v6136, %v6278
      %v6358 = vadd.f32 %v6137, %v6277
      %v6359 = vadd.f32 %v6138, %v6281
      %v6360 = vadd.f32 %v6139, %v6283
      %v6361 = vadd.f32 %v6140, %v6282
      %v6362 = vmul.f32 %v1471, %v1967
      %v6363 = vmul.f32 %v1476, %v1967
      %v6364 = vmul.f32 %v1481, %v1967
      %v6365 = vmul.f32 %v1486, %v1967
      %v6366 = vmul.f32 %v1491, %v1967
      %v6367 = vmul.f32 %v1496, %v1967
      %v6368 = vmul.f32 %v1501, %v1967
      %v6369 = vmul.f32 %v1506, %v1967
      %v6370 = vmul.f32 %v1511, %v1967
      %v6371 = vmul.f32 %v1516, %v1967
      %v6372 = vmul.f32 %v1521, %v1967
      %v6373 = vmul.f32 %v1526, %v1967
      %v6374 = vmul.f32 %v1531, %v1967
      %v6375 = vmul.f32 %v1536, %v1967
      %v6376 = vmul.f32 %v1541, %v1967
      %v6377 = vmul.f32 %v1546, %v1967
      %v6378 = vmul.f32 %v1551, %v1967
      %v6379 = vmul.f32 %v1556, %v1967
      %v6380 = vmul.f32 %v1561, %v1967
      %v6381 = vmul.f32 %v1566, %v1967
      %v6382 = vmul.f32 %v1571, %v1967
      %v6383 = vmul.f32 %v1576, %v1967
      %v6384 = vmul.f32 %v1581, %v1967
      %v6385 = vmul.f32 %v1586, %v1967
      %v6386 = vmul.f32 %v1591, %v1967
      %v6387 = vmul.f32 %v1596, %v1967
      %v6388 = vmul.f32 %v1601, %v1967
      %v6389 = vmul.f32 %v1606, %v1967
      %v6390 = vmul.f32 %v1611, %v1967
      %v6391 = vmul.f32 %v1616, %v1967
      %v6392 = vmul.f32 %v1621, %v1967
      %v6393 = vmul.f32 %v1626, %v1967
      %v6394 = vmul.f32 %v1631, %v1967
      %v6395 = vmul.f32 %v1636, %v1967
      %v6396 = vmul.f32 %v1641, %v1967
      %v6397 = vmul.f32 %v1646, %v1967
      %v6398 = vmul.f32 %v4933, %v1967
      %v6399 = vmul.f32 %v4938, %v1967
      %v6400 = vmul.f32 %v4943, %v1967
      %v6401 = vadd.f32 %v6323, %v6362
      %v6402 = vadd.f32 %v6324, %v6363
      %v6403 = vadd.f32 %v6325, %v6364
      %v6404 = vadd.f32 %v6326, %v6365
      %v6405 = vadd.f32 %v6327, %v6366
      %v6406 = vadd.f32 %v6328, %v6367
      %v6407 = vadd.f32 %v6329, %v6368
      %v6408 = vadd.f32 %v6330, %v6369
      %v6409 = vadd.f32 %v6331, %v6370
      %v6410 = vadd.f32 %v6332, %v6371
      %v6411 = vadd.f32 %v6333, %v6372
      %v6412 = vadd.f32 %v6334, %v6373
      %v6413 = vadd.f32 %v6335, %v6374
      %v6414 = vadd.f32 %v6336, %v6375
      %v6415 = vadd.f32 %v6337, %v6376
      %v6416 = vadd.f32 %v6338, %v6377
      %v6417 = vadd.f32 %v6339, %v6378
      %v6418 = vadd.f32 %v6340, %v6379
      %v6419 = vadd.f32 %v6341, %v6380
      %v6420 = vadd.f32 %v6342, %v6381
      %v6421 = vadd.f32 %v6343, %v6382
      %v6422 = vadd.f32 %v6344, %v6383
      %v6423 = vadd.f32 %v6345, %v6384
      %v6424 = vadd.f32 %v6346, %v6385
      %v6425 = vadd.f32 %v6347, %v6386
      %v6426 = vadd.f32 %v6348, %v6387
      %v6427 = vadd.f32 %v6349, %v6388
      %v6428 = vadd.f32 %v6350, %v6389
      %v6429 = vadd.f32 %v6351, %v6390
      %v6430 = vadd.f32 %v6352, %v6391
      %v6431 = vadd.f32 %v6353, %v6392
      %v6432 = vadd.f32 %v6354, %v6393
      %v6433 = vadd.f32 %v6355, %v6394
      %v6434 = vadd.f32 %v6356, %v6395
      %v6435 = vadd.f32 %v6357, %v6396
      %v6436 = vadd.f32 %v6358, %v6397
      %v6437 = vadd.f32 %v6359, %v6398
      %v6438 = vadd.f32 %v6360, %v6399
      %v6439 = vadd.f32 %v6361, %v6400
      %v6440 = vmul.f32 %v1196, %v2062
      %v6441 = vmul.f32 %v1201, %v2062
      %v6442 = vmul.f32 %v1206, %v2062
      %v6443 = vmul.f32 %v1211, %v2062
      %v6444 = vmul.f32 %v1216, %v2062
      %v6445 = vmul.f32 %v1221, %v2062
      %v6446 = vmul.f32 %v1226, %v2062
      %v6447 = vmul.f32 %v1231, %v2062
      %v6448 = vmul.f32 %v1236, %v2062
      %v6449 = vmul.f32 %v1241, %v2062
      %v6450 = vmul.f32 %v1246, %v2062
      %v6451 = vmul.f32 %v1251, %v2062
      %v6452 = vmul.f32 %v1256, %v2062
      %v6453 = vmul.f32 %v1261, %v2062
      %v6454 = vmul.f32 %v1266, %v2062
      %v6455 = vmul.f32 %v1271, %v2062
      %v6456 = vmul.f32 %v1276, %v2062
      %v6457 = vmul.f32 %v1281, %v2062
      %v6458 = vmul.f32 %v1286, %v2062
      %v6459 = vmul.f32 %v1291, %v2062
      %v6460 = vmul.f32 %v1296, %v2062
      %v6461 = vmul.f32 %v1301, %v2062
      %v6462 = vmul.f32 %v1306, %v2062
      %v6463 = vmul.f32 %v1311, %v2062
      %v6464 = vmul.f32 %v1316, %v2062
      %v6465 = vmul.f32 %v1321, %v2062
      %v6466 = vmul.f32 %v1326, %v2062
      %v6467 = vmul.f32 %v1331, %v2062
      %v6468 = vmul.f32 %v1336, %v2062
      %v6469 = vmul.f32 %v1341, %v2062
      %v6470 = vmul.f32 %v1346, %v2062
      %v6471 = vmul.f32 %v1351, %v2062
      %v6472 = vmul.f32 %v1356, %v2062
      %v6473 = vmul.f32 %v1361, %v2062
      %v6474 = vmul.f32 %v1366, %v2062
      %v6475 = vmul.f32 %v1371, %v2062
      %v6476 = vmul.f32 %v4840, %v2062
      %v6477 = vmul.f32 %v4845, %v2062
      %v6478 = vmul.f32 %v4850, %v2062
      %v6518 = vrot.slane %v6440, 1
      %v6519 = vrot.slane %v6441, 1
      %v6520 = vsel %vm1032, %v6518, %v6519
      %v6521 = vrot.slane %v6442, 1
      %v6522 = vsel %vm1032, %v6519, %v6521
      %v6523 = vrot.slane %v6443, 1
      %v6524 = vrot.slane %v6444, 1
      %v6525 = vsel %vm1032, %v6523, %v6524
      %v6526 = vrot.slane %v6445, 1
      %v6527 = vsel %vm1032, %v6524, %v6526
      %v6528 = vrot.slane %v6446, 1
      %v6529 = vrot.slane %v6447, 1
      %v6530 = vsel %vm1032, %v6528, %v6529
      %v6531 = vrot.slane %v6448, 1
      %v6532 = vsel %vm1032, %v6529, %v6531
      %v6533 = vrot.slane %v6449, 1
      %v6534 = vrot.slane %v6450, 1
      %v6535 = vsel %vm1032, %v6533, %v6534
      %v6536 = vrot.slane %v6451, 1
      %v6537 = vsel %vm1032, %v6534, %v6536
      %v6538 = vrot.slane %v6452, 1
      %v6539 = vrot.slane %v6453, 1
      %v6540 = vsel %vm1032, %v6538, %v6539
      %v6541 = vrot.slane %v6454, 1
      %v6542 = vsel %vm1032, %v6539, %v6541
      %v6543 = vrot.slane %v6455, 1
      %v6544 = vrot.slane %v6456, 1
      %v6545 = vsel %vm1032, %v6543, %v6544
      %v6546 = vrot.slane %v6457, 1
      %v6547 = vsel %vm1032, %v6544, %v6546
      %v6548 = vrot.slane %v6458, 1
      %v6549 = vrot.slane %v6459, 1
      %v6550 = vsel %vm1032, %v6548, %v6549
      %v6551 = vrot.slane %v6460, 1
      %v6552 = vsel %vm1032, %v6549, %v6551
      %v6553 = vrot.slane %v6461, 1
      %v6554 = vrot.slane %v6462, 1
      %v6555 = vsel %vm1032, %v6553, %v6554
      %v6556 = vrot.slane %v6463, 1
      %v6557 = vsel %vm1032, %v6554, %v6556
      %v6558 = vrot.slane %v6464, 1
      %v6559 = vrot.slane %v6465, 1
      %v6560 = vsel %vm1032, %v6558, %v6559
      %v6561 = vrot.slane %v6466, 1
      %v6562 = vsel %vm1032, %v6559, %v6561
      %v6563 = vrot.slane %v6467, 1
      %v6564 = vrot.slane %v6468, 1
      %v6565 = vsel %vm1032, %v6563, %v6564
      %v6566 = vrot.slane %v6469, 1
      %v6567 = vsel %vm1032, %v6564, %v6566
      %v6568 = vrot.slane %v6470, 1
      %v6569 = vrot.slane %v6471, 1
      %v6570 = vsel %vm1032, %v6568, %v6569
      %v6571 = vrot.slane %v6472, 1
      %v6572 = vsel %vm1032, %v6569, %v6571
      %v6573 = vrot.slane %v6473, 1
      %v6574 = vrot.slane %v6474, 1
      %v6575 = vsel %vm1032, %v6573, %v6574
      %v6576 = vrot.slane %v6475, 1
      %v6577 = vsel %vm1032, %v6574, %v6576
      %v6578 = vrot.slane %v6476, 1
      %v6579 = vrot.slane %v6477, 1
      %v6580 = vsel %vm1032, %v6578, %v6579
      %v6581 = vrot.slane %v6478, 1
      %v6582 = vsel %vm1032, %v6579, %v6581
      %v6622 = vadd.f32 %v6401, %v6520
      %v6623 = vadd.f32 %v6402, %v6522
      %v6624 = vadd.f32 %v6403, %v6521
      %v6625 = vadd.f32 %v6404, %v6525
      %v6626 = vadd.f32 %v6405, %v6527
      %v6627 = vadd.f32 %v6406, %v6526
      %v6628 = vadd.f32 %v6407, %v6530
      %v6629 = vadd.f32 %v6408, %v6532
      %v6630 = vadd.f32 %v6409, %v6531
      %v6631 = vadd.f32 %v6410, %v6535
      %v6632 = vadd.f32 %v6411, %v6537
      %v6633 = vadd.f32 %v6412, %v6536
      %v6634 = vadd.f32 %v6413, %v6540
      %v6635 = vadd.f32 %v6414, %v6542
      %v6636 = vadd.f32 %v6415, %v6541
      %v6637 = vadd.f32 %v6416, %v6545
      %v6638 = vadd.f32 %v6417, %v6547
      %v6639 = vadd.f32 %v6418, %v6546
      %v6640 = vadd.f32 %v6419, %v6550
      %v6641 = vadd.f32 %v6420, %v6552
      %v6642 = vadd.f32 %v6421, %v6551
      %v6643 = vadd.f32 %v6422, %v6555
      %v6644 = vadd.f32 %v6423, %v6557
      %v6645 = vadd.f32 %v6424, %v6556
      %v6646 = vadd.f32 %v6425, %v6560
      %v6647 = vadd.f32 %v6426, %v6562
      %v6648 = vadd.f32 %v6427, %v6561
      %v6649 = vadd.f32 %v6428, %v6565
      %v6650 = vadd.f32 %v6429, %v6567
      %v6651 = vadd.f32 %v6430, %v6566
      %v6652 = vadd.f32 %v6431, %v6570
      %v6653 = vadd.f32 %v6432, %v6572
      %v6654 = vadd.f32 %v6433, %v6571
      %v6655 = vadd.f32 %v6434, %v6575
      %v6656 = vadd.f32 %v6435, %v6577
      %v6657 = vadd.f32 %v6436, %v6576
      %v6658 = vadd.f32 %v6437, %v6580
      %v6659 = vadd.f32 %v6438, %v6582
      %v6660 = vadd.f32 %v6439, %v6581
      %v6661 = vmul.f32 %v1471, %v2142
      %v6662 = vmul.f32 %v1476, %v2142
      %v6663 = vmul.f32 %v1481, %v2142
      %v6664 = vmul.f32 %v1486, %v2142
      %v6665 = vmul.f32 %v1491, %v2142
      %v6666 = vmul.f32 %v1496, %v2142
      %v6667 = vmul.f32 %v1501, %v2142
      %v6668 = vmul.f32 %v1506, %v2142
      %v6669 = vmul.f32 %v1511, %v2142
      %v6670 = vmul.f32 %v1516, %v2142
      %v6671 = vmul.f32 %v1521, %v2142
      %v6672 = vmul.f32 %v1526, %v2142
      %v6673 = vmul.f32 %v1531, %v2142
      %v6674 = vmul.f32 %v1536, %v2142
      %v6675 = vmul.f32 %v1541, %v2142
      %v6676 = vmul.f32 %v1546, %v2142
      %v6677 = vmul.f32 %v1551, %v2142
      %v6678 = vmul.f32 %v1556, %v2142
      %v6679 = vmul.f32 %v1561, %v2142
      %v6680 = vmul.f32 %v1566, %v2142
      %v6681 = vmul.f32 %v1571, %v2142
      %v6682 = vmul.f32 %v1576, %v2142
      %v6683 = vmul.f32 %v1581, %v2142
      %v6684 = vmul.f32 %v1586, %v2142
      %v6685 = vmul.f32 %v1591, %v2142
      %v6686 = vmul.f32 %v1596, %v2142
      %v6687 = vmul.f32 %v1601, %v2142
      %v6688 = vmul.f32 %v1606, %v2142
      %v6689 = vmul.f32 %v1611, %v2142
      %v6690 = vmul.f32 %v1616, %v2142
      %v6691 = vmul.f32 %v1621, %v2142
      %v6692 = vmul.f32 %v1626, %v2142
      %v6693 = vmul.f32 %v1631, %v2142
      %v6694 = vmul.f32 %v1636, %v2142
      %v6695 = vmul.f32 %v1641, %v2142
      %v6696 = vmul.f32 %v1646, %v2142
      %v6697 = vmul.f32 %v4933, %v2142
      %v6698 = vmul.f32 %v4938, %v2142
      %v6699 = vmul.f32 %v4943, %v2142
      %v6739 = vrot.slane %v6661, 1
      %v6740 = vrot.slane %v6662, 1
      %v6741 = vsel %vm1032, %v6739, %v6740
      %v6742 = vrot.slane %v6663, 1
      %v6743 = vsel %vm1032, %v6740, %v6742
      %v6744 = vrot.slane %v6664, 1
      %v6745 = vrot.slane %v6665, 1
      %v6746 = vsel %vm1032, %v6744, %v6745
      %v6747 = vrot.slane %v6666, 1
      %v6748 = vsel %vm1032, %v6745, %v6747
      %v6749 = vrot.slane %v6667, 1
      %v6750 = vrot.slane %v6668, 1
      %v6751 = vsel %vm1032, %v6749, %v6750
      %v6752 = vrot.slane %v6669, 1
      %v6753 = vsel %vm1032, %v6750, %v6752
      %v6754 = vrot.slane %v6670, 1
      %v6755 = vrot.slane %v6671, 1
      %v6756 = vsel %vm1032, %v6754, %v6755
      %v6757 = vrot.slane %v6672, 1
      %v6758 = vsel %vm1032, %v6755, %v6757
      %v6759 = vrot.slane %v6673, 1
      %v6760 = vrot.slane %v6674, 1
      %v6761 = vsel %vm1032, %v6759, %v6760
      %v6762 = vrot.slane %v6675, 1
      %v6763 = vsel %vm1032, %v6760, %v6762
      %v6764 = vrot.slane %v6676, 1
      %v6765 = vrot.slane %v6677, 1
      %v6766 = vsel %vm1032, %v6764, %v6765
      %v6767 = vrot.slane %v6678, 1
      %v6768 = vsel %vm1032, %v6765, %v6767
      %v6769 = vrot.slane %v6679, 1
      %v6770 = vrot.slane %v6680, 1
      %v6771 = vsel %vm1032, %v6769, %v6770
      %v6772 = vrot.slane %v6681, 1
      %v6773 = vsel %vm1032, %v6770, %v6772
      %v6774 = vrot.slane %v6682, 1
      %v6775 = vrot.slane %v6683, 1
      %v6776 = vsel %vm1032, %v6774, %v6775
      %v6777 = vrot.slane %v6684, 1
      %v6778 = vsel %vm1032, %v6775, %v6777
      %v6779 = vrot.slane %v6685, 1
      %v6780 = vrot.slane %v6686, 1
      %v6781 = vsel %vm1032, %v6779, %v6780
      %v6782 = vrot.slane %v6687, 1
      %v6783 = vsel %vm1032, %v6780, %v6782
      %v6784 = vrot.slane %v6688, 1
      %v6785 = vrot.slane %v6689, 1
      %v6786 = vsel %vm1032, %v6784, %v6785
      %v6787 = vrot.slane %v6690, 1
      %v6788 = vsel %vm1032, %v6785, %v6787
      %v6789 = vrot.slane %v6691, 1
      %v6790 = vrot.slane %v6692, 1
      %v6791 = vsel %vm1032, %v6789, %v6790
      %v6792 = vrot.slane %v6693, 1
      %v6793 = vsel %vm1032, %v6790, %v6792
      %v6794 = vrot.slane %v6694, 1
      %v6795 = vrot.slane %v6695, 1
      %v6796 = vsel %vm1032, %v6794, %v6795
      %v6797 = vrot.slane %v6696, 1
      %v6798 = vsel %vm1032, %v6795, %v6797
      %v6799 = vrot.slane %v6697, 1
      %v6800 = vrot.slane %v6698, 1
      %v6801 = vsel %vm1032, %v6799, %v6800
      %v6802 = vrot.slane %v6699, 1
      %v6803 = vsel %vm1032, %v6800, %v6802
      %v6843 = vadd.f32 %v6622, %v6741
      %v6844 = vadd.f32 %v6623, %v6743
      %v6845 = vadd.f32 %v6624, %v6742
      %v6846 = vadd.f32 %v6625, %v6746
      %v6847 = vadd.f32 %v6626, %v6748
      %v6848 = vadd.f32 %v6627, %v6747
      %v6849 = vadd.f32 %v6628, %v6751
      %v6850 = vadd.f32 %v6629, %v6753
      %v6851 = vadd.f32 %v6630, %v6752
      %v6852 = vadd.f32 %v6631, %v6756
      %v6853 = vadd.f32 %v6632, %v6758
      %v6854 = vadd.f32 %v6633, %v6757
      %v6855 = vadd.f32 %v6634, %v6761
      %v6856 = vadd.f32 %v6635, %v6763
      %v6857 = vadd.f32 %v6636, %v6762
      %v6858 = vadd.f32 %v6637, %v6766
      %v6859 = vadd.f32 %v6638, %v6768
      %v6860 = vadd.f32 %v6639, %v6767
      %v6861 = vadd.f32 %v6640, %v6771
      %v6862 = vadd.f32 %v6641, %v6773
      %v6863 = vadd.f32 %v6642, %v6772
      %v6864 = vadd.f32 %v6643, %v6776
      %v6865 = vadd.f32 %v6644, %v6778
      %v6866 = vadd.f32 %v6645, %v6777
      %v6867 = vadd.f32 %v6646, %v6781
      %v6868 = vadd.f32 %v6647, %v6783
      %v6869 = vadd.f32 %v6648, %v6782
      %v6870 = vadd.f32 %v6649, %v6786
      %v6871 = vadd.f32 %v6650, %v6788
      %v6872 = vadd.f32 %v6651, %v6787
      %v6873 = vadd.f32 %v6652, %v6791
      %v6874 = vadd.f32 %v6653, %v6793
      %v6875 = vadd.f32 %v6654, %v6792
      %v6876 = vadd.f32 %v6655, %v6796
      %v6877 = vadd.f32 %v6656, %v6798
      %v6878 = vadd.f32 %v6657, %v6797
      %v6879 = vadd.f32 %v6658, %v6801
      %v6880 = vadd.f32 %v6659, %v6803
      %v6881 = vadd.f32 %v6660, %v6802
      %v6882 = vadd.f32 %v6843, %v2365
      %v6883 = vadd.f32 %v6844, %v2365
      %v6884 = vadd.f32 %v6845, %v2365
      %v6885 = vadd.f32 %v6846, %v2365
      %v6886 = vadd.f32 %v6847, %v2365
      %v6887 = vadd.f32 %v6848, %v2365
      %v6888 = vadd.f32 %v6849, %v2365
      %v6889 = vadd.f32 %v6850, %v2365
      %v6890 = vadd.f32 %v6851, %v2365
      %v6891 = vadd.f32 %v6852, %v2365
      %v6892 = vadd.f32 %v6853, %v2365
      %v6893 = vadd.f32 %v6854, %v2365
      %v6894 = vadd.f32 %v6855, %v2365
      %v6895 = vadd.f32 %v6856, %v2365
      %v6896 = vadd.f32 %v6857, %v2365
      %v6897 = vadd.f32 %v6858, %v2365
      %v6898 = vadd.f32 %v6859, %v2365
      %v6899 = vadd.f32 %v6860, %v2365
      %v6900 = vadd.f32 %v6861, %v2365
      %v6901 = vadd.f32 %v6862, %v2365
      %v6902 = vadd.f32 %v6863, %v2365
      %v6903 = vadd.f32 %v6864, %v2365
      %v6904 = vadd.f32 %v6865, %v2365
      %v6905 = vadd.f32 %v6866, %v2365
      %v6906 = vadd.f32 %v6867, %v2365
      %v6907 = vadd.f32 %v6868, %v2365
      %v6908 = vadd.f32 %v6869, %v2365
      %v6909 = vadd.f32 %v6870, %v2365
      %v6910 = vadd.f32 %v6871, %v2365
      %v6911 = vadd.f32 %v6872, %v2365
      %v6912 = vadd.f32 %v6873, %v2365
      %v6913 = vadd.f32 %v6874, %v2365
      %v6914 = vadd.f32 %v6875, %v2365
      %v6915 = vadd.f32 %v6876, %v2365
      %v6916 = vadd.f32 %v6877, %v2365
      %v6917 = vadd.f32 %v6878, %v2365
      %v6918 = vadd.f32 %v6879, %v2365
      %v6919 = vadd.f32 %v6880, %v2365
      %v6920 = vadd.f32 %v6881, %v2365
      %v6921 = vmax.f32 %v6882, 0.0
      %v6922 = vmax.f32 %v6883, 0.0
      %v6923 = vmax.f32 %v6884, 0.0
      %v6924 = vmax.f32 %v6885, 0.0
      %v6925 = vmax.f32 %v6886, 0.0
      %v6926 = vmax.f32 %v6887, 0.0
      %v6927 = vmax.f32 %v6888, 0.0
      %v6928 = vmax.f32 %v6889, 0.0
      %v6929 = vmax.f32 %v6890, 0.0
      %v6930 = vmax.f32 %v6891, 0.0
      %v6931 = vmax.f32 %v6892, 0.0
      %v6932 = vmax.f32 %v6893, 0.0
      %v6933 = vmax.f32 %v6894, 0.0
      %v6934 = vmax.f32 %v6895, 0.0
      %v6935 = vmax.f32 %v6896, 0.0
      %v6936 = vmax.f32 %v6897, 0.0
      %v6937 = vmax.f32 %v6898, 0.0
      %v6938 = vmax.f32 %v6899, 0.0
      %v6939 = vmax.f32 %v6900, 0.0
      %v6940 = vmax.f32 %v6901, 0.0
      %v6941 = vmax.f32 %v6902, 0.0
      %v6942 = vmax.f32 %v6903, 0.0
      %v6943 = vmax.f32 %v6904, 0.0
      %v6944 = vmax.f32 %v6905, 0.0
      %v6945 = vmax.f32 %v6906, 0.0
      %v6946 = vmax.f32 %v6907, 0.0
      %v6947 = vmax.f32 %v6908, 0.0
      %v6948 = vmax.f32 %v6909, 0.0
      %v6949 = vmax.f32 %v6910, 0.0
      %v6950 = vmax.f32 %v6911, 0.0
      %v6951 = vmax.f32 %v6912, 0.0
      %v6952 = vmax.f32 %v6913, 0.0
      %v6953 = vmax.f32 %v6914, 0.0
      %v6954 = vmax.f32 %v6915, 0.0
      %v6955 = vmax.f32 %v6916, 0.0
      %v6956 = vmax.f32 %v6917, 0.0
      %v6957 = vmax.f32 %v6918, 0.0
      %v6958 = vmax.f32 %v6919, 0.0
      %v6959 = vmax.f32 %v6920, 0.0
      %v6960 = vld [vmem:[%s3] sm:$0xff]
      %v6961 = vld [vmem:[%s3 + $0x8] sm:$0xff]
      %v6962 = vld [vmem:[%s3 + $0x10] sm:$0xff]
      %v6963 = vld [vmem:[%s3 + $0x18] sm:$0xff]
      %s6964 = scalar_lea.vmem %s3, 32
      %v6965 = vld [vmem:[%s6964] sm:$0xff]
      %v6966 = vld [vmem:[%s6964 + $0x8] sm:$0xff]
      %v6967 = vld [vmem:[%s6964 + $0x10] sm:$0xff]
      %v6968 = vld [vmem:[%s6964 + $0x18] sm:$0xff]
      %vm6969 = vcmask 261120
      %v6971 = vsel %vm6969, %v4044, 0
      %v6974 = vsel %vm6969, %v4045, 0
      %v6977 = vsel %vm6969, %v4047, 0
      %v6980 = vsel %vm6969, %v4048, 0
      %v6983 = vsel %vm6969, %v4050, 0
      %v6986 = vsel %vm6969, %v4051, 0
      %v6989 = vsel %vm6969, %v4053, 0
      %v6992 = vsel %vm6969, %v4054, 0
      %v6995 = vsel %vm6969, %v4056, 0
      %v6998 = vsel %vm6969, %v4057, 0
      %v7001 = vsel %vm6969, %v4059, 0
      %v7004 = vsel %vm6969, %v4060, 0
      %v7007 = vsel %vm6969, %v4062, 0
      %v7010 = vsel %vm6969, %v4063, 0
      %v7013 = vsel %vm6969, %v4065, 0
      %v7016 = vsel %vm6969, %v4066, 0
      %v7019 = vsel %vm6969, %v4068, 0
      %v7022 = vsel %vm6969, %v4069, 0
      %v7025 = vsel %vm6969, %v4071, 0
      %v7028 = vsel %vm6969, %v4072, 0
      %v7031 = vsel %vm6969, %v4074, 0
      %v7034 = vsel %vm6969, %v4075, 0
      %v7037 = vsel %vm6969, %v4077, 0
      %v7040 = vsel %vm6969, %v4078, 0
      %7042 = vmatpush.msra.mxu0 0.0
      %7043 = vmatpush.msra.mxu0 0.0
      %7044 = vmatpush.msra.mxu0 0.0
      %7045 = vmatpush.msra.mxu0 0.0
      %7046 = vmatpush.msra.mxu0 0.0
      %7047 = vmatpush.msra.mxu0 0.0
      %7048 = vmatpush.msra.mxu0 0.0
      %7049 = vmatpush.msra.mxu0 0.0
      %7050 = vmatpush.msra.mxu0 0.0
      %7051 = vmatpush.msra.mxu0 0.0
      %7052 = vmatpush.msra.mxu0 0.0
      %7053 = vmatpush.msra.mxu0 0.0
      %7054 = vmatpush.msra.mxu0 %v6968
      %7055 = vmatpush.msra.mxu0 %v6967
      %7056 = vmatpush.msra.mxu0 %v6966
      %7057 = vmatpush.msra.mxu0 %v6965
      %7058 = vmatmul.f32.gmra.mxu0 %v6971
      %v7059 = vpop.f32.mrf.mxu0
      %v7060 = vadd.f32 0.0, %v7059
      %7061 = vmatmul.f32.gmra.mxu0 %v6974
      %v7062 = vpop.f32.mrf.mxu0
      %v7063 = vadd.f32 0.0, %v7062
      %7064 = vmatmul.f32.gmra.mxu0 %v6977
      %v7065 = vpop.f32.mrf.mxu0
      %v7066 = vadd.f32 0.0, %v7065
      %7067 = vmatmul.f32.gmra.mxu0 %v6980
      %v7068 = vpop.f32.mrf.mxu0
      %v7069 = vadd.f32 0.0, %v7068
      %7070 = vmatmul.f32.gmra.mxu0 %v6983
      %v7071 = vpop.f32.mrf.mxu0
      %v7072 = vadd.f32 0.0, %v7071
      %7073 = vmatmul.f32.gmra.mxu0 %v6986
      %v7074 = vpop.f32.mrf.mxu0
      %v7075 = vadd.f32 0.0, %v7074
      %7076 = vmatmul.f32.gmra.mxu0 %v6989
      %v7077 = vpop.f32.mrf.mxu0
      %v7078 = vadd.f32 0.0, %v7077
      %7079 = vmatmul.f32.gmra.mxu0 %v6992
      %v7080 = vpop.f32.mrf.mxu0
      %v7081 = vadd.f32 0.0, %v7080
      %7082 = vmatmul.f32.gmra.mxu0 %v6995
      %v7083 = vpop.f32.mrf.mxu0
      %v7084 = vadd.f32 0.0, %v7083
      %7085 = vmatmul.f32.gmra.mxu0 %v6998
      %v7086 = vpop.f32.mrf.mxu0
      %v7087 = vadd.f32 0.0, %v7086
      %7088 = vmatmul.f32.gmra.mxu0 %v7001
      %v7089 = vpop.f32.mrf.mxu0
      %v7090 = vadd.f32 0.0, %v7089
      %7091 = vmatmul.f32.gmra.mxu0 %v7004
      %v7092 = vpop.f32.mrf.mxu0
      %v7093 = vadd.f32 0.0, %v7092
      %7094 = vmatmul.f32.gmra.mxu0 %v7007
      %v7095 = vpop.f32.mrf.mxu0
      %v7096 = vadd.f32 0.0, %v7095
      %7097 = vmatmul.f32.gmra.mxu0 %v7010
      %v7098 = vpop.f32.mrf.mxu0
      %v7099 = vadd.f32 0.0, %v7098
      %7100 = vmatmul.f32.gmra.mxu0 %v7013
      %v7101 = vpop.f32.mrf.mxu0
      %v7102 = vadd.f32 0.0, %v7101
      %7103 = vmatmul.f32.gmra.mxu0 %v7016
      %v7104 = vpop.f32.mrf.mxu0
      %v7105 = vadd.f32 0.0, %v7104
      %7106 = vmatmul.f32.gmra.mxu0 %v7019
      %v7107 = vpop.f32.mrf.mxu0
      %v7108 = vadd.f32 0.0, %v7107
      %7109 = vmatmul.f32.gmra.mxu0 %v7022
      %v7110 = vpop.f32.mrf.mxu0
      %v7111 = vadd.f32 0.0, %v7110
      %7112 = vmatmul.f32.gmra.mxu0 %v7025
      %v7113 = vpop.f32.mrf.mxu0
      %v7114 = vadd.f32 0.0, %v7113
      %7115 = vmatmul.f32.gmra.mxu0 %v7028
      %v7116 = vpop.f32.mrf.mxu0
      %v7117 = vadd.f32 0.0, %v7116
      %7118 = vmatmul.f32.gmra.mxu0 %v7031
      %v7119 = vpop.f32.mrf.mxu0
      %v7120 = vadd.f32 0.0, %v7119
      %7121 = vmatmul.f32.gmra.mxu0 %v7034
      %v7122 = vpop.f32.mrf.mxu0
      %v7123 = vadd.f32 0.0, %v7122
      %7124 = vmatmul.f32.gmra.mxu0 %v7037
      %v7125 = vpop.f32.mrf.mxu0
      %v7126 = vadd.f32 0.0, %v7125
      %7127 = vmatmul.f32.gmra.mxu0 %v7040
      %v7128 = vpop.f32.mrf.mxu0
      %v7129 = vadd.f32 0.0, %v7128
      %7130 = vdwg.mxu0
      %v7132 = vsel %vm6969, %v2406, 0
      %v7135 = vsel %vm6969, %v2407, 0
      %v7138 = vsel %vm6969, %v2409, 0
      %v7141 = vsel %vm6969, %v2410, 0
      %v7144 = vsel %vm6969, %v2412, 0
      %v7147 = vsel %vm6969, %v2413, 0
      %v7150 = vsel %vm6969, %v2415, 0
      %v7153 = vsel %vm6969, %v2416, 0
      %v7156 = vsel %vm6969, %v2418, 0
      %v7159 = vsel %vm6969, %v2419, 0
      %v7162 = vsel %vm6969, %v2421, 0
      %v7165 = vsel %vm6969, %v2422, 0
      %v7168 = vsel %vm6969, %v2424, 0
      %v7171 = vsel %vm6969, %v2425, 0
      %v7174 = vsel %vm6969, %v2427, 0
      %v7177 = vsel %vm6969, %v2428, 0
      %v7180 = vsel %vm6969, %v2430, 0
      %v7183 = vsel %vm6969, %v2431, 0
      %v7186 = vsel %vm6969, %v2433, 0
      %v7189 = vsel %vm6969, %v2434, 0
      %v7192 = vsel %vm6969, %v2436, 0
      %v7195 = vsel %vm6969, %v2437, 0
      %v7198 = vsel %vm6969, %v2439, 0
      %v7201 = vsel %vm6969, %v2440, 0
      %7203 = vmatpush.msra.mxu0 0.0
      %7204 = vmatpush.msra.mxu0 0.0
      %7205 = vmatpush.msra.mxu0 0.0
      %7206 = vmatpush.msra.mxu0 0.0
      %7207 = vmatpush.msra.mxu0 0.0
      %7208 = vmatpush.msra.mxu0 0.0
      %7209 = vmatpush.msra.mxu0 0.0
      %7210 = vmatpush.msra.mxu0 0.0
      %7211 = vmatpush.msra.mxu0 0.0
      %7212 = vmatpush.msra.mxu0 0.0
      %7213 = vmatpush.msra.mxu0 0.0
      %7214 = vmatpush.msra.mxu0 0.0
      %7215 = vmatpush.msra.mxu0 %v6963
      %7216 = vmatpush.msra.mxu0 %v6962
      %7217 = vmatpush.msra.mxu0 %v6961
      %7218 = vmatpush.msra.mxu0 %v6960
      %7219 = vmatmul.f32.gmra.mxu0 %v7132
      %v7220 = vpop.f32.mrf.mxu0
      %v7221 = vadd.f32 %v7060, %v7220
      %7222 = vmatmul.f32.gmra.mxu0 %v7135
      %v7223 = vpop.f32.mrf.mxu0
      %v7224 = vadd.f32 %v7063, %v7223
      %7225 = vmatmul.f32.gmra.mxu0 %v7138
      %v7226 = vpop.f32.mrf.mxu0
      %v7227 = vadd.f32 %v7066, %v7226
      %7228 = vmatmul.f32.gmra.mxu0 %v7141
      %v7229 = vpop.f32.mrf.mxu0
      %v7230 = vadd.f32 %v7069, %v7229
      %7231 = vmatmul.f32.gmra.mxu0 %v7144
      %v7232 = vpop.f32.mrf.mxu0
      %v7233 = vadd.f32 %v7072, %v7232
      %7234 = vmatmul.f32.gmra.mxu0 %v7147
      %v7235 = vpop.f32.mrf.mxu0
      %v7236 = vadd.f32 %v7075, %v7235
      %7237 = vmatmul.f32.gmra.mxu0 %v7150
      %v7238 = vpop.f32.mrf.mxu0
      %v7239 = vadd.f32 %v7078, %v7238
      %7240 = vmatmul.f32.gmra.mxu0 %v7153
      %v7241 = vpop.f32.mrf.mxu0
      %v7242 = vadd.f32 %v7081, %v7241
      %7243 = vmatmul.f32.gmra.mxu0 %v7156
      %v7244 = vpop.f32.mrf.mxu0
      %v7245 = vadd.f32 %v7084, %v7244
      %7246 = vmatmul.f32.gmra.mxu0 %v7159
      %v7247 = vpop.f32.mrf.mxu0
      %v7248 = vadd.f32 %v7087, %v7247
      %7249 = vmatmul.f32.gmra.mxu0 %v7162
      %v7250 = vpop.f32.mrf.mxu0
      %v7251 = vadd.f32 %v7090, %v7250
      %7252 = vmatmul.f32.gmra.mxu0 %v7165
      %v7253 = vpop.f32.mrf.mxu0
      %v7254 = vadd.f32 %v7093, %v7253
      %7255 = vmatmul.f32.gmra.mxu0 %v7168
      %v7256 = vpop.f32.mrf.mxu0
      %v7257 = vadd.f32 %v7096, %v7256
      %7258 = vmatmul.f32.gmra.mxu0 %v7171
      %v7259 = vpop.f32.mrf.mxu0
      %v7260 = vadd.f32 %v7099, %v7259
      %7261 = vmatmul.f32.gmra.mxu0 %v7174
      %v7262 = vpop.f32.mrf.mxu0
      %v7263 = vadd.f32 %v7102, %v7262
      %7264 = vmatmul.f32.gmra.mxu0 %v7177
      %v7265 = vpop.f32.mrf.mxu0
      %v7266 = vadd.f32 %v7105, %v7265
      %7267 = vmatmul.f32.gmra.mxu0 %v7180
      %v7268 = vpop.f32.mrf.mxu0
      %v7269 = vadd.f32 %v7108, %v7268
      %7270 = vmatmul.f32.gmra.mxu0 %v7183
      %v7271 = vpop.f32.mrf.mxu0
      %v7272 = vadd.f32 %v7111, %v7271
      %7273 = vmatmul.f32.gmra.mxu0 %v7186
      %v7274 = vpop.f32.mrf.mxu0
      %v7275 = vadd.f32 %v7114, %v7274
      %7276 = vmatmul.f32.gmra.mxu0 %v7189
      %v7277 = vpop.f32.mrf.mxu0
      %v7278 = vadd.f32 %v7117, %v7277
      %7279 = vmatmul.f32.gmra.mxu0 %v7192
      %v7280 = vpop.f32.mrf.mxu0
      %v7281 = vadd.f32 %v7120, %v7280
      %7282 = vmatmul.f32.gmra.mxu0 %v7195
      %v7283 = vpop.f32.mrf.mxu0
      %v7284 = vadd.f32 %v7123, %v7283
      %7285 = vmatmul.f32.gmra.mxu0 %v7198
      %v7286 = vpop.f32.mrf.mxu0
      %v7287 = vadd.f32 %v7126, %v7286
      %7288 = vmatmul.f32.gmra.mxu0 %v7201
      %v7289 = vpop.f32.mrf.mxu0
      %v7290 = vadd.f32 %v7129, %v7289
      %7291 = vdwg.mxu0
      %v7304 = vrot.slane %v2406, 1
      %v7305 = vrot.slane %v2407, 1
      %v7306 = vsel %vm1032, %v7304, %v7305
      %v7307 = vrot.slane %v2408, 1
      %v7308 = vsel %vm1032, %v7305, %v7307
      %v7309 = vrot.slane %v2409, 1
      %v7310 = vrot.slane %v2410, 1
      %v7311 = vsel %vm1032, %v7309, %v7310
      %v7312 = vrot.slane %v2411, 1
      %v7313 = vsel %vm1032, %v7310, %v7312
      %v7314 = vrot.slane %v2412, 1
      %v7315 = vrot.slane %v2413, 1
      %v7316 = vsel %vm1032, %v7314, %v7315
      %v7317 = vrot.slane %v2414, 1
      %v7318 = vsel %vm1032, %v7315, %v7317
      %v7319 = vrot.slane %v2415, 1
      %v7320 = vrot.slane %v2416, 1
      %v7321 = vsel %vm1032, %v7319, %v7320
      %v7322 = vrot.slane %v2417, 1
      %v7323 = vsel %vm1032, %v7320, %v7322
      %v7324 = vrot.slane %v2418, 1
      %v7325 = vrot.slane %v2419, 1
      %v7326 = vsel %vm1032, %v7324, %v7325
      %v7327 = vrot.slane %v2420, 1
      %v7328 = vsel %vm1032, %v7325, %v7327
      %v7329 = vrot.slane %v2421, 1
      %v7330 = vrot.slane %v2422, 1
      %v7331 = vsel %vm1032, %v7329, %v7330
      %v7332 = vrot.slane %v2423, 1
      %v7333 = vsel %vm1032, %v7330, %v7332
      %v7334 = vrot.slane %v2424, 1
      %v7335 = vrot.slane %v2425, 1
      %v7336 = vsel %vm1032, %v7334, %v7335
      %v7337 = vrot.slane %v2426, 1
      %v7338 = vsel %vm1032, %v7335, %v7337
      %v7339 = vrot.slane %v2427, 1
      %v7340 = vrot.slane %v2428, 1
      %v7341 = vsel %vm1032, %v7339, %v7340
      %v7342 = vrot.slane %v2429, 1
      %v7343 = vsel %vm1032, %v7340, %v7342
      %v7344 = vrot.slane %v2430, 1
      %v7345 = vrot.slane %v2431, 1
      %v7346 = vsel %vm1032, %v7344, %v7345
      %v7347 = vrot.slane %v2432, 1
      %v7348 = vsel %vm1032, %v7345, %v7347
      %v7349 = vrot.slane %v2433, 1
      %v7350 = vrot.slane %v2434, 1
      %v7351 = vsel %vm1032, %v7349, %v7350
      %v7352 = vrot.slane %v2435, 1
      %v7353 = vsel %vm1032, %v7350, %v7352
      %v7354 = vrot.slane %v2436, 1
      %v7355 = vrot.slane %v2437, 1
      %v7356 = vsel %vm1032, %v7354, %v7355
      %v7357 = vrot.slane %v2438, 1
      %v7358 = vsel %vm1032, %v7355, %v7357
      %v7359 = vrot.slane %v2439, 1
      %v7360 = vrot.slane %v2440, 1
      %v7361 = vsel %vm1032, %v7359, %v7360
      %v7362 = vrot.slane %v2441, 1
      %v7363 = vsel %vm1032, %v7360, %v7362
      %s7364 = scalar_lea.vmem %s3, 64
      %v7365 = vld [vmem:[%s7364] sm:$0xff]
      %v7366 = vld [vmem:[%s7364 + $0x8] sm:$0xff]
      %v7367 = vld [vmem:[%s7364 + $0x10] sm:$0xff]
      %v7368 = vld [vmem:[%s7364 + $0x18] sm:$0xff]
      %v7369 = vsel %vm6969, %v7306, 0
      %v7371 = vsel %vm6969, %v7308, 0
      %v7373 = vsel %vm6969, %v7311, 0
      %v7375 = vsel %vm6969, %v7313, 0
      %v7377 = vsel %vm6969, %v7316, 0
      %v7379 = vsel %vm6969, %v7318, 0
      %v7381 = vsel %vm6969, %v7321, 0
      %v7383 = vsel %vm6969, %v7323, 0
      %v7385 = vsel %vm6969, %v7326, 0
      %v7387 = vsel %vm6969, %v7328, 0
      %v7389 = vsel %vm6969, %v7331, 0
      %v7391 = vsel %vm6969, %v7333, 0
      %v7393 = vsel %vm6969, %v7336, 0
      %v7395 = vsel %vm6969, %v7338, 0
      %v7397 = vsel %vm6969, %v7341, 0
      %v7399 = vsel %vm6969, %v7343, 0
      %v7401 = vsel %vm6969, %v7346, 0
      %v7403 = vsel %vm6969, %v7348, 0
      %v7405 = vsel %vm6969, %v7351, 0
      %v7407 = vsel %vm6969, %v7353, 0
      %v7409 = vsel %vm6969, %v7356, 0
      %v7411 = vsel %vm6969, %v7358, 0
      %v7413 = vsel %vm6969, %v7361, 0
      %v7415 = vsel %vm6969, %v7363, 0
      %7417 = vmatpush.msra.mxu0 0.0
      %7418 = vmatpush.msra.mxu0 0.0
      %7419 = vmatpush.msra.mxu0 0.0
      %7420 = vmatpush.msra.mxu0 0.0
      %7421 = vmatpush.msra.mxu0 0.0
      %7422 = vmatpush.msra.mxu0 0.0
      %7423 = vmatpush.msra.mxu0 0.0
      %7424 = vmatpush.msra.mxu0 0.0
      %7425 = vmatpush.msra.mxu0 0.0
      %7426 = vmatpush.msra.mxu0 0.0
      %7427 = vmatpush.msra.mxu0 0.0
      %7428 = vmatpush.msra.mxu0 0.0
      %7429 = vmatpush.msra.mxu0 %v7368
      %7430 = vmatpush.msra.mxu0 %v7367
      %7431 = vmatpush.msra.mxu0 %v7366
      %7432 = vmatpush.msra.mxu0 %v7365
      %7433 = vmatmul.f32.gmra.mxu0 %v7369
      %v7434 = vpop.f32.mrf.mxu0
      %v7435 = vadd.f32 0.0, %v7434
      %7436 = vmatmul.f32.gmra.mxu0 %v7371
      %v7437 = vpop.f32.mrf.mxu0
      %v7438 = vadd.f32 0.0, %v7437
      %7439 = vmatmul.f32.gmra.mxu0 %v7373
      %v7440 = vpop.f32.mrf.mxu0
      %v7441 = vadd.f32 0.0, %v7440
      %7442 = vmatmul.f32.gmra.mxu0 %v7375
      %v7443 = vpop.f32.mrf.mxu0
      %v7444 = vadd.f32 0.0, %v7443
      %7445 = vmatmul.f32.gmra.mxu0 %v7377
      %v7446 = vpop.f32.mrf.mxu0
      %v7447 = vadd.f32 0.0, %v7446
      %7448 = vmatmul.f32.gmra.mxu0 %v7379
      %v7449 = vpop.f32.mrf.mxu0
      %v7450 = vadd.f32 0.0, %v7449
      %7451 = vmatmul.f32.gmra.mxu0 %v7381
      %v7452 = vpop.f32.mrf.mxu0
      %v7453 = vadd.f32 0.0, %v7452
      %7454 = vmatmul.f32.gmra.mxu0 %v7383
      %v7455 = vpop.f32.mrf.mxu0
      %v7456 = vadd.f32 0.0, %v7455
      %7457 = vmatmul.f32.gmra.mxu0 %v7385
      %v7458 = vpop.f32.mrf.mxu0
      %v7459 = vadd.f32 0.0, %v7458
      %7460 = vmatmul.f32.gmra.mxu0 %v7387
      %v7461 = vpop.f32.mrf.mxu0
      %v7462 = vadd.f32 0.0, %v7461
      %7463 = vmatmul.f32.gmra.mxu0 %v7389
      %v7464 = vpop.f32.mrf.mxu0
      %v7465 = vadd.f32 0.0, %v7464
      %7466 = vmatmul.f32.gmra.mxu0 %v7391
      %v7467 = vpop.f32.mrf.mxu0
      %v7468 = vadd.f32 0.0, %v7467
      %7469 = vmatmul.f32.gmra.mxu0 %v7393
      %v7470 = vpop.f32.mrf.mxu0
      %v7471 = vadd.f32 0.0, %v7470
      %7472 = vmatmul.f32.gmra.mxu0 %v7395
      %v7473 = vpop.f32.mrf.mxu0
      %v7474 = vadd.f32 0.0, %v7473
      %7475 = vmatmul.f32.gmra.mxu0 %v7397
      %v7476 = vpop.f32.mrf.mxu0
      %v7477 = vadd.f32 0.0, %v7476
      %7478 = vmatmul.f32.gmra.mxu0 %v7399
      %v7479 = vpop.f32.mrf.mxu0
      %v7480 = vadd.f32 0.0, %v7479
      %7481 = vmatmul.f32.gmra.mxu0 %v7401
      %v7482 = vpop.f32.mrf.mxu0
      %v7483 = vadd.f32 0.0, %v7482
      %7484 = vmatmul.f32.gmra.mxu0 %v7403
      %v7485 = vpop.f32.mrf.mxu0
      %v7486 = vadd.f32 0.0, %v7485
      %7487 = vmatmul.f32.gmra.mxu0 %v7405
      %v7488 = vpop.f32.mrf.mxu0
      %v7489 = vadd.f32 0.0, %v7488
      %7490 = vmatmul.f32.gmra.mxu0 %v7407
      %v7491 = vpop.f32.mrf.mxu0
      %v7492 = vadd.f32 0.0, %v7491
      %7493 = vmatmul.f32.gmra.mxu0 %v7409
      %v7494 = vpop.f32.mrf.mxu0
      %v7495 = vadd.f32 0.0, %v7494
      %7496 = vmatmul.f32.gmra.mxu0 %v7411
      %v7497 = vpop.f32.mrf.mxu0
      %v7498 = vadd.f32 0.0, %v7497
      %7499 = vmatmul.f32.gmra.mxu0 %v7413
      %v7500 = vpop.f32.mrf.mxu0
      %v7501 = vadd.f32 0.0, %v7500
      %7502 = vmatmul.f32.gmra.mxu0 %v7415
      %v7503 = vpop.f32.mrf.mxu0
      %v7504 = vadd.f32 0.0, %v7503
      %7505 = vdwg.mxu0
      %v7506 = vadd.f32 %v7221, %v7435
      %v7507 = vadd.f32 %v7224, %v7438
      %v7508 = vadd.f32 %v7227, %v7441
      %v7509 = vadd.f32 %v7230, %v7444
      %v7510 = vadd.f32 %v7233, %v7447
      %v7511 = vadd.f32 %v7236, %v7450
      %v7512 = vadd.f32 %v7239, %v7453
      %v7513 = vadd.f32 %v7242, %v7456
      %v7514 = vadd.f32 %v7245, %v7459
      %v7515 = vadd.f32 %v7248, %v7462
      %v7516 = vadd.f32 %v7251, %v7465
      %v7517 = vadd.f32 %v7254, %v7468
      %v7518 = vadd.f32 %v7257, %v7471
      %v7519 = vadd.f32 %v7260, %v7474
      %v7520 = vadd.f32 %v7263, %v7477
      %v7521 = vadd.f32 %v7266, %v7480
      %v7522 = vadd.f32 %v7269, %v7483
      %v7523 = vadd.f32 %v7272, %v7486
      %v7524 = vadd.f32 %v7275, %v7489
      %v7525 = vadd.f32 %v7278, %v7492
      %v7526 = vadd.f32 %v7281, %v7495
      %v7527 = vadd.f32 %v7284, %v7498
      %v7528 = vadd.f32 %v7287, %v7501
      %v7529 = vadd.f32 %v7290, %v7504
      %s7530 = scalar_lea.vmem %s3, 96
      %v7531 = vld [vmem:[%s7530] sm:$0xff]
      %v7532 = vld [vmem:[%s7530 + $0x8] sm:$0xff]
      %v7533 = vld [vmem:[%s7530 + $0x10] sm:$0xff]
      %v7534 = vld [vmem:[%s7530 + $0x18] sm:$0xff]
      %v7536 = vsel %vm6969, %v5283, 0
      %v7539 = vsel %vm6969, %v5284, 0
      %v7542 = vsel %vm6969, %v5286, 0
      %v7545 = vsel %vm6969, %v5287, 0
      %v7548 = vsel %vm6969, %v5289, 0
      %v7551 = vsel %vm6969, %v5290, 0
      %v7554 = vsel %vm6969, %v5292, 0
      %v7557 = vsel %vm6969, %v5293, 0
      %v7560 = vsel %vm6969, %v5295, 0
      %v7563 = vsel %vm6969, %v5296, 0
      %v7566 = vsel %vm6969, %v5298, 0
      %v7569 = vsel %vm6969, %v5299, 0
      %v7572 = vsel %vm6969, %v5301, 0
      %v7575 = vsel %vm6969, %v5302, 0
      %v7578 = vsel %vm6969, %v5304, 0
      %v7581 = vsel %vm6969, %v5305, 0
      %v7584 = vsel %vm6969, %v5307, 0
      %v7587 = vsel %vm6969, %v5308, 0
      %v7590 = vsel %vm6969, %v5310, 0
      %v7593 = vsel %vm6969, %v5311, 0
      %v7596 = vsel %vm6969, %v5313, 0
      %v7599 = vsel %vm6969, %v5314, 0
      %v7602 = vsel %vm6969, %v5316, 0
      %v7605 = vsel %vm6969, %v5317, 0
      %7607 = vmatpush.msra.mxu0 0.0
      %7608 = vmatpush.msra.mxu0 0.0
      %7609 = vmatpush.msra.mxu0 0.0
      %7610 = vmatpush.msra.mxu0 0.0
      %7611 = vmatpush.msra.mxu0 0.0
      %7612 = vmatpush.msra.mxu0 0.0
      %7613 = vmatpush.msra.mxu0 0.0
      %7614 = vmatpush.msra.mxu0 0.0
      %7615 = vmatpush.msra.mxu0 0.0
      %7616 = vmatpush.msra.mxu0 0.0
      %7617 = vmatpush.msra.mxu0 0.0
      %7618 = vmatpush.msra.mxu0 0.0
      %7619 = vmatpush.msra.mxu0 %v7534
      %7620 = vmatpush.msra.mxu0 %v7533
      %7621 = vmatpush.msra.mxu0 %v7532
      %7622 = vmatpush.msra.mxu0 %v7531
      %7623 = vmatmul.f32.gmra.mxu0 %v7536
      %v7624 = vpop.f32.mrf.mxu0
      %v7625 = vadd.f32 0.0, %v7624
      %7626 = vmatmul.f32.gmra.mxu0 %v7539
      %v7627 = vpop.f32.mrf.mxu0
      %v7628 = vadd.f32 0.0, %v7627
      %7629 = vmatmul.f32.gmra.mxu0 %v7542
      %v7630 = vpop.f32.mrf.mxu0
      %v7631 = vadd.f32 0.0, %v7630
      %7632 = vmatmul.f32.gmra.mxu0 %v7545
      %v7633 = vpop.f32.mrf.mxu0
      %v7634 = vadd.f32 0.0, %v7633
      %7635 = vmatmul.f32.gmra.mxu0 %v7548
      %v7636 = vpop.f32.mrf.mxu0
      %v7637 = vadd.f32 0.0, %v7636
      %7638 = vmatmul.f32.gmra.mxu0 %v7551
      %v7639 = vpop.f32.mrf.mxu0
      %v7640 = vadd.f32 0.0, %v7639
      %7641 = vmatmul.f32.gmra.mxu0 %v7554
      %v7642 = vpop.f32.mrf.mxu0
      %v7643 = vadd.f32 0.0, %v7642
      %7644 = vmatmul.f32.gmra.mxu0 %v7557
      %v7645 = vpop.f32.mrf.mxu0
      %v7646 = vadd.f32 0.0, %v7645
      %7647 = vmatmul.f32.gmra.mxu0 %v7560
      %v7648 = vpop.f32.mrf.mxu0
      %v7649 = vadd.f32 0.0, %v7648
      %7650 = vmatmul.f32.gmra.mxu0 %v7563
      %v7651 = vpop.f32.mrf.mxu0
      %v7652 = vadd.f32 0.0, %v7651
      %7653 = vmatmul.f32.gmra.mxu0 %v7566
      %v7654 = vpop.f32.mrf.mxu0
      %v7655 = vadd.f32 0.0, %v7654
      %7656 = vmatmul.f32.gmra.mxu0 %v7569
      %v7657 = vpop.f32.mrf.mxu0
      %v7658 = vadd.f32 0.0, %v7657
      %7659 = vmatmul.f32.gmra.mxu0 %v7572
      %v7660 = vpop.f32.mrf.mxu0
      %v7661 = vadd.f32 0.0, %v7660
      %7662 = vmatmul.f32.gmra.mxu0 %v7575
      %v7663 = vpop.f32.mrf.mxu0
      %v7664 = vadd.f32 0.0, %v7663
      %7665 = vmatmul.f32.gmra.mxu0 %v7578
      %v7666 = vpop.f32.mrf.mxu0
      %v7667 = vadd.f32 0.0, %v7666
      %7668 = vmatmul.f32.gmra.mxu0 %v7581
      %v7669 = vpop.f32.mrf.mxu0
      %v7670 = vadd.f32 0.0, %v7669
      %7671 = vmatmul.f32.gmra.mxu0 %v7584
      %v7672 = vpop.f32.mrf.mxu0
      %v7673 = vadd.f32 0.0, %v7672
      %7674 = vmatmul.f32.gmra.mxu0 %v7587
      %v7675 = vpop.f32.mrf.mxu0
      %v7676 = vadd.f32 0.0, %v7675
      %7677 = vmatmul.f32.gmra.mxu0 %v7590
      %v7678 = vpop.f32.mrf.mxu0
      %v7679 = vadd.f32 0.0, %v7678
      %7680 = vmatmul.f32.gmra.mxu0 %v7593
      %v7681 = vpop.f32.mrf.mxu0
      %v7682 = vadd.f32 0.0, %v7681
      %7683 = vmatmul.f32.gmra.mxu0 %v7596
      %v7684 = vpop.f32.mrf.mxu0
      %v7685 = vadd.f32 0.0, %v7684
      %7686 = vmatmul.f32.gmra.mxu0 %v7599
      %v7687 = vpop.f32.mrf.mxu0
      %v7688 = vadd.f32 0.0, %v7687
      %7689 = vmatmul.f32.gmra.mxu0 %v7602
      %v7690 = vpop.f32.mrf.mxu0
      %v7691 = vadd.f32 0.0, %v7690
      %7692 = vmatmul.f32.gmra.mxu0 %v7605
      %v7693 = vpop.f32.mrf.mxu0
      %v7694 = vadd.f32 0.0, %v7693
      %7695 = vdwg.mxu0
      %v7696 = vadd.f32 %v7506, %v7625
      %v7697 = vadd.f32 %v7507, %v7628
      %v7698 = vadd.f32 %v7508, %v7631
      %v7699 = vadd.f32 %v7509, %v7634
      %v7700 = vadd.f32 %v7510, %v7637
      %v7701 = vadd.f32 %v7511, %v7640
      %v7702 = vadd.f32 %v7512, %v7643
      %v7703 = vadd.f32 %v7513, %v7646
      %v7704 = vadd.f32 %v7514, %v7649
      %v7705 = vadd.f32 %v7515, %v7652
      %v7706 = vadd.f32 %v7516, %v7655
      %v7707 = vadd.f32 %v7517, %v7658
      %v7708 = vadd.f32 %v7518, %v7661
      %v7709 = vadd.f32 %v7519, %v7664
      %v7710 = vadd.f32 %v7520, %v7667
      %v7711 = vadd.f32 %v7521, %v7670
      %v7712 = vadd.f32 %v7522, %v7673
      %v7713 = vadd.f32 %v7523, %v7676
      %v7714 = vadd.f32 %v7524, %v7679
      %v7715 = vadd.f32 %v7525, %v7682
      %v7716 = vadd.f32 %v7526, %v7685
      %v7717 = vadd.f32 %v7527, %v7688
      %v7718 = vadd.f32 %v7528, %v7691
      %v7719 = vadd.f32 %v7529, %v7694
      %s7720 = scalar_lea.vmem %s3, 128
      %v7721 = vld [vmem:[%s7720] sm:$0xff]
      %v7722 = vld [vmem:[%s7720 + $0x8] sm:$0xff]
      %v7723 = vld [vmem:[%s7720 + $0x10] sm:$0xff]
      %v7724 = vld [vmem:[%s7720 + $0x18] sm:$0xff]
      %v7726 = vsel %vm6969, %v6921, 0
      %v7729 = vsel %vm6969, %v6922, 0
      %v7732 = vsel %vm6969, %v6924, 0
      %v7735 = vsel %vm6969, %v6925, 0
      %v7738 = vsel %vm6969, %v6927, 0
      %v7741 = vsel %vm6969, %v6928, 0
      %v7744 = vsel %vm6969, %v6930, 0
      %v7747 = vsel %vm6969, %v6931, 0
      %v7750 = vsel %vm6969, %v6933, 0
      %v7753 = vsel %vm6969, %v6934, 0
      %v7756 = vsel %vm6969, %v6936, 0
      %v7759 = vsel %vm6969, %v6937, 0
      %v7762 = vsel %vm6969, %v6939, 0
      %v7765 = vsel %vm6969, %v6940, 0
      %v7768 = vsel %vm6969, %v6942, 0
      %v7771 = vsel %vm6969, %v6943, 0
      %v7774 = vsel %vm6969, %v6945, 0
      %v7777 = vsel %vm6969, %v6946, 0
      %v7780 = vsel %vm6969, %v6948, 0
      %v7783 = vsel %vm6969, %v6949, 0
      %v7786 = vsel %vm6969, %v6951, 0
      %v7789 = vsel %vm6969, %v6952, 0
      %v7792 = vsel %vm6969, %v6954, 0
      %v7795 = vsel %vm6969, %v6955, 0
      %7797 = vmatpush.msra.mxu0 0.0
      %7798 = vmatpush.msra.mxu0 0.0
      %7799 = vmatpush.msra.mxu0 0.0
      %7800 = vmatpush.msra.mxu0 0.0
      %7801 = vmatpush.msra.mxu0 0.0
      %7802 = vmatpush.msra.mxu0 0.0
      %7803 = vmatpush.msra.mxu0 0.0
      %7804 = vmatpush.msra.mxu0 0.0
      %7805 = vmatpush.msra.mxu0 0.0
      %7806 = vmatpush.msra.mxu0 0.0
      %7807 = vmatpush.msra.mxu0 0.0
      %7808 = vmatpush.msra.mxu0 0.0
      %7809 = vmatpush.msra.mxu0 %v7724
      %7810 = vmatpush.msra.mxu0 %v7723
      %7811 = vmatpush.msra.mxu0 %v7722
      %7812 = vmatpush.msra.mxu0 %v7721
      %7813 = vmatmul.f32.gmra.mxu0 %v7726
      %v7814 = vpop.f32.mrf.mxu0
      %v7815 = vadd.f32 0.0, %v7814
      %7816 = vmatmul.f32.gmra.mxu0 %v7729
      %v7817 = vpop.f32.mrf.mxu0
      %v7818 = vadd.f32 0.0, %v7817
      %7819 = vmatmul.f32.gmra.mxu0 %v7732
      %v7820 = vpop.f32.mrf.mxu0
      %v7821 = vadd.f32 0.0, %v7820
      %7822 = vmatmul.f32.gmra.mxu0 %v7735
      %v7823 = vpop.f32.mrf.mxu0
      %v7824 = vadd.f32 0.0, %v7823
      %7825 = vmatmul.f32.gmra.mxu0 %v7738
      %v7826 = vpop.f32.mrf.mxu0
      %v7827 = vadd.f32 0.0, %v7826
      %7828 = vmatmul.f32.gmra.mxu0 %v7741
      %v7829 = vpop.f32.mrf.mxu0
      %v7830 = vadd.f32 0.0, %v7829
      %7831 = vmatmul.f32.gmra.mxu0 %v7744
      %v7832 = vpop.f32.mrf.mxu0
      %v7833 = vadd.f32 0.0, %v7832
      %7834 = vmatmul.f32.gmra.mxu0 %v7747
      %v7835 = vpop.f32.mrf.mxu0
      %v7836 = vadd.f32 0.0, %v7835
      %7837 = vmatmul.f32.gmra.mxu0 %v7750
      %v7838 = vpop.f32.mrf.mxu0
      %v7839 = vadd.f32 0.0, %v7838
      %7840 = vmatmul.f32.gmra.mxu0 %v7753
      %v7841 = vpop.f32.mrf.mxu0
      %v7842 = vadd.f32 0.0, %v7841
      %7843 = vmatmul.f32.gmra.mxu0 %v7756
      %v7844 = vpop.f32.mrf.mxu0
      %v7845 = vadd.f32 0.0, %v7844
      %7846 = vmatmul.f32.gmra.mxu0 %v7759
      %v7847 = vpop.f32.mrf.mxu0
      %v7848 = vadd.f32 0.0, %v7847
      %7849 = vmatmul.f32.gmra.mxu0 %v7762
      %v7850 = vpop.f32.mrf.mxu0
      %v7851 = vadd.f32 0.0, %v7850
      %7852 = vmatmul.f32.gmra.mxu0 %v7765
      %v7853 = vpop.f32.mrf.mxu0
      %v7854 = vadd.f32 0.0, %v7853
      %7855 = vmatmul.f32.gmra.mxu0 %v7768
      %v7856 = vpop.f32.mrf.mxu0
      %v7857 = vadd.f32 0.0, %v7856
      %7858 = vmatmul.f32.gmra.mxu0 %v7771
      %v7859 = vpop.f32.mrf.mxu0
      %v7860 = vadd.f32 0.0, %v7859
      %7861 = vmatmul.f32.gmra.mxu0 %v7774
      %v7862 = vpop.f32.mrf.mxu0
      %v7863 = vadd.f32 0.0, %v7862
      %7864 = vmatmul.f32.gmra.mxu0 %v7777
      %v7865 = vpop.f32.mrf.mxu0
      %v7866 = vadd.f32 0.0, %v7865
      %7867 = vmatmul.f32.gmra.mxu0 %v7780
      %v7868 = vpop.f32.mrf.mxu0
      %v7869 = vadd.f32 0.0, %v7868
      %7870 = vmatmul.f32.gmra.mxu0 %v7783
      %v7871 = vpop.f32.mrf.mxu0
      %v7872 = vadd.f32 0.0, %v7871
      %7873 = vmatmul.f32.gmra.mxu0 %v7786
      %v7874 = vpop.f32.mrf.mxu0
      %v7875 = vadd.f32 0.0, %v7874
      %7876 = vmatmul.f32.gmra.mxu0 %v7789
      %v7877 = vpop.f32.mrf.mxu0
      %v7878 = vadd.f32 0.0, %v7877
      %7879 = vmatmul.f32.gmra.mxu0 %v7792
      %v7880 = vpop.f32.mrf.mxu0
      %v7881 = vadd.f32 0.0, %v7880
      %7882 = vmatmul.f32.gmra.mxu0 %v7795
      %v7883 = vpop.f32.mrf.mxu0
      %v7884 = vadd.f32 0.0, %v7883
      %7885 = vdwg.mxu0
      %v7886 = vadd.f32 %v7696, %v7815
      %v7887 = vadd.f32 %v7697, %v7818
      %v7888 = vadd.f32 %v7698, %v7821
      %v7889 = vadd.f32 %v7699, %v7824
      %v7890 = vadd.f32 %v7700, %v7827
      %v7891 = vadd.f32 %v7701, %v7830
      %v7892 = vadd.f32 %v7702, %v7833
      %v7893 = vadd.f32 %v7703, %v7836
      %v7894 = vadd.f32 %v7704, %v7839
      %v7895 = vadd.f32 %v7705, %v7842
      %v7896 = vadd.f32 %v7706, %v7845
      %v7897 = vadd.f32 %v7707, %v7848
      %v7898 = vadd.f32 %v7708, %v7851
      %v7899 = vadd.f32 %v7709, %v7854
      %v7900 = vadd.f32 %v7710, %v7857
      %v7901 = vadd.f32 %v7711, %v7860
      %v7902 = vadd.f32 %v7712, %v7863
      %v7903 = vadd.f32 %v7713, %v7866
      %v7904 = vadd.f32 %v7714, %v7869
      %v7905 = vadd.f32 %v7715, %v7872
      %v7906 = vadd.f32 %v7716, %v7875
      %v7907 = vadd.f32 %v7717, %v7878
      %v7908 = vadd.f32 %v7718, %v7881
      %v7909 = vadd.f32 %v7719, %v7884
      %v7922 = vrot.slane %v5283, 1
      %v7923 = vrot.slane %v5284, 1
      %v7924 = vsel %vm1032, %v7922, %v7923
      %v7925 = vrot.slane %v5285, 1
      %v7926 = vsel %vm1032, %v7923, %v7925
      %v7927 = vrot.slane %v5286, 1
      %v7928 = vrot.slane %v5287, 1
      %v7929 = vsel %vm1032, %v7927, %v7928
      %v7930 = vrot.slane %v5288, 1
      %v7931 = vsel %vm1032, %v7928, %v7930
      %v7932 = vrot.slane %v5289, 1
      %v7933 = vrot.slane %v5290, 1
      %v7934 = vsel %vm1032, %v7932, %v7933
      %v7935 = vrot.slane %v5291, 1
      %v7936 = vsel %vm1032, %v7933, %v7935
      %v7937 = vrot.slane %v5292, 1
      %v7938 = vrot.slane %v5293, 1
      %v7939 = vsel %vm1032, %v7937, %v7938
      %v7940 = vrot.slane %v5294, 1
      %v7941 = vsel %vm1032, %v7938, %v7940
      %v7942 = vrot.slane %v5295, 1
      %v7943 = vrot.slane %v5296, 1
      %v7944 = vsel %vm1032, %v7942, %v7943
      %v7945 = vrot.slane %v5297, 1
      %v7946 = vsel %vm1032, %v7943, %v7945
      %v7947 = vrot.slane %v5298, 1
      %v7948 = vrot.slane %v5299, 1
      %v7949 = vsel %vm1032, %v7947, %v7948
      %v7950 = vrot.slane %v5300, 1
      %v7951 = vsel %vm1032, %v7948, %v7950
      %v7952 = vrot.slane %v5301, 1
      %v7953 = vrot.slane %v5302, 1
      %v7954 = vsel %vm1032, %v7952, %v7953
      %v7955 = vrot.slane %v5303, 1
      %v7956 = vsel %vm1032, %v7953, %v7955
      %v7957 = vrot.slane %v5304, 1
      %v7958 = vrot.slane %v5305, 1
      %v7959 = vsel %vm1032, %v7957, %v7958
      %v7960 = vrot.slane %v5306, 1
      %v7961 = vsel %vm1032, %v7958, %v7960
      %v7962 = vrot.slane %v5307, 1
      %v7963 = vrot.slane %v5308, 1
      %v7964 = vsel %vm1032, %v7962, %v7963
      %v7965 = vrot.slane %v5309, 1
      %v7966 = vsel %vm1032, %v7963, %v7965
      %v7967 = vrot.slane %v5310, 1
      %v7968 = vrot.slane %v5311, 1
      %v7969 = vsel %vm1032, %v7967, %v7968
      %v7970 = vrot.slane %v5312, 1
      %v7971 = vsel %vm1032, %v7968, %v7970
      %v7972 = vrot.slane %v5313, 1
      %v7973 = vrot.slane %v5314, 1
      %v7974 = vsel %vm1032, %v7972, %v7973
      %v7975 = vrot.slane %v5315, 1
      %v7976 = vsel %vm1032, %v7973, %v7975
      %v7977 = vrot.slane %v5316, 1
      %v7978 = vrot.slane %v5317, 1
      %v7979 = vsel %vm1032, %v7977, %v7978
      %v7980 = vrot.slane %v5318, 1
      %v7981 = vsel %vm1032, %v7978, %v7980
      %s7982 = scalar_lea.vmem %s3, 160
      %v7983 = vld [vmem:[%s7982] sm:$0xff]
      %v7984 = vld [vmem:[%s7982 + $0x8] sm:$0xff]
      %v7985 = vld [vmem:[%s7982 + $0x10] sm:$0xff]
      %v7986 = vld [vmem:[%s7982 + $0x18] sm:$0xff]
      %v7987 = vsel %vm6969, %v7924, 0
      %v7989 = vsel %vm6969, %v7926, 0
      %v7991 = vsel %vm6969, %v7929, 0
      %v7993 = vsel %vm6969, %v7931, 0
      %v7995 = vsel %vm6969, %v7934, 0
      %v7997 = vsel %vm6969, %v7936, 0
      %v7999 = vsel %vm6969, %v7939, 0
      %v8001 = vsel %vm6969, %v7941, 0
      %v8003 = vsel %vm6969, %v7944, 0
      %v8005 = vsel %vm6969, %v7946, 0
      %v8007 = vsel %vm6969, %v7949, 0
      %v8009 = vsel %vm6969, %v7951, 0
      %v8011 = vsel %vm6969, %v7954, 0
      %v8013 = vsel %vm6969, %v7956, 0
      %v8015 = vsel %vm6969, %v7959, 0
      %v8017 = vsel %vm6969, %v7961, 0
      %v8019 = vsel %vm6969, %v7964, 0
      %v8021 = vsel %vm6969, %v7966, 0
      %v8023 = vsel %vm6969, %v7969, 0
      %v8025 = vsel %vm6969, %v7971, 0
      %v8027 = vsel %vm6969, %v7974, 0
      %v8029 = vsel %vm6969, %v7976, 0
      %v8031 = vsel %vm6969, %v7979, 0
      %v8033 = vsel %vm6969, %v7981, 0
      %8035 = vmatpush.msra.mxu0 0.0
      %8036 = vmatpush.msra.mxu0 0.0
      %8037 = vmatpush.msra.mxu0 0.0
      %8038 = vmatpush.msra.mxu0 0.0
      %8039 = vmatpush.msra.mxu0 0.0
      %8040 = vmatpush.msra.mxu0 0.0
      %8041 = vmatpush.msra.mxu0 0.0
      %8042 = vmatpush.msra.mxu0 0.0
      %8043 = vmatpush.msra.mxu0 0.0
      %8044 = vmatpush.msra.mxu0 0.0
      %8045 = vmatpush.msra.mxu0 0.0
      %8046 = vmatpush.msra.mxu0 0.0
      %8047 = vmatpush.msra.mxu0 %v7986
      %8048 = vmatpush.msra.mxu0 %v7985
      %8049 = vmatpush.msra.mxu0 %v7984
      %8050 = vmatpush.msra.mxu0 %v7983
      %8051 = vmatmul.f32.gmra.mxu0 %v7987
      %v8052 = vpop.f32.mrf.mxu0
      %v8053 = vadd.f32 0.0, %v8052
      %8054 = vmatmul.f32.gmra.mxu0 %v7989
      %v8055 = vpop.f32.mrf.mxu0
      %v8056 = vadd.f32 0.0, %v8055
      %8057 = vmatmul.f32.gmra.mxu0 %v7991
      %v8058 = vpop.f32.mrf.mxu0
      %v8059 = vadd.f32 0.0, %v8058
      %8060 = vmatmul.f32.gmra.mxu0 %v7993
      %v8061 = vpop.f32.mrf.mxu0
      %v8062 = vadd.f32 0.0, %v8061
      %8063 = vmatmul.f32.gmra.mxu0 %v7995
      %v8064 = vpop.f32.mrf.mxu0
      %v8065 = vadd.f32 0.0, %v8064
      %8066 = vmatmul.f32.gmra.mxu0 %v7997
      %v8067 = vpop.f32.mrf.mxu0
      %v8068 = vadd.f32 0.0, %v8067
      %8069 = vmatmul.f32.gmra.mxu0 %v7999
      %v8070 = vpop.f32.mrf.mxu0
      %v8071 = vadd.f32 0.0, %v8070
      %8072 = vmatmul.f32.gmra.mxu0 %v8001
      %v8073 = vpop.f32.mrf.mxu0
      %v8074 = vadd.f32 0.0, %v8073
      %8075 = vmatmul.f32.gmra.mxu0 %v8003
      %v8076 = vpop.f32.mrf.mxu0
      %v8077 = vadd.f32 0.0, %v8076
      %8078 = vmatmul.f32.gmra.mxu0 %v8005
      %v8079 = vpop.f32.mrf.mxu0
      %v8080 = vadd.f32 0.0, %v8079
      %8081 = vmatmul.f32.gmra.mxu0 %v8007
      %v8082 = vpop.f32.mrf.mxu0
      %v8083 = vadd.f32 0.0, %v8082
      %8084 = vmatmul.f32.gmra.mxu0 %v8009
      %v8085 = vpop.f32.mrf.mxu0
      %v8086 = vadd.f32 0.0, %v8085
      %8087 = vmatmul.f32.gmra.mxu0 %v8011
      %v8088 = vpop.f32.mrf.mxu0
      %v8089 = vadd.f32 0.0, %v8088
      %8090 = vmatmul.f32.gmra.mxu0 %v8013
      %v8091 = vpop.f32.mrf.mxu0
      %v8092 = vadd.f32 0.0, %v8091
      %8093 = vmatmul.f32.gmra.mxu0 %v8015
      %v8094 = vpop.f32.mrf.mxu0
      %v8095 = vadd.f32 0.0, %v8094
      %8096 = vmatmul.f32.gmra.mxu0 %v8017
      %v8097 = vpop.f32.mrf.mxu0
      %v8098 = vadd.f32 0.0, %v8097
      %8099 = vmatmul.f32.gmra.mxu0 %v8019
      %v8100 = vpop.f32.mrf.mxu0
      %v8101 = vadd.f32 0.0, %v8100
      %8102 = vmatmul.f32.gmra.mxu0 %v8021
      %v8103 = vpop.f32.mrf.mxu0
      %v8104 = vadd.f32 0.0, %v8103
      %8105 = vmatmul.f32.gmra.mxu0 %v8023
      %v8106 = vpop.f32.mrf.mxu0
      %v8107 = vadd.f32 0.0, %v8106
      %8108 = vmatmul.f32.gmra.mxu0 %v8025
      %v8109 = vpop.f32.mrf.mxu0
      %v8110 = vadd.f32 0.0, %v8109
      %8111 = vmatmul.f32.gmra.mxu0 %v8027
      %v8112 = vpop.f32.mrf.mxu0
      %v8113 = vadd.f32 0.0, %v8112
      %8114 = vmatmul.f32.gmra.mxu0 %v8029
      %v8115 = vpop.f32.mrf.mxu0
      %v8116 = vadd.f32 0.0, %v8115
      %8117 = vmatmul.f32.gmra.mxu0 %v8031
      %v8118 = vpop.f32.mrf.mxu0
      %v8119 = vadd.f32 0.0, %v8118
      %8120 = vmatmul.f32.gmra.mxu0 %v8033
      %v8121 = vpop.f32.mrf.mxu0
      %v8122 = vadd.f32 0.0, %v8121
      %8123 = vdwg.mxu0
      %v8124 = vadd.f32 %v7886, %v8053
      %v8125 = vadd.f32 %v7887, %v8056
      %v8126 = vadd.f32 %v7888, %v8059
      %v8127 = vadd.f32 %v7889, %v8062
      %v8128 = vadd.f32 %v7890, %v8065
      %v8129 = vadd.f32 %v7891, %v8068
      %v8130 = vadd.f32 %v7892, %v8071
      %v8131 = vadd.f32 %v7893, %v8074
      %v8132 = vadd.f32 %v7894, %v8077
      %v8133 = vadd.f32 %v7895, %v8080
      %v8134 = vadd.f32 %v7896, %v8083
      %v8135 = vadd.f32 %v7897, %v8086
      %v8136 = vadd.f32 %v7898, %v8089
      %v8137 = vadd.f32 %v7899, %v8092
      %v8138 = vadd.f32 %v7900, %v8095
      %v8139 = vadd.f32 %v7901, %v8098
      %v8140 = vadd.f32 %v7902, %v8101
      %v8141 = vadd.f32 %v7903, %v8104
      %v8142 = vadd.f32 %v7904, %v8107
      %v8143 = vadd.f32 %v7905, %v8110
      %v8144 = vadd.f32 %v7906, %v8113
      %v8145 = vadd.f32 %v7907, %v8116
      %v8146 = vadd.f32 %v7908, %v8119
      %v8147 = vadd.f32 %v7909, %v8122
      %s8148 = scalar_lea.vmem %s3, 192
      %v8149 = vld [vmem:[%s8148] sm:$0xff]
      %v8150 = vld [vmem:[%s8148 + $0x8] sm:$0xff]
      %v8151 = vld [vmem:[%s8148 + $0x10] sm:$0xff]
      %v8152 = vld [vmem:[%s8148 + $0x18] sm:$0xff]
      %v8154 = vsel %vm6969, %v2442, 0
      %v8157 = vsel %vm6969, %v2443, 0
      %8159 = vmatpush.msra.mxu0 0.0
      %8160 = vmatpush.msra.mxu0 0.0
      %8161 = vmatpush.msra.mxu0 0.0
      %8162 = vmatpush.msra.mxu0 0.0
      %8163 = vmatpush.msra.mxu0 0.0
      %8164 = vmatpush.msra.mxu0 0.0
      %8165 = vmatpush.msra.mxu0 0.0
      %8166 = vmatpush.msra.mxu0 0.0
      %8167 = vmatpush.msra.mxu0 0.0
      %8168 = vmatpush.msra.mxu0 0.0
      %8169 = vmatpush.msra.mxu0 0.0
      %8170 = vmatpush.msra.mxu0 0.0
      %8171 = vmatpush.msra.mxu0 %v8152
      %8172 = vmatpush.msra.mxu0 %v8151
      %8173 = vmatpush.msra.mxu0 %v8150
      %8174 = vmatpush.msra.mxu0 %v8149
      %8175 = vmatmul.f32.gmra.mxu0 %v7138
      %v8176 = vpop.f32.mrf.mxu0
      %v8177 = vadd.f32 0.0, %v8176
      %8178 = vmatmul.f32.gmra.mxu0 %v7141
      %v8179 = vpop.f32.mrf.mxu0
      %v8180 = vadd.f32 0.0, %v8179
      %8181 = vmatmul.f32.gmra.mxu0 %v7144
      %v8182 = vpop.f32.mrf.mxu0
      %v8183 = vadd.f32 0.0, %v8182
      %8184 = vmatmul.f32.gmra.mxu0 %v7147
      %v8185 = vpop.f32.mrf.mxu0
      %v8186 = vadd.f32 0.0, %v8185
      %8187 = vmatmul.f32.gmra.mxu0 %v7150
      %v8188 = vpop.f32.mrf.mxu0
      %v8189 = vadd.f32 0.0, %v8188
      %8190 = vmatmul.f32.gmra.mxu0 %v7153
      %v8191 = vpop.f32.mrf.mxu0
      %v8192 = vadd.f32 0.0, %v8191
      %8193 = vmatmul.f32.gmra.mxu0 %v7156
      %v8194 = vpop.f32.mrf.mxu0
      %v8195 = vadd.f32 0.0, %v8194
      %8196 = vmatmul.f32.gmra.mxu0 %v7159
      %v8197 = vpop.f32.mrf.mxu0
      %v8198 = vadd.f32 0.0, %v8197
      %8199 = vmatmul.f32.gmra.mxu0 %v7162
      %v8200 = vpop.f32.mrf.mxu0
      %v8201 = vadd.f32 0.0, %v8200
      %8202 = vmatmul.f32.gmra.mxu0 %v7165
      %v8203 = vpop.f32.mrf.mxu0
      %v8204 = vadd.f32 0.0, %v8203
      %8205 = vmatmul.f32.gmra.mxu0 %v7168
      %v8206 = vpop.f32.mrf.mxu0
      %v8207 = vadd.f32 0.0, %v8206
      %8208 = vmatmul.f32.gmra.mxu0 %v7171
      %v8209 = vpop.f32.mrf.mxu0
      %v8210 = vadd.f32 0.0, %v8209
      %8211 = vmatmul.f32.gmra.mxu0 %v7174
      %v8212 = vpop.f32.mrf.mxu0
      %v8213 = vadd.f32 0.0, %v8212
      %8214 = vmatmul.f32.gmra.mxu0 %v7177
      %v8215 = vpop.f32.mrf.mxu0
      %v8216 = vadd.f32 0.0, %v8215
      %8217 = vmatmul.f32.gmra.mxu0 %v7180
      %v8218 = vpop.f32.mrf.mxu0
      %v8219 = vadd.f32 0.0, %v8218
      %8220 = vmatmul.f32.gmra.mxu0 %v7183
      %v8221 = vpop.f32.mrf.mxu0
      %v8222 = vadd.f32 0.0, %v8221
      %8223 = vmatmul.f32.gmra.mxu0 %v7186
      %v8224 = vpop.f32.mrf.mxu0
      %v8225 = vadd.f32 0.0, %v8224
      %8226 = vmatmul.f32.gmra.mxu0 %v7189
      %v8227 = vpop.f32.mrf.mxu0
      %v8228 = vadd.f32 0.0, %v8227
      %8229 = vmatmul.f32.gmra.mxu0 %v7192
      %v8230 = vpop.f32.mrf.mxu0
      %v8231 = vadd.f32 0.0, %v8230
      %8232 = vmatmul.f32.gmra.mxu0 %v7195
      %v8233 = vpop.f32.mrf.mxu0
      %v8234 = vadd.f32 0.0, %v8233
      %8235 = vmatmul.f32.gmra.mxu0 %v7198
      %v8236 = vpop.f32.mrf.mxu0
      %v8237 = vadd.f32 0.0, %v8236
      %8238 = vmatmul.f32.gmra.mxu0 %v7201
      %v8239 = vpop.f32.mrf.mxu0
      %v8240 = vadd.f32 0.0, %v8239
      %8241 = vmatmul.f32.gmra.mxu0 %v8154
      %v8242 = vpop.f32.mrf.mxu0
      %v8243 = vadd.f32 0.0, %v8242
      %8244 = vmatmul.f32.gmra.mxu0 %v8157
      %v8245 = vpop.f32.mrf.mxu0
      %v8246 = vadd.f32 0.0, %v8245
      %8247 = vdwg.mxu0
      %v8248 = vadd.f32 %v8124, %v8177
      %v8249 = vadd.f32 %v8125, %v8180
      %v8250 = vadd.f32 %v8126, %v8183
      %v8251 = vadd.f32 %v8127, %v8186
      %v8252 = vadd.f32 %v8128, %v8189
      %v8253 = vadd.f32 %v8129, %v8192
      %v8254 = vadd.f32 %v8130, %v8195
      %v8255 = vadd.f32 %v8131, %v8198
      %v8256 = vadd.f32 %v8132, %v8201
      %v8257 = vadd.f32 %v8133, %v8204
      %v8258 = vadd.f32 %v8134, %v8207
      %v8259 = vadd.f32 %v8135, %v8210
      %v8260 = vadd.f32 %v8136, %v8213
      %v8261 = vadd.f32 %v8137, %v8216
      %v8262 = vadd.f32 %v8138, %v8219
      %v8263 = vadd.f32 %v8139, %v8222
      %v8264 = vadd.f32 %v8140, %v8225
      %v8265 = vadd.f32 %v8141, %v8228
      %v8266 = vadd.f32 %v8142, %v8231
      %v8267 = vadd.f32 %v8143, %v8234
      %v8268 = vadd.f32 %v8144, %v8237
      %v8269 = vadd.f32 %v8145, %v8240
      %v8270 = vadd.f32 %v8146, %v8243
      %v8271 = vadd.f32 %v8147, %v8246
      %s8272 = scalar_lea.vmem %s3, 224
      %v8273 = vld [vmem:[%s8272] sm:$0xff]
      %v8274 = vld [vmem:[%s8272 + $0x8] sm:$0xff]
      %v8275 = vld [vmem:[%s8272 + $0x10] sm:$0xff]
      %v8276 = vld [vmem:[%s8272 + $0x18] sm:$0xff]
      %v8278 = vsel %vm6969, %v4080, 0
      %v8281 = vsel %vm6969, %v4081, 0
      %8283 = vmatpush.msra.mxu0 0.0
      %8284 = vmatpush.msra.mxu0 0.0
      %8285 = vmatpush.msra.mxu0 0.0
      %8286 = vmatpush.msra.mxu0 0.0
      %8287 = vmatpush.msra.mxu0 0.0
      %8288 = vmatpush.msra.mxu0 0.0
      %8289 = vmatpush.msra.mxu0 0.0
      %8290 = vmatpush.msra.mxu0 0.0
      %8291 = vmatpush.msra.mxu0 0.0
      %8292 = vmatpush.msra.mxu0 0.0
      %8293 = vmatpush.msra.mxu0 0.0
      %8294 = vmatpush.msra.mxu0 0.0
      %8295 = vmatpush.msra.mxu0 %v8276
      %8296 = vmatpush.msra.mxu0 %v8275
      %8297 = vmatpush.msra.mxu0 %v8274
      %8298 = vmatpush.msra.mxu0 %v8273
      %8299 = vmatmul.f32.gmra.mxu0 %v6977
      %v8300 = vpop.f32.mrf.mxu0
      %v8301 = vadd.f32 0.0, %v8300
      %8302 = vmatmul.f32.gmra.mxu0 %v6980
      %v8303 = vpop.f32.mrf.mxu0
      %v8304 = vadd.f32 0.0, %v8303
      %8305 = vmatmul.f32.gmra.mxu0 %v6983
      %v8306 = vpop.f32.mrf.mxu0
      %v8307 = vadd.f32 0.0, %v8306
      %8308 = vmatmul.f32.gmra.mxu0 %v6986
      %v8309 = vpop.f32.mrf.mxu0
      %v8310 = vadd.f32 0.0, %v8309
      %8311 = vmatmul.f32.gmra.mxu0 %v6989
      %v8312 = vpop.f32.mrf.mxu0
      %v8313 = vadd.f32 0.0, %v8312
      %8314 = vmatmul.f32.gmra.mxu0 %v6992
      %v8315 = vpop.f32.mrf.mxu0
      %v8316 = vadd.f32 0.0, %v8315
      %8317 = vmatmul.f32.gmra.mxu0 %v6995
      %v8318 = vpop.f32.mrf.mxu0
      %v8319 = vadd.f32 0.0, %v8318
      %8320 = vmatmul.f32.gmra.mxu0 %v6998
      %v8321 = vpop.f32.mrf.mxu0
      %v8322 = vadd.f32 0.0, %v8321
      %8323 = vmatmul.f32.gmra.mxu0 %v7001
      %v8324 = vpop.f32.mrf.mxu0
      %v8325 = vadd.f32 0.0, %v8324
      %8326 = vmatmul.f32.gmra.mxu0 %v7004
      %v8327 = vpop.f32.mrf.mxu0
      %v8328 = vadd.f32 0.0, %v8327
      %8329 = vmatmul.f32.gmra.mxu0 %v7007
      %v8330 = vpop.f32.mrf.mxu0
      %v8331 = vadd.f32 0.0, %v8330
      %8332 = vmatmul.f32.gmra.mxu0 %v7010
      %v8333 = vpop.f32.mrf.mxu0
      %v8334 = vadd.f32 0.0, %v8333
      %8335 = vmatmul.f32.gmra.mxu0 %v7013
      %v8336 = vpop.f32.mrf.mxu0
      %v8337 = vadd.f32 0.0, %v8336
      %8338 = vmatmul.f32.gmra.mxu0 %v7016
      %v8339 = vpop.f32.mrf.mxu0
      %v8340 = vadd.f32 0.0, %v8339
      %8341 = vmatmul.f32.gmra.mxu0 %v7019
      %v8342 = vpop.f32.mrf.mxu0
      %v8343 = vadd.f32 0.0, %v8342
      %8344 = vmatmul.f32.gmra.mxu0 %v7022
      %v8345 = vpop.f32.mrf.mxu0
      %v8346 = vadd.f32 0.0, %v8345
      %8347 = vmatmul.f32.gmra.mxu0 %v7025
      %v8348 = vpop.f32.mrf.mxu0
      %v8349 = vadd.f32 0.0, %v8348
      %8350 = vmatmul.f32.gmra.mxu0 %v7028
      %v8351 = vpop.f32.mrf.mxu0
      %v8352 = vadd.f32 0.0, %v8351
      %8353 = vmatmul.f32.gmra.mxu0 %v7031
      %v8354 = vpop.f32.mrf.mxu0
      %v8355 = vadd.f32 0.0, %v8354
      %8356 = vmatmul.f32.gmra.mxu0 %v7034
      %v8357 = vpop.f32.mrf.mxu0
      %v8358 = vadd.f32 0.0, %v8357
      %8359 = vmatmul.f32.gmra.mxu0 %v7037
      %v8360 = vpop.f32.mrf.mxu0
      %v8361 = vadd.f32 0.0, %v8360
      %8362 = vmatmul.f32.gmra.mxu0 %v7040
      %v8363 = vpop.f32.mrf.mxu0
      %v8364 = vadd.f32 0.0, %v8363
      %8365 = vmatmul.f32.gmra.mxu0 %v8278
      %v8366 = vpop.f32.mrf.mxu0
      %v8367 = vadd.f32 0.0, %v8366
      %8368 = vmatmul.f32.gmra.mxu0 %v8281
      %v8369 = vpop.f32.mrf.mxu0
      %v8370 = vadd.f32 0.0, %v8369
      %8371 = vdwg.mxu0
      %v8372 = vadd.f32 %v8248, %v8301
      %v8373 = vadd.f32 %v8249, %v8304
      %v8374 = vadd.f32 %v8250, %v8307
      %v8375 = vadd.f32 %v8251, %v8310
      %v8376 = vadd.f32 %v8252, %v8313
      %v8377 = vadd.f32 %v8253, %v8316
      %v8378 = vadd.f32 %v8254, %v8319
      %v8379 = vadd.f32 %v8255, %v8322
      %v8380 = vadd.f32 %v8256, %v8325
      %v8381 = vadd.f32 %v8257, %v8328
      %v8382 = vadd.f32 %v8258, %v8331
      %v8383 = vadd.f32 %v8259, %v8334
      %v8384 = vadd.f32 %v8260, %v8337
      %v8385 = vadd.f32 %v8261, %v8340
      %v8386 = vadd.f32 %v8262, %v8343
      %v8387 = vadd.f32 %v8263, %v8346
      %v8388 = vadd.f32 %v8264, %v8349
      %v8389 = vadd.f32 %v8265, %v8352
      %v8390 = vadd.f32 %v8266, %v8355
      %v8391 = vadd.f32 %v8267, %v8358
      %v8392 = vadd.f32 %v8268, %v8361
      %v8393 = vadd.f32 %v8269, %v8364
      %v8394 = vadd.f32 %v8270, %v8367
      %v8395 = vadd.f32 %v8271, %v8370
      %v8397 = vrot.slane %v2442, 1
      %v8398 = vrot.slane %v2443, 1
      %v8399 = vsel %vm1032, %v8397, %v8398
      %v8400 = vrot.slane %v2444, 1
      %v8401 = vsel %vm1032, %v8398, %v8400
      %s8402 = scalar_lea.vmem %s3, 256
      %v8403 = vld [vmem:[%s8402] sm:$0xff]
      %v8404 = vld [vmem:[%s8402 + $0x8] sm:$0xff]
      %v8405 = vld [vmem:[%s8402 + $0x10] sm:$0xff]
      %v8406 = vld [vmem:[%s8402 + $0x18] sm:$0xff]
      %v8407 = vsel %vm6969, %v8399, 0
      %v8409 = vsel %vm6969, %v8401, 0
      %8411 = vmatpush.msra.mxu0 0.0
      %8412 = vmatpush.msra.mxu0 0.0
      %8413 = vmatpush.msra.mxu0 0.0
      %8414 = vmatpush.msra.mxu0 0.0
      %8415 = vmatpush.msra.mxu0 0.0
      %8416 = vmatpush.msra.mxu0 0.0
      %8417 = vmatpush.msra.mxu0 0.0
      %8418 = vmatpush.msra.mxu0 0.0
      %8419 = vmatpush.msra.mxu0 0.0
      %8420 = vmatpush.msra.mxu0 0.0
      %8421 = vmatpush.msra.mxu0 0.0
      %8422 = vmatpush.msra.mxu0 0.0
      %8423 = vmatpush.msra.mxu0 %v8406
      %8424 = vmatpush.msra.mxu0 %v8405
      %8425 = vmatpush.msra.mxu0 %v8404
      %8426 = vmatpush.msra.mxu0 %v8403
      %8427 = vmatmul.f32.gmra.mxu0 %v7373
      %v8428 = vpop.f32.mrf.mxu0
      %v8429 = vadd.f32 0.0, %v8428
      %8430 = vmatmul.f32.gmra.mxu0 %v7375
      %v8431 = vpop.f32.mrf.mxu0
      %v8432 = vadd.f32 0.0, %v8431
      %8433 = vmatmul.f32.gmra.mxu0 %v7377
      %v8434 = vpop.f32.mrf.mxu0
      %v8435 = vadd.f32 0.0, %v8434
      %8436 = vmatmul.f32.gmra.mxu0 %v7379
      %v8437 = vpop.f32.mrf.mxu0
      %v8438 = vadd.f32 0.0, %v8437
      %8439 = vmatmul.f32.gmra.mxu0 %v7381
      %v8440 = vpop.f32.mrf.mxu0
      %v8441 = vadd.f32 0.0, %v8440
      %8442 = vmatmul.f32.gmra.mxu0 %v7383
      %v8443 = vpop.f32.mrf.mxu0
      %v8444 = vadd.f32 0.0, %v8443
      %8445 = vmatmul.f32.gmra.mxu0 %v7385
      %v8446 = vpop.f32.mrf.mxu0
      %v8447 = vadd.f32 0.0, %v8446
      %8448 = vmatmul.f32.gmra.mxu0 %v7387
      %v8449 = vpop.f32.mrf.mxu0
      %v8450 = vadd.f32 0.0, %v8449
      %8451 = vmatmul.f32.gmra.mxu0 %v7389
      %v8452 = vpop.f32.mrf.mxu0
      %v8453 = vadd.f32 0.0, %v8452
      %8454 = vmatmul.f32.gmra.mxu0 %v7391
      %v8455 = vpop.f32.mrf.mxu0
      %v8456 = vadd.f32 0.0, %v8455
      %8457 = vmatmul.f32.gmra.mxu0 %v7393
      %v8458 = vpop.f32.mrf.mxu0
      %v8459 = vadd.f32 0.0, %v8458
      %8460 = vmatmul.f32.gmra.mxu0 %v7395
      %v8461 = vpop.f32.mrf.mxu0
      %v8462 = vadd.f32 0.0, %v8461
      %8463 = vmatmul.f32.gmra.mxu0 %v7397
      %v8464 = vpop.f32.mrf.mxu0
      %v8465 = vadd.f32 0.0, %v8464
      %8466 = vmatmul.f32.gmra.mxu0 %v7399
      %v8467 = vpop.f32.mrf.mxu0
      %v8468 = vadd.f32 0.0, %v8467
      %8469 = vmatmul.f32.gmra.mxu0 %v7401
      %v8470 = vpop.f32.mrf.mxu0
      %v8471 = vadd.f32 0.0, %v8470
      %8472 = vmatmul.f32.gmra.mxu0 %v7403
      %v8473 = vpop.f32.mrf.mxu0
      %v8474 = vadd.f32 0.0, %v8473
      %8475 = vmatmul.f32.gmra.mxu0 %v7405
      %v8476 = vpop.f32.mrf.mxu0
      %v8477 = vadd.f32 0.0, %v8476
      %8478 = vmatmul.f32.gmra.mxu0 %v7407
      %v8479 = vpop.f32.mrf.mxu0
      %v8480 = vadd.f32 0.0, %v8479
      %8481 = vmatmul.f32.gmra.mxu0 %v7409
      %v8482 = vpop.f32.mrf.mxu0
      %v8483 = vadd.f32 0.0, %v8482
      %8484 = vmatmul.f32.gmra.mxu0 %v7411
      %v8485 = vpop.f32.mrf.mxu0
      %v8486 = vadd.f32 0.0, %v8485
      %8487 = vmatmul.f32.gmra.mxu0 %v7413
      %v8488 = vpop.f32.mrf.mxu0
      %v8489 = vadd.f32 0.0, %v8488
      %8490 = vmatmul.f32.gmra.mxu0 %v7415
      %v8491 = vpop.f32.mrf.mxu0
      %v8492 = vadd.f32 0.0, %v8491
      %8493 = vmatmul.f32.gmra.mxu0 %v8407
      %v8494 = vpop.f32.mrf.mxu0
      %v8495 = vadd.f32 0.0, %v8494
      %8496 = vmatmul.f32.gmra.mxu0 %v8409
      %v8497 = vpop.f32.mrf.mxu0
      %v8498 = vadd.f32 0.0, %v8497
      %8499 = vdwg.mxu0
      %v8500 = vadd.f32 %v8372, %v8429
      %v8501 = vadd.f32 %v8373, %v8432
      %v8502 = vadd.f32 %v8374, %v8435
      %v8503 = vadd.f32 %v8375, %v8438
      %v8504 = vadd.f32 %v8376, %v8441
      %v8505 = vadd.f32 %v8377, %v8444
      %v8506 = vadd.f32 %v8378, %v8447
      %v8507 = vadd.f32 %v8379, %v8450
      %v8508 = vadd.f32 %v8380, %v8453
      %v8509 = vadd.f32 %v8381, %v8456
      %v8510 = vadd.f32 %v8382, %v8459
      %v8511 = vadd.f32 %v8383, %v8462
      %v8512 = vadd.f32 %v8384, %v8465
      %v8513 = vadd.f32 %v8385, %v8468
      %v8514 = vadd.f32 %v8386, %v8471
      %v8515 = vadd.f32 %v8387, %v8474
      %v8516 = vadd.f32 %v8388, %v8477
      %v8517 = vadd.f32 %v8389, %v8480
      %v8518 = vadd.f32 %v8390, %v8483
      %v8519 = vadd.f32 %v8391, %v8486
      %v8520 = vadd.f32 %v8392, %v8489
      %v8521 = vadd.f32 %v8393, %v8492
      %v8522 = vadd.f32 %v8394, %v8495
      %v8523 = vadd.f32 %v8395, %v8498
      %8524 = vmatpush.msra.mxu0 0.0
      %8525 = vmatpush.msra.mxu0 0.0
      %8526 = vmatpush.msra.mxu0 0.0
      %8527 = vmatpush.msra.mxu0 0.0
      %8528 = vmatpush.msra.mxu0 0.0
      %8529 = vmatpush.msra.mxu0 0.0
      %8530 = vmatpush.msra.mxu0 0.0
      %8531 = vmatpush.msra.mxu0 0.0
      %8532 = vmatpush.msra.mxu0 0.0
      %8533 = vmatpush.msra.mxu0 0.0
      %8534 = vmatpush.msra.mxu0 0.0
      %8535 = vmatpush.msra.mxu0 0.0
      %8536 = vmatpush.msra.mxu0 %v6968
      %8537 = vmatpush.msra.mxu0 %v6967
      %8538 = vmatpush.msra.mxu0 %v6966
      %8539 = vmatpush.msra.mxu0 %v6965
      %8540 = vmatmul.f32.gmra.mxu0 %v7369
      %v8541 = vpop.f32.mrf.mxu0
      %v8542 = vadd.f32 0.0, %v8541
      %8543 = vmatmul.f32.gmra.mxu0 %v7371
      %v8544 = vpop.f32.mrf.mxu0
      %v8545 = vadd.f32 0.0, %v8544
      %8546 = vmatmul.f32.gmra.mxu0 %v7373
      %v8547 = vpop.f32.mrf.mxu0
      %v8548 = vadd.f32 0.0, %v8547
      %8549 = vmatmul.f32.gmra.mxu0 %v7375
      %v8550 = vpop.f32.mrf.mxu0
      %v8551 = vadd.f32 0.0, %v8550
      %8552 = vmatmul.f32.gmra.mxu0 %v7377
      %v8553 = vpop.f32.mrf.mxu0
      %v8554 = vadd.f32 0.0, %v8553
      %8555 = vmatmul.f32.gmra.mxu0 %v7379
      %v8556 = vpop.f32.mrf.mxu0
      %v8557 = vadd.f32 0.0, %v8556
      %8558 = vmatmul.f32.gmra.mxu0 %v7381
      %v8559 = vpop.f32.mrf.mxu0
      %v8560 = vadd.f32 0.0, %v8559
      %8561 = vmatmul.f32.gmra.mxu0 %v7383
      %v8562 = vpop.f32.mrf.mxu0
      %v8563 = vadd.f32 0.0, %v8562
      %8564 = vmatmul.f32.gmra.mxu0 %v7385
      %v8565 = vpop.f32.mrf.mxu0
      %v8566 = vadd.f32 0.0, %v8565
      %8567 = vmatmul.f32.gmra.mxu0 %v7387
      %v8568 = vpop.f32.mrf.mxu0
      %v8569 = vadd.f32 0.0, %v8568
      %8570 = vmatmul.f32.gmra.mxu0 %v7389
      %v8571 = vpop.f32.mrf.mxu0
      %v8572 = vadd.f32 0.0, %v8571
      %8573 = vmatmul.f32.gmra.mxu0 %v7391
      %v8574 = vpop.f32.mrf.mxu0
      %v8575 = vadd.f32 0.0, %v8574
      %8576 = vmatmul.f32.gmra.mxu0 %v7393
      %v8577 = vpop.f32.mrf.mxu0
      %v8578 = vadd.f32 0.0, %v8577
      %8579 = vmatmul.f32.gmra.mxu0 %v7395
      %v8580 = vpop.f32.mrf.mxu0
      %v8581 = vadd.f32 0.0, %v8580
      %8582 = vmatmul.f32.gmra.mxu0 %v7397
      %v8583 = vpop.f32.mrf.mxu0
      %v8584 = vadd.f32 0.0, %v8583
      %8585 = vmatmul.f32.gmra.mxu0 %v7399
      %v8586 = vpop.f32.mrf.mxu0
      %v8587 = vadd.f32 0.0, %v8586
      %8588 = vmatmul.f32.gmra.mxu0 %v7401
      %v8589 = vpop.f32.mrf.mxu0
      %v8590 = vadd.f32 0.0, %v8589
      %8591 = vmatmul.f32.gmra.mxu0 %v7403
      %v8592 = vpop.f32.mrf.mxu0
      %v8593 = vadd.f32 0.0, %v8592
      %8594 = vmatmul.f32.gmra.mxu0 %v7405
      %v8595 = vpop.f32.mrf.mxu0
      %v8596 = vadd.f32 0.0, %v8595
      %8597 = vmatmul.f32.gmra.mxu0 %v7407
      %v8598 = vpop.f32.mrf.mxu0
      %v8599 = vadd.f32 0.0, %v8598
      %8600 = vmatmul.f32.gmra.mxu0 %v7409
      %v8601 = vpop.f32.mrf.mxu0
      %v8602 = vadd.f32 0.0, %v8601
      %8603 = vmatmul.f32.gmra.mxu0 %v7411
      %v8604 = vpop.f32.mrf.mxu0
      %v8605 = vadd.f32 0.0, %v8604
      %8606 = vmatmul.f32.gmra.mxu0 %v7413
      %v8607 = vpop.f32.mrf.mxu0
      %v8608 = vadd.f32 0.0, %v8607
      %8609 = vmatmul.f32.gmra.mxu0 %v7415
      %v8610 = vpop.f32.mrf.mxu0
      %v8611 = vadd.f32 0.0, %v8610
      %8612 = vdwg.mxu0
      %8613 = vmatpush.msra.mxu0 0.0
      %8614 = vmatpush.msra.mxu0 0.0
      %8615 = vmatpush.msra.mxu0 0.0
      %8616 = vmatpush.msra.mxu0 0.0
      %8617 = vmatpush.msra.mxu0 0.0
      %8618 = vmatpush.msra.mxu0 0.0
      %8619 = vmatpush.msra.mxu0 0.0
      %8620 = vmatpush.msra.mxu0 0.0
      %8621 = vmatpush.msra.mxu0 0.0
      %8622 = vmatpush.msra.mxu0 0.0
      %8623 = vmatpush.msra.mxu0 0.0
      %8624 = vmatpush.msra.mxu0 0.0
      %8625 = vmatpush.msra.mxu0 %v6963
      %8626 = vmatpush.msra.mxu0 %v6962
      %8627 = vmatpush.msra.mxu0 %v6961
      %8628 = vmatpush.msra.mxu0 %v6960
      %8629 = vmatmul.f32.gmra.mxu0 %v6971
      %v8630 = vpop.f32.mrf.mxu0
      %v8631 = vadd.f32 %v8542, %v8630
      %8632 = vmatmul.f32.gmra.mxu0 %v6974
      %v8633 = vpop.f32.mrf.mxu0
      %v8634 = vadd.f32 %v8545, %v8633
      %8635 = vmatmul.f32.gmra.mxu0 %v6977
      %v8636 = vpop.f32.mrf.mxu0
      %v8637 = vadd.f32 %v8548, %v8636
      %8638 = vmatmul.f32.gmra.mxu0 %v6980
      %v8639 = vpop.f32.mrf.mxu0
      %v8640 = vadd.f32 %v8551, %v8639
      %8641 = vmatmul.f32.gmra.mxu0 %v6983
      %v8642 = vpop.f32.mrf.mxu0
      %v8643 = vadd.f32 %v8554, %v8642
      %8644 = vmatmul.f32.gmra.mxu0 %v6986
      %v8645 = vpop.f32.mrf.mxu0
      %v8646 = vadd.f32 %v8557, %v8645
      %8647 = vmatmul.f32.gmra.mxu0 %v6989
      %v8648 = vpop.f32.mrf.mxu0
      %v8649 = vadd.f32 %v8560, %v8648
      %8650 = vmatmul.f32.gmra.mxu0 %v6992
      %v8651 = vpop.f32.mrf.mxu0
      %v8652 = vadd.f32 %v8563, %v8651
      %8653 = vmatmul.f32.gmra.mxu0 %v6995
      %v8654 = vpop.f32.mrf.mxu0
      %v8655 = vadd.f32 %v8566, %v8654
      %8656 = vmatmul.f32.gmra.mxu0 %v6998
      %v8657 = vpop.f32.mrf.mxu0
      %v8658 = vadd.f32 %v8569, %v8657
      %8659 = vmatmul.f32.gmra.mxu0 %v7001
      %v8660 = vpop.f32.mrf.mxu0
      %v8661 = vadd.f32 %v8572, %v8660
      %8662 = vmatmul.f32.gmra.mxu0 %v7004
      %v8663 = vpop.f32.mrf.mxu0
      %v8664 = vadd.f32 %v8575, %v8663
      %8665 = vmatmul.f32.gmra.mxu0 %v7007
      %v8666 = vpop.f32.mrf.mxu0
      %v8667 = vadd.f32 %v8578, %v8666
      %8668 = vmatmul.f32.gmra.mxu0 %v7010
      %v8669 = vpop.f32.mrf.mxu0
      %v8670 = vadd.f32 %v8581, %v8669
      %8671 = vmatmul.f32.gmra.mxu0 %v7013
      %v8672 = vpop.f32.mrf.mxu0
      %v8673 = vadd.f32 %v8584, %v8672
      %8674 = vmatmul.f32.gmra.mxu0 %v7016
      %v8675 = vpop.f32.mrf.mxu0
      %v8676 = vadd.f32 %v8587, %v8675
      %8677 = vmatmul.f32.gmra.mxu0 %v7019
      %v8678 = vpop.f32.mrf.mxu0
      %v8679 = vadd.f32 %v8590, %v8678
      %8680 = vmatmul.f32.gmra.mxu0 %v7022
      %v8681 = vpop.f32.mrf.mxu0
      %v8682 = vadd.f32 %v8593, %v8681
      %8683 = vmatmul.f32.gmra.mxu0 %v7025
      %v8684 = vpop.f32.mrf.mxu0
      %v8685 = vadd.f32 %v8596, %v8684
      %8686 = vmatmul.f32.gmra.mxu0 %v7028
      %v8687 = vpop.f32.mrf.mxu0
      %v8688 = vadd.f32 %v8599, %v8687
      %8689 = vmatmul.f32.gmra.mxu0 %v7031
      %v8690 = vpop.f32.mrf.mxu0
      %v8691 = vadd.f32 %v8602, %v8690
      %8692 = vmatmul.f32.gmra.mxu0 %v7034
      %v8693 = vpop.f32.mrf.mxu0
      %v8694 = vadd.f32 %v8605, %v8693
      %8695 = vmatmul.f32.gmra.mxu0 %v7037
      %v8696 = vpop.f32.mrf.mxu0
      %v8697 = vadd.f32 %v8608, %v8696
      %8698 = vmatmul.f32.gmra.mxu0 %v7040
      %v8699 = vpop.f32.mrf.mxu0
      %v8700 = vadd.f32 %v8611, %v8699
      %8701 = vdwg.mxu0
      %v8714 = vrot.slane %v4044, 1
      %v8715 = vrot.slane %v4045, 1
      %v8716 = vsel %vm1032, %v8714, %v8715
      %v8717 = vrot.slane %v4046, 1
      %v8718 = vsel %vm1032, %v8715, %v8717
      %v8719 = vrot.slane %v4047, 1
      %v8720 = vrot.slane %v4048, 1
      %v8721 = vsel %vm1032, %v8719, %v8720
      %v8722 = vrot.slane %v4049, 1
      %v8723 = vsel %vm1032, %v8720, %v8722
      %v8724 = vrot.slane %v4050, 1
      %v8725 = vrot.slane %v4051, 1
      %v8726 = vsel %vm1032, %v8724, %v8725
      %v8727 = vrot.slane %v4052, 1
      %v8728 = vsel %vm1032, %v8725, %v8727
      %v8729 = vrot.slane %v4053, 1
      %v8730 = vrot.slane %v4054, 1
      %v8731 = vsel %vm1032, %v8729, %v8730
      %v8732 = vrot.slane %v4055, 1
      %v8733 = vsel %vm1032, %v8730, %v8732
      %v8734 = vrot.slane %v4056, 1
      %v8735 = vrot.slane %v4057, 1
      %v8736 = vsel %vm1032, %v8734, %v8735
      %v8737 = vrot.slane %v4058, 1
      %v8738 = vsel %vm1032, %v8735, %v8737
      %v8739 = vrot.slane %v4059, 1
      %v8740 = vrot.slane %v4060, 1
      %v8741 = vsel %vm1032, %v8739, %v8740
      %v8742 = vrot.slane %v4061, 1
      %v8743 = vsel %vm1032, %v8740, %v8742
      %v8744 = vrot.slane %v4062, 1
      %v8745 = vrot.slane %v4063, 1
      %v8746 = vsel %vm1032, %v8744, %v8745
      %v8747 = vrot.slane %v4064, 1
      %v8748 = vsel %vm1032, %v8745, %v8747
      %v8749 = vrot.slane %v4065, 1
      %v8750 = vrot.slane %v4066, 1
      %v8751 = vsel %vm1032, %v8749, %v8750
      %v8752 = vrot.slane %v4067, 1
      %v8753 = vsel %vm1032, %v8750, %v8752
      %v8754 = vrot.slane %v4068, 1
      %v8755 = vrot.slane %v4069, 1
      %v8756 = vsel %vm1032, %v8754, %v8755
      %v8757 = vrot.slane %v4070, 1
      %v8758 = vsel %vm1032, %v8755, %v8757
      %v8759 = vrot.slane %v4071, 1
      %v8760 = vrot.slane %v4072, 1
      %v8761 = vsel %vm1032, %v8759, %v8760
      %v8762 = vrot.slane %v4073, 1
      %v8763 = vsel %vm1032, %v8760, %v8762
      %v8764 = vrot.slane %v4074, 1
      %v8765 = vrot.slane %v4075, 1
      %v8766 = vsel %vm1032, %v8764, %v8765
      %v8767 = vrot.slane %v4076, 1
      %v8768 = vsel %vm1032, %v8765, %v8767
      %v8769 = vrot.slane %v4077, 1
      %v8770 = vrot.slane %v4078, 1
      %v8771 = vsel %vm1032, %v8769, %v8770
      %v8772 = vrot.slane %v4079, 1
      %v8773 = vsel %vm1032, %v8770, %v8772
      %v8774 = vsel %vm6969, %v8716, 0
      %v8776 = vsel %vm6969, %v8718, 0
      %v8778 = vsel %vm6969, %v8721, 0
      %v8780 = vsel %vm6969, %v8723, 0
      %v8782 = vsel %vm6969, %v8726, 0
      %v8784 = vsel %vm6969, %v8728, 0
      %v8786 = vsel %vm6969, %v8731, 0
      %v8788 = vsel %vm6969, %v8733, 0
      %v8790 = vsel %vm6969, %v8736, 0
      %v8792 = vsel %vm6969, %v8738, 0
      %v8794 = vsel %vm6969, %v8741, 0
      %v8796 = vsel %vm6969, %v8743, 0
      %v8798 = vsel %vm6969, %v8746, 0
      %v8800 = vsel %vm6969, %v8748, 0
      %v8802 = vsel %vm6969, %v8751, 0
      %v8804 = vsel %vm6969, %v8753, 0
      %v8806 = vsel %vm6969, %v8756, 0
      %v8808 = vsel %vm6969, %v8758, 0
      %v8810 = vsel %vm6969, %v8761, 0
      %v8812 = vsel %vm6969, %v8763, 0
      %v8814 = vsel %vm6969, %v8766, 0
      %v8816 = vsel %vm6969, %v8768, 0
      %v8818 = vsel %vm6969, %v8771, 0
      %v8820 = vsel %vm6969, %v8773, 0
      %8822 = vmatpush.msra.mxu0 0.0
      %8823 = vmatpush.msra.mxu0 0.0
      %8824 = vmatpush.msra.mxu0 0.0
      %8825 = vmatpush.msra.mxu0 0.0
      %8826 = vmatpush.msra.mxu0 0.0
      %8827 = vmatpush.msra.mxu0 0.0
      %8828 = vmatpush.msra.mxu0 0.0
      %8829 = vmatpush.msra.mxu0 0.0
      %8830 = vmatpush.msra.mxu0 0.0
      %8831 = vmatpush.msra.mxu0 0.0
      %8832 = vmatpush.msra.mxu0 0.0
      %8833 = vmatpush.msra.mxu0 0.0
      %8834 = vmatpush.msra.mxu0 %v7368
      %8835 = vmatpush.msra.mxu0 %v7367
      %8836 = vmatpush.msra.mxu0 %v7366
      %8837 = vmatpush.msra.mxu0 %v7365
      %8838 = vmatmul.f32.gmra.mxu0 %v8774
      %v8839 = vpop.f32.mrf.mxu0
      %v8840 = vadd.f32 0.0, %v8839
      %8841 = vmatmul.f32.gmra.mxu0 %v8776
      %v8842 = vpop.f32.mrf.mxu0
      %v8843 = vadd.f32 0.0, %v8842
      %8844 = vmatmul.f32.gmra.mxu0 %v8778
      %v8845 = vpop.f32.mrf.mxu0
      %v8846 = vadd.f32 0.0, %v8845
      %8847 = vmatmul.f32.gmra.mxu0 %v8780
      %v8848 = vpop.f32.mrf.mxu0
      %v8849 = vadd.f32 0.0, %v8848
      %8850 = vmatmul.f32.gmra.mxu0 %v8782
      %v8851 = vpop.f32.mrf.mxu0
      %v8852 = vadd.f32 0.0, %v8851
      %8853 = vmatmul.f32.gmra.mxu0 %v8784
      %v8854 = vpop.f32.mrf.mxu0
      %v8855 = vadd.f32 0.0, %v8854
      %8856 = vmatmul.f32.gmra.mxu0 %v8786
      %v8857 = vpop.f32.mrf.mxu0
      %v8858 = vadd.f32 0.0, %v8857
      %8859 = vmatmul.f32.gmra.mxu0 %v8788
      %v8860 = vpop.f32.mrf.mxu0
      %v8861 = vadd.f32 0.0, %v8860
      %8862 = vmatmul.f32.gmra.mxu0 %v8790
      %v8863 = vpop.f32.mrf.mxu0
      %v8864 = vadd.f32 0.0, %v8863
      %8865 = vmatmul.f32.gmra.mxu0 %v8792
      %v8866 = vpop.f32.mrf.mxu0
      %v8867 = vadd.f32 0.0, %v8866
      %8868 = vmatmul.f32.gmra.mxu0 %v8794
      %v8869 = vpop.f32.mrf.mxu0
      %v8870 = vadd.f32 0.0, %v8869
      %8871 = vmatmul.f32.gmra.mxu0 %v8796
      %v8872 = vpop.f32.mrf.mxu0
      %v8873 = vadd.f32 0.0, %v8872
      %8874 = vmatmul.f32.gmra.mxu0 %v8798
      %v8875 = vpop.f32.mrf.mxu0
      %v8876 = vadd.f32 0.0, %v8875
      %8877 = vmatmul.f32.gmra.mxu0 %v8800
      %v8878 = vpop.f32.mrf.mxu0
      %v8879 = vadd.f32 0.0, %v8878
      %8880 = vmatmul.f32.gmra.mxu0 %v8802
      %v8881 = vpop.f32.mrf.mxu0
      %v8882 = vadd.f32 0.0, %v8881
      %8883 = vmatmul.f32.gmra.mxu0 %v8804
      %v8884 = vpop.f32.mrf.mxu0
      %v8885 = vadd.f32 0.0, %v8884
      %8886 = vmatmul.f32.gmra.mxu0 %v8806
      %v8887 = vpop.f32.mrf.mxu0
      %v8888 = vadd.f32 0.0, %v8887
      %8889 = vmatmul.f32.gmra.mxu0 %v8808
      %v8890 = vpop.f32.mrf.mxu0
      %v8891 = vadd.f32 0.0, %v8890
      %8892 = vmatmul.f32.gmra.mxu0 %v8810
      %v8893 = vpop.f32.mrf.mxu0
      %v8894 = vadd.f32 0.0, %v8893
      %8895 = vmatmul.f32.gmra.mxu0 %v8812
      %v8896 = vpop.f32.mrf.mxu0
      %v8897 = vadd.f32 0.0, %v8896
      %8898 = vmatmul.f32.gmra.mxu0 %v8814
      %v8899 = vpop.f32.mrf.mxu0
      %v8900 = vadd.f32 0.0, %v8899
      %8901 = vmatmul.f32.gmra.mxu0 %v8816
      %v8902 = vpop.f32.mrf.mxu0
      %v8903 = vadd.f32 0.0, %v8902
      %8904 = vmatmul.f32.gmra.mxu0 %v8818
      %v8905 = vpop.f32.mrf.mxu0
      %v8906 = vadd.f32 0.0, %v8905
      %8907 = vmatmul.f32.gmra.mxu0 %v8820
      %v8908 = vpop.f32.mrf.mxu0
      %v8909 = vadd.f32 0.0, %v8908
      %8910 = vdwg.mxu0
      %v8911 = vadd.f32 %v8631, %v8840
      %v8912 = vadd.f32 %v8634, %v8843
      %v8913 = vadd.f32 %v8637, %v8846
      %v8914 = vadd.f32 %v8640, %v8849
      %v8915 = vadd.f32 %v8643, %v8852
      %v8916 = vadd.f32 %v8646, %v8855
      %v8917 = vadd.f32 %v8649, %v8858
      %v8918 = vadd.f32 %v8652, %v8861
      %v8919 = vadd.f32 %v8655, %v8864
      %v8920 = vadd.f32 %v8658, %v8867
      %v8921 = vadd.f32 %v8661, %v8870
      %v8922 = vadd.f32 %v8664, %v8873
      %v8923 = vadd.f32 %v8667, %v8876
      %v8924 = vadd.f32 %v8670, %v8879
      %v8925 = vadd.f32 %v8673, %v8882
      %v8926 = vadd.f32 %v8676, %v8885
      %v8927 = vadd.f32 %v8679, %v8888
      %v8928 = vadd.f32 %v8682, %v8891
      %v8929 = vadd.f32 %v8685, %v8894
      %v8930 = vadd.f32 %v8688, %v8897
      %v8931 = vadd.f32 %v8691, %v8900
      %v8932 = vadd.f32 %v8694, %v8903
      %v8933 = vadd.f32 %v8697, %v8906
      %v8934 = vadd.f32 %v8700, %v8909
      %8935 = vmatpush.msra.mxu0 0.0
      %8936 = vmatpush.msra.mxu0 0.0
      %8937 = vmatpush.msra.mxu0 0.0
      %8938 = vmatpush.msra.mxu0 0.0
      %8939 = vmatpush.msra.mxu0 0.0
      %8940 = vmatpush.msra.mxu0 0.0
      %8941 = vmatpush.msra.mxu0 0.0
      %8942 = vmatpush.msra.mxu0 0.0
      %8943 = vmatpush.msra.mxu0 0.0
      %8944 = vmatpush.msra.mxu0 0.0
      %8945 = vmatpush.msra.mxu0 0.0
      %8946 = vmatpush.msra.mxu0 0.0
      %8947 = vmatpush.msra.mxu0 %v7534
      %8948 = vmatpush.msra.mxu0 %v7533
      %8949 = vmatpush.msra.mxu0 %v7532
      %8950 = vmatpush.msra.mxu0 %v7531
      %8951 = vmatmul.f32.gmra.mxu0 %v7726
      %v8952 = vpop.f32.mrf.mxu0
      %v8953 = vadd.f32 0.0, %v8952
      %8954 = vmatmul.f32.gmra.mxu0 %v7729
      %v8955 = vpop.f32.mrf.mxu0
      %v8956 = vadd.f32 0.0, %v8955
      %8957 = vmatmul.f32.gmra.mxu0 %v7732
      %v8958 = vpop.f32.mrf.mxu0
      %v8959 = vadd.f32 0.0, %v8958
      %8960 = vmatmul.f32.gmra.mxu0 %v7735
      %v8961 = vpop.f32.mrf.mxu0
      %v8962 = vadd.f32 0.0, %v8961
      %8963 = vmatmul.f32.gmra.mxu0 %v7738
      %v8964 = vpop.f32.mrf.mxu0
      %v8965 = vadd.f32 0.0, %v8964
      %8966 = vmatmul.f32.gmra.mxu0 %v7741
      %v8967 = vpop.f32.mrf.mxu0
      %v8968 = vadd.f32 0.0, %v8967
      %8969 = vmatmul.f32.gmra.mxu0 %v7744
      %v8970 = vpop.f32.mrf.mxu0
      %v8971 = vadd.f32 0.0, %v8970
      %8972 = vmatmul.f32.gmra.mxu0 %v7747
      %v8973 = vpop.f32.mrf.mxu0
      %v8974 = vadd.f32 0.0, %v8973
      %8975 = vmatmul.f32.gmra.mxu0 %v7750
      %v8976 = vpop.f32.mrf.mxu0
      %v8977 = vadd.f32 0.0, %v8976
      %8978 = vmatmul.f32.gmra.mxu0 %v7753
      %v8979 = vpop.f32.mrf.mxu0
      %v8980 = vadd.f32 0.0, %v8979
      %8981 = vmatmul.f32.gmra.mxu0 %v7756
      %v8982 = vpop.f32.mrf.mxu0
      %v8983 = vadd.f32 0.0, %v8982
      %8984 = vmatmul.f32.gmra.mxu0 %v7759
      %v8985 = vpop.f32.mrf.mxu0
      %v8986 = vadd.f32 0.0, %v8985
      %8987 = vmatmul.f32.gmra.mxu0 %v7762
      %v8988 = vpop.f32.mrf.mxu0
      %v8989 = vadd.f32 0.0, %v8988
      %8990 = vmatmul.f32.gmra.mxu0 %v7765
      %v8991 = vpop.f32.mrf.mxu0
      %v8992 = vadd.f32 0.0, %v8991
      %8993 = vmatmul.f32.gmra.mxu0 %v7768
      %v8994 = vpop.f32.mrf.mxu0
      %v8995 = vadd.f32 0.0, %v8994
      %8996 = vmatmul.f32.gmra.mxu0 %v7771
      %v8997 = vpop.f32.mrf.mxu0
      %v8998 = vadd.f32 0.0, %v8997
      %8999 = vmatmul.f32.gmra.mxu0 %v7774
      %v9000 = vpop.f32.mrf.mxu0
      %v9001 = vadd.f32 0.0, %v9000
      %9002 = vmatmul.f32.gmra.mxu0 %v7777
      %v9003 = vpop.f32.mrf.mxu0
      %v9004 = vadd.f32 0.0, %v9003
      %9005 = vmatmul.f32.gmra.mxu0 %v7780
      %v9006 = vpop.f32.mrf.mxu0
      %v9007 = vadd.f32 0.0, %v9006
      %9008 = vmatmul.f32.gmra.mxu0 %v7783
      %v9009 = vpop.f32.mrf.mxu0
      %v9010 = vadd.f32 0.0, %v9009
      %9011 = vmatmul.f32.gmra.mxu0 %v7786
      %v9012 = vpop.f32.mrf.mxu0
      %v9013 = vadd.f32 0.0, %v9012
      %9014 = vmatmul.f32.gmra.mxu0 %v7789
      %v9015 = vpop.f32.mrf.mxu0
      %v9016 = vadd.f32 0.0, %v9015
      %9017 = vmatmul.f32.gmra.mxu0 %v7792
      %v9018 = vpop.f32.mrf.mxu0
      %v9019 = vadd.f32 0.0, %v9018
      %9020 = vmatmul.f32.gmra.mxu0 %v7795
      %v9021 = vpop.f32.mrf.mxu0
      %v9022 = vadd.f32 0.0, %v9021
      %9023 = vdwg.mxu0
      %v9024 = vadd.f32 %v8911, %v8953
      %v9025 = vadd.f32 %v8912, %v8956
      %v9026 = vadd.f32 %v8913, %v8959
      %v9027 = vadd.f32 %v8914, %v8962
      %v9028 = vadd.f32 %v8915, %v8965
      %v9029 = vadd.f32 %v8916, %v8968
      %v9030 = vadd.f32 %v8917, %v8971
      %v9031 = vadd.f32 %v8918, %v8974
      %v9032 = vadd.f32 %v8919, %v8977
      %v9033 = vadd.f32 %v8920, %v8980
      %v9034 = vadd.f32 %v8921, %v8983
      %v9035 = vadd.f32 %v8922, %v8986
      %v9036 = vadd.f32 %v8923, %v8989
      %v9037 = vadd.f32 %v8924, %v8992
      %v9038 = vadd.f32 %v8925, %v8995
      %v9039 = vadd.f32 %v8926, %v8998
      %v9040 = vadd.f32 %v8927, %v9001
      %v9041 = vadd.f32 %v8928, %v9004
      %v9042 = vadd.f32 %v8929, %v9007
      %v9043 = vadd.f32 %v8930, %v9010
      %v9044 = vadd.f32 %v8931, %v9013
      %v9045 = vadd.f32 %v8932, %v9016
      %v9046 = vadd.f32 %v8933, %v9019
      %v9047 = vadd.f32 %v8934, %v9022
      %9048 = vmatpush.msra.mxu0 0.0
      %9049 = vmatpush.msra.mxu0 0.0
      %9050 = vmatpush.msra.mxu0 0.0
      %9051 = vmatpush.msra.mxu0 0.0
      %9052 = vmatpush.msra.mxu0 0.0
      %9053 = vmatpush.msra.mxu0 0.0
      %9054 = vmatpush.msra.mxu0 0.0
      %9055 = vmatpush.msra.mxu0 0.0
      %9056 = vmatpush.msra.mxu0 0.0
      %9057 = vmatpush.msra.mxu0 0.0
      %9058 = vmatpush.msra.mxu0 0.0
      %9059 = vmatpush.msra.mxu0 0.0
      %9060 = vmatpush.msra.mxu0 %v7724
      %9061 = vmatpush.msra.mxu0 %v7723
      %9062 = vmatpush.msra.mxu0 %v7722
      %9063 = vmatpush.msra.mxu0 %v7721
      %9064 = vmatmul.f32.gmra.mxu0 %v7987
      %v9065 = vpop.f32.mrf.mxu0
      %v9066 = vadd.f32 0.0, %v9065
      %9067 = vmatmul.f32.gmra.mxu0 %v7989
      %v9068 = vpop.f32.mrf.mxu0
      %v9069 = vadd.f32 0.0, %v9068
      %9070 = vmatmul.f32.gmra.mxu0 %v7991
      %v9071 = vpop.f32.mrf.mxu0
      %v9072 = vadd.f32 0.0, %v9071
      %9073 = vmatmul.f32.gmra.mxu0 %v7993
      %v9074 = vpop.f32.mrf.mxu0
      %v9075 = vadd.f32 0.0, %v9074
      %9076 = vmatmul.f32.gmra.mxu0 %v7995
      %v9077 = vpop.f32.mrf.mxu0
      %v9078 = vadd.f32 0.0, %v9077
      %9079 = vmatmul.f32.gmra.mxu0 %v7997
      %v9080 = vpop.f32.mrf.mxu0
      %v9081 = vadd.f32 0.0, %v9080
      %9082 = vmatmul.f32.gmra.mxu0 %v7999
      %v9083 = vpop.f32.mrf.mxu0
      %v9084 = vadd.f32 0.0, %v9083
      %9085 = vmatmul.f32.gmra.mxu0 %v8001
      %v9086 = vpop.f32.mrf.mxu0
      %v9087 = vadd.f32 0.0, %v9086
      %9088 = vmatmul.f32.gmra.mxu0 %v8003
      %v9089 = vpop.f32.mrf.mxu0
      %v9090 = vadd.f32 0.0, %v9089
      %9091 = vmatmul.f32.gmra.mxu0 %v8005
      %v9092 = vpop.f32.mrf.mxu0
      %v9093 = vadd.f32 0.0, %v9092
      %9094 = vmatmul.f32.gmra.mxu0 %v8007
      %v9095 = vpop.f32.mrf.mxu0
      %v9096 = vadd.f32 0.0, %v9095
      %9097 = vmatmul.f32.gmra.mxu0 %v8009
      %v9098 = vpop.f32.mrf.mxu0
      %v9099 = vadd.f32 0.0, %v9098
      %9100 = vmatmul.f32.gmra.mxu0 %v8011
      %v9101 = vpop.f32.mrf.mxu0
      %v9102 = vadd.f32 0.0, %v9101
      %9103 = vmatmul.f32.gmra.mxu0 %v8013
      %v9104 = vpop.f32.mrf.mxu0
      %v9105 = vadd.f32 0.0, %v9104
      %9106 = vmatmul.f32.gmra.mxu0 %v8015
      %v9107 = vpop.f32.mrf.mxu0
      %v9108 = vadd.f32 0.0, %v9107
      %9109 = vmatmul.f32.gmra.mxu0 %v8017
      %v9110 = vpop.f32.mrf.mxu0
      %v9111 = vadd.f32 0.0, %v9110
      %9112 = vmatmul.f32.gmra.mxu0 %v8019
      %v9113 = vpop.f32.mrf.mxu0
      %v9114 = vadd.f32 0.0, %v9113
      %9115 = vmatmul.f32.gmra.mxu0 %v8021
      %v9116 = vpop.f32.mrf.mxu0
      %v9117 = vadd.f32 0.0, %v9116
      %9118 = vmatmul.f32.gmra.mxu0 %v8023
      %v9119 = vpop.f32.mrf.mxu0
      %v9120 = vadd.f32 0.0, %v9119
      %9121 = vmatmul.f32.gmra.mxu0 %v8025
      %v9122 = vpop.f32.mrf.mxu0
      %v9123 = vadd.f32 0.0, %v9122
      %9124 = vmatmul.f32.gmra.mxu0 %v8027
      %v9125 = vpop.f32.mrf.mxu0
      %v9126 = vadd.f32 0.0, %v9125
      %9127 = vmatmul.f32.gmra.mxu0 %v8029
      %v9128 = vpop.f32.mrf.mxu0
      %v9129 = vadd.f32 0.0, %v9128
      %9130 = vmatmul.f32.gmra.mxu0 %v8031
      %v9131 = vpop.f32.mrf.mxu0
      %v9132 = vadd.f32 0.0, %v9131
      %9133 = vmatmul.f32.gmra.mxu0 %v8033
      %v9134 = vpop.f32.mrf.mxu0
      %v9135 = vadd.f32 0.0, %v9134
      %9136 = vdwg.mxu0
      %v9137 = vadd.f32 %v9024, %v9066
      %v9138 = vadd.f32 %v9025, %v9069
      %v9139 = vadd.f32 %v9026, %v9072
      %v9140 = vadd.f32 %v9027, %v9075
      %v9141 = vadd.f32 %v9028, %v9078
      %v9142 = vadd.f32 %v9029, %v9081
      %v9143 = vadd.f32 %v9030, %v9084
      %v9144 = vadd.f32 %v9031, %v9087
      %v9145 = vadd.f32 %v9032, %v9090
      %v9146 = vadd.f32 %v9033, %v9093
      %v9147 = vadd.f32 %v9034, %v9096
      %v9148 = vadd.f32 %v9035, %v9099
      %v9149 = vadd.f32 %v9036, %v9102
      %v9150 = vadd.f32 %v9037, %v9105
      %v9151 = vadd.f32 %v9038, %v9108
      %v9152 = vadd.f32 %v9039, %v9111
      %v9153 = vadd.f32 %v9040, %v9114
      %v9154 = vadd.f32 %v9041, %v9117
      %v9155 = vadd.f32 %v9042, %v9120
      %v9156 = vadd.f32 %v9043, %v9123
      %v9157 = vadd.f32 %v9044, %v9126
      %v9158 = vadd.f32 %v9045, %v9129
      %v9159 = vadd.f32 %v9046, %v9132
      %v9160 = vadd.f32 %v9047, %v9135
      %v9173 = vrot.slane %v6921, 1
      %v9174 = vrot.slane %v6922, 1
      %v9175 = vsel %vm1032, %v9173, %v9174
      %v9176 = vrot.slane %v6923, 1
      %v9177 = vsel %vm1032, %v9174, %v9176
      %v9178 = vrot.slane %v6924, 1
      %v9179 = vrot.slane %v6925, 1
      %v9180 = vsel %vm1032, %v9178, %v9179
      %v9181 = vrot.slane %v6926, 1
      %v9182 = vsel %vm1032, %v9179, %v9181
      %v9183 = vrot.slane %v6927, 1
      %v9184 = vrot.slane %v6928, 1
      %v9185 = vsel %vm1032, %v9183, %v9184
      %v9186 = vrot.slane %v6929, 1
      %v9187 = vsel %vm1032, %v9184, %v9186
      %v9188 = vrot.slane %v6930, 1
      %v9189 = vrot.slane %v6931, 1
      %v9190 = vsel %vm1032, %v9188, %v9189
      %v9191 = vrot.slane %v6932, 1
      %v9192 = vsel %vm1032, %v9189, %v9191
      %v9193 = vrot.slane %v6933, 1
      %v9194 = vrot.slane %v6934, 1
      %v9195 = vsel %vm1032, %v9193, %v9194
      %v9196 = vrot.slane %v6935, 1
      %v9197 = vsel %vm1032, %v9194, %v9196
      %v9198 = vrot.slane %v6936, 1
      %v9199 = vrot.slane %v6937, 1
      %v9200 = vsel %vm1032, %v9198, %v9199
      %v9201 = vrot.slane %v6938, 1
      %v9202 = vsel %vm1032, %v9199, %v9201
      %v9203 = vrot.slane %v6939, 1
      %v9204 = vrot.slane %v6940, 1
      %v9205 = vsel %vm1032, %v9203, %v9204
      %v9206 = vrot.slane %v6941, 1
      %v9207 = vsel %vm1032, %v9204, %v9206
      %v9208 = vrot.slane %v6942, 1
      %v9209 = vrot.slane %v6943, 1
      %v9210 = vsel %vm1032, %v9208, %v9209
      %v9211 = vrot.slane %v6944, 1
      %v9212 = vsel %vm1032, %v9209, %v9211
      %v9213 = vrot.slane %v6945, 1
      %v9214 = vrot.slane %v6946, 1
      %v9215 = vsel %vm1032, %v9213, %v9214
      %v9216 = vrot.slane %v6947, 1
      %v9217 = vsel %vm1032, %v9214, %v9216
      %v9218 = vrot.slane %v6948, 1
      %v9219 = vrot.slane %v6949, 1
      %v9220 = vsel %vm1032, %v9218, %v9219
      %v9221 = vrot.slane %v6950, 1
      %v9222 = vsel %vm1032, %v9219, %v9221
      %v9223 = vrot.slane %v6951, 1
      %v9224 = vrot.slane %v6952, 1
      %v9225 = vsel %vm1032, %v9223, %v9224
      %v9226 = vrot.slane %v6953, 1
      %v9227 = vsel %vm1032, %v9224, %v9226
      %v9228 = vrot.slane %v6954, 1
      %v9229 = vrot.slane %v6955, 1
      %v9230 = vsel %vm1032, %v9228, %v9229
      %v9231 = vrot.slane %v6956, 1
      %v9232 = vsel %vm1032, %v9229, %v9231
      %v9233 = vsel %vm6969, %v9175, 0
      %v9235 = vsel %vm6969, %v9177, 0
      %v9237 = vsel %vm6969, %v9180, 0
      %v9239 = vsel %vm6969, %v9182, 0
      %v9241 = vsel %vm6969, %v9185, 0
      %v9243 = vsel %vm6969, %v9187, 0
      %v9245 = vsel %vm6969, %v9190, 0
      %v9247 = vsel %vm6969, %v9192, 0
      %v9249 = vsel %vm6969, %v9195, 0
      %v9251 = vsel %vm6969, %v9197, 0
      %v9253 = vsel %vm6969, %v9200, 0
      %v9255 = vsel %vm6969, %v9202, 0
      %v9257 = vsel %vm6969, %v9205, 0
      %v9259 = vsel %vm6969, %v9207, 0
      %v9261 = vsel %vm6969, %v9210, 0
      %v9263 = vsel %vm6969, %v9212, 0
      %v9265 = vsel %vm6969, %v9215, 0
      %v9267 = vsel %vm6969, %v9217, 0
      %v9269 = vsel %vm6969, %v9220, 0
      %v9271 = vsel %vm6969, %v9222, 0
      %v9273 = vsel %vm6969, %v9225, 0
      %v9275 = vsel %vm6969, %v9227, 0
      %v9277 = vsel %vm6969, %v9230, 0
      %v9279 = vsel %vm6969, %v9232, 0
      %9281 = vmatpush.msra.mxu0 0.0
      %9282 = vmatpush.msra.mxu0 0.0
      %9283 = vmatpush.msra.mxu0 0.0
      %9284 = vmatpush.msra.mxu0 0.0
      %9285 = vmatpush.msra.mxu0 0.0
      %9286 = vmatpush.msra.mxu0 0.0
      %9287 = vmatpush.msra.mxu0 0.0
      %9288 = vmatpush.msra.mxu0 0.0
      %9289 = vmatpush.msra.mxu0 0.0
      %9290 = vmatpush.msra.mxu0 0.0
      %9291 = vmatpush.msra.mxu0 0.0
      %9292 = vmatpush.msra.mxu0 0.0
      %9293 = vmatpush.msra.mxu0 %v7986
      %9294 = vmatpush.msra.mxu0 %v7985
      %9295 = vmatpush.msra.mxu0 %v7984
      %9296 = vmatpush.msra.mxu0 %v7983
      %9297 = vmatmul.f32.gmra.mxu0 %v9233
      %v9298 = vpop.f32.mrf.mxu0
      %v9299 = vadd.f32 0.0, %v9298
      %9300 = vmatmul.f32.gmra.mxu0 %v9235
      %v9301 = vpop.f32.mrf.mxu0
      %v9302 = vadd.f32 0.0, %v9301
      %9303 = vmatmul.f32.gmra.mxu0 %v9237
      %v9304 = vpop.f32.mrf.mxu0
      %v9305 = vadd.f32 0.0, %v9304
      %9306 = vmatmul.f32.gmra.mxu0 %v9239
      %v9307 = vpop.f32.mrf.mxu0
      %v9308 = vadd.f32 0.0, %v9307
      %9309 = vmatmul.f32.gmra.mxu0 %v9241
      %v9310 = vpop.f32.mrf.mxu0
      %v9311 = vadd.f32 0.0, %v9310
      %9312 = vmatmul.f32.gmra.mxu0 %v9243
      %v9313 = vpop.f32.mrf.mxu0
      %v9314 = vadd.f32 0.0, %v9313
      %9315 = vmatmul.f32.gmra.mxu0 %v9245
      %v9316 = vpop.f32.mrf.mxu0
      %v9317 = vadd.f32 0.0, %v9316
      %9318 = vmatmul.f32.gmra.mxu0 %v9247
      %v9319 = vpop.f32.mrf.mxu0
      %v9320 = vadd.f32 0.0, %v9319
      %9321 = vmatmul.f32.gmra.mxu0 %v9249
      %v9322 = vpop.f32.mrf.mxu0
      %v9323 = vadd.f32 0.0, %v9322
      %9324 = vmatmul.f32.gmra.mxu0 %v9251
      %v9325 = vpop.f32.mrf.mxu0
      %v9326 = vadd.f32 0.0, %v9325
      %9327 = vmatmul.f32.gmra.mxu0 %v9253
      %v9328 = vpop.f32.mrf.mxu0
      %v9329 = vadd.f32 0.0, %v9328
      %9330 = vmatmul.f32.gmra.mxu0 %v9255
      %v9331 = vpop.f32.mrf.mxu0
      %v9332 = vadd.f32 0.0, %v9331
      %9333 = vmatmul.f32.gmra.mxu0 %v9257
      %v9334 = vpop.f32.mrf.mxu0
      %v9335 = vadd.f32 0.0, %v9334
      %9336 = vmatmul.f32.gmra.mxu0 %v9259
      %v9337 = vpop.f32.mrf.mxu0
      %v9338 = vadd.f32 0.0, %v9337
      %9339 = vmatmul.f32.gmra.mxu0 %v9261
      %v9340 = vpop.f32.mrf.mxu0
      %v9341 = vadd.f32 0.0, %v9340
      %9342 = vmatmul.f32.gmra.mxu0 %v9263
      %v9343 = vpop.f32.mrf.mxu0
      %v9344 = vadd.f32 0.0, %v9343
      %9345 = vmatmul.f32.gmra.mxu0 %v9265
      %v9346 = vpop.f32.mrf.mxu0
      %v9347 = vadd.f32 0.0, %v9346
      %9348 = vmatmul.f32.gmra.mxu0 %v9267
      %v9349 = vpop.f32.mrf.mxu0
      %v9350 = vadd.f32 0.0, %v9349
      %9351 = vmatmul.f32.gmra.mxu0 %v9269
      %v9352 = vpop.f32.mrf.mxu0
      %v9353 = vadd.f32 0.0, %v9352
      %9354 = vmatmul.f32.gmra.mxu0 %v9271
      %v9355 = vpop.f32.mrf.mxu0
      %v9356 = vadd.f32 0.0, %v9355
      %9357 = vmatmul.f32.gmra.mxu0 %v9273
      %v9358 = vpop.f32.mrf.mxu0
      %v9359 = vadd.f32 0.0, %v9358
      %9360 = vmatmul.f32.gmra.mxu0 %v9275
      %v9361 = vpop.f32.mrf.mxu0
      %v9362 = vadd.f32 0.0, %v9361
      %9363 = vmatmul.f32.gmra.mxu0 %v9277
      %v9364 = vpop.f32.mrf.mxu0
      %v9365 = vadd.f32 0.0, %v9364
      %9366 = vmatmul.f32.gmra.mxu0 %v9279
      %v9367 = vpop.f32.mrf.mxu0
      %v9368 = vadd.f32 0.0, %v9367
      %9369 = vdwg.mxu0
      %v9370 = vadd.f32 %v9137, %v9299
      %v9371 = vadd.f32 %v9138, %v9302
      %v9372 = vadd.f32 %v9139, %v9305
      %v9373 = vadd.f32 %v9140, %v9308
      %v9374 = vadd.f32 %v9141, %v9311
      %v9375 = vadd.f32 %v9142, %v9314
      %v9376 = vadd.f32 %v9143, %v9317
      %v9377 = vadd.f32 %v9144, %v9320
      %v9378 = vadd.f32 %v9145, %v9323
      %v9379 = vadd.f32 %v9146, %v9326
      %v9380 = vadd.f32 %v9147, %v9329
      %v9381 = vadd.f32 %v9148, %v9332
      %v9382 = vadd.f32 %v9149, %v9335
      %v9383 = vadd.f32 %v9150, %v9338
      %v9384 = vadd.f32 %v9151, %v9341
      %v9385 = vadd.f32 %v9152, %v9344
      %v9386 = vadd.f32 %v9153, %v9347
      %v9387 = vadd.f32 %v9154, %v9350
      %v9388 = vadd.f32 %v9155, %v9353
      %v9389 = vadd.f32 %v9156, %v9356
      %v9390 = vadd.f32 %v9157, %v9359
      %v9391 = vadd.f32 %v9158, %v9362
      %v9392 = vadd.f32 %v9159, %v9365
      %v9393 = vadd.f32 %v9160, %v9368
      %9394 = vmatpush.msra.mxu0 0.0
      %9395 = vmatpush.msra.mxu0 0.0
      %9396 = vmatpush.msra.mxu0 0.0
      %9397 = vmatpush.msra.mxu0 0.0
      %9398 = vmatpush.msra.mxu0 0.0
      %9399 = vmatpush.msra.mxu0 0.0
      %9400 = vmatpush.msra.mxu0 0.0
      %9401 = vmatpush.msra.mxu0 0.0
      %9402 = vmatpush.msra.mxu0 0.0
      %9403 = vmatpush.msra.mxu0 0.0
      %9404 = vmatpush.msra.mxu0 0.0
      %9405 = vmatpush.msra.mxu0 0.0
      %9406 = vmatpush.msra.mxu0 %v8152
      %9407 = vmatpush.msra.mxu0 %v8151
      %9408 = vmatpush.msra.mxu0 %v8150
      %9409 = vmatpush.msra.mxu0 %v8149
      %9410 = vmatmul.f32.gmra.mxu0 %v6977
      %v9411 = vpop.f32.mrf.mxu0
      %v9412 = vadd.f32 0.0, %v9411
      %9413 = vmatmul.f32.gmra.mxu0 %v6980
      %v9414 = vpop.f32.mrf.mxu0
      %v9415 = vadd.f32 0.0, %v9414
      %9416 = vmatmul.f32.gmra.mxu0 %v6983
      %v9417 = vpop.f32.mrf.mxu0
      %v9418 = vadd.f32 0.0, %v9417
      %9419 = vmatmul.f32.gmra.mxu0 %v6986
      %v9420 = vpop.f32.mrf.mxu0
      %v9421 = vadd.f32 0.0, %v9420
      %9422 = vmatmul.f32.gmra.mxu0 %v6989
      %v9423 = vpop.f32.mrf.mxu0
      %v9424 = vadd.f32 0.0, %v9423
      %9425 = vmatmul.f32.gmra.mxu0 %v6992
      %v9426 = vpop.f32.mrf.mxu0
      %v9427 = vadd.f32 0.0, %v9426
      %9428 = vmatmul.f32.gmra.mxu0 %v6995
      %v9429 = vpop.f32.mrf.mxu0
      %v9430 = vadd.f32 0.0, %v9429
      %9431 = vmatmul.f32.gmra.mxu0 %v6998
      %v9432 = vpop.f32.mrf.mxu0
      %v9433 = vadd.f32 0.0, %v9432
      %9434 = vmatmul.f32.gmra.mxu0 %v7001
      %v9435 = vpop.f32.mrf.mxu0
      %v9436 = vadd.f32 0.0, %v9435
      %9437 = vmatmul.f32.gmra.mxu0 %v7004
      %v9438 = vpop.f32.mrf.mxu0
      %v9439 = vadd.f32 0.0, %v9438
      %9440 = vmatmul.f32.gmra.mxu0 %v7007
      %v9441 = vpop.f32.mrf.mxu0
      %v9442 = vadd.f32 0.0, %v9441
      %9443 = vmatmul.f32.gmra.mxu0 %v7010
      %v9444 = vpop.f32.mrf.mxu0
      %v9445 = vadd.f32 0.0, %v9444
      %9446 = vmatmul.f32.gmra.mxu0 %v7013
      %v9447 = vpop.f32.mrf.mxu0
      %v9448 = vadd.f32 0.0, %v9447
      %9449 = vmatmul.f32.gmra.mxu0 %v7016
      %v9450 = vpop.f32.mrf.mxu0
      %v9451 = vadd.f32 0.0, %v9450
      %9452 = vmatmul.f32.gmra.mxu0 %v7019
      %v9453 = vpop.f32.mrf.mxu0
      %v9454 = vadd.f32 0.0, %v9453
      %9455 = vmatmul.f32.gmra.mxu0 %v7022
      %v9456 = vpop.f32.mrf.mxu0
      %v9457 = vadd.f32 0.0, %v9456
      %9458 = vmatmul.f32.gmra.mxu0 %v7025
      %v9459 = vpop.f32.mrf.mxu0
      %v9460 = vadd.f32 0.0, %v9459
      %9461 = vmatmul.f32.gmra.mxu0 %v7028
      %v9462 = vpop.f32.mrf.mxu0
      %v9463 = vadd.f32 0.0, %v9462
      %9464 = vmatmul.f32.gmra.mxu0 %v7031
      %v9465 = vpop.f32.mrf.mxu0
      %v9466 = vadd.f32 0.0, %v9465
      %9467 = vmatmul.f32.gmra.mxu0 %v7034
      %v9468 = vpop.f32.mrf.mxu0
      %v9469 = vadd.f32 0.0, %v9468
      %9470 = vmatmul.f32.gmra.mxu0 %v7037
      %v9471 = vpop.f32.mrf.mxu0
      %v9472 = vadd.f32 0.0, %v9471
      %9473 = vmatmul.f32.gmra.mxu0 %v7040
      %v9474 = vpop.f32.mrf.mxu0
      %v9475 = vadd.f32 0.0, %v9474
      %9476 = vmatmul.f32.gmra.mxu0 %v8278
      %v9477 = vpop.f32.mrf.mxu0
      %v9478 = vadd.f32 0.0, %v9477
      %9479 = vmatmul.f32.gmra.mxu0 %v8281
      %v9480 = vpop.f32.mrf.mxu0
      %v9481 = vadd.f32 0.0, %v9480
      %9482 = vdwg.mxu0
      %v9483 = vadd.f32 %v9370, %v9412
      %v9484 = vadd.f32 %v9371, %v9415
      %v9485 = vadd.f32 %v9372, %v9418
      %v9486 = vadd.f32 %v9373, %v9421
      %v9487 = vadd.f32 %v9374, %v9424
      %v9488 = vadd.f32 %v9375, %v9427
      %v9489 = vadd.f32 %v9376, %v9430
      %v9490 = vadd.f32 %v9377, %v9433
      %v9491 = vadd.f32 %v9378, %v9436
      %v9492 = vadd.f32 %v9379, %v9439
      %v9493 = vadd.f32 %v9380, %v9442
      %v9494 = vadd.f32 %v9381, %v9445
      %v9495 = vadd.f32 %v9382, %v9448
      %v9496 = vadd.f32 %v9383, %v9451
      %v9497 = vadd.f32 %v9384, %v9454
      %v9498 = vadd.f32 %v9385, %v9457
      %v9499 = vadd.f32 %v9386, %v9460
      %v9500 = vadd.f32 %v9387, %v9463
      %v9501 = vadd.f32 %v9388, %v9466
      %v9502 = vadd.f32 %v9389, %v9469
      %v9503 = vadd.f32 %v9390, %v9472
      %v9504 = vadd.f32 %v9391, %v9475
      %v9505 = vadd.f32 %v9392, %v9478
      %v9506 = vadd.f32 %v9393, %v9481
      %9507 = vmatpush.msra.mxu0 0.0
      %9508 = vmatpush.msra.mxu0 0.0
      %9509 = vmatpush.msra.mxu0 0.0
      %9510 = vmatpush.msra.mxu0 0.0
      %9511 = vmatpush.msra.mxu0 0.0
      %9512 = vmatpush.msra.mxu0 0.0
      %9513 = vmatpush.msra.mxu0 0.0
      %9514 = vmatpush.msra.mxu0 0.0
      %9515 = vmatpush.msra.mxu0 0.0
      %9516 = vmatpush.msra.mxu0 0.0
      %9517 = vmatpush.msra.mxu0 0.0
      %9518 = vmatpush.msra.mxu0 0.0
      %9519 = vmatpush.msra.mxu0 %v8276
      %9520 = vmatpush.msra.mxu0 %v8275
      %9521 = vmatpush.msra.mxu0 %v8274
      %9522 = vmatpush.msra.mxu0 %v8273
      %9523 = vmatmul.f32.gmra.mxu0 %v7373
      %v9524 = vpop.f32.mrf.mxu0
      %v9525 = vadd.f32 0.0, %v9524
      %9526 = vmatmul.f32.gmra.mxu0 %v7375
      %v9527 = vpop.f32.mrf.mxu0
      %v9528 = vadd.f32 0.0, %v9527
      %9529 = vmatmul.f32.gmra.mxu0 %v7377
      %v9530 = vpop.f32.mrf.mxu0
      %v9531 = vadd.f32 0.0, %v9530
      %9532 = vmatmul.f32.gmra.mxu0 %v7379
      %v9533 = vpop.f32.mrf.mxu0
      %v9534 = vadd.f32 0.0, %v9533
      %9535 = vmatmul.f32.gmra.mxu0 %v7381
      %v9536 = vpop.f32.mrf.mxu0
      %v9537 = vadd.f32 0.0, %v9536
      %9538 = vmatmul.f32.gmra.mxu0 %v7383
      %v9539 = vpop.f32.mrf.mxu0
      %v9540 = vadd.f32 0.0, %v9539
      %9541 = vmatmul.f32.gmra.mxu0 %v7385
      %v9542 = vpop.f32.mrf.mxu0
      %v9543 = vadd.f32 0.0, %v9542
      %9544 = vmatmul.f32.gmra.mxu0 %v7387
      %v9545 = vpop.f32.mrf.mxu0
      %v9546 = vadd.f32 0.0, %v9545
      %9547 = vmatmul.f32.gmra.mxu0 %v7389
      %v9548 = vpop.f32.mrf.mxu0
      %v9549 = vadd.f32 0.0, %v9548
      %9550 = vmatmul.f32.gmra.mxu0 %v7391
      %v9551 = vpop.f32.mrf.mxu0
      %v9552 = vadd.f32 0.0, %v9551
      %9553 = vmatmul.f32.gmra.mxu0 %v7393
      %v9554 = vpop.f32.mrf.mxu0
      %v9555 = vadd.f32 0.0, %v9554
      %9556 = vmatmul.f32.gmra.mxu0 %v7395
      %v9557 = vpop.f32.mrf.mxu0
      %v9558 = vadd.f32 0.0, %v9557
      %9559 = vmatmul.f32.gmra.mxu0 %v7397
      %v9560 = vpop.f32.mrf.mxu0
      %v9561 = vadd.f32 0.0, %v9560
      %9562 = vmatmul.f32.gmra.mxu0 %v7399
      %v9563 = vpop.f32.mrf.mxu0
      %v9564 = vadd.f32 0.0, %v9563
      %9565 = vmatmul.f32.gmra.mxu0 %v7401
      %v9566 = vpop.f32.mrf.mxu0
      %v9567 = vadd.f32 0.0, %v9566
      %9568 = vmatmul.f32.gmra.mxu0 %v7403
      %v9569 = vpop.f32.mrf.mxu0
      %v9570 = vadd.f32 0.0, %v9569
      %9571 = vmatmul.f32.gmra.mxu0 %v7405
      %v9572 = vpop.f32.mrf.mxu0
      %v9573 = vadd.f32 0.0, %v9572
      %9574 = vmatmul.f32.gmra.mxu0 %v7407
      %v9575 = vpop.f32.mrf.mxu0
      %v9576 = vadd.f32 0.0, %v9575
      %9577 = vmatmul.f32.gmra.mxu0 %v7409
      %v9578 = vpop.f32.mrf.mxu0
      %v9579 = vadd.f32 0.0, %v9578
      %9580 = vmatmul.f32.gmra.mxu0 %v7411
      %v9581 = vpop.f32.mrf.mxu0
      %v9582 = vadd.f32 0.0, %v9581
      %9583 = vmatmul.f32.gmra.mxu0 %v7413
      %v9584 = vpop.f32.mrf.mxu0
      %v9585 = vadd.f32 0.0, %v9584
      %9586 = vmatmul.f32.gmra.mxu0 %v7415
      %v9587 = vpop.f32.mrf.mxu0
      %v9588 = vadd.f32 0.0, %v9587
      %9589 = vmatmul.f32.gmra.mxu0 %v8407
      %v9590 = vpop.f32.mrf.mxu0
      %v9591 = vadd.f32 0.0, %v9590
      %9592 = vmatmul.f32.gmra.mxu0 %v8409
      %v9593 = vpop.f32.mrf.mxu0
      %v9594 = vadd.f32 0.0, %v9593
      %9595 = vdwg.mxu0
      %v9596 = vadd.f32 %v9483, %v9525
      %v9597 = vadd.f32 %v9484, %v9528
      %v9598 = vadd.f32 %v9485, %v9531
      %v9599 = vadd.f32 %v9486, %v9534
      %v9600 = vadd.f32 %v9487, %v9537
      %v9601 = vadd.f32 %v9488, %v9540
      %v9602 = vadd.f32 %v9489, %v9543
      %v9603 = vadd.f32 %v9490, %v9546
      %v9604 = vadd.f32 %v9491, %v9549
      %v9605 = vadd.f32 %v9492, %v9552
      %v9606 = vadd.f32 %v9493, %v9555
      %v9607 = vadd.f32 %v9494, %v9558
      %v9608 = vadd.f32 %v9495, %v9561
      %v9609 = vadd.f32 %v9496, %v9564
      %v9610 = vadd.f32 %v9497, %v9567
      %v9611 = vadd.f32 %v9498, %v9570
      %v9612 = vadd.f32 %v9499, %v9573
      %v9613 = vadd.f32 %v9500, %v9576
      %v9614 = vadd.f32 %v9501, %v9579
      %v9615 = vadd.f32 %v9502, %v9582
      %v9616 = vadd.f32 %v9503, %v9585
      %v9617 = vadd.f32 %v9504, %v9588
      %v9618 = vadd.f32 %v9505, %v9591
      %v9619 = vadd.f32 %v9506, %v9594
      %v9621 = vrot.slane %v4080, 1
      %v9622 = vrot.slane %v4081, 1
      %v9623 = vsel %vm1032, %v9621, %v9622
      %v9624 = vrot.slane %v4082, 1
      %v9625 = vsel %vm1032, %v9622, %v9624
      %v9626 = vsel %vm6969, %v9623, 0
      %v9628 = vsel %vm6969, %v9625, 0
      %9630 = vmatpush.msra.mxu0 0.0
      %9631 = vmatpush.msra.mxu0 0.0
      %9632 = vmatpush.msra.mxu0 0.0
      %9633 = vmatpush.msra.mxu0 0.0
      %9634 = vmatpush.msra.mxu0 0.0
      %9635 = vmatpush.msra.mxu0 0.0
      %9636 = vmatpush.msra.mxu0 0.0
      %9637 = vmatpush.msra.mxu0 0.0
      %9638 = vmatpush.msra.mxu0 0.0
      %9639 = vmatpush.msra.mxu0 0.0
      %9640 = vmatpush.msra.mxu0 0.0
      %9641 = vmatpush.msra.mxu0 0.0
      %9642 = vmatpush.msra.mxu0 %v8406
      %9643 = vmatpush.msra.mxu0 %v8405
      %9644 = vmatpush.msra.mxu0 %v8404
      %9645 = vmatpush.msra.mxu0 %v8403
      %9646 = vmatmul.f32.gmra.mxu0 %v8778
      %v9647 = vpop.f32.mrf.mxu0
      %v9648 = vadd.f32 0.0, %v9647
      %9649 = vmatmul.f32.gmra.mxu0 %v8780
      %v9650 = vpop.f32.mrf.mxu0
      %v9651 = vadd.f32 0.0, %v9650
      %9652 = vmatmul.f32.gmra.mxu0 %v8782
      %v9653 = vpop.f32.mrf.mxu0
      %v9654 = vadd.f32 0.0, %v9653
      %9655 = vmatmul.f32.gmra.mxu0 %v8784
      %v9656 = vpop.f32.mrf.mxu0
      %v9657 = vadd.f32 0.0, %v9656
      %9658 = vmatmul.f32.gmra.mxu0 %v8786
      %v9659 = vpop.f32.mrf.mxu0
      %v9660 = vadd.f32 0.0, %v9659
      %9661 = vmatmul.f32.gmra.mxu0 %v8788
      %v9662 = vpop.f32.mrf.mxu0
      %v9663 = vadd.f32 0.0, %v9662
      %9664 = vmatmul.f32.gmra.mxu0 %v8790
      %v9665 = vpop.f32.mrf.mxu0
      %v9666 = vadd.f32 0.0, %v9665
      %9667 = vmatmul.f32.gmra.mxu0 %v8792
      %v9668 = vpop.f32.mrf.mxu0
      %v9669 = vadd.f32 0.0, %v9668
      %9670 = vmatmul.f32.gmra.mxu0 %v8794
      %v9671 = vpop.f32.mrf.mxu0
      %v9672 = vadd.f32 0.0, %v9671
      %9673 = vmatmul.f32.gmra.mxu0 %v8796
      %v9674 = vpop.f32.mrf.mxu0
      %v9675 = vadd.f32 0.0, %v9674
      %9676 = vmatmul.f32.gmra.mxu0 %v8798
      %v9677 = vpop.f32.mrf.mxu0
      %v9678 = vadd.f32 0.0, %v9677
      %9679 = vmatmul.f32.gmra.mxu0 %v8800
      %v9680 = vpop.f32.mrf.mxu0
      %v9681 = vadd.f32 0.0, %v9680
      %9682 = vmatmul.f32.gmra.mxu0 %v8802
      %v9683 = vpop.f32.mrf.mxu0
      %v9684 = vadd.f32 0.0, %v9683
      %9685 = vmatmul.f32.gmra.mxu0 %v8804
      %v9686 = vpop.f32.mrf.mxu0
      %v9687 = vadd.f32 0.0, %v9686
      %9688 = vmatmul.f32.gmra.mxu0 %v8806
      %v9689 = vpop.f32.mrf.mxu0
      %v9690 = vadd.f32 0.0, %v9689
      %9691 = vmatmul.f32.gmra.mxu0 %v8808
      %v9692 = vpop.f32.mrf.mxu0
      %v9693 = vadd.f32 0.0, %v9692
      %9694 = vmatmul.f32.gmra.mxu0 %v8810
      %v9695 = vpop.f32.mrf.mxu0
      %v9696 = vadd.f32 0.0, %v9695
      %9697 = vmatmul.f32.gmra.mxu0 %v8812
      %v9698 = vpop.f32.mrf.mxu0
      %v9699 = vadd.f32 0.0, %v9698
      %9700 = vmatmul.f32.gmra.mxu0 %v8814
      %v9701 = vpop.f32.mrf.mxu0
      %v9702 = vadd.f32 0.0, %v9701
      %9703 = vmatmul.f32.gmra.mxu0 %v8816
      %v9704 = vpop.f32.mrf.mxu0
      %v9705 = vadd.f32 0.0, %v9704
      %9706 = vmatmul.f32.gmra.mxu0 %v8818
      %v9707 = vpop.f32.mrf.mxu0
      %v9708 = vadd.f32 0.0, %v9707
      %9709 = vmatmul.f32.gmra.mxu0 %v8820
      %v9710 = vpop.f32.mrf.mxu0
      %v9711 = vadd.f32 0.0, %v9710
      %9712 = vmatmul.f32.gmra.mxu0 %v9626
      %v9713 = vpop.f32.mrf.mxu0
      %v9714 = vadd.f32 0.0, %v9713
      %9715 = vmatmul.f32.gmra.mxu0 %v9628
      %v9716 = vpop.f32.mrf.mxu0
      %v9717 = vadd.f32 0.0, %v9716
      %9718 = vdwg.mxu0
      %v9719 = vadd.f32 %v9596, %v9648
      %v9720 = vadd.f32 %v9597, %v9651
      %v9721 = vadd.f32 %v9598, %v9654
      %v9722 = vadd.f32 %v9599, %v9657
      %v9723 = vadd.f32 %v9600, %v9660
      %v9724 = vadd.f32 %v9601, %v9663
      %v9725 = vadd.f32 %v9602, %v9666
      %v9726 = vadd.f32 %v9603, %v9669
      %v9727 = vadd.f32 %v9604, %v9672
      %v9728 = vadd.f32 %v9605, %v9675
      %v9729 = vadd.f32 %v9606, %v9678
      %v9730 = vadd.f32 %v9607, %v9681
      %v9731 = vadd.f32 %v9608, %v9684
      %v9732 = vadd.f32 %v9609, %v9687
      %v9733 = vadd.f32 %v9610, %v9690
      %v9734 = vadd.f32 %v9611, %v9693
      %v9735 = vadd.f32 %v9612, %v9696
      %v9736 = vadd.f32 %v9613, %v9699
      %v9737 = vadd.f32 %v9614, %v9702
      %v9738 = vadd.f32 %v9615, %v9705
      %v9739 = vadd.f32 %v9616, %v9708
      %v9740 = vadd.f32 %v9617, %v9711
      %v9741 = vadd.f32 %v9618, %v9714
      %v9742 = vadd.f32 %v9619, %v9717
      %9743 = vmatpush.msra.mxu0 0.0
      %9744 = vmatpush.msra.mxu0 0.0
      %9745 = vmatpush.msra.mxu0 0.0
      %9746 = vmatpush.msra.mxu0 0.0
      %9747 = vmatpush.msra.mxu0 0.0
      %9748 = vmatpush.msra.mxu0 0.0
      %9749 = vmatpush.msra.mxu0 0.0
      %9750 = vmatpush.msra.mxu0 0.0
      %9751 = vmatpush.msra.mxu0 0.0
      %9752 = vmatpush.msra.mxu0 0.0
      %9753 = vmatpush.msra.mxu0 0.0
      %9754 = vmatpush.msra.mxu0 0.0
      %9755 = vmatpush.msra.mxu0 %v6968
      %9756 = vmatpush.msra.mxu0 %v6967
      %9757 = vmatpush.msra.mxu0 %v6966
      %9758 = vmatpush.msra.mxu0 %v6965
      %9759 = vmatmul.f32.gmra.mxu0 %v7726
      %v9760 = vpop.f32.mrf.mxu0
      %v9761 = vadd.f32 0.0, %v9760
      %9762 = vmatmul.f32.gmra.mxu0 %v7729
      %v9763 = vpop.f32.mrf.mxu0
      %v9764 = vadd.f32 0.0, %v9763
      %9765 = vmatmul.f32.gmra.mxu0 %v7732
      %v9766 = vpop.f32.mrf.mxu0
      %v9767 = vadd.f32 0.0, %v9766
      %9768 = vmatmul.f32.gmra.mxu0 %v7735
      %v9769 = vpop.f32.mrf.mxu0
      %v9770 = vadd.f32 0.0, %v9769
      %9771 = vmatmul.f32.gmra.mxu0 %v7738
      %v9772 = vpop.f32.mrf.mxu0
      %v9773 = vadd.f32 0.0, %v9772
      %9774 = vmatmul.f32.gmra.mxu0 %v7741
      %v9775 = vpop.f32.mrf.mxu0
      %v9776 = vadd.f32 0.0, %v9775
      %9777 = vmatmul.f32.gmra.mxu0 %v7744
      %v9778 = vpop.f32.mrf.mxu0
      %v9779 = vadd.f32 0.0, %v9778
      %9780 = vmatmul.f32.gmra.mxu0 %v7747
      %v9781 = vpop.f32.mrf.mxu0
      %v9782 = vadd.f32 0.0, %v9781
      %9783 = vmatmul.f32.gmra.mxu0 %v7750
      %v9784 = vpop.f32.mrf.mxu0
      %v9785 = vadd.f32 0.0, %v9784
      %9786 = vmatmul.f32.gmra.mxu0 %v7753
      %v9787 = vpop.f32.mrf.mxu0
      %v9788 = vadd.f32 0.0, %v9787
      %9789 = vmatmul.f32.gmra.mxu0 %v7756
      %v9790 = vpop.f32.mrf.mxu0
      %v9791 = vadd.f32 0.0, %v9790
      %9792 = vmatmul.f32.gmra.mxu0 %v7759
      %v9793 = vpop.f32.mrf.mxu0
      %v9794 = vadd.f32 0.0, %v9793
      %9795 = vmatmul.f32.gmra.mxu0 %v7762
      %v9796 = vpop.f32.mrf.mxu0
      %v9797 = vadd.f32 0.0, %v9796
      %9798 = vmatmul.f32.gmra.mxu0 %v7765
      %v9799 = vpop.f32.mrf.mxu0
      %v9800 = vadd.f32 0.0, %v9799
      %9801 = vmatmul.f32.gmra.mxu0 %v7768
      %v9802 = vpop.f32.mrf.mxu0
      %v9803 = vadd.f32 0.0, %v9802
      %9804 = vmatmul.f32.gmra.mxu0 %v7771
      %v9805 = vpop.f32.mrf.mxu0
      %v9806 = vadd.f32 0.0, %v9805
      %9807 = vmatmul.f32.gmra.mxu0 %v7774
      %v9808 = vpop.f32.mrf.mxu0
      %v9809 = vadd.f32 0.0, %v9808
      %9810 = vmatmul.f32.gmra.mxu0 %v7777
      %v9811 = vpop.f32.mrf.mxu0
      %v9812 = vadd.f32 0.0, %v9811
      %9813 = vmatmul.f32.gmra.mxu0 %v7780
      %v9814 = vpop.f32.mrf.mxu0
      %v9815 = vadd.f32 0.0, %v9814
      %9816 = vmatmul.f32.gmra.mxu0 %v7783
      %v9817 = vpop.f32.mrf.mxu0
      %v9818 = vadd.f32 0.0, %v9817
      %9819 = vmatmul.f32.gmra.mxu0 %v7786
      %v9820 = vpop.f32.mrf.mxu0
      %v9821 = vadd.f32 0.0, %v9820
      %9822 = vmatmul.f32.gmra.mxu0 %v7789
      %v9823 = vpop.f32.mrf.mxu0
      %v9824 = vadd.f32 0.0, %v9823
      %9825 = vmatmul.f32.gmra.mxu0 %v7792
      %v9826 = vpop.f32.mrf.mxu0
      %v9827 = vadd.f32 0.0, %v9826
      %9828 = vmatmul.f32.gmra.mxu0 %v7795
      %v9829 = vpop.f32.mrf.mxu0
      %v9830 = vadd.f32 0.0, %v9829
      %9831 = vdwg.mxu0
      %9832 = vmatpush.msra.mxu0 0.0
      %9833 = vmatpush.msra.mxu0 0.0
      %9834 = vmatpush.msra.mxu0 0.0
      %9835 = vmatpush.msra.mxu0 0.0
      %9836 = vmatpush.msra.mxu0 0.0
      %9837 = vmatpush.msra.mxu0 0.0
      %9838 = vmatpush.msra.mxu0 0.0
      %9839 = vmatpush.msra.mxu0 0.0
      %9840 = vmatpush.msra.mxu0 0.0
      %9841 = vmatpush.msra.mxu0 0.0
      %9842 = vmatpush.msra.mxu0 0.0
      %9843 = vmatpush.msra.mxu0 0.0
      %9844 = vmatpush.msra.mxu0 %v6963
      %9845 = vmatpush.msra.mxu0 %v6962
      %9846 = vmatpush.msra.mxu0 %v6961
      %9847 = vmatpush.msra.mxu0 %v6960
      %9848 = vmatmul.f32.gmra.mxu0 %v7536
      %v9849 = vpop.f32.mrf.mxu0
      %v9850 = vadd.f32 %v9761, %v9849
      %9851 = vmatmul.f32.gmra.mxu0 %v7539
      %v9852 = vpop.f32.mrf.mxu0
      %v9853 = vadd.f32 %v9764, %v9852
      %9854 = vmatmul.f32.gmra.mxu0 %v7542
      %v9855 = vpop.f32.mrf.mxu0
      %v9856 = vadd.f32 %v9767, %v9855
      %9857 = vmatmul.f32.gmra.mxu0 %v7545
      %v9858 = vpop.f32.mrf.mxu0
      %v9859 = vadd.f32 %v9770, %v9858
      %9860 = vmatmul.f32.gmra.mxu0 %v7548
      %v9861 = vpop.f32.mrf.mxu0
      %v9862 = vadd.f32 %v9773, %v9861
      %9863 = vmatmul.f32.gmra.mxu0 %v7551
      %v9864 = vpop.f32.mrf.mxu0
      %v9865 = vadd.f32 %v9776, %v9864
      %9866 = vmatmul.f32.gmra.mxu0 %v7554
      %v9867 = vpop.f32.mrf.mxu0
      %v9868 = vadd.f32 %v9779, %v9867
      %9869 = vmatmul.f32.gmra.mxu0 %v7557
      %v9870 = vpop.f32.mrf.mxu0
      %v9871 = vadd.f32 %v9782, %v9870
      %9872 = vmatmul.f32.gmra.mxu0 %v7560
      %v9873 = vpop.f32.mrf.mxu0
      %v9874 = vadd.f32 %v9785, %v9873
      %9875 = vmatmul.f32.gmra.mxu0 %v7563
      %v9876 = vpop.f32.mrf.mxu0
      %v9877 = vadd.f32 %v9788, %v9876
      %9878 = vmatmul.f32.gmra.mxu0 %v7566
      %v9879 = vpop.f32.mrf.mxu0
      %v9880 = vadd.f32 %v9791, %v9879
      %9881 = vmatmul.f32.gmra.mxu0 %v7569
      %v9882 = vpop.f32.mrf.mxu0
      %v9883 = vadd.f32 %v9794, %v9882
      %9884 = vmatmul.f32.gmra.mxu0 %v7572
      %v9885 = vpop.f32.mrf.mxu0
      %v9886 = vadd.f32 %v9797, %v9885
      %9887 = vmatmul.f32.gmra.mxu0 %v7575
      %v9888 = vpop.f32.mrf.mxu0
      %v9889 = vadd.f32 %v9800, %v9888
      %9890 = vmatmul.f32.gmra.mxu0 %v7578
      %v9891 = vpop.f32.mrf.mxu0
      %v9892 = vadd.f32 %v9803, %v9891
      %9893 = vmatmul.f32.gmra.mxu0 %v7581
      %v9894 = vpop.f32.mrf.mxu0
      %v9895 = vadd.f32 %v9806, %v9894
      %9896 = vmatmul.f32.gmra.mxu0 %v7584
      %v9897 = vpop.f32.mrf.mxu0
      %v9898 = vadd.f32 %v9809, %v9897
      %9899 = vmatmul.f32.gmra.mxu0 %v7587
      %v9900 = vpop.f32.mrf.mxu0
      %v9901 = vadd.f32 %v9812, %v9900
      %9902 = vmatmul.f32.gmra.mxu0 %v7590
      %v9903 = vpop.f32.mrf.mxu0
      %v9904 = vadd.f32 %v9815, %v9903
      %9905 = vmatmul.f32.gmra.mxu0 %v7593
      %v9906 = vpop.f32.mrf.mxu0
      %v9907 = vadd.f32 %v9818, %v9906
      %9908 = vmatmul.f32.gmra.mxu0 %v7596
      %v9909 = vpop.f32.mrf.mxu0
      %v9910 = vadd.f32 %v9821, %v9909
      %9911 = vmatmul.f32.gmra.mxu0 %v7599
      %v9912 = vpop.f32.mrf.mxu0
      %v9913 = vadd.f32 %v9824, %v9912
      %9914 = vmatmul.f32.gmra.mxu0 %v7602
      %v9915 = vpop.f32.mrf.mxu0
      %v9916 = vadd.f32 %v9827, %v9915
      %9917 = vmatmul.f32.gmra.mxu0 %v7605
      %v9918 = vpop.f32.mrf.mxu0
      %v9919 = vadd.f32 %v9830, %v9918
      %9920 = vdwg.mxu0
      %9921 = vmatpush.msra.mxu0 0.0
      %9922 = vmatpush.msra.mxu0 0.0
      %9923 = vmatpush.msra.mxu0 0.0
      %9924 = vmatpush.msra.mxu0 0.0
      %9925 = vmatpush.msra.mxu0 0.0
      %9926 = vmatpush.msra.mxu0 0.0
      %9927 = vmatpush.msra.mxu0 0.0
      %9928 = vmatpush.msra.mxu0 0.0
      %9929 = vmatpush.msra.mxu0 0.0
      %9930 = vmatpush.msra.mxu0 0.0
      %9931 = vmatpush.msra.mxu0 0.0
      %9932 = vmatpush.msra.mxu0 0.0
      %9933 = vmatpush.msra.mxu0 %v7368
      %9934 = vmatpush.msra.mxu0 %v7367
      %9935 = vmatpush.msra.mxu0 %v7366
      %9936 = vmatpush.msra.mxu0 %v7365
      %9937 = vmatmul.f32.gmra.mxu0 %v7987
      %v9938 = vpop.f32.mrf.mxu0
      %v9939 = vadd.f32 0.0, %v9938
      %9940 = vmatmul.f32.gmra.mxu0 %v7989
      %v9941 = vpop.f32.mrf.mxu0
      %v9942 = vadd.f32 0.0, %v9941
      %9943 = vmatmul.f32.gmra.mxu0 %v7991
      %v9944 = vpop.f32.mrf.mxu0
      %v9945 = vadd.f32 0.0, %v9944
      %9946 = vmatmul.f32.gmra.mxu0 %v7993
      %v9947 = vpop.f32.mrf.mxu0
      %v9948 = vadd.f32 0.0, %v9947
      %9949 = vmatmul.f32.gmra.mxu0 %v7995
      %v9950 = vpop.f32.mrf.mxu0
      %v9951 = vadd.f32 0.0, %v9950
      %9952 = vmatmul.f32.gmra.mxu0 %v7997
      %v9953 = vpop.f32.mrf.mxu0
      %v9954 = vadd.f32 0.0, %v9953
      %9955 = vmatmul.f32.gmra.mxu0 %v7999
      %v9956 = vpop.f32.mrf.mxu0
      %v9957 = vadd.f32 0.0, %v9956
      %9958 = vmatmul.f32.gmra.mxu0 %v8001
      %v9959 = vpop.f32.mrf.mxu0
      %v9960 = vadd.f32 0.0, %v9959
      %9961 = vmatmul.f32.gmra.mxu0 %v8003
      %v9962 = vpop.f32.mrf.mxu0
      %v9963 = vadd.f32 0.0, %v9962
      %9964 = vmatmul.f32.gmra.mxu0 %v8005
      %v9965 = vpop.f32.mrf.mxu0
      %v9966 = vadd.f32 0.0, %v9965
      %9967 = vmatmul.f32.gmra.mxu0 %v8007
      %v9968 = vpop.f32.mrf.mxu0
      %v9969 = vadd.f32 0.0, %v9968
      %9970 = vmatmul.f32.gmra.mxu0 %v8009
      %v9971 = vpop.f32.mrf.mxu0
      %v9972 = vadd.f32 0.0, %v9971
      %9973 = vmatmul.f32.gmra.mxu0 %v8011
      %v9974 = vpop.f32.mrf.mxu0
      %v9975 = vadd.f32 0.0, %v9974
      %9976 = vmatmul.f32.gmra.mxu0 %v8013
      %v9977 = vpop.f32.mrf.mxu0
      %v9978 = vadd.f32 0.0, %v9977
      %9979 = vmatmul.f32.gmra.mxu0 %v8015
      %v9980 = vpop.f32.mrf.mxu0
      %v9981 = vadd.f32 0.0, %v9980
      %9982 = vmatmul.f32.gmra.mxu0 %v8017
      %v9983 = vpop.f32.mrf.mxu0
      %v9984 = vadd.f32 0.0, %v9983
      %9985 = vmatmul.f32.gmra.mxu0 %v8019
      %v9986 = vpop.f32.mrf.mxu0
      %v9987 = vadd.f32 0.0, %v9986
      %9988 = vmatmul.f32.gmra.mxu0 %v8021
      %v9989 = vpop.f32.mrf.mxu0
      %v9990 = vadd.f32 0.0, %v9989
      %9991 = vmatmul.f32.gmra.mxu0 %v8023
      %v9992 = vpop.f32.mrf.mxu0
      %v9993 = vadd.f32 0.0, %v9992
      %9994 = vmatmul.f32.gmra.mxu0 %v8025
      %v9995 = vpop.f32.mrf.mxu0
      %v9996 = vadd.f32 0.0, %v9995
      %9997 = vmatmul.f32.gmra.mxu0 %v8027
      %v9998 = vpop.f32.mrf.mxu0
      %v9999 = vadd.f32 0.0, %v9998
      %10000 = vmatmul.f32.gmra.mxu0 %v8029
      %v10001 = vpop.f32.mrf.mxu0
      %v10002 = vadd.f32 0.0, %v10001
      %10003 = vmatmul.f32.gmra.mxu0 %v8031
      %v10004 = vpop.f32.mrf.mxu0
      %v10005 = vadd.f32 0.0, %v10004
      %10006 = vmatmul.f32.gmra.mxu0 %v8033
      %v10007 = vpop.f32.mrf.mxu0
      %v10008 = vadd.f32 0.0, %v10007
      %10009 = vdwg.mxu0
      %v10010 = vadd.f32 %v9850, %v9939
      %v10011 = vadd.f32 %v9853, %v9942
      %v10012 = vadd.f32 %v9856, %v9945
      %v10013 = vadd.f32 %v9859, %v9948
      %v10014 = vadd.f32 %v9862, %v9951
      %v10015 = vadd.f32 %v9865, %v9954
      %v10016 = vadd.f32 %v9868, %v9957
      %v10017 = vadd.f32 %v9871, %v9960
      %v10018 = vadd.f32 %v9874, %v9963
      %v10019 = vadd.f32 %v9877, %v9966
      %v10020 = vadd.f32 %v9880, %v9969
      %v10021 = vadd.f32 %v9883, %v9972
      %v10022 = vadd.f32 %v9886, %v9975
      %v10023 = vadd.f32 %v9889, %v9978
      %v10024 = vadd.f32 %v9892, %v9981
      %v10025 = vadd.f32 %v9895, %v9984
      %v10026 = vadd.f32 %v9898, %v9987
      %v10027 = vadd.f32 %v9901, %v9990
      %v10028 = vadd.f32 %v9904, %v9993
      %v10029 = vadd.f32 %v9907, %v9996
      %v10030 = vadd.f32 %v9910, %v9999
      %v10031 = vadd.f32 %v9913, %v10002
      %v10032 = vadd.f32 %v9916, %v10005
      %v10033 = vadd.f32 %v9919, %v10008
      %10034 = vmatpush.msra.mxu0 0.0
      %10035 = vmatpush.msra.mxu0 0.0
      %10036 = vmatpush.msra.mxu0 0.0
      %10037 = vmatpush.msra.mxu0 0.0
      %10038 = vmatpush.msra.mxu0 0.0
      %10039 = vmatpush.msra.mxu0 0.0
      %10040 = vmatpush.msra.mxu0 0.0
      %10041 = vmatpush.msra.mxu0 0.0
      %10042 = vmatpush.msra.mxu0 0.0
      %10043 = vmatpush.msra.mxu0 0.0
      %10044 = vmatpush.msra.mxu0 0.0
      %10045 = vmatpush.msra.mxu0 0.0
      %10046 = vmatpush.msra.mxu0 %v7534
      %10047 = vmatpush.msra.mxu0 %v7533
      %10048 = vmatpush.msra.mxu0 %v7532
      %10049 = vmatpush.msra.mxu0 %v7531
      %10050 = vmatmul.f32.gmra.mxu0 %v7138
      %v10051 = vpop.f32.mrf.mxu0
      %v10052 = vadd.f32 0.0, %v10051
      %10053 = vmatmul.f32.gmra.mxu0 %v7141
      %v10054 = vpop.f32.mrf.mxu0
      %v10055 = vadd.f32 0.0, %v10054
      %10056 = vmatmul.f32.gmra.mxu0 %v7144
      %v10057 = vpop.f32.mrf.mxu0
      %v10058 = vadd.f32 0.0, %v10057
      %10059 = vmatmul.f32.gmra.mxu0 %v7147
      %v10060 = vpop.f32.mrf.mxu0
      %v10061 = vadd.f32 0.0, %v10060
      %10062 = vmatmul.f32.gmra.mxu0 %v7150
      %v10063 = vpop.f32.mrf.mxu0
      %v10064 = vadd.f32 0.0, %v10063
      %10065 = vmatmul.f32.gmra.mxu0 %v7153
      %v10066 = vpop.f32.mrf.mxu0
      %v10067 = vadd.f32 0.0, %v10066
      %10068 = vmatmul.f32.gmra.mxu0 %v7156
      %v10069 = vpop.f32.mrf.mxu0
      %v10070 = vadd.f32 0.0, %v10069
      %10071 = vmatmul.f32.gmra.mxu0 %v7159
      %v10072 = vpop.f32.mrf.mxu0
      %v10073 = vadd.f32 0.0, %v10072
      %10074 = vmatmul.f32.gmra.mxu0 %v7162
      %v10075 = vpop.f32.mrf.mxu0
      %v10076 = vadd.f32 0.0, %v10075
      %10077 = vmatmul.f32.gmra.mxu0 %v7165
      %v10078 = vpop.f32.mrf.mxu0
      %v10079 = vadd.f32 0.0, %v10078
      %10080 = vmatmul.f32.gmra.mxu0 %v7168
      %v10081 = vpop.f32.mrf.mxu0
      %v10082 = vadd.f32 0.0, %v10081
      %10083 = vmatmul.f32.gmra.mxu0 %v7171
      %v10084 = vpop.f32.mrf.mxu0
      %v10085 = vadd.f32 0.0, %v10084
      %10086 = vmatmul.f32.gmra.mxu0 %v7174
      %v10087 = vpop.f32.mrf.mxu0
      %v10088 = vadd.f32 0.0, %v10087
      %10089 = vmatmul.f32.gmra.mxu0 %v7177
      %v10090 = vpop.f32.mrf.mxu0
      %v10091 = vadd.f32 0.0, %v10090
      %10092 = vmatmul.f32.gmra.mxu0 %v7180
      %v10093 = vpop.f32.mrf.mxu0
      %v10094 = vadd.f32 0.0, %v10093
      %10095 = vmatmul.f32.gmra.mxu0 %v7183
      %v10096 = vpop.f32.mrf.mxu0
      %v10097 = vadd.f32 0.0, %v10096
      %10098 = vmatmul.f32.gmra.mxu0 %v7186
      %v10099 = vpop.f32.mrf.mxu0
      %v10100 = vadd.f32 0.0, %v10099
      %10101 = vmatmul.f32.gmra.mxu0 %v7189
      %v10102 = vpop.f32.mrf.mxu0
      %v10103 = vadd.f32 0.0, %v10102
      %10104 = vmatmul.f32.gmra.mxu0 %v7192
      %v10105 = vpop.f32.mrf.mxu0
      %v10106 = vadd.f32 0.0, %v10105
      %10107 = vmatmul.f32.gmra.mxu0 %v7195
      %v10108 = vpop.f32.mrf.mxu0
      %v10109 = vadd.f32 0.0, %v10108
      %10110 = vmatmul.f32.gmra.mxu0 %v7198
      %v10111 = vpop.f32.mrf.mxu0
      %v10112 = vadd.f32 0.0, %v10111
      %10113 = vmatmul.f32.gmra.mxu0 %v7201
      %v10114 = vpop.f32.mrf.mxu0
      %v10115 = vadd.f32 0.0, %v10114
      %10116 = vmatmul.f32.gmra.mxu0 %v8154
      %v10117 = vpop.f32.mrf.mxu0
      %v10118 = vadd.f32 0.0, %v10117
      %10119 = vmatmul.f32.gmra.mxu0 %v8157
      %v10120 = vpop.f32.mrf.mxu0
      %v10121 = vadd.f32 0.0, %v10120
      %10122 = vdwg.mxu0
      %v10123 = vadd.f32 %v10010, %v10052
      %v10124 = vadd.f32 %v10011, %v10055
      %v10125 = vadd.f32 %v10012, %v10058
      %v10126 = vadd.f32 %v10013, %v10061
      %v10127 = vadd.f32 %v10014, %v10064
      %v10128 = vadd.f32 %v10015, %v10067
      %v10129 = vadd.f32 %v10016, %v10070
      %v10130 = vadd.f32 %v10017, %v10073
      %v10131 = vadd.f32 %v10018, %v10076
      %v10132 = vadd.f32 %v10019, %v10079
      %v10133 = vadd.f32 %v10020, %v10082
      %v10134 = vadd.f32 %v10021, %v10085
      %v10135 = vadd.f32 %v10022, %v10088
      %v10136 = vadd.f32 %v10023, %v10091
      %v10137 = vadd.f32 %v10024, %v10094
      %v10138 = vadd.f32 %v10025, %v10097
      %v10139 = vadd.f32 %v10026, %v10100
      %v10140 = vadd.f32 %v10027, %v10103
      %v10141 = vadd.f32 %v10028, %v10106
      %v10142 = vadd.f32 %v10029, %v10109
      %v10143 = vadd.f32 %v10030, %v10112
      %v10144 = vadd.f32 %v10031, %v10115
      %v10145 = vadd.f32 %v10032, %v10118
      %v10146 = vadd.f32 %v10033, %v10121
      %10147 = vmatpush.msra.mxu0 0.0
      %10148 = vmatpush.msra.mxu0 0.0
      %10149 = vmatpush.msra.mxu0 0.0
      %10150 = vmatpush.msra.mxu0 0.0
      %10151 = vmatpush.msra.mxu0 0.0
      %10152 = vmatpush.msra.mxu0 0.0
      %10153 = vmatpush.msra.mxu0 0.0
      %10154 = vmatpush.msra.mxu0 0.0
      %10155 = vmatpush.msra.mxu0 0.0
      %10156 = vmatpush.msra.mxu0 0.0
      %10157 = vmatpush.msra.mxu0 0.0
      %10158 = vmatpush.msra.mxu0 0.0
      %10159 = vmatpush.msra.mxu0 %v7724
      %10160 = vmatpush.msra.mxu0 %v7723
      %10161 = vmatpush.msra.mxu0 %v7722
      %10162 = vmatpush.msra.mxu0 %v7721
      %10163 = vmatmul.f32.gmra.mxu0 %v6977
      %v10164 = vpop.f32.mrf.mxu0
      %v10165 = vadd.f32 0.0, %v10164
      %10166 = vmatmul.f32.gmra.mxu0 %v6980
      %v10167 = vpop.f32.mrf.mxu0
      %v10168 = vadd.f32 0.0, %v10167
      %10169 = vmatmul.f32.gmra.mxu0 %v6983
      %v10170 = vpop.f32.mrf.mxu0
      %v10171 = vadd.f32 0.0, %v10170
      %10172 = vmatmul.f32.gmra.mxu0 %v6986
      %v10173 = vpop.f32.mrf.mxu0
      %v10174 = vadd.f32 0.0, %v10173
      %10175 = vmatmul.f32.gmra.mxu0 %v6989
      %v10176 = vpop.f32.mrf.mxu0
      %v10177 = vadd.f32 0.0, %v10176
      %10178 = vmatmul.f32.gmra.mxu0 %v6992
      %v10179 = vpop.f32.mrf.mxu0
      %v10180 = vadd.f32 0.0, %v10179
      %10181 = vmatmul.f32.gmra.mxu0 %v6995
      %v10182 = vpop.f32.mrf.mxu0
      %v10183 = vadd.f32 0.0, %v10182
      %10184 = vmatmul.f32.gmra.mxu0 %v6998
      %v10185 = vpop.f32.mrf.mxu0
      %v10186 = vadd.f32 0.0, %v10185
      %10187 = vmatmul.f32.gmra.mxu0 %v7001
      %v10188 = vpop.f32.mrf.mxu0
      %v10189 = vadd.f32 0.0, %v10188
      %10190 = vmatmul.f32.gmra.mxu0 %v7004
      %v10191 = vpop.f32.mrf.mxu0
      %v10192 = vadd.f32 0.0, %v10191
      %10193 = vmatmul.f32.gmra.mxu0 %v7007
      %v10194 = vpop.f32.mrf.mxu0
      %v10195 = vadd.f32 0.0, %v10194
      %10196 = vmatmul.f32.gmra.mxu0 %v7010
      %v10197 = vpop.f32.mrf.mxu0
      %v10198 = vadd.f32 0.0, %v10197
      %10199 = vmatmul.f32.gmra.mxu0 %v7013
      %v10200 = vpop.f32.mrf.mxu0
      %v10201 = vadd.f32 0.0, %v10200
      %10202 = vmatmul.f32.gmra.mxu0 %v7016
      %v10203 = vpop.f32.mrf.mxu0
      %v10204 = vadd.f32 0.0, %v10203
      %10205 = vmatmul.f32.gmra.mxu0 %v7019
      %v10206 = vpop.f32.mrf.mxu0
      %v10207 = vadd.f32 0.0, %v10206
      %10208 = vmatmul.f32.gmra.mxu0 %v7022
      %v10209 = vpop.f32.mrf.mxu0
      %v10210 = vadd.f32 0.0, %v10209
      %10211 = vmatmul.f32.gmra.mxu0 %v7025
      %v10212 = vpop.f32.mrf.mxu0
      %v10213 = vadd.f32 0.0, %v10212
      %10214 = vmatmul.f32.gmra.mxu0 %v7028
      %v10215 = vpop.f32.mrf.mxu0
      %v10216 = vadd.f32 0.0, %v10215
      %10217 = vmatmul.f32.gmra.mxu0 %v7031
      %v10218 = vpop.f32.mrf.mxu0
      %v10219 = vadd.f32 0.0, %v10218
      %10220 = vmatmul.f32.gmra.mxu0 %v7034
      %v10221 = vpop.f32.mrf.mxu0
      %v10222 = vadd.f32 0.0, %v10221
      %10223 = vmatmul.f32.gmra.mxu0 %v7037
      %v10224 = vpop.f32.mrf.mxu0
      %v10225 = vadd.f32 0.0, %v10224
      %10226 = vmatmul.f32.gmra.mxu0 %v7040
      %v10227 = vpop.f32.mrf.mxu0
      %v10228 = vadd.f32 0.0, %v10227
      %10229 = vmatmul.f32.gmra.mxu0 %v8278
      %v10230 = vpop.f32.mrf.mxu0
      %v10231 = vadd.f32 0.0, %v10230
      %10232 = vmatmul.f32.gmra.mxu0 %v8281
      %v10233 = vpop.f32.mrf.mxu0
      %v10234 = vadd.f32 0.0, %v10233
      %10235 = vdwg.mxu0
      %v10236 = vadd.f32 %v10123, %v10165
      %v10237 = vadd.f32 %v10124, %v10168
      %v10238 = vadd.f32 %v10125, %v10171
      %v10239 = vadd.f32 %v10126, %v10174
      %v10240 = vadd.f32 %v10127, %v10177
      %v10241 = vadd.f32 %v10128, %v10180
      %v10242 = vadd.f32 %v10129, %v10183
      %v10243 = vadd.f32 %v10130, %v10186
      %v10244 = vadd.f32 %v10131, %v10189
      %v10245 = vadd.f32 %v10132, %v10192
      %v10246 = vadd.f32 %v10133, %v10195
      %v10247 = vadd.f32 %v10134, %v10198
      %v10248 = vadd.f32 %v10135, %v10201
      %v10249 = vadd.f32 %v10136, %v10204
      %v10250 = vadd.f32 %v10137, %v10207
      %v10251 = vadd.f32 %v10138, %v10210
      %v10252 = vadd.f32 %v10139, %v10213
      %v10253 = vadd.f32 %v10140, %v10216
      %v10254 = vadd.f32 %v10141, %v10219
      %v10255 = vadd.f32 %v10142, %v10222
      %v10256 = vadd.f32 %v10143, %v10225
      %v10257 = vadd.f32 %v10144, %v10228
      %v10258 = vadd.f32 %v10145, %v10231
      %v10259 = vadd.f32 %v10146, %v10234
      %10260 = vmatpush.msra.mxu0 0.0
      %10261 = vmatpush.msra.mxu0 0.0
      %10262 = vmatpush.msra.mxu0 0.0
      %10263 = vmatpush.msra.mxu0 0.0
      %10264 = vmatpush.msra.mxu0 0.0
      %10265 = vmatpush.msra.mxu0 0.0
      %10266 = vmatpush.msra.mxu0 0.0
      %10267 = vmatpush.msra.mxu0 0.0
      %10268 = vmatpush.msra.mxu0 0.0
      %10269 = vmatpush.msra.mxu0 0.0
      %10270 = vmatpush.msra.mxu0 0.0
      %10271 = vmatpush.msra.mxu0 0.0
      %10272 = vmatpush.msra.mxu0 %v7986
      %10273 = vmatpush.msra.mxu0 %v7985
      %10274 = vmatpush.msra.mxu0 %v7984
      %10275 = vmatpush.msra.mxu0 %v7983
      %10276 = vmatmul.f32.gmra.mxu0 %v7373
      %v10277 = vpop.f32.mrf.mxu0
      %v10278 = vadd.f32 0.0, %v10277
      %10279 = vmatmul.f32.gmra.mxu0 %v7375
      %v10280 = vpop.f32.mrf.mxu0
      %v10281 = vadd.f32 0.0, %v10280
      %10282 = vmatmul.f32.gmra.mxu0 %v7377
      %v10283 = vpop.f32.mrf.mxu0
      %v10284 = vadd.f32 0.0, %v10283
      %10285 = vmatmul.f32.gmra.mxu0 %v7379
      %v10286 = vpop.f32.mrf.mxu0
      %v10287 = vadd.f32 0.0, %v10286
      %10288 = vmatmul.f32.gmra.mxu0 %v7381
      %v10289 = vpop.f32.mrf.mxu0
      %v10290 = vadd.f32 0.0, %v10289
      %10291 = vmatmul.f32.gmra.mxu0 %v7383
      %v10292 = vpop.f32.mrf.mxu0
      %v10293 = vadd.f32 0.0, %v10292
      %10294 = vmatmul.f32.gmra.mxu0 %v7385
      %v10295 = vpop.f32.mrf.mxu0
      %v10296 = vadd.f32 0.0, %v10295
      %10297 = vmatmul.f32.gmra.mxu0 %v7387
      %v10298 = vpop.f32.mrf.mxu0
      %v10299 = vadd.f32 0.0, %v10298
      %10300 = vmatmul.f32.gmra.mxu0 %v7389
      %v10301 = vpop.f32.mrf.mxu0
      %v10302 = vadd.f32 0.0, %v10301
      %10303 = vmatmul.f32.gmra.mxu0 %v7391
      %v10304 = vpop.f32.mrf.mxu0
      %v10305 = vadd.f32 0.0, %v10304
      %10306 = vmatmul.f32.gmra.mxu0 %v7393
      %v10307 = vpop.f32.mrf.mxu0
      %v10308 = vadd.f32 0.0, %v10307
      %10309 = vmatmul.f32.gmra.mxu0 %v7395
      %v10310 = vpop.f32.mrf.mxu0
      %v10311 = vadd.f32 0.0, %v10310
      %10312 = vmatmul.f32.gmra.mxu0 %v7397
      %v10313 = vpop.f32.mrf.mxu0
      %v10314 = vadd.f32 0.0, %v10313
      %10315 = vmatmul.f32.gmra.mxu0 %v7399
      %v10316 = vpop.f32.mrf.mxu0
      %v10317 = vadd.f32 0.0, %v10316
      %10318 = vmatmul.f32.gmra.mxu0 %v7401
      %v10319 = vpop.f32.mrf.mxu0
      %v10320 = vadd.f32 0.0, %v10319
      %10321 = vmatmul.f32.gmra.mxu0 %v7403
      %v10322 = vpop.f32.mrf.mxu0
      %v10323 = vadd.f32 0.0, %v10322
      %10324 = vmatmul.f32.gmra.mxu0 %v7405
      %v10325 = vpop.f32.mrf.mxu0
      %v10326 = vadd.f32 0.0, %v10325
      %10327 = vmatmul.f32.gmra.mxu0 %v7407
      %v10328 = vpop.f32.mrf.mxu0
      %v10329 = vadd.f32 0.0, %v10328
      %10330 = vmatmul.f32.gmra.mxu0 %v7409
      %v10331 = vpop.f32.mrf.mxu0
      %v10332 = vadd.f32 0.0, %v10331
      %10333 = vmatmul.f32.gmra.mxu0 %v7411
      %v10334 = vpop.f32.mrf.mxu0
      %v10335 = vadd.f32 0.0, %v10334
      %10336 = vmatmul.f32.gmra.mxu0 %v7413
      %v10337 = vpop.f32.mrf.mxu0
      %v10338 = vadd.f32 0.0, %v10337
      %10339 = vmatmul.f32.gmra.mxu0 %v7415
      %v10340 = vpop.f32.mrf.mxu0
      %v10341 = vadd.f32 0.0, %v10340
      %10342 = vmatmul.f32.gmra.mxu0 %v8407
      %v10343 = vpop.f32.mrf.mxu0
      %v10344 = vadd.f32 0.0, %v10343
      %10345 = vmatmul.f32.gmra.mxu0 %v8409
      %v10346 = vpop.f32.mrf.mxu0
      %v10347 = vadd.f32 0.0, %v10346
      %10348 = vdwg.mxu0
      %v10349 = vadd.f32 %v10236, %v10278
      %v10350 = vadd.f32 %v10237, %v10281
      %v10351 = vadd.f32 %v10238, %v10284
      %v10352 = vadd.f32 %v10239, %v10287
      %v10353 = vadd.f32 %v10240, %v10290
      %v10354 = vadd.f32 %v10241, %v10293
      %v10355 = vadd.f32 %v10242, %v10296
      %v10356 = vadd.f32 %v10243, %v10299
      %v10357 = vadd.f32 %v10244, %v10302
      %v10358 = vadd.f32 %v10245, %v10305
      %v10359 = vadd.f32 %v10246, %v10308
      %v10360 = vadd.f32 %v10247, %v10311
      %v10361 = vadd.f32 %v10248, %v10314
      %v10362 = vadd.f32 %v10249, %v10317
      %v10363 = vadd.f32 %v10250, %v10320
      %v10364 = vadd.f32 %v10251, %v10323
      %v10365 = vadd.f32 %v10252, %v10326
      %v10366 = vadd.f32 %v10253, %v10329
      %v10367 = vadd.f32 %v10254, %v10332
      %v10368 = vadd.f32 %v10255, %v10335
      %v10369 = vadd.f32 %v10256, %v10338
      %v10370 = vadd.f32 %v10257, %v10341
      %v10371 = vadd.f32 %v10258, %v10344
      %v10372 = vadd.f32 %v10259, %v10347
      %v10374 = vsel %vm6969, %v5319, 0
      %v10377 = vsel %vm6969, %v5320, 0
      %10379 = vmatpush.msra.mxu0 0.0
      %10380 = vmatpush.msra.mxu0 0.0
      %10381 = vmatpush.msra.mxu0 0.0
      %10382 = vmatpush.msra.mxu0 0.0
      %10383 = vmatpush.msra.mxu0 0.0
      %10384 = vmatpush.msra.mxu0 0.0
      %10385 = vmatpush.msra.mxu0 0.0
      %10386 = vmatpush.msra.mxu0 0.0
      %10387 = vmatpush.msra.mxu0 0.0
      %10388 = vmatpush.msra.mxu0 0.0
      %10389 = vmatpush.msra.mxu0 0.0
      %10390 = vmatpush.msra.mxu0 0.0
      %10391 = vmatpush.msra.mxu0 %v8152
      %10392 = vmatpush.msra.mxu0 %v8151
      %10393 = vmatpush.msra.mxu0 %v8150
      %10394 = vmatpush.msra.mxu0 %v8149
      %10395 = vmatmul.f32.gmra.mxu0 %v7542
      %v10396 = vpop.f32.mrf.mxu0
      %v10397 = vadd.f32 0.0, %v10396
      %10398 = vmatmul.f32.gmra.mxu0 %v7545
      %v10399 = vpop.f32.mrf.mxu0
      %v10400 = vadd.f32 0.0, %v10399
      %10401 = vmatmul.f32.gmra.mxu0 %v7548
      %v10402 = vpop.f32.mrf.mxu0
      %v10403 = vadd.f32 0.0, %v10402
      %10404 = vmatmul.f32.gmra.mxu0 %v7551
      %v10405 = vpop.f32.mrf.mxu0
      %v10406 = vadd.f32 0.0, %v10405
      %10407 = vmatmul.f32.gmra.mxu0 %v7554
      %v10408 = vpop.f32.mrf.mxu0
      %v10409 = vadd.f32 0.0, %v10408
      %10410 = vmatmul.f32.gmra.mxu0 %v7557
      %v10411 = vpop.f32.mrf.mxu0
      %v10412 = vadd.f32 0.0, %v10411
      %10413 = vmatmul.f32.gmra.mxu0 %v7560
      %v10414 = vpop.f32.mrf.mxu0
      %v10415 = vadd.f32 0.0, %v10414
      %10416 = vmatmul.f32.gmra.mxu0 %v7563
      %v10417 = vpop.f32.mrf.mxu0
      %v10418 = vadd.f32 0.0, %v10417
      %10419 = vmatmul.f32.gmra.mxu0 %v7566
      %v10420 = vpop.f32.mrf.mxu0
      %v10421 = vadd.f32 0.0, %v10420
      %10422 = vmatmul.f32.gmra.mxu0 %v7569
      %v10423 = vpop.f32.mrf.mxu0
      %v10424 = vadd.f32 0.0, %v10423
      %10425 = vmatmul.f32.gmra.mxu0 %v7572
      %v10426 = vpop.f32.mrf.mxu0
      %v10427 = vadd.f32 0.0, %v10426
      %10428 = vmatmul.f32.gmra.mxu0 %v7575
      %v10429 = vpop.f32.mrf.mxu0
      %v10430 = vadd.f32 0.0, %v10429
      %10431 = vmatmul.f32.gmra.mxu0 %v7578
      %v10432 = vpop.f32.mrf.mxu0
      %v10433 = vadd.f32 0.0, %v10432
      %10434 = vmatmul.f32.gmra.mxu0 %v7581
      %v10435 = vpop.f32.mrf.mxu0
      %v10436 = vadd.f32 0.0, %v10435
      %10437 = vmatmul.f32.gmra.mxu0 %v7584
      %v10438 = vpop.f32.mrf.mxu0
      %v10439 = vadd.f32 0.0, %v10438
      %10440 = vmatmul.f32.gmra.mxu0 %v7587
      %v10441 = vpop.f32.mrf.mxu0
      %v10442 = vadd.f32 0.0, %v10441
      %10443 = vmatmul.f32.gmra.mxu0 %v7590
      %v10444 = vpop.f32.mrf.mxu0
      %v10445 = vadd.f32 0.0, %v10444
      %10446 = vmatmul.f32.gmra.mxu0 %v7593
      %v10447 = vpop.f32.mrf.mxu0
      %v10448 = vadd.f32 0.0, %v10447
      %10449 = vmatmul.f32.gmra.mxu0 %v7596
      %v10450 = vpop.f32.mrf.mxu0
      %v10451 = vadd.f32 0.0, %v10450
      %10452 = vmatmul.f32.gmra.mxu0 %v7599
      %v10453 = vpop.f32.mrf.mxu0
      %v10454 = vadd.f32 0.0, %v10453
      %10455 = vmatmul.f32.gmra.mxu0 %v7602
      %v10456 = vpop.f32.mrf.mxu0
      %v10457 = vadd.f32 0.0, %v10456
      %10458 = vmatmul.f32.gmra.mxu0 %v7605
      %v10459 = vpop.f32.mrf.mxu0
      %v10460 = vadd.f32 0.0, %v10459
      %10461 = vmatmul.f32.gmra.mxu0 %v10374
      %v10462 = vpop.f32.mrf.mxu0
      %v10463 = vadd.f32 0.0, %v10462
      %10464 = vmatmul.f32.gmra.mxu0 %v10377
      %v10465 = vpop.f32.mrf.mxu0
      %v10466 = vadd.f32 0.0, %v10465
      %10467 = vdwg.mxu0
      %v10468 = vadd.f32 %v10349, %v10397
      %v10469 = vadd.f32 %v10350, %v10400
      %v10470 = vadd.f32 %v10351, %v10403
      %v10471 = vadd.f32 %v10352, %v10406
      %v10472 = vadd.f32 %v10353, %v10409
      %v10473 = vadd.f32 %v10354, %v10412
      %v10474 = vadd.f32 %v10355, %v10415
      %v10475 = vadd.f32 %v10356, %v10418
      %v10476 = vadd.f32 %v10357, %v10421
      %v10477 = vadd.f32 %v10358, %v10424
      %v10478 = vadd.f32 %v10359, %v10427
      %v10479 = vadd.f32 %v10360, %v10430
      %v10480 = vadd.f32 %v10361, %v10433
      %v10481 = vadd.f32 %v10362, %v10436
      %v10482 = vadd.f32 %v10363, %v10439
      %v10483 = vadd.f32 %v10364, %v10442
      %v10484 = vadd.f32 %v10365, %v10445
      %v10485 = vadd.f32 %v10366, %v10448
      %v10486 = vadd.f32 %v10367, %v10451
      %v10487 = vadd.f32 %v10368, %v10454
      %v10488 = vadd.f32 %v10369, %v10457
      %v10489 = vadd.f32 %v10370, %v10460
      %v10490 = vadd.f32 %v10371, %v10463
      %v10491 = vadd.f32 %v10372, %v10466
      %v10493 = vsel %vm6969, %v6957, 0
      %v10496 = vsel %vm6969, %v6958, 0
      %10498 = vmatpush.msra.mxu0 0.0
      %10499 = vmatpush.msra.mxu0 0.0
      %10500 = vmatpush.msra.mxu0 0.0
      %10501 = vmatpush.msra.mxu0 0.0
      %10502 = vmatpush.msra.mxu0 0.0
      %10503 = vmatpush.msra.mxu0 0.0
      %10504 = vmatpush.msra.mxu0 0.0
      %10505 = vmatpush.msra.mxu0 0.0
      %10506 = vmatpush.msra.mxu0 0.0
      %10507 = vmatpush.msra.mxu0 0.0
      %10508 = vmatpush.msra.mxu0 0.0
      %10509 = vmatpush.msra.mxu0 0.0
      %10510 = vmatpush.msra.mxu0 %v8276
      %10511 = vmatpush.msra.mxu0 %v8275
      %10512 = vmatpush.msra.mxu0 %v8274
      %10513 = vmatpush.msra.mxu0 %v8273
      %10514 = vmatmul.f32.gmra.mxu0 %v7732
      %v10515 = vpop.f32.mrf.mxu0
      %v10516 = vadd.f32 0.0, %v10515
      %10517 = vmatmul.f32.gmra.mxu0 %v7735
      %v10518 = vpop.f32.mrf.mxu0
      %v10519 = vadd.f32 0.0, %v10518
      %10520 = vmatmul.f32.gmra.mxu0 %v7738
      %v10521 = vpop.f32.mrf.mxu0
      %v10522 = vadd.f32 0.0, %v10521
      %10523 = vmatmul.f32.gmra.mxu0 %v7741
      %v10524 = vpop.f32.mrf.mxu0
      %v10525 = vadd.f32 0.0, %v10524
      %10526 = vmatmul.f32.gmra.mxu0 %v7744
      %v10527 = vpop.f32.mrf.mxu0
      %v10528 = vadd.f32 0.0, %v10527
      %10529 = vmatmul.f32.gmra.mxu0 %v7747
      %v10530 = vpop.f32.mrf.mxu0
      %v10531 = vadd.f32 0.0, %v10530
      %10532 = vmatmul.f32.gmra.mxu0 %v7750
      %v10533 = vpop.f32.mrf.mxu0
      %v10534 = vadd.f32 0.0, %v10533
      %10535 = vmatmul.f32.gmra.mxu0 %v7753
      %v10536 = vpop.f32.mrf.mxu0
      %v10537 = vadd.f32 0.0, %v10536
      %10538 = vmatmul.f32.gmra.mxu0 %v7756
      %v10539 = vpop.f32.mrf.mxu0
      %v10540 = vadd.f32 0.0, %v10539
      %10541 = vmatmul.f32.gmra.mxu0 %v7759
      %v10542 = vpop.f32.mrf.mxu0
      %v10543 = vadd.f32 0.0, %v10542
      %10544 = vmatmul.f32.gmra.mxu0 %v7762
      %v10545 = vpop.f32.mrf.mxu0
      %v10546 = vadd.f32 0.0, %v10545
      %10547 = vmatmul.f32.gmra.mxu0 %v7765
      %v10548 = vpop.f32.mrf.mxu0
      %v10549 = vadd.f32 0.0, %v10548
      %10550 = vmatmul.f32.gmra.mxu0 %v7768
      %v10551 = vpop.f32.mrf.mxu0
      %v10552 = vadd.f32 0.0, %v10551
      %10553 = vmatmul.f32.gmra.mxu0 %v7771
      %v10554 = vpop.f32.mrf.mxu0
      %v10555 = vadd.f32 0.0, %v10554
      %10556 = vmatmul.f32.gmra.mxu0 %v7774
      %v10557 = vpop.f32.mrf.mxu0
      %v10558 = vadd.f32 0.0, %v10557
      %10559 = vmatmul.f32.gmra.mxu0 %v7777
      %v10560 = vpop.f32.mrf.mxu0
      %v10561 = vadd.f32 0.0, %v10560
      %10562 = vmatmul.f32.gmra.mxu0 %v7780
      %v10563 = vpop.f32.mrf.mxu0
      %v10564 = vadd.f32 0.0, %v10563
      %10565 = vmatmul.f32.gmra.mxu0 %v7783
      %v10566 = vpop.f32.mrf.mxu0
      %v10567 = vadd.f32 0.0, %v10566
      %10568 = vmatmul.f32.gmra.mxu0 %v7786
      %v10569 = vpop.f32.mrf.mxu0
      %v10570 = vadd.f32 0.0, %v10569
      %10571 = vmatmul.f32.gmra.mxu0 %v7789
      %v10572 = vpop.f32.mrf.mxu0
      %v10573 = vadd.f32 0.0, %v10572
      %10574 = vmatmul.f32.gmra.mxu0 %v7792
      %v10575 = vpop.f32.mrf.mxu0
      %v10576 = vadd.f32 0.0, %v10575
      %10577 = vmatmul.f32.gmra.mxu0 %v7795
      %v10578 = vpop.f32.mrf.mxu0
      %v10579 = vadd.f32 0.0, %v10578
      %10580 = vmatmul.f32.gmra.mxu0 %v10493
      %v10581 = vpop.f32.mrf.mxu0
      %v10582 = vadd.f32 0.0, %v10581
      %10583 = vmatmul.f32.gmra.mxu0 %v10496
      %v10584 = vpop.f32.mrf.mxu0
      %v10585 = vadd.f32 0.0, %v10584
      %10586 = vdwg.mxu0
      %v10587 = vadd.f32 %v10468, %v10516
      %v10588 = vadd.f32 %v10469, %v10519
      %v10589 = vadd.f32 %v10470, %v10522
      %v10590 = vadd.f32 %v10471, %v10525
      %v10591 = vadd.f32 %v10472, %v10528
      %v10592 = vadd.f32 %v10473, %v10531
      %v10593 = vadd.f32 %v10474, %v10534
      %v10594 = vadd.f32 %v10475, %v10537
      %v10595 = vadd.f32 %v10476, %v10540
      %v10596 = vadd.f32 %v10477, %v10543
      %v10597 = vadd.f32 %v10478, %v10546
      %v10598 = vadd.f32 %v10479, %v10549
      %v10599 = vadd.f32 %v10480, %v10552
      %v10600 = vadd.f32 %v10481, %v10555
      %v10601 = vadd.f32 %v10482, %v10558
      %v10602 = vadd.f32 %v10483, %v10561
      %v10603 = vadd.f32 %v10484, %v10564
      %v10604 = vadd.f32 %v10485, %v10567
      %v10605 = vadd.f32 %v10486, %v10570
      %v10606 = vadd.f32 %v10487, %v10573
      %v10607 = vadd.f32 %v10488, %v10576
      %v10608 = vadd.f32 %v10489, %v10579
      %v10609 = vadd.f32 %v10490, %v10582
      %v10610 = vadd.f32 %v10491, %v10585
      %v10612 = vrot.slane %v5319, 1
      %v10613 = vrot.slane %v5320, 1
      %v10614 = vsel %vm1032, %v10612, %v10613
      %v10615 = vrot.slane %v5321, 1
      %v10616 = vsel %vm1032, %v10613, %v10615
      %v10617 = vsel %vm6969, %v10614, 0
      %v10619 = vsel %vm6969, %v10616, 0
      %10621 = vmatpush.msra.mxu0 0.0
      %10622 = vmatpush.msra.mxu0 0.0
      %10623 = vmatpush.msra.mxu0 0.0
      %10624 = vmatpush.msra.mxu0 0.0
      %10625 = vmatpush.msra.mxu0 0.0
      %10626 = vmatpush.msra.mxu0 0.0
      %10627 = vmatpush.msra.mxu0 0.0
      %10628 = vmatpush.msra.mxu0 0.0
      %10629 = vmatpush.msra.mxu0 0.0
      %10630 = vmatpush.msra.mxu0 0.0
      %10631 = vmatpush.msra.mxu0 0.0
      %10632 = vmatpush.msra.mxu0 0.0
      %10633 = vmatpush.msra.mxu0 %v8406
      %10634 = vmatpush.msra.mxu0 %v8405
      %10635 = vmatpush.msra.mxu0 %v8404
      %10636 = vmatpush.msra.mxu0 %v8403
      %10637 = vmatmul.f32.gmra.mxu0 %v7991
      %v10638 = vpop.f32.mrf.mxu0
      %v10639 = vadd.f32 0.0, %v10638
      %10640 = vmatmul.f32.gmra.mxu0 %v7993
      %v10641 = vpop.f32.mrf.mxu0
      %v10642 = vadd.f32 0.0, %v10641
      %10643 = vmatmul.f32.gmra.mxu0 %v7995
      %v10644 = vpop.f32.mrf.mxu0
      %v10645 = vadd.f32 0.0, %v10644
      %10646 = vmatmul.f32.gmra.mxu0 %v7997
      %v10647 = vpop.f32.mrf.mxu0
      %v10648 = vadd.f32 0.0, %v10647
      %10649 = vmatmul.f32.gmra.mxu0 %v7999
      %v10650 = vpop.f32.mrf.mxu0
      %v10651 = vadd.f32 0.0, %v10650
      %10652 = vmatmul.f32.gmra.mxu0 %v8001
      %v10653 = vpop.f32.mrf.mxu0
      %v10654 = vadd.f32 0.0, %v10653
      %10655 = vmatmul.f32.gmra.mxu0 %v8003
      %v10656 = vpop.f32.mrf.mxu0
      %v10657 = vadd.f32 0.0, %v10656
      %10658 = vmatmul.f32.gmra.mxu0 %v8005
      %v10659 = vpop.f32.mrf.mxu0
      %v10660 = vadd.f32 0.0, %v10659
      %10661 = vmatmul.f32.gmra.mxu0 %v8007
      %v10662 = vpop.f32.mrf.mxu0
      %v10663 = vadd.f32 0.0, %v10662
      %10664 = vmatmul.f32.gmra.mxu0 %v8009
      %v10665 = vpop.f32.mrf.mxu0
      %v10666 = vadd.f32 0.0, %v10665
      %10667 = vmatmul.f32.gmra.mxu0 %v8011
      %v10668 = vpop.f32.mrf.mxu0
      %v10669 = vadd.f32 0.0, %v10668
      %10670 = vmatmul.f32.gmra.mxu0 %v8013
      %v10671 = vpop.f32.mrf.mxu0
      %v10672 = vadd.f32 0.0, %v10671
      %10673 = vmatmul.f32.gmra.mxu0 %v8015
      %v10674 = vpop.f32.mrf.mxu0
      %v10675 = vadd.f32 0.0, %v10674
      %10676 = vmatmul.f32.gmra.mxu0 %v8017
      %v10677 = vpop.f32.mrf.mxu0
      %v10678 = vadd.f32 0.0, %v10677
      %10679 = vmatmul.f32.gmra.mxu0 %v8019
      %v10680 = vpop.f32.mrf.mxu0
      %v10681 = vadd.f32 0.0, %v10680
      %10682 = vmatmul.f32.gmra.mxu0 %v8021
      %v10683 = vpop.f32.mrf.mxu0
      %v10684 = vadd.f32 0.0, %v10683
      %10685 = vmatmul.f32.gmra.mxu0 %v8023
      %v10686 = vpop.f32.mrf.mxu0
      %v10687 = vadd.f32 0.0, %v10686
      %10688 = vmatmul.f32.gmra.mxu0 %v8025
      %v10689 = vpop.f32.mrf.mxu0
      %v10690 = vadd.f32 0.0, %v10689
      %10691 = vmatmul.f32.gmra.mxu0 %v8027
      %v10692 = vpop.f32.mrf.mxu0
      %v10693 = vadd.f32 0.0, %v10692
      %10694 = vmatmul.f32.gmra.mxu0 %v8029
      %v10695 = vpop.f32.mrf.mxu0
      %v10696 = vadd.f32 0.0, %v10695
      %10697 = vmatmul.f32.gmra.mxu0 %v8031
      %v10698 = vpop.f32.mrf.mxu0
      %v10699 = vadd.f32 0.0, %v10698
      %10700 = vmatmul.f32.gmra.mxu0 %v8033
      %v10701 = vpop.f32.mrf.mxu0
      %v10702 = vadd.f32 0.0, %v10701
      %10703 = vmatmul.f32.gmra.mxu0 %v10617
      %v10704 = vpop.f32.mrf.mxu0
      %v10705 = vadd.f32 0.0, %v10704
      %10706 = vmatmul.f32.gmra.mxu0 %v10619
      %v10707 = vpop.f32.mrf.mxu0
      %v10708 = vadd.f32 0.0, %v10707
      %10709 = vdwg.mxu0
      %v10710 = vadd.f32 %v10587, %v10639
      %v10711 = vadd.f32 %v10588, %v10642
      %v10712 = vadd.f32 %v10589, %v10645
      %v10713 = vadd.f32 %v10590, %v10648
      %v10714 = vadd.f32 %v10591, %v10651
      %v10715 = vadd.f32 %v10592, %v10654
      %v10716 = vadd.f32 %v10593, %v10657
      %v10717 = vadd.f32 %v10594, %v10660
      %v10718 = vadd.f32 %v10595, %v10663
      %v10719 = vadd.f32 %v10596, %v10666
      %v10720 = vadd.f32 %v10597, %v10669
      %v10721 = vadd.f32 %v10598, %v10672
      %v10722 = vadd.f32 %v10599, %v10675
      %v10723 = vadd.f32 %v10600, %v10678
      %v10724 = vadd.f32 %v10601, %v10681
      %v10725 = vadd.f32 %v10602, %v10684
      %v10726 = vadd.f32 %v10603, %v10687
      %v10727 = vadd.f32 %v10604, %v10690
      %v10728 = vadd.f32 %v10605, %v10693
      %v10729 = vadd.f32 %v10606, %v10696
      %v10730 = vadd.f32 %v10607, %v10699
      %v10731 = vadd.f32 %v10608, %v10702
      %v10732 = vadd.f32 %v10609, %v10705
      %v10733 = vadd.f32 %v10610, %v10708
      %10734 = vmatpush.msra.mxu0 0.0
      %10735 = vmatpush.msra.mxu0 0.0
      %10736 = vmatpush.msra.mxu0 0.0
      %10737 = vmatpush.msra.mxu0 0.0
      %10738 = vmatpush.msra.mxu0 0.0
      %10739 = vmatpush.msra.mxu0 0.0
      %10740 = vmatpush.msra.mxu0 0.0
      %10741 = vmatpush.msra.mxu0 0.0
      %10742 = vmatpush.msra.mxu0 0.0
      %10743 = vmatpush.msra.mxu0 0.0
      %10744 = vmatpush.msra.mxu0 0.0
      %10745 = vmatpush.msra.mxu0 0.0
      %10746 = vmatpush.msra.mxu0 %v6968
      %10747 = vmatpush.msra.mxu0 %v6967
      %10748 = vmatpush.msra.mxu0 %v6966
      %10749 = vmatpush.msra.mxu0 %v6965
      %10750 = vmatmul.f32.gmra.mxu0 %v7987
      %v10751 = vpop.f32.mrf.mxu0
      %v10752 = vadd.f32 0.0, %v10751
      %10753 = vmatmul.f32.gmra.mxu0 %v7989
      %v10754 = vpop.f32.mrf.mxu0
      %v10755 = vadd.f32 0.0, %v10754
      %10756 = vmatmul.f32.gmra.mxu0 %v7991
      %v10757 = vpop.f32.mrf.mxu0
      %v10758 = vadd.f32 0.0, %v10757
      %10759 = vmatmul.f32.gmra.mxu0 %v7993
      %v10760 = vpop.f32.mrf.mxu0
      %v10761 = vadd.f32 0.0, %v10760
      %10762 = vmatmul.f32.gmra.mxu0 %v7995
      %v10763 = vpop.f32.mrf.mxu0
      %v10764 = vadd.f32 0.0, %v10763
      %10765 = vmatmul.f32.gmra.mxu0 %v7997
      %v10766 = vpop.f32.mrf.mxu0
      %v10767 = vadd.f32 0.0, %v10766
      %10768 = vmatmul.f32.gmra.mxu0 %v7999
      %v10769 = vpop.f32.mrf.mxu0
      %v10770 = vadd.f32 0.0, %v10769
      %10771 = vmatmul.f32.gmra.mxu0 %v8001
      %v10772 = vpop.f32.mrf.mxu0
      %v10773 = vadd.f32 0.0, %v10772
      %10774 = vmatmul.f32.gmra.mxu0 %v8003
      %v10775 = vpop.f32.mrf.mxu0
      %v10776 = vadd.f32 0.0, %v10775
      %10777 = vmatmul.f32.gmra.mxu0 %v8005
      %v10778 = vpop.f32.mrf.mxu0
      %v10779 = vadd.f32 0.0, %v10778
      %10780 = vmatmul.f32.gmra.mxu0 %v8007
      %v10781 = vpop.f32.mrf.mxu0
      %v10782 = vadd.f32 0.0, %v10781
      %10783 = vmatmul.f32.gmra.mxu0 %v8009
      %v10784 = vpop.f32.mrf.mxu0
      %v10785 = vadd.f32 0.0, %v10784
      %10786 = vmatmul.f32.gmra.mxu0 %v8011
      %v10787 = vpop.f32.mrf.mxu0
      %v10788 = vadd.f32 0.0, %v10787
      %10789 = vmatmul.f32.gmra.mxu0 %v8013
      %v10790 = vpop.f32.mrf.mxu0
      %v10791 = vadd.f32 0.0, %v10790
      %10792 = vmatmul.f32.gmra.mxu0 %v8015
      %v10793 = vpop.f32.mrf.mxu0
      %v10794 = vadd.f32 0.0, %v10793
      %10795 = vmatmul.f32.gmra.mxu0 %v8017
      %v10796 = vpop.f32.mrf.mxu0
      %v10797 = vadd.f32 0.0, %v10796
      %10798 = vmatmul.f32.gmra.mxu0 %v8019
      %v10799 = vpop.f32.mrf.mxu0
      %v10800 = vadd.f32 0.0, %v10799
      %10801 = vmatmul.f32.gmra.mxu0 %v8021
      %v10802 = vpop.f32.mrf.mxu0
      %v10803 = vadd.f32 0.0, %v10802
      %10804 = vmatmul.f32.gmra.mxu0 %v8023
      %v10805 = vpop.f32.mrf.mxu0
      %v10806 = vadd.f32 0.0, %v10805
      %10807 = vmatmul.f32.gmra.mxu0 %v8025
      %v10808 = vpop.f32.mrf.mxu0
      %v10809 = vadd.f32 0.0, %v10808
      %10810 = vmatmul.f32.gmra.mxu0 %v8027
      %v10811 = vpop.f32.mrf.mxu0
      %v10812 = vadd.f32 0.0, %v10811
      %10813 = vmatmul.f32.gmra.mxu0 %v8029
      %v10814 = vpop.f32.mrf.mxu0
      %v10815 = vadd.f32 0.0, %v10814
      %10816 = vmatmul.f32.gmra.mxu0 %v8031
      %v10817 = vpop.f32.mrf.mxu0
      %v10818 = vadd.f32 0.0, %v10817
      %10819 = vmatmul.f32.gmra.mxu0 %v8033
      %v10820 = vpop.f32.mrf.mxu0
      %v10821 = vadd.f32 0.0, %v10820
      %10822 = vdwg.mxu0
      %10823 = vmatpush.msra.mxu0 0.0
      %10824 = vmatpush.msra.mxu0 0.0
      %10825 = vmatpush.msra.mxu0 0.0
      %10826 = vmatpush.msra.mxu0 0.0
      %10827 = vmatpush.msra.mxu0 0.0
      %10828 = vmatpush.msra.mxu0 0.0
      %10829 = vmatpush.msra.mxu0 0.0
      %10830 = vmatpush.msra.mxu0 0.0
      %10831 = vmatpush.msra.mxu0 0.0
      %10832 = vmatpush.msra.mxu0 0.0
      %10833 = vmatpush.msra.mxu0 0.0
      %10834 = vmatpush.msra.mxu0 0.0
      %10835 = vmatpush.msra.mxu0 %v6963
      %10836 = vmatpush.msra.mxu0 %v6962
      %10837 = vmatpush.msra.mxu0 %v6961
      %10838 = vmatpush.msra.mxu0 %v6960
      %10839 = vmatmul.f32.gmra.mxu0 %v7726
      %v10840 = vpop.f32.mrf.mxu0
      %v10841 = vadd.f32 %v10752, %v10840
      %10842 = vmatmul.f32.gmra.mxu0 %v7729
      %v10843 = vpop.f32.mrf.mxu0
      %v10844 = vadd.f32 %v10755, %v10843
      %10845 = vmatmul.f32.gmra.mxu0 %v7732
      %v10846 = vpop.f32.mrf.mxu0
      %v10847 = vadd.f32 %v10758, %v10846
      %10848 = vmatmul.f32.gmra.mxu0 %v7735
      %v10849 = vpop.f32.mrf.mxu0
      %v10850 = vadd.f32 %v10761, %v10849
      %10851 = vmatmul.f32.gmra.mxu0 %v7738
      %v10852 = vpop.f32.mrf.mxu0
      %v10853 = vadd.f32 %v10764, %v10852
      %10854 = vmatmul.f32.gmra.mxu0 %v7741
      %v10855 = vpop.f32.mrf.mxu0
      %v10856 = vadd.f32 %v10767, %v10855
      %10857 = vmatmul.f32.gmra.mxu0 %v7744
      %v10858 = vpop.f32.mrf.mxu0
      %v10859 = vadd.f32 %v10770, %v10858
      %10860 = vmatmul.f32.gmra.mxu0 %v7747
      %v10861 = vpop.f32.mrf.mxu0
      %v10862 = vadd.f32 %v10773, %v10861
      %10863 = vmatmul.f32.gmra.mxu0 %v7750
      %v10864 = vpop.f32.mrf.mxu0
      %v10865 = vadd.f32 %v10776, %v10864
      %10866 = vmatmul.f32.gmra.mxu0 %v7753
      %v10867 = vpop.f32.mrf.mxu0
      %v10868 = vadd.f32 %v10779, %v10867
      %10869 = vmatmul.f32.gmra.mxu0 %v7756
      %v10870 = vpop.f32.mrf.mxu0
      %v10871 = vadd.f32 %v10782, %v10870
      %10872 = vmatmul.f32.gmra.mxu0 %v7759
      %v10873 = vpop.f32.mrf.mxu0
      %v10874 = vadd.f32 %v10785, %v10873
      %10875 = vmatmul.f32.gmra.mxu0 %v7762
      %v10876 = vpop.f32.mrf.mxu0
      %v10877 = vadd.f32 %v10788, %v10876
      %10878 = vmatmul.f32.gmra.mxu0 %v7765
      %v10879 = vpop.f32.mrf.mxu0
      %v10880 = vadd.f32 %v10791, %v10879
      %10881 = vmatmul.f32.gmra.mxu0 %v7768
      %v10882 = vpop.f32.mrf.mxu0
      %v10883 = vadd.f32 %v10794, %v10882
      %10884 = vmatmul.f32.gmra.mxu0 %v7771
      %v10885 = vpop.f32.mrf.mxu0
      %v10886 = vadd.f32 %v10797, %v10885
      %10887 = vmatmul.f32.gmra.mxu0 %v7774
      %v10888 = vpop.f32.mrf.mxu0
      %v10889 = vadd.f32 %v10800, %v10888
      %10890 = vmatmul.f32.gmra.mxu0 %v7777
      %v10891 = vpop.f32.mrf.mxu0
      %v10892 = vadd.f32 %v10803, %v10891
      %10893 = vmatmul.f32.gmra.mxu0 %v7780
      %v10894 = vpop.f32.mrf.mxu0
      %v10895 = vadd.f32 %v10806, %v10894
      %10896 = vmatmul.f32.gmra.mxu0 %v7783
      %v10897 = vpop.f32.mrf.mxu0
      %v10898 = vadd.f32 %v10809, %v10897
      %10899 = vmatmul.f32.gmra.mxu0 %v7786
      %v10900 = vpop.f32.mrf.mxu0
      %v10901 = vadd.f32 %v10812, %v10900
      %10902 = vmatmul.f32.gmra.mxu0 %v7789
      %v10903 = vpop.f32.mrf.mxu0
      %v10904 = vadd.f32 %v10815, %v10903
      %10905 = vmatmul.f32.gmra.mxu0 %v7792
      %v10906 = vpop.f32.mrf.mxu0
      %v10907 = vadd.f32 %v10818, %v10906
      %10908 = vmatmul.f32.gmra.mxu0 %v7795
      %v10909 = vpop.f32.mrf.mxu0
      %v10910 = vadd.f32 %v10821, %v10909
      %10911 = vdwg.mxu0
      %10912 = vmatpush.msra.mxu0 0.0
      %10913 = vmatpush.msra.mxu0 0.0
      %10914 = vmatpush.msra.mxu0 0.0
      %10915 = vmatpush.msra.mxu0 0.0
      %10916 = vmatpush.msra.mxu0 0.0
      %10917 = vmatpush.msra.mxu0 0.0
      %10918 = vmatpush.msra.mxu0 0.0
      %10919 = vmatpush.msra.mxu0 0.0
      %10920 = vmatpush.msra.mxu0 0.0
      %10921 = vmatpush.msra.mxu0 0.0
      %10922 = vmatpush.msra.mxu0 0.0
      %10923 = vmatpush.msra.mxu0 0.0
      %10924 = vmatpush.msra.mxu0 %v7368
      %10925 = vmatpush.msra.mxu0 %v7367
      %10926 = vmatpush.msra.mxu0 %v7366
      %10927 = vmatpush.msra.mxu0 %v7365
      %10928 = vmatmul.f32.gmra.mxu0 %v9233
      %v10929 = vpop.f32.mrf.mxu0
      %v10930 = vadd.f32 0.0, %v10929
      %10931 = vmatmul.f32.gmra.mxu0 %v9235
      %v10932 = vpop.f32.mrf.mxu0
      %v10933 = vadd.f32 0.0, %v10932
      %10934 = vmatmul.f32.gmra.mxu0 %v9237
      %v10935 = vpop.f32.mrf.mxu0
      %v10936 = vadd.f32 0.0, %v10935
      %10937 = vmatmul.f32.gmra.mxu0 %v9239
      %v10938 = vpop.f32.mrf.mxu0
      %v10939 = vadd.f32 0.0, %v10938
      %10940 = vmatmul.f32.gmra.mxu0 %v9241
      %v10941 = vpop.f32.mrf.mxu0
      %v10942 = vadd.f32 0.0, %v10941
      %10943 = vmatmul.f32.gmra.mxu0 %v9243
      %v10944 = vpop.f32.mrf.mxu0
      %v10945 = vadd.f32 0.0, %v10944
      %10946 = vmatmul.f32.gmra.mxu0 %v9245
      %v10947 = vpop.f32.mrf.mxu0
      %v10948 = vadd.f32 0.0, %v10947
      %10949 = vmatmul.f32.gmra.mxu0 %v9247
      %v10950 = vpop.f32.mrf.mxu0
      %v10951 = vadd.f32 0.0, %v10950
      %10952 = vmatmul.f32.gmra.mxu0 %v9249
      %v10953 = vpop.f32.mrf.mxu0
      %v10954 = vadd.f32 0.0, %v10953
      %10955 = vmatmul.f32.gmra.mxu0 %v9251
      %v10956 = vpop.f32.mrf.mxu0
      %v10957 = vadd.f32 0.0, %v10956
      %10958 = vmatmul.f32.gmra.mxu0 %v9253
      %v10959 = vpop.f32.mrf.mxu0
      %v10960 = vadd.f32 0.0, %v10959
      %10961 = vmatmul.f32.gmra.mxu0 %v9255
      %v10962 = vpop.f32.mrf.mxu0
      %v10963 = vadd.f32 0.0, %v10962
      %10964 = vmatmul.f32.gmra.mxu0 %v9257
      %v10965 = vpop.f32.mrf.mxu0
      %v10966 = vadd.f32 0.0, %v10965
      %10967 = vmatmul.f32.gmra.mxu0 %v9259
      %v10968 = vpop.f32.mrf.mxu0
      %v10969 = vadd.f32 0.0, %v10968
      %10970 = vmatmul.f32.gmra.mxu0 %v9261
      %v10971 = vpop.f32.mrf.mxu0
      %v10972 = vadd.f32 0.0, %v10971
      %10973 = vmatmul.f32.gmra.mxu0 %v9263
      %v10974 = vpop.f32.mrf.mxu0
      %v10975 = vadd.f32 0.0, %v10974
      %10976 = vmatmul.f32.gmra.mxu0 %v9265
      %v10977 = vpop.f32.mrf.mxu0
      %v10978 = vadd.f32 0.0, %v10977
      %10979 = vmatmul.f32.gmra.mxu0 %v9267
      %v10980 = vpop.f32.mrf.mxu0
      %v10981 = vadd.f32 0.0, %v10980
      %10982 = vmatmul.f32.gmra.mxu0 %v9269
      %v10983 = vpop.f32.mrf.mxu0
      %v10984 = vadd.f32 0.0, %v10983
      %10985 = vmatmul.f32.gmra.mxu0 %v9271
      %v10986 = vpop.f32.mrf.mxu0
      %v10987 = vadd.f32 0.0, %v10986
      %10988 = vmatmul.f32.gmra.mxu0 %v9273
      %v10989 = vpop.f32.mrf.mxu0
      %v10990 = vadd.f32 0.0, %v10989
      %10991 = vmatmul.f32.gmra.mxu0 %v9275
      %v10992 = vpop.f32.mrf.mxu0
      %v10993 = vadd.f32 0.0, %v10992
      %10994 = vmatmul.f32.gmra.mxu0 %v9277
      %v10995 = vpop.f32.mrf.mxu0
      %v10996 = vadd.f32 0.0, %v10995
      %10997 = vmatmul.f32.gmra.mxu0 %v9279
      %v10998 = vpop.f32.mrf.mxu0
      %v10999 = vadd.f32 0.0, %v10998
      %11000 = vdwg.mxu0
      %v11001 = vadd.f32 %v10841, %v10930
      %v11002 = vadd.f32 %v10844, %v10933
      %v11003 = vadd.f32 %v10847, %v10936
      %v11004 = vadd.f32 %v10850, %v10939
      %v11005 = vadd.f32 %v10853, %v10942
      %v11006 = vadd.f32 %v10856, %v10945
      %v11007 = vadd.f32 %v10859, %v10948
      %v11008 = vadd.f32 %v10862, %v10951
      %v11009 = vadd.f32 %v10865, %v10954
      %v11010 = vadd.f32 %v10868, %v10957
      %v11011 = vadd.f32 %v10871, %v10960
      %v11012 = vadd.f32 %v10874, %v10963
      %v11013 = vadd.f32 %v10877, %v10966
      %v11014 = vadd.f32 %v10880, %v10969
      %v11015 = vadd.f32 %v10883, %v10972
      %v11016 = vadd.f32 %v10886, %v10975
      %v11017 = vadd.f32 %v10889, %v10978
      %v11018 = vadd.f32 %v10892, %v10981
      %v11019 = vadd.f32 %v10895, %v10984
      %v11020 = vadd.f32 %v10898, %v10987
      %v11021 = vadd.f32 %v10901, %v10990
      %v11022 = vadd.f32 %v10904, %v10993
      %v11023 = vadd.f32 %v10907, %v10996
      %v11024 = vadd.f32 %v10910, %v10999
      %11025 = vmatpush.msra.mxu0 0.0
      %11026 = vmatpush.msra.mxu0 0.0
      %11027 = vmatpush.msra.mxu0 0.0
      %11028 = vmatpush.msra.mxu0 0.0
      %11029 = vmatpush.msra.mxu0 0.0
      %11030 = vmatpush.msra.mxu0 0.0
      %11031 = vmatpush.msra.mxu0 0.0
      %11032 = vmatpush.msra.mxu0 0.0
      %11033 = vmatpush.msra.mxu0 0.0
      %11034 = vmatpush.msra.mxu0 0.0
      %11035 = vmatpush.msra.mxu0 0.0
      %11036 = vmatpush.msra.mxu0 0.0
      %11037 = vmatpush.msra.mxu0 %v7534
      %11038 = vmatpush.msra.mxu0 %v7533
      %11039 = vmatpush.msra.mxu0 %v7532
      %11040 = vmatpush.msra.mxu0 %v7531
      %11041 = vmatmul.f32.gmra.mxu0 %v6977
      %v11042 = vpop.f32.mrf.mxu0
      %v11043 = vadd.f32 0.0, %v11042
      %11044 = vmatmul.f32.gmra.mxu0 %v6980
      %v11045 = vpop.f32.mrf.mxu0
      %v11046 = vadd.f32 0.0, %v11045
      %11047 = vmatmul.f32.gmra.mxu0 %v6983
      %v11048 = vpop.f32.mrf.mxu0
      %v11049 = vadd.f32 0.0, %v11048
      %11050 = vmatmul.f32.gmra.mxu0 %v6986
      %v11051 = vpop.f32.mrf.mxu0
      %v11052 = vadd.f32 0.0, %v11051
      %11053 = vmatmul.f32.gmra.mxu0 %v6989
      %v11054 = vpop.f32.mrf.mxu0
      %v11055 = vadd.f32 0.0, %v11054
      %11056 = vmatmul.f32.gmra.mxu0 %v6992
      %v11057 = vpop.f32.mrf.mxu0
      %v11058 = vadd.f32 0.0, %v11057
      %11059 = vmatmul.f32.gmra.mxu0 %v6995
      %v11060 = vpop.f32.mrf.mxu0
      %v11061 = vadd.f32 0.0, %v11060
      %11062 = vmatmul.f32.gmra.mxu0 %v6998
      %v11063 = vpop.f32.mrf.mxu0
      %v11064 = vadd.f32 0.0, %v11063
      %11065 = vmatmul.f32.gmra.mxu0 %v7001
      %v11066 = vpop.f32.mrf.mxu0
      %v11067 = vadd.f32 0.0, %v11066
      %11068 = vmatmul.f32.gmra.mxu0 %v7004
      %v11069 = vpop.f32.mrf.mxu0
      %v11070 = vadd.f32 0.0, %v11069
      %11071 = vmatmul.f32.gmra.mxu0 %v7007
      %v11072 = vpop.f32.mrf.mxu0
      %v11073 = vadd.f32 0.0, %v11072
      %11074 = vmatmul.f32.gmra.mxu0 %v7010
      %v11075 = vpop.f32.mrf.mxu0
      %v11076 = vadd.f32 0.0, %v11075
      %11077 = vmatmul.f32.gmra.mxu0 %v7013
      %v11078 = vpop.f32.mrf.mxu0
      %v11079 = vadd.f32 0.0, %v11078
      %11080 = vmatmul.f32.gmra.mxu0 %v7016
      %v11081 = vpop.f32.mrf.mxu0
      %v11082 = vadd.f32 0.0, %v11081
      %11083 = vmatmul.f32.gmra.mxu0 %v7019
      %v11084 = vpop.f32.mrf.mxu0
      %v11085 = vadd.f32 0.0, %v11084
      %11086 = vmatmul.f32.gmra.mxu0 %v7022
      %v11087 = vpop.f32.mrf.mxu0
      %v11088 = vadd.f32 0.0, %v11087
      %11089 = vmatmul.f32.gmra.mxu0 %v7025
      %v11090 = vpop.f32.mrf.mxu0
      %v11091 = vadd.f32 0.0, %v11090
      %11092 = vmatmul.f32.gmra.mxu0 %v7028
      %v11093 = vpop.f32.mrf.mxu0
      %v11094 = vadd.f32 0.0, %v11093
      %11095 = vmatmul.f32.gmra.mxu0 %v7031
      %v11096 = vpop.f32.mrf.mxu0
      %v11097 = vadd.f32 0.0, %v11096
      %11098 = vmatmul.f32.gmra.mxu0 %v7034
      %v11099 = vpop.f32.mrf.mxu0
      %v11100 = vadd.f32 0.0, %v11099
      %11101 = vmatmul.f32.gmra.mxu0 %v7037
      %v11102 = vpop.f32.mrf.mxu0
      %v11103 = vadd.f32 0.0, %v11102
      %11104 = vmatmul.f32.gmra.mxu0 %v7040
      %v11105 = vpop.f32.mrf.mxu0
      %v11106 = vadd.f32 0.0, %v11105
      %11107 = vmatmul.f32.gmra.mxu0 %v8278
      %v11108 = vpop.f32.mrf.mxu0
      %v11109 = vadd.f32 0.0, %v11108
      %11110 = vmatmul.f32.gmra.mxu0 %v8281
      %v11111 = vpop.f32.mrf.mxu0
      %v11112 = vadd.f32 0.0, %v11111
      %11113 = vdwg.mxu0
      %v11114 = vadd.f32 %v11001, %v11043
      %v11115 = vadd.f32 %v11002, %v11046
      %v11116 = vadd.f32 %v11003, %v11049
      %v11117 = vadd.f32 %v11004, %v11052
      %v11118 = vadd.f32 %v11005, %v11055
      %v11119 = vadd.f32 %v11006, %v11058
      %v11120 = vadd.f32 %v11007, %v11061
      %v11121 = vadd.f32 %v11008, %v11064
      %v11122 = vadd.f32 %v11009, %v11067
      %v11123 = vadd.f32 %v11010, %v11070
      %v11124 = vadd.f32 %v11011, %v11073
      %v11125 = vadd.f32 %v11012, %v11076
      %v11126 = vadd.f32 %v11013, %v11079
      %v11127 = vadd.f32 %v11014, %v11082
      %v11128 = vadd.f32 %v11015, %v11085
      %v11129 = vadd.f32 %v11016, %v11088
      %v11130 = vadd.f32 %v11017, %v11091
      %v11131 = vadd.f32 %v11018, %v11094
      %v11132 = vadd.f32 %v11019, %v11097
      %v11133 = vadd.f32 %v11020, %v11100
      %v11134 = vadd.f32 %v11021, %v11103
      %v11135 = vadd.f32 %v11022, %v11106
      %v11136 = vadd.f32 %v11023, %v11109
      %v11137 = vadd.f32 %v11024, %v11112
      %11138 = vmatpush.msra.mxu0 0.0
      %11139 = vmatpush.msra.mxu0 0.0
      %11140 = vmatpush.msra.mxu0 0.0
      %11141 = vmatpush.msra.mxu0 0.0
      %11142 = vmatpush.msra.mxu0 0.0
      %11143 = vmatpush.msra.mxu0 0.0
      %11144 = vmatpush.msra.mxu0 0.0
      %11145 = vmatpush.msra.mxu0 0.0
      %11146 = vmatpush.msra.mxu0 0.0
      %11147 = vmatpush.msra.mxu0 0.0
      %11148 = vmatpush.msra.mxu0 0.0
      %11149 = vmatpush.msra.mxu0 0.0
      %11150 = vmatpush.msra.mxu0 %v7724
      %11151 = vmatpush.msra.mxu0 %v7723
      %11152 = vmatpush.msra.mxu0 %v7722
      %11153 = vmatpush.msra.mxu0 %v7721
      %11154 = vmatmul.f32.gmra.mxu0 %v7373
      %v11155 = vpop.f32.mrf.mxu0
      %v11156 = vadd.f32 0.0, %v11155
      %11157 = vmatmul.f32.gmra.mxu0 %v7375
      %v11158 = vpop.f32.mrf.mxu0
      %v11159 = vadd.f32 0.0, %v11158
      %11160 = vmatmul.f32.gmra.mxu0 %v7377
      %v11161 = vpop.f32.mrf.mxu0
      %v11162 = vadd.f32 0.0, %v11161
      %11163 = vmatmul.f32.gmra.mxu0 %v7379
      %v11164 = vpop.f32.mrf.mxu0
      %v11165 = vadd.f32 0.0, %v11164
      %11166 = vmatmul.f32.gmra.mxu0 %v7381
      %v11167 = vpop.f32.mrf.mxu0
      %v11168 = vadd.f32 0.0, %v11167
      %11169 = vmatmul.f32.gmra.mxu0 %v7383
      %v11170 = vpop.f32.mrf.mxu0
      %v11171 = vadd.f32 0.0, %v11170
      %11172 = vmatmul.f32.gmra.mxu0 %v7385
      %v11173 = vpop.f32.mrf.mxu0
      %v11174 = vadd.f32 0.0, %v11173
      %11175 = vmatmul.f32.gmra.mxu0 %v7387
      %v11176 = vpop.f32.mrf.mxu0
      %v11177 = vadd.f32 0.0, %v11176
      %11178 = vmatmul.f32.gmra.mxu0 %v7389
      %v11179 = vpop.f32.mrf.mxu0
      %v11180 = vadd.f32 0.0, %v11179
      %11181 = vmatmul.f32.gmra.mxu0 %v7391
      %v11182 = vpop.f32.mrf.mxu0
      %v11183 = vadd.f32 0.0, %v11182
      %11184 = vmatmul.f32.gmra.mxu0 %v7393
      %v11185 = vpop.f32.mrf.mxu0
      %v11186 = vadd.f32 0.0, %v11185
      %11187 = vmatmul.f32.gmra.mxu0 %v7395
      %v11188 = vpop.f32.mrf.mxu0
      %v11189 = vadd.f32 0.0, %v11188
      %11190 = vmatmul.f32.gmra.mxu0 %v7397
      %v11191 = vpop.f32.mrf.mxu0
      %v11192 = vadd.f32 0.0, %v11191
      %11193 = vmatmul.f32.gmra.mxu0 %v7399
      %v11194 = vpop.f32.mrf.mxu0
      %v11195 = vadd.f32 0.0, %v11194
      %11196 = vmatmul.f32.gmra.mxu0 %v7401
      %v11197 = vpop.f32.mrf.mxu0
      %v11198 = vadd.f32 0.0, %v11197
      %11199 = vmatmul.f32.gmra.mxu0 %v7403
      %v11200 = vpop.f32.mrf.mxu0
      %v11201 = vadd.f32 0.0, %v11200
      %11202 = vmatmul.f32.gmra.mxu0 %v7405
      %v11203 = vpop.f32.mrf.mxu0
      %v11204 = vadd.f32 0.0, %v11203
      %11205 = vmatmul.f32.gmra.mxu0 %v7407
      %v11206 = vpop.f32.mrf.mxu0
      %v11207 = vadd.f32 0.0, %v11206
      %11208 = vmatmul.f32.gmra.mxu0 %v7409
      %v11209 = vpop.f32.mrf.mxu0
      %v11210 = vadd.f32 0.0, %v11209
      %11211 = vmatmul.f32.gmra.mxu0 %v7411
      %v11212 = vpop.f32.mrf.mxu0
      %v11213 = vadd.f32 0.0, %v11212
      %11214 = vmatmul.f32.gmra.mxu0 %v7413
      %v11215 = vpop.f32.mrf.mxu0
      %v11216 = vadd.f32 0.0, %v11215
      %11217 = vmatmul.f32.gmra.mxu0 %v7415
      %v11218 = vpop.f32.mrf.mxu0
      %v11219 = vadd.f32 0.0, %v11218
      %11220 = vmatmul.f32.gmra.mxu0 %v8407
      %v11221 = vpop.f32.mrf.mxu0
      %v11222 = vadd.f32 0.0, %v11221
      %11223 = vmatmul.f32.gmra.mxu0 %v8409
      %v11224 = vpop.f32.mrf.mxu0
      %v11225 = vadd.f32 0.0, %v11224
      %11226 = vdwg.mxu0
      %v11227 = vadd.f32 %v11114, %v11156
      %v11228 = vadd.f32 %v11115, %v11159
      %v11229 = vadd.f32 %v11116, %v11162
      %v11230 = vadd.f32 %v11117, %v11165
      %v11231 = vadd.f32 %v11118, %v11168
      %v11232 = vadd.f32 %v11119, %v11171
      %v11233 = vadd.f32 %v11120, %v11174
      %v11234 = vadd.f32 %v11121, %v11177
      %v11235 = vadd.f32 %v11122, %v11180
      %v11236 = vadd.f32 %v11123, %v11183
      %v11237 = vadd.f32 %v11124, %v11186
      %v11238 = vadd.f32 %v11125, %v11189
      %v11239 = vadd.f32 %v11126, %v11192
      %v11240 = vadd.f32 %v11127, %v11195
      %v11241 = vadd.f32 %v11128, %v11198
      %v11242 = vadd.f32 %v11129, %v11201
      %v11243 = vadd.f32 %v11130, %v11204
      %v11244 = vadd.f32 %v11131, %v11207
      %v11245 = vadd.f32 %v11132, %v11210
      %v11246 = vadd.f32 %v11133, %v11213
      %v11247 = vadd.f32 %v11134, %v11216
      %v11248 = vadd.f32 %v11135, %v11219
      %v11249 = vadd.f32 %v11136, %v11222
      %v11250 = vadd.f32 %v11137, %v11225
      %11251 = vmatpush.msra.mxu0 0.0
      %11252 = vmatpush.msra.mxu0 0.0
      %11253 = vmatpush.msra.mxu0 0.0
      %11254 = vmatpush.msra.mxu0 0.0
      %11255 = vmatpush.msra.mxu0 0.0
      %11256 = vmatpush.msra.mxu0 0.0
      %11257 = vmatpush.msra.mxu0 0.0
      %11258 = vmatpush.msra.mxu0 0.0
      %11259 = vmatpush.msra.mxu0 0.0
      %11260 = vmatpush.msra.mxu0 0.0
      %11261 = vmatpush.msra.mxu0 0.0
      %11262 = vmatpush.msra.mxu0 0.0
      %11263 = vmatpush.msra.mxu0 %v7986
      %11264 = vmatpush.msra.mxu0 %v7985
      %11265 = vmatpush.msra.mxu0 %v7984
      %11266 = vmatpush.msra.mxu0 %v7983
      %11267 = vmatmul.f32.gmra.mxu0 %v8778
      %v11268 = vpop.f32.mrf.mxu0
      %v11269 = vadd.f32 0.0, %v11268
      %11270 = vmatmul.f32.gmra.mxu0 %v8780
      %v11271 = vpop.f32.mrf.mxu0
      %v11272 = vadd.f32 0.0, %v11271
      %11273 = vmatmul.f32.gmra.mxu0 %v8782
      %v11274 = vpop.f32.mrf.mxu0
      %v11275 = vadd.f32 0.0, %v11274
      %11276 = vmatmul.f32.gmra.mxu0 %v8784
      %v11277 = vpop.f32.mrf.mxu0
      %v11278 = vadd.f32 0.0, %v11277
      %11279 = vmatmul.f32.gmra.mxu0 %v8786
      %v11280 = vpop.f32.mrf.mxu0
      %v11281 = vadd.f32 0.0, %v11280
      %11282 = vmatmul.f32.gmra.mxu0 %v8788
      %v11283 = vpop.f32.mrf.mxu0
      %v11284 = vadd.f32 0.0, %v11283
      %11285 = vmatmul.f32.gmra.mxu0 %v8790
      %v11286 = vpop.f32.mrf.mxu0
      %v11287 = vadd.f32 0.0, %v11286
      %11288 = vmatmul.f32.gmra.mxu0 %v8792
      %v11289 = vpop.f32.mrf.mxu0
      %v11290 = vadd.f32 0.0, %v11289
      %11291 = vmatmul.f32.gmra.mxu0 %v8794
      %v11292 = vpop.f32.mrf.mxu0
      %v11293 = vadd.f32 0.0, %v11292
      %11294 = vmatmul.f32.gmra.mxu0 %v8796
      %v11295 = vpop.f32.mrf.mxu0
      %v11296 = vadd.f32 0.0, %v11295
      %11297 = vmatmul.f32.gmra.mxu0 %v8798
      %v11298 = vpop.f32.mrf.mxu0
      %v11299 = vadd.f32 0.0, %v11298
      %11300 = vmatmul.f32.gmra.mxu0 %v8800
      %v11301 = vpop.f32.mrf.mxu0
      %v11302 = vadd.f32 0.0, %v11301
      %11303 = vmatmul.f32.gmra.mxu0 %v8802
      %v11304 = vpop.f32.mrf.mxu0
      %v11305 = vadd.f32 0.0, %v11304
      %11306 = vmatmul.f32.gmra.mxu0 %v8804
      %v11307 = vpop.f32.mrf.mxu0
      %v11308 = vadd.f32 0.0, %v11307
      %11309 = vmatmul.f32.gmra.mxu0 %v8806
      %v11310 = vpop.f32.mrf.mxu0
      %v11311 = vadd.f32 0.0, %v11310
      %11312 = vmatmul.f32.gmra.mxu0 %v8808
      %v11313 = vpop.f32.mrf.mxu0
      %v11314 = vadd.f32 0.0, %v11313
      %11315 = vmatmul.f32.gmra.mxu0 %v8810
      %v11316 = vpop.f32.mrf.mxu0
      %v11317 = vadd.f32 0.0, %v11316
      %11318 = vmatmul.f32.gmra.mxu0 %v8812
      %v11319 = vpop.f32.mrf.mxu0
      %v11320 = vadd.f32 0.0, %v11319
      %11321 = vmatmul.f32.gmra.mxu0 %v8814
      %v11322 = vpop.f32.mrf.mxu0
      %v11323 = vadd.f32 0.0, %v11322
      %11324 = vmatmul.f32.gmra.mxu0 %v8816
      %v11325 = vpop.f32.mrf.mxu0
      %v11326 = vadd.f32 0.0, %v11325
      %11327 = vmatmul.f32.gmra.mxu0 %v8818
      %v11328 = vpop.f32.mrf.mxu0
      %v11329 = vadd.f32 0.0, %v11328
      %11330 = vmatmul.f32.gmra.mxu0 %v8820
      %v11331 = vpop.f32.mrf.mxu0
      %v11332 = vadd.f32 0.0, %v11331
      %11333 = vmatmul.f32.gmra.mxu0 %v9626
      %v11334 = vpop.f32.mrf.mxu0
      %v11335 = vadd.f32 0.0, %v11334
      %11336 = vmatmul.f32.gmra.mxu0 %v9628
      %v11337 = vpop.f32.mrf.mxu0
      %v11338 = vadd.f32 0.0, %v11337
      %11339 = vdwg.mxu0
      %v11340 = vadd.f32 %v11227, %v11269
      %v11341 = vadd.f32 %v11228, %v11272
      %v11342 = vadd.f32 %v11229, %v11275
      %v11343 = vadd.f32 %v11230, %v11278
      %v11344 = vadd.f32 %v11231, %v11281
      %v11345 = vadd.f32 %v11232, %v11284
      %v11346 = vadd.f32 %v11233, %v11287
      %v11347 = vadd.f32 %v11234, %v11290
      %v11348 = vadd.f32 %v11235, %v11293
      %v11349 = vadd.f32 %v11236, %v11296
      %v11350 = vadd.f32 %v11237, %v11299
      %v11351 = vadd.f32 %v11238, %v11302
      %v11352 = vadd.f32 %v11239, %v11305
      %v11353 = vadd.f32 %v11240, %v11308
      %v11354 = vadd.f32 %v11241, %v11311
      %v11355 = vadd.f32 %v11242, %v11314
      %v11356 = vadd.f32 %v11243, %v11317
      %v11357 = vadd.f32 %v11244, %v11320
      %v11358 = vadd.f32 %v11245, %v11323
      %v11359 = vadd.f32 %v11246, %v11326
      %v11360 = vadd.f32 %v11247, %v11329
      %v11361 = vadd.f32 %v11248, %v11332
      %v11362 = vadd.f32 %v11249, %v11335
      %v11363 = vadd.f32 %v11250, %v11338
      %11364 = vmatpush.msra.mxu0 0.0
      %11365 = vmatpush.msra.mxu0 0.0
      %11366 = vmatpush.msra.mxu0 0.0
      %11367 = vmatpush.msra.mxu0 0.0
      %11368 = vmatpush.msra.mxu0 0.0
      %11369 = vmatpush.msra.mxu0 0.0
      %11370 = vmatpush.msra.mxu0 0.0
      %11371 = vmatpush.msra.mxu0 0.0
      %11372 = vmatpush.msra.mxu0 0.0
      %11373 = vmatpush.msra.mxu0 0.0
      %11374 = vmatpush.msra.mxu0 0.0
      %11375 = vmatpush.msra.mxu0 0.0
      %11376 = vmatpush.msra.mxu0 %v8152
      %11377 = vmatpush.msra.mxu0 %v8151
      %11378 = vmatpush.msra.mxu0 %v8150
      %11379 = vmatpush.msra.mxu0 %v8149
      %11380 = vmatmul.f32.gmra.mxu0 %v7732
      %v11381 = vpop.f32.mrf.mxu0
      %v11382 = vadd.f32 0.0, %v11381
      %11383 = vmatmul.f32.gmra.mxu0 %v7735
      %v11384 = vpop.f32.mrf.mxu0
      %v11385 = vadd.f32 0.0, %v11384
      %11386 = vmatmul.f32.gmra.mxu0 %v7738
      %v11387 = vpop.f32.mrf.mxu0
      %v11388 = vadd.f32 0.0, %v11387
      %11389 = vmatmul.f32.gmra.mxu0 %v7741
      %v11390 = vpop.f32.mrf.mxu0
      %v11391 = vadd.f32 0.0, %v11390
      %11392 = vmatmul.f32.gmra.mxu0 %v7744
      %v11393 = vpop.f32.mrf.mxu0
      %v11394 = vadd.f32 0.0, %v11393
      %11395 = vmatmul.f32.gmra.mxu0 %v7747
      %v11396 = vpop.f32.mrf.mxu0
      %v11397 = vadd.f32 0.0, %v11396
      %11398 = vmatmul.f32.gmra.mxu0 %v7750
      %v11399 = vpop.f32.mrf.mxu0
      %v11400 = vadd.f32 0.0, %v11399
      %11401 = vmatmul.f32.gmra.mxu0 %v7753
      %v11402 = vpop.f32.mrf.mxu0
      %v11403 = vadd.f32 0.0, %v11402
      %11404 = vmatmul.f32.gmra.mxu0 %v7756
      %v11405 = vpop.f32.mrf.mxu0
      %v11406 = vadd.f32 0.0, %v11405
      %11407 = vmatmul.f32.gmra.mxu0 %v7759
      %v11408 = vpop.f32.mrf.mxu0
      %v11409 = vadd.f32 0.0, %v11408
      %11410 = vmatmul.f32.gmra.mxu0 %v7762
      %v11411 = vpop.f32.mrf.mxu0
      %v11412 = vadd.f32 0.0, %v11411
      %11413 = vmatmul.f32.gmra.mxu0 %v7765
      %v11414 = vpop.f32.mrf.mxu0
      %v11415 = vadd.f32 0.0, %v11414
      %11416 = vmatmul.f32.gmra.mxu0 %v7768
      %v11417 = vpop.f32.mrf.mxu0
      %v11418 = vadd.f32 0.0, %v11417
      %11419 = vmatmul.f32.gmra.mxu0 %v7771
      %v11420 = vpop.f32.mrf.mxu0
      %v11421 = vadd.f32 0.0, %v11420
      %11422 = vmatmul.f32.gmra.mxu0 %v7774
      %v11423 = vpop.f32.mrf.mxu0
      %v11424 = vadd.f32 0.0, %v11423
      %11425 = vmatmul.f32.gmra.mxu0 %v7777
      %v11426 = vpop.f32.mrf.mxu0
      %v11427 = vadd.f32 0.0, %v11426
      %11428 = vmatmul.f32.gmra.mxu0 %v7780
      %v11429 = vpop.f32.mrf.mxu0
      %v11430 = vadd.f32 0.0, %v11429
      %11431 = vmatmul.f32.gmra.mxu0 %v7783
      %v11432 = vpop.f32.mrf.mxu0
      %v11433 = vadd.f32 0.0, %v11432
      %11434 = vmatmul.f32.gmra.mxu0 %v7786
      %v11435 = vpop.f32.mrf.mxu0
      %v11436 = vadd.f32 0.0, %v11435
      %11437 = vmatmul.f32.gmra.mxu0 %v7789
      %v11438 = vpop.f32.mrf.mxu0
      %v11439 = vadd.f32 0.0, %v11438
      %11440 = vmatmul.f32.gmra.mxu0 %v7792
      %v11441 = vpop.f32.mrf.mxu0
      %v11442 = vadd.f32 0.0, %v11441
      %11443 = vmatmul.f32.gmra.mxu0 %v7795
      %v11444 = vpop.f32.mrf.mxu0
      %v11445 = vadd.f32 0.0, %v11444
      %11446 = vmatmul.f32.gmra.mxu0 %v10493
      %v11447 = vpop.f32.mrf.mxu0
      %v11448 = vadd.f32 0.0, %v11447
      %11449 = vmatmul.f32.gmra.mxu0 %v10496
      %v11450 = vpop.f32.mrf.mxu0
      %v11451 = vadd.f32 0.0, %v11450
      %11452 = vdwg.mxu0
      %v11453 = vadd.f32 %v11340, %v11382
      %v11454 = vadd.f32 %v11341, %v11385
      %v11455 = vadd.f32 %v11342, %v11388
      %v11456 = vadd.f32 %v11343, %v11391
      %v11457 = vadd.f32 %v11344, %v11394
      %v11458 = vadd.f32 %v11345, %v11397
      %v11459 = vadd.f32 %v11346, %v11400
      %v11460 = vadd.f32 %v11347, %v11403
      %v11461 = vadd.f32 %v11348, %v11406
      %v11462 = vadd.f32 %v11349, %v11409
      %v11463 = vadd.f32 %v11350, %v11412
      %v11464 = vadd.f32 %v11351, %v11415
      %v11465 = vadd.f32 %v11352, %v11418
      %v11466 = vadd.f32 %v11353, %v11421
      %v11467 = vadd.f32 %v11354, %v11424
      %v11468 = vadd.f32 %v11355, %v11427
      %v11469 = vadd.f32 %v11356, %v11430
      %v11470 = vadd.f32 %v11357, %v11433
      %v11471 = vadd.f32 %v11358, %v11436
      %v11472 = vadd.f32 %v11359, %v11439
      %v11473 = vadd.f32 %v11360, %v11442
      %v11474 = vadd.f32 %v11361, %v11445
      %v11475 = vadd.f32 %v11362, %v11448
      %v11476 = vadd.f32 %v11363, %v11451
      %11477 = vmatpush.msra.mxu0 0.0
      %11478 = vmatpush.msra.mxu0 0.0
      %11479 = vmatpush.msra.mxu0 0.0
      %11480 = vmatpush.msra.mxu0 0.0
      %11481 = vmatpush.msra.mxu0 0.0
      %11482 = vmatpush.msra.mxu0 0.0
      %11483 = vmatpush.msra.mxu0 0.0
      %11484 = vmatpush.msra.mxu0 0.0
      %11485 = vmatpush.msra.mxu0 0.0
      %11486 = vmatpush.msra.mxu0 0.0
      %11487 = vmatpush.msra.mxu0 0.0
      %11488 = vmatpush.msra.mxu0 0.0
      %11489 = vmatpush.msra.mxu0 %v8276
      %11490 = vmatpush.msra.mxu0 %v8275
      %11491 = vmatpush.msra.mxu0 %v8274
      %11492 = vmatpush.msra.mxu0 %v8273
      %11493 = vmatmul.f32.gmra.mxu0 %v7991
      %v11494 = vpop.f32.mrf.mxu0
      %v11495 = vadd.f32 0.0, %v11494
      %11496 = vmatmul.f32.gmra.mxu0 %v7993
      %v11497 = vpop.f32.mrf.mxu0
      %v11498 = vadd.f32 0.0, %v11497
      %11499 = vmatmul.f32.gmra.mxu0 %v7995
      %v11500 = vpop.f32.mrf.mxu0
      %v11501 = vadd.f32 0.0, %v11500
      %11502 = vmatmul.f32.gmra.mxu0 %v7997
      %v11503 = vpop.f32.mrf.mxu0
      %v11504 = vadd.f32 0.0, %v11503
      %11505 = vmatmul.f32.gmra.mxu0 %v7999
      %v11506 = vpop.f32.mrf.mxu0
      %v11507 = vadd.f32 0.0, %v11506
      %11508 = vmatmul.f32.gmra.mxu0 %v8001
      %v11509 = vpop.f32.mrf.mxu0
      %v11510 = vadd.f32 0.0, %v11509
      %11511 = vmatmul.f32.gmra.mxu0 %v8003
      %v11512 = vpop.f32.mrf.mxu0
      %v11513 = vadd.f32 0.0, %v11512
      %11514 = vmatmul.f32.gmra.mxu0 %v8005
      %v11515 = vpop.f32.mrf.mxu0
      %v11516 = vadd.f32 0.0, %v11515
      %11517 = vmatmul.f32.gmra.mxu0 %v8007
      %v11518 = vpop.f32.mrf.mxu0
      %v11519 = vadd.f32 0.0, %v11518
      %11520 = vmatmul.f32.gmra.mxu0 %v8009
      %v11521 = vpop.f32.mrf.mxu0
      %v11522 = vadd.f32 0.0, %v11521
      %11523 = vmatmul.f32.gmra.mxu0 %v8011
      %v11524 = vpop.f32.mrf.mxu0
      %v11525 = vadd.f32 0.0, %v11524
      %11526 = vmatmul.f32.gmra.mxu0 %v8013
      %v11527 = vpop.f32.mrf.mxu0
      %v11528 = vadd.f32 0.0, %v11527
      %11529 = vmatmul.f32.gmra.mxu0 %v8015
      %v11530 = vpop.f32.mrf.mxu0
      %v11531 = vadd.f32 0.0, %v11530
      %11532 = vmatmul.f32.gmra.mxu0 %v8017
      %v11533 = vpop.f32.mrf.mxu0
      %v11534 = vadd.f32 0.0, %v11533
      %11535 = vmatmul.f32.gmra.mxu0 %v8019
      %v11536 = vpop.f32.mrf.mxu0
      %v11537 = vadd.f32 0.0, %v11536
      %11538 = vmatmul.f32.gmra.mxu0 %v8021
      %v11539 = vpop.f32.mrf.mxu0
      %v11540 = vadd.f32 0.0, %v11539
      %11541 = vmatmul.f32.gmra.mxu0 %v8023
      %v11542 = vpop.f32.mrf.mxu0
      %v11543 = vadd.f32 0.0, %v11542
      %11544 = vmatmul.f32.gmra.mxu0 %v8025
      %v11545 = vpop.f32.mrf.mxu0
      %v11546 = vadd.f32 0.0, %v11545
      %11547 = vmatmul.f32.gmra.mxu0 %v8027
      %v11548 = vpop.f32.mrf.mxu0
      %v11549 = vadd.f32 0.0, %v11548
      %11550 = vmatmul.f32.gmra.mxu0 %v8029
      %v11551 = vpop.f32.mrf.mxu0
      %v11552 = vadd.f32 0.0, %v11551
      %11553 = vmatmul.f32.gmra.mxu0 %v8031
      %v11554 = vpop.f32.mrf.mxu0
      %v11555 = vadd.f32 0.0, %v11554
      %11556 = vmatmul.f32.gmra.mxu0 %v8033
      %v11557 = vpop.f32.mrf.mxu0
      %v11558 = vadd.f32 0.0, %v11557
      %11559 = vmatmul.f32.gmra.mxu0 %v10617
      %v11560 = vpop.f32.mrf.mxu0
      %v11561 = vadd.f32 0.0, %v11560
      %11562 = vmatmul.f32.gmra.mxu0 %v10619
      %v11563 = vpop.f32.mrf.mxu0
      %v11564 = vadd.f32 0.0, %v11563
      %11565 = vdwg.mxu0
      %v11566 = vadd.f32 %v11453, %v11495
      %v11567 = vadd.f32 %v11454, %v11498
      %v11568 = vadd.f32 %v11455, %v11501
      %v11569 = vadd.f32 %v11456, %v11504
      %v11570 = vadd.f32 %v11457, %v11507
      %v11571 = vadd.f32 %v11458, %v11510
      %v11572 = vadd.f32 %v11459, %v11513
      %v11573 = vadd.f32 %v11460, %v11516
      %v11574 = vadd.f32 %v11461, %v11519
      %v11575 = vadd.f32 %v11462, %v11522
      %v11576 = vadd.f32 %v11463, %v11525
      %v11577 = vadd.f32 %v11464, %v11528
      %v11578 = vadd.f32 %v11465, %v11531
      %v11579 = vadd.f32 %v11466, %v11534
      %v11580 = vadd.f32 %v11467, %v11537
      %v11581 = vadd.f32 %v11468, %v11540
      %v11582 = vadd.f32 %v11469, %v11543
      %v11583 = vadd.f32 %v11470, %v11546
      %v11584 = vadd.f32 %v11471, %v11549
      %v11585 = vadd.f32 %v11472, %v11552
      %v11586 = vadd.f32 %v11473, %v11555
      %v11587 = vadd.f32 %v11474, %v11558
      %v11588 = vadd.f32 %v11475, %v11561
      %v11589 = vadd.f32 %v11476, %v11564
      %v11591 = vrot.slane %v6957, 1
      %v11592 = vrot.slane %v6958, 1
      %v11593 = vsel %vm1032, %v11591, %v11592
      %v11594 = vrot.slane %v6959, 1
      %v11595 = vsel %vm1032, %v11592, %v11594
      %v11596 = vsel %vm6969, %v11593, 0
      %v11598 = vsel %vm6969, %v11595, 0
      %11600 = vmatpush.msra.mxu0 0.0
      %11601 = vmatpush.msra.mxu0 0.0
      %11602 = vmatpush.msra.mxu0 0.0
      %11603 = vmatpush.msra.mxu0 0.0
      %11604 = vmatpush.msra.mxu0 0.0
      %11605 = vmatpush.msra.mxu0 0.0
      %11606 = vmatpush.msra.mxu0 0.0
      %11607 = vmatpush.msra.mxu0 0.0
      %11608 = vmatpush.msra.mxu0 0.0
      %11609 = vmatpush.msra.mxu0 0.0
      %11610 = vmatpush.msra.mxu0 0.0
      %11611 = vmatpush.msra.mxu0 0.0
      %11612 = vmatpush.msra.mxu0 %v8406
      %11613 = vmatpush.msra.mxu0 %v8405
      %11614 = vmatpush.msra.mxu0 %v8404
      %11615 = vmatpush.msra.mxu0 %v8403
      %11616 = vmatmul.f32.gmra.mxu0 %v9237
      %v11617 = vpop.f32.mrf.mxu0
      %v11618 = vadd.f32 0.0, %v11617
      %11619 = vmatmul.f32.gmra.mxu0 %v9239
      %v11620 = vpop.f32.mrf.mxu0
      %v11621 = vadd.f32 0.0, %v11620
      %11622 = vmatmul.f32.gmra.mxu0 %v9241
      %v11623 = vpop.f32.mrf.mxu0
      %v11624 = vadd.f32 0.0, %v11623
      %11625 = vmatmul.f32.gmra.mxu0 %v9243
      %v11626 = vpop.f32.mrf.mxu0
      %v11627 = vadd.f32 0.0, %v11626
      %11628 = vmatmul.f32.gmra.mxu0 %v9245
      %v11629 = vpop.f32.mrf.mxu0
      %v11630 = vadd.f32 0.0, %v11629
      %11631 = vmatmul.f32.gmra.mxu0 %v9247
      %v11632 = vpop.f32.mrf.mxu0
      %v11633 = vadd.f32 0.0, %v11632
      %11634 = vmatmul.f32.gmra.mxu0 %v9249
      %v11635 = vpop.f32.mrf.mxu0
      %v11636 = vadd.f32 0.0, %v11635
      %11637 = vmatmul.f32.gmra.mxu0 %v9251
      %v11638 = vpop.f32.mrf.mxu0
      %v11639 = vadd.f32 0.0, %v11638
      %11640 = vmatmul.f32.gmra.mxu0 %v9253
      %v11641 = vpop.f32.mrf.mxu0
      %v11642 = vadd.f32 0.0, %v11641
      %11643 = vmatmul.f32.gmra.mxu0 %v9255
      %v11644 = vpop.f32.mrf.mxu0
      %v11645 = vadd.f32 0.0, %v11644
      %11646 = vmatmul.f32.gmra.mxu0 %v9257
      %v11647 = vpop.f32.mrf.mxu0
      %v11648 = vadd.f32 0.0, %v11647
      %11649 = vmatmul.f32.gmra.mxu0 %v9259
      %v11650 = vpop.f32.mrf.mxu0
      %v11651 = vadd.f32 0.0, %v11650
      %11652 = vmatmul.f32.gmra.mxu0 %v9261
      %v11653 = vpop.f32.mrf.mxu0
      %v11654 = vadd.f32 0.0, %v11653
      %11655 = vmatmul.f32.gmra.mxu0 %v9263
      %v11656 = vpop.f32.mrf.mxu0
      %v11657 = vadd.f32 0.0, %v11656
      %11658 = vmatmul.f32.gmra.mxu0 %v9265
      %v11659 = vpop.f32.mrf.mxu0
      %v11660 = vadd.f32 0.0, %v11659
      %11661 = vmatmul.f32.gmra.mxu0 %v9267
      %v11662 = vpop.f32.mrf.mxu0
      %v11663 = vadd.f32 0.0, %v11662
      %11664 = vmatmul.f32.gmra.mxu0 %v9269
      %v11665 = vpop.f32.mrf.mxu0
      %v11666 = vadd.f32 0.0, %v11665
      %11667 = vmatmul.f32.gmra.mxu0 %v9271
      %v11668 = vpop.f32.mrf.mxu0
      %v11669 = vadd.f32 0.0, %v11668
      %11670 = vmatmul.f32.gmra.mxu0 %v9273
      %v11671 = vpop.f32.mrf.mxu0
      %v11672 = vadd.f32 0.0, %v11671
      %11673 = vmatmul.f32.gmra.mxu0 %v9275
      %v11674 = vpop.f32.mrf.mxu0
      %v11675 = vadd.f32 0.0, %v11674
      %11676 = vmatmul.f32.gmra.mxu0 %v9277
      %v11677 = vpop.f32.mrf.mxu0
      %v11678 = vadd.f32 0.0, %v11677
      %11679 = vmatmul.f32.gmra.mxu0 %v9279
      %v11680 = vpop.f32.mrf.mxu0
      %v11681 = vadd.f32 0.0, %v11680
      %11682 = vmatmul.f32.gmra.mxu0 %v11596
      %v11683 = vpop.f32.mrf.mxu0
      %v11684 = vadd.f32 0.0, %v11683
      %11685 = vmatmul.f32.gmra.mxu0 %v11598
      %v11686 = vpop.f32.mrf.mxu0
      %v11687 = vadd.f32 0.0, %v11686
      %11688 = vdwg.mxu0
      %v11689 = vadd.f32 %v11566, %v11618
      %v11690 = vadd.f32 %v11567, %v11621
      %v11691 = vadd.f32 %v11568, %v11624
      %v11692 = vadd.f32 %v11569, %v11627
      %v11693 = vadd.f32 %v11570, %v11630
      %v11694 = vadd.f32 %v11571, %v11633
      %v11695 = vadd.f32 %v11572, %v11636
      %v11696 = vadd.f32 %v11573, %v11639
      %v11697 = vadd.f32 %v11574, %v11642
      %v11698 = vadd.f32 %v11575, %v11645
      %v11699 = vadd.f32 %v11576, %v11648
      %v11700 = vadd.f32 %v11577, %v11651
      %v11701 = vadd.f32 %v11578, %v11654
      %v11702 = vadd.f32 %v11579, %v11657
      %v11703 = vadd.f32 %v11580, %v11660
      %v11704 = vadd.f32 %v11581, %v11663
      %v11705 = vadd.f32 %v11582, %v11666
      %v11706 = vadd.f32 %v11583, %v11669
      %v11707 = vadd.f32 %v11584, %v11672
      %v11708 = vadd.f32 %v11585, %v11675
      %v11709 = vadd.f32 %v11586, %v11678
      %v11710 = vadd.f32 %v11587, %v11681
      %v11711 = vadd.f32 %v11588, %v11684
      %v11712 = vadd.f32 %v11589, %v11687
      %v11713 = vmax.f32 %v8500, %v9719
      %v11714 = vmax.f32 %v8501, %v9720
      %v11715 = vmax.f32 %v8502, %v9721
      %v11716 = vmax.f32 %v8503, %v9722
      %v11717 = vmax.f32 %v8504, %v9723
      %v11718 = vmax.f32 %v8505, %v9724
      %v11719 = vmax.f32 %v8506, %v9725
      %v11720 = vmax.f32 %v8507, %v9726
      %v11721 = vmax.f32 %v8508, %v9727
      %v11722 = vmax.f32 %v8509, %v9728
      %v11723 = vmax.f32 %v8510, %v9729
      %v11724 = vmax.f32 %v8511, %v9730
      %v11725 = vmax.f32 %v8512, %v9731
      %v11726 = vmax.f32 %v8513, %v9732
      %v11727 = vmax.f32 %v8514, %v9733
      %v11728 = vmax.f32 %v8515, %v9734
      %v11729 = vmax.f32 %v8516, %v9735
      %v11730 = vmax.f32 %v8517, %v9736
      %v11731 = vmax.f32 %v8518, %v9737
      %v11732 = vmax.f32 %v8519, %v9738
      %v11733 = vmax.f32 %v8520, %v9739
      %v11734 = vmax.f32 %v8521, %v9740
      %v11735 = vmax.f32 %v8522, %v9741
      %v11736 = vmax.f32 %v8523, %v9742
      %v11737 = vmax.f32 %v10710, %v11689
      %v11738 = vmax.f32 %v10711, %v11690
      %v11739 = vmax.f32 %v10712, %v11691
      %v11740 = vmax.f32 %v10713, %v11692
      %v11741 = vmax.f32 %v10714, %v11693
      %v11742 = vmax.f32 %v10715, %v11694
      %v11743 = vmax.f32 %v10716, %v11695
      %v11744 = vmax.f32 %v10717, %v11696
      %v11745 = vmax.f32 %v10718, %v11697
      %v11746 = vmax.f32 %v10719, %v11698
      %v11747 = vmax.f32 %v10720, %v11699
      %v11748 = vmax.f32 %v10721, %v11700
      %v11749 = vmax.f32 %v10722, %v11701
      %v11750 = vmax.f32 %v10723, %v11702
      %v11751 = vmax.f32 %v10724, %v11703
      %v11752 = vmax.f32 %v10725, %v11704
      %v11753 = vmax.f32 %v10726, %v11705
      %v11754 = vmax.f32 %v10727, %v11706
      %v11755 = vmax.f32 %v10728, %v11707
      %v11756 = vmax.f32 %v10729, %v11708
      %v11757 = vmax.f32 %v10730, %v11709
      %v11758 = vmax.f32 %v10731, %v11710
      %v11759 = vmax.f32 %v10732, %v11711
      %v11760 = vmax.f32 %v10733, %v11712
      %v11761 = vmax.f32 %v11713, %v11737
      %v11762 = vmax.f32 %v11714, %v11738
      %v11763 = vmax.f32 %v11715, %v11739
      %v11764 = vmax.f32 %v11716, %v11740
      %v11765 = vmax.f32 %v11717, %v11741
      %v11766 = vmax.f32 %v11718, %v11742
      %v11767 = vmax.f32 %v11719, %v11743
      %v11768 = vmax.f32 %v11720, %v11744
      %v11769 = vmax.f32 %v11721, %v11745
      %v11770 = vmax.f32 %v11722, %v11746
      %v11771 = vmax.f32 %v11723, %v11747
      %v11772 = vmax.f32 %v11724, %v11748
      %v11773 = vmax.f32 %v11725, %v11749
      %v11774 = vmax.f32 %v11726, %v11750
      %v11775 = vmax.f32 %v11727, %v11751
      %v11776 = vmax.f32 %v11728, %v11752
      %v11777 = vmax.f32 %v11729, %v11753
      %v11778 = vmax.f32 %v11730, %v11754
      %v11779 = vmax.f32 %v11731, %v11755
      %v11780 = vmax.f32 %v11732, %v11756
      %v11781 = vmax.f32 %v11733, %v11757
      %v11782 = vmax.f32 %v11734, %v11758
      %v11783 = vmax.f32 %v11735, %v11759
      %v11784 = vmax.f32 %v11736, %v11760
      %v11785 = vld [vmem:[%s4] sm:$0x1]
      %v11787 = vperm.slane %v11785, 0
      %v11789 = vadd.f32 %v11761, %v11787
      %v11790 = vadd.f32 %v11762, %v11787
      %v11791 = vadd.f32 %v11763, %v11787
      %v11792 = vadd.f32 %v11764, %v11787
      %v11793 = vadd.f32 %v11765, %v11787
      %v11794 = vadd.f32 %v11766, %v11787
      %v11795 = vadd.f32 %v11767, %v11787
      %v11796 = vadd.f32 %v11768, %v11787
      %v11797 = vadd.f32 %v11769, %v11787
      %v11798 = vadd.f32 %v11770, %v11787
      %v11799 = vadd.f32 %v11771, %v11787
      %v11800 = vadd.f32 %v11772, %v11787
      %v11801 = vadd.f32 %v11773, %v11787
      %v11802 = vadd.f32 %v11774, %v11787
      %v11803 = vadd.f32 %v11775, %v11787
      %v11804 = vadd.f32 %v11776, %v11787
      %v11805 = vadd.f32 %v11777, %v11787
      %v11806 = vadd.f32 %v11778, %v11787
      %v11807 = vadd.f32 %v11779, %v11787
      %v11808 = vadd.f32 %v11780, %v11787
      %v11809 = vadd.f32 %v11781, %v11787
      %v11810 = vadd.f32 %v11782, %v11787
      %v11811 = vadd.f32 %v11783, %v11787
      %v11812 = vadd.f32 %v11784, %v11787
      %vm11813 = vcmask 523264
      %11814 = vst.msk [vmem:[%s229] sm:$0xff] %vm11813, %v11789
      %11815 = vst.msk [vmem:[%s229 + $0x8] sm:$0xff] %vm11813, %v11790
      %11816 = vst.msk [vmem:[%s229 + $0x10] sm:$0xff] %vm11813, %v11791
      %11817 = vst.msk [vmem:[%s229 + $0x18] sm:$0xff] %vm11813, %v11792
      %11818 = vst.msk [vmem:[%s229 + $0x20] sm:$0xff] %vm11813, %v11793
      %11819 = vst.msk [vmem:[%s229 + $0x28] sm:$0xff] %vm11813, %v11794
      %11820 = vst.msk [vmem:[%s229 + $0x30] sm:$0xff] %vm11813, %v11795
      %11821 = vst.msk [vmem:[%s229 + $0x38] sm:$0xff] %vm11813, %v11796
      %11822 = vst.msk [vmem:[%s229 + $0x40] sm:$0xff] %vm11813, %v11797
      %11823 = vst.msk [vmem:[%s229 + $0x48] sm:$0xff] %vm11813, %v11798
      %11824 = vst.msk [vmem:[%s229 + $0x50] sm:$0xff] %vm11813, %v11799
      %11825 = vst.msk [vmem:[%s229 + $0x58] sm:$0xff] %vm11813, %v11800
      %11826 = vst.msk [vmem:[%s229 + $0x60] sm:$0xff] %vm11813, %v11801
      %11827 = vst.msk [vmem:[%s229 + $0x68] sm:$0xff] %vm11813, %v11802
      %11828 = vst.msk [vmem:[%s229 + $0x70] sm:$0xff] %vm11813, %v11803
      %11829 = vst.msk [vmem:[%s229 + $0x78] sm:$0xff] %vm11813, %v11804
      %11830 = vst.msk [vmem:[%s229 + $0x80] sm:$0xff] %vm11813, %v11805
      %11831 = vst.msk [vmem:[%s229 + $0x88] sm:$0xff] %vm11813, %v11806
      %11832 = vst.msk [vmem:[%s229 + $0x90] sm:$0xff] %vm11813, %v11807
      %11833 = vst.msk [vmem:[%s229 + $0x98] sm:$0xff] %vm11813, %v11808
      %11834 = vst.msk [vmem:[%s229 + $0xa0] sm:$0xff] %vm11813, %v11809
      %11835 = vst.msk [vmem:[%s229 + $0xa8] sm:$0xff] %vm11813, %v11810
      %11836 = vst.msk [vmem:[%s229 + $0xb0] sm:$0xff] %vm11813, %v11811
      %11837 = vst.msk [vmem:[%s229 + $0xb8] sm:$0xff] %vm11813, %v11812
      %p11838 = scmp.lt.s32.totalorder %s16, 1
      %s11839 = scalar_select %p11838, %s16, 1
      %s11840 = smul.addr %s11839, 24
      %s11841 = smul.addr %s11840, 8
      %s11842 = scalar_lea.vmem %s5, %s11841
      // Predicated region
      $region41: #{tpu_custom_call.1} parent=39 // pred_check
        %p11843 = pneg %p144
      $region42: #{tpu_custom_call.1} parent=39 // pred_check_branch
        %11845 = sbr.rel (%p11843) target = $region44
      $region43: #{tpu_custom_call.1} parent=39 // pred_region
        _
      $region44: #{tpu_custom_call.1} parent=39 // pred_fallthru
        _
    $region40: #{tpu_custom_call.1} parent=5 // pred_fallthru
      _
    %p11846 = scmp.le.s32.totalorder 2, %s11
    // Predicated region
    $region45: #{tpu_custom_call.1} parent=5 // pred_check
      %p11847 = pneg %p11846
    $region46: #{tpu_custom_call.1} parent=5 // pred_check_branch
      %11849 = sbr.rel (%p11847) target = $region48
    $region47: #{tpu_custom_call.1} parent=5 // pred_region
      %s11850 = ssub.s32 %s11, 2
      // Predicated region
      $region49: #{tpu_custom_call.1} parent=47 // pred_check
        %p11851 = pneg %p150
      $region50: #{tpu_custom_call.1} parent=47 // pred_check_branch
        %11853 = sbr.rel (%p11851) target = $region52
      $region51: #{tpu_custom_call.1} parent=47 // pred_region
        %p11854 = scmp.lt.s32.totalorder %s17, 1
        %s11855 = scalar_select %p11854, %s17, 1
        %s11856 = smul.addr %s11855, 24
        %s11857 = smul.addr %s11856, 8
        %s11858 = scalar_lea.vmem %s5, %s11857
      $region52: #{tpu_custom_call.1} parent=47 // pred_fallthru
        _
    $region48: #{tpu_custom_call.1} parent=5 // pred_fallthru
      _
  $region6: #{tpu_custom_call.1} parent=0 // loop_footer
    %s15 = sadd.s32 1, %s11
  $region7: #{tpu_custom_call.1} parent=0 // loop_footer_branch
    %10 = sbr.rel target = $region3
  $region8: #{tpu_custom_call.1} parent=0 // loop_exit
    _

</llo_original>
